<compile_context>
chip_gen: v5e
topology: v5e:2x2
jax: 0.10.0
libtpu: 0.0.40
codegen_flags: <defaults>
</compile_context>

<pallas_src>
import functools

import jax
import jax.numpy as jnp
from jax.experimental import pallas as pl
from jax.experimental.pallas import tpu as pltpu


# ----------------------------- Pallas kernels ------------------------------ #

def _linear_relu_kernel(x_ref, w_ref, b_ref, o_ref, *, relu):
    """One row-tile of  relu(x @ w + b)  with bf16 operands / f32 accumulation."""
    acc = jnp.dot(x_ref[...].astype(jnp.bfloat16),
                  w_ref[...].astype(jnp.bfloat16),
                  preferred_element_type=jnp.float32)
    acc = acc + b_ref[...]
    if relu:
        acc = jnp.maximum(acc, 0.0)
    o_ref[...] = acc.astype(o_ref.dtype)


def pallas_linear_relu(x, w, b, *, relu=True, out_dtype=jnp.bfloat16):
    """x: (M, K) @ w: (K, N) + b: (N,) -> (M, N) bf16 with optional fused ReLU.

    Large M is row-tiled with a parallel grid (so v7x shards across both
    TensorCores); small M runs as one full block (no pad / slice ops - a
    block_shape equal to the full array dims is legal even off the (8,128)
    grid).
    """
    M, K = x.shape
    N = w.shape[1]
    tm, gm = M, 1
    if M >= 512:
        for g in (2, 4, 8):
            if M % g == 0 and (M // g) % 8 == 0:
                tm, gm = M // g, g
                break

    return pl.pallas_call(
        functools.partial(_linear_relu_kernel, relu=relu),
        out_shape=jax.ShapeDtypeStruct((M, N), out_dtype),
        grid=(gm,),
        in_specs=[pl.BlockSpec((tm, K), lambda i: (i, 0)),
                  pl.BlockSpec((K, N), lambda i: (0, 0)),
                  pl.BlockSpec((1, N), lambda i: (0, 0))],
        out_specs=pl.BlockSpec((tm, N), lambda i: (i, 0)),
        compiler_params=pltpu.CompilerParams(
            dimension_semantics=("parallel",)),
    )(x, w, b.reshape(1, N))


def _noisy_hidden_kernel(flatT_ref,
                         a1w_ref, a1s_ref, a1e_ref,
                         v1w_ref, v1s_ref, v1e_ref,
                         haT_ref, hvT_ref):
    """One 64-row chunk of both noisy layer-1 pre-activations (no carry).

    Weight chunks arrive in bf16 and native (out, in) layout; the effective
    weight w + sigma*eps is formed in f32 (v5e-safe) and the matmul runs with
    the big operand as the MXU-native LHS (contraction on its last dim).
    """
    f32 = jnp.float32
    x = flatT_ref[...]                                                   # (K, B) bf16
    wa = (a1w_ref[...].astype(f32)
          + a1s_ref[...].astype(f32) * a1e_ref[...].astype(f32)).astype(jnp.bfloat16)
    wv = (v1w_ref[...].astype(f32)
          + v1s_ref[...].astype(f32) * v1e_ref[...].astype(f32)).astype(jnp.bfloat16)
    haT_ref[...] = jnp.dot(wa, x, preferred_element_type=f32)            # (NT, B)
    hvT_ref[...] = jnp.dot(wv, x, preferred_element_type=f32)            # (NT, B)


def pallas_noisy_hidden(flatT, a1w, a1s, a1e, v1w, v1s, v1e, *, nt=64):
    """flatT: (K, B) bf16; layer-1 noisy params: (H, K) bf16 -> two (H, B) f32.

    The grid streams contiguous NT-row chunks of the six big weight tensors;
    each step writes its own hidden chunk, so the axis is fully parallel
    (megacore-friendly) with ~5 MB of double-buffered VMEM.
    """
    K, B = flatT.shape
    H = a1w.shape[0]
    if H % nt != 0:
        nt = H
    nchunks = H // nt

    def wspec():
        return pl.BlockSpec((nt, K), lambda n: (n, 0))

    return pl.pallas_call(
        _noisy_hidden_kernel,
        out_shape=(jax.ShapeDtypeStruct((H, B), jnp.float32),
                   jax.ShapeDtypeStruct((H, B), jnp.float32)),
        grid=(nchunks,),
        in_specs=[pl.BlockSpec((K, B), lambda n: (0, 0)),
                  wspec(), wspec(), wspec(),
                  wspec(), wspec(), wspec()],
        out_specs=(pl.BlockSpec((nt, B), lambda n: (n, 0)),
                   pl.BlockSpec((nt, B), lambda n: (n, 0))),
        compiler_params=pltpu.CompilerParams(
            dimension_semantics=("parallel",)),
    )(flatT, a1w, a1s, a1e, v1w, v1s, v1e)


def _dueling_epilogue_kernel(haT_ref, hvT_ref, ba1_ref, bv1_ref,
                             wa2_ref, ba2_ref, wv2_ref, bv2_ref, o_ref):
    """Tiny fused epilogue: bias+ReLU, noisy layer-2 matmuls, dueling combine."""
    bf16 = jnp.bfloat16
    h_a = jnp.maximum(haT_ref[...] + ba1_ref[...], 0.0).astype(bf16)     # (H, B)
    h_v = jnp.maximum(hvT_ref[...] + bv1_ref[...], 0.0).astype(bf16)     # (H, B)
    advT = jnp.dot(wa2_ref[...].astype(bf16), h_a,
                   preferred_element_type=jnp.float32) + ba2_ref[...]    # (A, B)
    valT = jnp.dot(wv2_ref[...].astype(bf16), h_v,
                   preferred_element_type=jnp.float32) + bv2_ref[...]    # (1, B)
    o_ref[...] = valT + (advT - jnp.mean(advT, axis=0, keepdims=True))   # (A, B)


def pallas_dueling_epilogue(haT, hvT, ba1, bv1, wa2, ba2, wv2, bv2):
    A = wa2.shape[0]
    B = haT.shape[1]
    return pl.pallas_call(
        _dueling_epilogue_kernel,
        out_shape=jax.ShapeDtypeStruct((A, B), jnp.float32),
    )(haT, hvT, ba1, bv1, wa2, ba2, wv2, bv2)


# ------------------------------- JAX glue ---------------------------------- #

def conv2d_nhwc(x_nhwc, wm, b, k, stride):
    """VALID conv on NHWC bf16 activations via patch extraction + Pallas matmul.

    wm is the pre-flattened (C*k*k, O) weight matrix whose row order matches
    the (C, kh, kw) feature order of conv_general_dilated_patches.
    """
    Bb = x_nhwc.shape[0]
    O = wm.shape[1]
    patches = jax.lax.conv_general_dilated_patches(
        x_nhwc, (k, k), (stride, stride), "VALID",
        dimension_numbers=("NHWC", "HWIO", "NHWC"))          # (B, OH, OW, C*k*k)
    _, OH, OW, KK = patches.shape
    colm = patches.reshape(Bb * OH * OW, KK)
    out = pallas_linear_relu(colm, wm, b, relu=True)         # (B*OH*OW, O) bf16
    return out.reshape(Bb, OH, OW, O)                        # stays NHWC


def prepare_params(p):
    """One-time inference layout prep (outside the jitted forward):
    conv weights flattened to (C*k*k, O) bf16 matmul matrices, and the six big
    noisy layer-1 tensors cast to bf16 (halves the head's HBM traffic)."""
    pp = {}
    for name in ("c1", "c2", "c3"):
        w = p[f"{name}_w"]
        pp[f"{name}_wm"] = w.reshape(w.shape[0], -1).T.astype(jnp.bfloat16)
        pp[f"{name}_b"] = p[f"{name}_b"]
    for name in ("a1", "v1"):
        for suf in ("w", "sw", "ew"):
            pp[f"{name}_{suf}"] = p[f"{name}_{suf}"].astype(jnp.bfloat16)
        for suf in ("b", "sb", "eb"):
            pp[f"{name}_{suf}"] = p[f"{name}_{suf}"]
    for name in ("a2", "v2"):
        for suf in ("w", "b", "sw", "sb", "ew", "eb"):
            pp[f"{name}_{suf}"] = p[f"{name}_{suf}"]
    return pp


def forward(pp, x):
    B = x.shape[0]
    h = jnp.transpose(x, (0, 2, 3, 1)).astype(jnp.bfloat16)  # NCHW -> NHWC once
    h = conv2d_nhwc(h, pp["c1_wm"], pp["c1_b"], 8, 4)        # (B, 20, 20, 32)
    h = conv2d_nhwc(h, pp["c2_wm"], pp["c2_b"], 4, 2)        # (B,  9,  9, 64)
    h = conv2d_nhwc(h, pp["c3_wm"], pp["c3_b"], 3, 1)        # (B,  7,  7, 64)
    # Flatten in torch's NCHW .view order, transposed to (conv_size, B) so the
    # head matmul keeps the big weight operand MXU-native (tiny: B*3136 bf16).
    flatT = jnp.transpose(h, (3, 1, 2, 0)).reshape(-1, B)    # (3136, B) bf16

    haT, hvT = pallas_noisy_hidden(
        flatT,
        pp["a1_w"], pp["a1_sw"], pp["a1_ew"],
        pp["v1_w"], pp["v1_sw"], pp["v1_ew"])                # (256, B) f32 each

    # Tiny noisy params (all biases + layer-2 weights) formed in plain JAX.
    ba1 = (pp["a1_b"] + pp["a1_sb"] * pp["a1_eb"]).reshape(-1, 1)   # (256, 1)
    bv1 = (pp["v1_b"] + pp["v1_sb"] * pp["v1_eb"]).reshape(-1, 1)   # (256, 1)
    wa2 = pp["a2_w"] + pp["a2_sw"] * pp["a2_ew"]                    # (6, 256)
    ba2 = (pp["a2_b"] + pp["a2_sb"] * pp["a2_eb"]).reshape(-1, 1)   # (6, 1)
    wv2 = pp["v2_w"] + pp["v2_sw"] * pp["v2_ew"]                    # (1, 256)
    bv2 = (pp["v2_b"] + pp["v2_sb"] * pp["v2_eb"]).reshape(1, 1)    # (1, 1)

    qT = pallas_dueling_epilogue(haT, hvT, ba1, bv1, wa2, ba2, wv2, bv2)  # (A, B)
    return qT.T                                                            # (B, A)


# --------------------------- reference (pure JAX) --------------------------- #

def reference(p, x):
    def conv(h, w, b, s):
        o = jax.lax.conv_general_dilated(
            h, w, (s, s), "VALID",
            dimension_numbers=("NCHW", "OIHW", "NCHW"),
            precision=jax.lax.Precision.HIGHEST)
        return jnp.maximum(o + b.reshape(1, -1, 1, 1), 0.0)

    h = conv(x, p["c1_w"], p["c1_b"], 4)
    h = conv(h, p["c2_w"], p["c2_b"], 2)
    h = conv(h, p["c3_w"], p["c3_b"], 1)
    flat = h.reshape(x.shape[0], -1)

    def noisy(z, w, b, sw, sb, ew, eb):
        v = w + sw * ew
        bb = b + sb * eb
        return jnp.dot(z, v.T, precision=jax.lax.Precision.HIGHEST) + bb

    ha = jnp.maximum(noisy(flat, p["a1_w"], p["a1_b"], p["a1_sw"], p["a1_sb"],
                           p["a1_ew"], p["a1_eb"]), 0.0)
    adv = noisy(ha, p["a2_w"], p["a2_b"], p["a2_sw"], p["a2_sb"],
                p["a2_ew"], p["a2_eb"])
    hv = jnp.maximum(noisy(flat, p["v1_w"], p["v1_b"], p["v1_sw"], p["v1_sb"],
                           p["v1_ew"], p["v1_eb"]), 0.0)
    val = noisy(hv, p["v2_w"], p["v2_b"], p["v2_sw"], p["v2_sb"],
                p["v2_ew"], p["v2_eb"])
    return val + (adv - adv.mean(axis=1, keepdims=True))


# ------------------------------ param setup --------------------------------- #

def init_params(key):
    SIGMA = 0.017
    CONV_OUT = 64 * 7 * 7  # 3136, as in the PyTorch module for 84x84 input
    ks = jax.random.split(key, 24)
    it = iter(range(24))

    def u(k, shape, bound):
        return jax.random.uniform(k, shape, jnp.float32, -bound, bound)

    p = {}
    # Conv2d default-ish init: U(-1/sqrt(fan_in), 1/sqrt(fan_in))
    for name, (o, c, kk) in [("c1", (32, 1, 8)), ("c2", (64, 32, 4)), ("c3", (64, 64, 3))]:
        bound = 1.0 / (c * kk * kk) ** 0.5
        p[f"{name}_w"] = u(ks[next(it)], (o, c, kk, kk), bound)
        p[f"{name}_b"] = u(ks[next(it)], (o,), bound)

    # NoisyLinear: weight/bias ~ U(-sqrt(3/in), sqrt(3/in)), sigma = 0.017,
    # epsilon ~ N(0, 1) (torch's in-forward .normal_() replaced by a fixed draw).
    for name, (fin, fout) in [("a1", (CONV_OUT, 256)), ("a2", (256, 6)),
                              ("v1", (CONV_OUT, 256)), ("v2", (256, 1))]:
        std = (3.0 / fin) ** 0.5
        p[f"{name}_w"] = u(ks[next(it)], (fout, fin), std)
        p[f"{name}_b"] = u(ks[next(it)], (fout,), std)
        p[f"{name}_sw"] = jnp.full((fout, fin), SIGMA, jnp.float32)
        p[f"{name}_sb"] = jnp.full((fout,), SIGMA, jnp.float32)
        p[f"{name}_ew"] = jax.random.normal(ks[next(it)], (fout, fin), jnp.float32)
        p[f"{name}_eb"] = jax.random.normal(ks[next(it)], (fout,), jnp.float32)
    return p


if __name__ == "__main__":
    key = jax.random.PRNGKey(0)
    pkey, xkey = jax.random.split(key)
    params = init_params(pkey)
    prepped = prepare_params(params)   # one-time bf16 / layout prep

    # Input must be 84x84 so the flattened conv features (3136) match the fc dims.
    x = jax.random.normal(xkey, (2, 1, 84, 84), jnp.float32)

    out = jax.block_until_ready(jax.jit(forward)(prepped, x))
    assert out.shape == (2, 6) and out.dtype == jnp.float32

    ref = jax.block_until_ready(jax.jit(reference)(params, x))
    assert jnp.allclose(out, ref, rtol=2e-2, atol=2e-2), (out, ref)

    print("KERNEL_OK")
</pallas_src>

<mosaic_0001>
module attributes {stable_mosaic.version = 11 : i64} {
  func.func @_linear_relu_kernel(%arg0: i32, %arg1: memref<400x64xbf16, #tpu.memory_space<vmem>>, %arg2: memref<64x32xbf16, #tpu.memory_space<vmem>>, %arg3: memref<1x32xf32, #tpu.memory_space<vmem>>, %arg4: memref<400x32xbf16, #tpu.memory_space<vmem>>) attributes {dimension_semantics = [#tpu.dimension_semantics<parallel>], iteration_bounds = array<i64: 2>, scalar_prefetch = 0 : i64, scratch_operands = 0 : i64, tpu.core_type = #tpu.core_type<tc>, window_params = [{transform_indices = @transform_0, window_bounds = array<i64: 400, 64>}, {pipeline_mode = #tpu.pipeline_mode<synchronous>, transform_indices = @transform_1, window_bounds = array<i64: 64, 32>}, {pipeline_mode = #tpu.pipeline_mode<synchronous>, transform_indices = @transform_2, window_bounds = array<i64: 1, 32>}, {transform_indices = @transform_3, window_bounds = array<i64: 400, 32>}]} {
    %c0 = arith.constant 0 : index
    %c0_0 = arith.constant 0 : index
    %0 = vector.load %arg1[%c0, %c0_0] : memref<400x64xbf16, #tpu.memory_space<vmem>>, vector<400x64xbf16>
    %c0_1 = arith.constant 0 : index
    %c0_2 = arith.constant 0 : index
    %1 = vector.load %arg2[%c0_1, %c0_2] : memref<64x32xbf16, #tpu.memory_space<vmem>>, vector<64x32xbf16>
    %cst = arith.constant dense<0.000000e+00> : vector<400x32xf32>
    %2 = tpu.matmul %0, %1, %cst {dimension_numbers = #tpu.dot_dimension_numbers<[1], [0], [0], [1], [0, 0, 1, 1], [], []>} : vector<400x64xbf16>, vector<64x32xbf16>, vector<400x32xf32> -> vector<400x32xf32>
    %c0_3 = arith.constant 0 : index
    %c0_4 = arith.constant 0 : index
    %3 = vector.load %arg3[%c0_3, %c0_4] : memref<1x32xf32, #tpu.memory_space<vmem>>, vector<1x32xf32>
    %4 = vector.broadcast %3 : vector<1x32xf32> to vector<400x32xf32>
    %5 = arith.addf %2, %4 : vector<400x32xf32>
    %cst_5 = arith.constant 0.000000e+00 : f32
    %6 = vector.broadcast %cst_5 : f32 to vector<400x32xf32>
    %7 = arith.maximumf %5, %6 : vector<400x32xf32>
    %8 = arith.truncf %7 : vector<400x32xf32> to vector<400x32xbf16>
    %c0_6 = arith.constant 0 : index
    %c0_7 = arith.constant 0 : index
    %9 = vector.load %arg4[%c0_6, %c0_7] : memref<400x32xbf16, #tpu.memory_space<vmem>>, vector<400x32xbf16>
    tpu.vector_store %arg4[%c0_6, %c0_7], %8 {strides = array<i32>} : memref<400x32xbf16, #tpu.memory_space<vmem>>, vector<400x32xbf16>,
    return
  }
  func.func @transform_0(%arg0: i32) -> (i32, i32) {
    %c0_i32 = arith.constant 0 : i32
    %c0_i32_0 = arith.constant 0 : i32
    return %arg0, %c0_i32 : i32, i32
  }
  func.func @transform_1(%arg0: i32) -> (i32, i32) {
    %c0_i32 = arith.constant 0 : i32
    %c0_i32_0 = arith.constant 0 : i32
    %c0_i32_1 = arith.constant 0 : i32
    return %c0_i32, %c0_i32_0 : i32, i32
  }
  func.func @transform_2(%arg0: i32) -> (i32, i32) {
    %c0_i32 = arith.constant 0 : i32
    %c0_i32_0 = arith.constant 0 : i32
    %c0_i32_1 = arith.constant 0 : i32
    return %c0_i32, %c0_i32_0 : i32, i32
  }
  func.func @transform_3(%arg0: i32) -> (i32, i32) {
    %c0_i32 = arith.constant 0 : i32
    %c0_i32_0 = arith.constant 0 : i32
    return %arg0, %c0_i32 : i32, i32
  }
}

module attributes {stable_mosaic.version = 11 : i64} {
  func.func @_linear_relu_kernel(%arg0: i32, %arg1: memref<162x512xbf16, #tpu.memory_space<vmem>>, %arg2: memref<512x64xbf16, #tpu.memory_space<vmem>>, %arg3: memref<1x64xf32, #tpu.memory_space<vmem>>, %arg4: memref<162x64xbf16, #tpu.memory_space<vmem>>) attributes {dimension_semantics = [#tpu.dimension_semantics<parallel>], iteration_bounds = array<i64: 1>, scalar_prefetch = 0 : i64, scratch_operands = 0 : i64, tpu.core_type = #tpu.core_type<tc>, window_params = [{transform_indices = @transform_0, window_bounds = array<i64: 162, 512>}, {pipeline_mode = #tpu.pipeline_mode<synchronous>, transform_indices = @transform_1, window_bounds = array<i64: 512, 64>}, {pipeline_mode = #tpu.pipeline_mode<synchronous>, transform_indices = @transform_2, window_bounds = array<i64: 1, 64>}, {transform_indices = @transform_3, window_bounds = array<i64: 162, 64>}]} {
    %c0 = arith.constant 0 : index
    %c0_0 = arith.constant 0 : index
    %0 = vector.load %arg1[%c0, %c0_0] : memref<162x512xbf16, #tpu.memory_space<vmem>>, vector<162x512xbf16>
    %c0_1 = arith.constant 0 : index
    %c0_2 = arith.constant 0 : index
    %1 = vector.load %arg2[%c0_1, %c0_2] : memref<512x64xbf16, #tpu.memory_space<vmem>>, vector<512x64xbf16>
    %cst = arith.constant dense<0.000000e+00> : vector<162x64xf32>
    %2 = tpu.matmul %0, %1, %cst {dimension_numbers = #tpu.dot_dimension_numbers<[1], [0], [0], [1], [0, 0, 1, 1], [], []>} : vector<162x512xbf16>, vector<512x64xbf16>, vector<162x64xf32> -> vector<162x64xf32>
    %c0_3 = arith.constant 0 : index
    %c0_4 = arith.constant 0 : index
    %3 = vector.load %arg3[%c0_3, %c0_4] : memref<1x64xf32, #tpu.memory_space<vmem>>, vector<1x64xf32>
    %4 = vector.broadcast %3 : vector<1x64xf32> to vector<162x64xf32>
    %5 = arith.addf %2, %4 : vector<162x64xf32>
    %cst_5 = arith.constant 0.000000e+00 : f32
    %6 = vector.broadcast %cst_5 : f32 to vector<162x64xf32>
    %7 = arith.maximumf %5, %6 : vector<162x64xf32>
    %8 = arith.truncf %7 : vector<162x64xf32> to vector<162x64xbf16>
    %c0_6 = arith.constant 0 : index
    %c0_7 = arith.constant 0 : index
    %9 = vector.load %arg4[%c0_6, %c0_7] : memref<162x64xbf16, #tpu.memory_space<vmem>>, vector<162x64xbf16>
    tpu.vector_store %arg4[%c0_6, %c0_7], %8 {strides = array<i32>} : memref<162x64xbf16, #tpu.memory_space<vmem>>, vector<162x64xbf16>,
    return
  }
  func.func @transform_0(%arg0: i32) -> (i32, i32) {
    %c0_i32 = arith.constant 0 : i32
    %c0_i32_0 = arith.constant 0 : i32
    return %arg0, %c0_i32 : i32, i32
  }
  func.func @transform_1(%arg0: i32) -> (i32, i32) {
    %c0_i32 = arith.constant 0 : i32
    %c0_i32_0 = arith.constant 0 : i32
    %c0_i32_1 = arith.constant 0 : i32
    return %c0_i32, %c0_i32_0 : i32, i32
  }
  func.func @transform_2(%arg0: i32) -> (i32, i32) {
    %c0_i32 = arith.constant 0 : i32
    %c0_i32_0 = arith.constant 0 : i32
    %c0_i32_1 = arith.constant 0 : i32
    return %c0_i32, %c0_i32_0 : i32, i32
  }
  func.func @transform_3(%arg0: i32) -> (i32, i32) {
    %c0_i32 = arith.constant 0 : i32
    %c0_i32_0 = arith.constant 0 : i32
    return %arg0, %c0_i32 : i32, i32
  }
}

module attributes {stable_mosaic.version = 11 : i64} {
  func.func @_linear_relu_kernel(%arg0: i32, %arg1: memref<98x576xbf16, #tpu.memory_space<vmem>>, %arg2: memref<576x64xbf16, #tpu.memory_space<vmem>>, %arg3: memref<1x64xf32, #tpu.memory_space<vmem>>, %arg4: memref<98x64xbf16, #tpu.memory_space<vmem>>) attributes {dimension_semantics = [#tpu.dimension_semantics<parallel>], iteration_bounds = array<i64: 1>, scalar_prefetch = 0 : i64, scratch_operands = 0 : i64, tpu.core_type = #tpu.core_type<tc>, window_params = [{transform_indices = @transform_0, window_bounds = array<i64: 98, 576>}, {pipeline_mode = #tpu.pipeline_mode<synchronous>, transform_indices = @transform_1, window_bounds = array<i64: 576, 64>}, {pipeline_mode = #tpu.pipeline_mode<synchronous>, transform_indices = @transform_2, window_bounds = array<i64: 1, 64>}, {transform_indices = @transform_3, window_bounds = array<i64: 98, 64>}]} {
    %c0 = arith.constant 0 : index
    %c0_0 = arith.constant 0 : index
    %0 = vector.load %arg1[%c0, %c0_0] : memref<98x576xbf16, #tpu.memory_space<vmem>>, vector<98x576xbf16>
    %c0_1 = arith.constant 0 : index
    %c0_2 = arith.constant 0 : index
    %1 = vector.load %arg2[%c0_1, %c0_2] : memref<576x64xbf16, #tpu.memory_space<vmem>>, vector<576x64xbf16>
    %cst = arith.constant dense<0.000000e+00> : vector<98x64xf32>
    %2 = tpu.matmul %0, %1, %cst {dimension_numbers = #tpu.dot_dimension_numbers<[1], [0], [0], [1], [0, 0, 1, 1], [], []>} : vector<98x576xbf16>, vector<576x64xbf16>, vector<98x64xf32> -> vector<98x64xf32>
    %c0_3 = arith.constant 0 : index
    %c0_4 = arith.constant 0 : index
    %3 = vector.load %arg3[%c0_3, %c0_4] : memref<1x64xf32, #tpu.memory_space<vmem>>, vector<1x64xf32>
    %4 = vector.broadcast %3 : vector<1x64xf32> to vector<98x64xf32>
    %5 = arith.addf %2, %4 : vector<98x64xf32>
    %cst_5 = arith.constant 0.000000e+00 : f32
    %6 = vector.broadcast %cst_5 : f32 to vector<98x64xf32>
    %7 = arith.maximumf %5, %6 : vector<98x64xf32>
    %8 = arith.truncf %7 : vector<98x64xf32> to vector<98x64xbf16>
    %c0_6 = arith.constant 0 : index
    %c0_7 = arith.constant 0 : index
    %9 = vector.load %arg4[%c0_6, %c0_7] : memref<98x64xbf16, #tpu.memory_space<vmem>>, vector<98x64xbf16>
    tpu.vector_store %arg4[%c0_6, %c0_7], %8 {strides = array<i32>} : memref<98x64xbf16, #tpu.memory_space<vmem>>, vector<98x64xbf16>,
    return
  }
  func.func @transform_0(%arg0: i32) -> (i32, i32) {
    %c0_i32 = arith.constant 0 : i32
    %c0_i32_0 = arith.constant 0 : i32
    return %arg0, %c0_i32 : i32, i32
  }
  func.func @transform_1(%arg0: i32) -> (i32, i32) {
    %c0_i32 = arith.constant 0 : i32
    %c0_i32_0 = arith.constant 0 : i32
    %c0_i32_1 = arith.constant 0 : i32
    return %c0_i32, %c0_i32_0 : i32, i32
  }
  func.func @transform_2(%arg0: i32) -> (i32, i32) {
    %c0_i32 = arith.constant 0 : i32
    %c0_i32_0 = arith.constant 0 : i32
    %c0_i32_1 = arith.constant 0 : i32
    return %c0_i32, %c0_i32_0 : i32, i32
  }
  func.func @transform_3(%arg0: i32) -> (i32, i32) {
    %c0_i32 = arith.constant 0 : i32
    %c0_i32_0 = arith.constant 0 : i32
    return %arg0, %c0_i32 : i32, i32
  }
}

module attributes {stable_mosaic.version = 11 : i64} {
  func.func @_noisy_hidden_kernel(%arg0: i32, %arg1: memref<3136x2xbf16, #tpu.memory_space<vmem>>, %arg2: memref<64x3136xbf16, #tpu.memory_space<vmem>>, %arg3: memref<64x3136xbf16, #tpu.memory_space<vmem>>, %arg4: memref<64x3136xbf16, #tpu.memory_space<vmem>>, %arg5: memref<64x3136xbf16, #tpu.memory_space<vmem>>, %arg6: memref<64x3136xbf16, #tpu.memory_space<vmem>>, %arg7: memref<64x3136xbf16, #tpu.memory_space<vmem>>, %arg8: memref<64x2xf32, #tpu.memory_space<vmem>>, %arg9: memref<64x2xf32, #tpu.memory_space<vmem>>) attributes {dimension_semantics = [#tpu.dimension_semantics<parallel>], iteration_bounds = array<i64: 4>, scalar_prefetch = 0 : i64, scratch_operands = 0 : i64, tpu.core_type = #tpu.core_type<tc>, window_params = [{pipeline_mode = #tpu.pipeline_mode<synchronous>, transform_indices = @transform_0, window_bounds = array<i64: 3136, 2>}, {transform_indices = @transform_1, window_bounds = array<i64: 64, 3136>}, {transform_indices = @transform_2, window_bounds = array<i64: 64, 3136>}, {transform_indices = @transform_3, window_bounds = array<i64: 64, 3136>}, {transform_indices = @transform_4, window_bounds = array<i64: 64, 3136>}, {transform_indices = @transform_5, window_bounds = array<i64: 64, 3136>}, {transform_indices = @transform_6, window_bounds = array<i64: 64, 3136>}, {transform_indices = @transform_7, window_bounds = array<i64: 64, 2>}, {transform_indices = @transform_8, window_bounds = array<i64: 64, 2>}]} {
    %c0 = arith.constant 0 : index
    %c0_0 = arith.constant 0 : index
    %0 = vector.load %arg1[%c0, %c0_0] : memref<3136x2xbf16, #tpu.memory_space<vmem>>, vector<3136x2xbf16>
    %c0_1 = arith.constant 0 : index
    %c0_2 = arith.constant 0 : index
    %1 = vector.load %arg2[%c0_1, %c0_2] : memref<64x3136xbf16, #tpu.memory_space<vmem>>, vector<64x3136xbf16>
    %2 = arith.extf %1 : vector<64x3136xbf16> to vector<64x3136xf32>
    %c0_3 = arith.constant 0 : index
    %c0_4 = arith.constant 0 : index
    %3 = vector.load %arg3[%c0_3, %c0_4] : memref<64x3136xbf16, #tpu.memory_space<vmem>>, vector<64x3136xbf16>
    %4 = arith.extf %3 : vector<64x3136xbf16> to vector<64x3136xf32>
    %c0_5 = arith.constant 0 : index
    %c0_6 = arith.constant 0 : index
    %5 = vector.load %arg4[%c0_5, %c0_6] : memref<64x3136xbf16, #tpu.memory_space<vmem>>, vector<64x3136xbf16>
    %6 = arith.extf %5 : vector<64x3136xbf16> to vector<64x3136xf32>
    %7 = arith.mulf %4, %6 : vector<64x3136xf32>
    %8 = arith.addf %2, %7 : vector<64x3136xf32>
    %9 = arith.truncf %8 : vector<64x3136xf32> to vector<64x3136xbf16>
    %c0_7 = arith.constant 0 : index
    %c0_8 = arith.constant 0 : index
    %10 = vector.load %arg5[%c0_7, %c0_8] : memref<64x3136xbf16, #tpu.memory_space<vmem>>, vector<64x3136xbf16>
    %11 = arith.extf %10 : vector<64x3136xbf16> to vector<64x3136xf32>
    %c0_9 = arith.constant 0 : index
    %c0_10 = arith.constant 0 : index
    %12 = vector.load %arg6[%c0_9, %c0_10] : memref<64x3136xbf16, #tpu.memory_space<vmem>>, vector<64x3136xbf16>
    %13 = arith.extf %12 : vector<64x3136xbf16> to vector<64x3136xf32>
    %c0_11 = arith.constant 0 : index
    %c0_12 = arith.constant 0 : index
    %14 = vector.load %arg7[%c0_11, %c0_12] : memref<64x3136xbf16, #tpu.memory_space<vmem>>, vector<64x3136xbf16>
    %15 = arith.extf %14 : vector<64x3136xbf16> to vector<64x3136xf32>
    %16 = arith.mulf %13, %15 : vector<64x3136xf32>
    %17 = arith.addf %11, %16 : vector<64x3136xf32>
    %18 = arith.truncf %17 : vector<64x3136xf32> to vector<64x3136xbf16>
    %cst = arith.constant dense<0.000000e+00> : vector<64x2xf32>
    %19 = tpu.matmul %9, %0, %cst {dimension_numbers = #tpu.dot_dimension_numbers<[1], [0], [0], [1], [0, 0, 1, 1], [], []>} : vector<64x3136xbf16>, vector<3136x2xbf16>, vector<64x2xf32> -> vector<64x2xf32>
    %c0_13 = arith.constant 0 : index
    %c0_14 = arith.constant 0 : index
    %20 = vector.load %arg8[%c0_13, %c0_14] : memref<64x2xf32, #tpu.memory_space<vmem>>, vector<64x2xf32>
    tpu.vector_store %arg8[%c0_13, %c0_14], %19 {strides = array<i32>} : memref<64x2xf32, #tpu.memory_space<vmem>>, vector<64x2xf32>,
    %cst_15 = arith.constant dense<0.000000e+00> : vector<64x2xf32>
    %21 = tpu.matmul %18, %0, %cst_15 {dimension_numbers = #tpu.dot_dimension_numbers<[1], [0], [0], [1], [0, 0, 1, 1], [], []>} : vector<64x3136xbf16>, vector<3136x2xbf16>, vector<64x2xf32> -> vector<64x2xf32>
    %c0_16 = arith.constant 0 : index
    %c0_17 = arith.constant 0 : index
    %22 = vector.load %arg9[%c0_16, %c0_17] : memref<64x2xf32, #tpu.memory_space<vmem>>, vector<64x2xf32>
    tpu.vector_store %arg9[%c0_16, %c0_17], %21 {strides = array<i32>} : memref<64x2xf32, #tpu.memory_space<vmem>>, vector<64x2xf32>,
    return
  }
  func.func @transform_0(%arg0: i32) -> (i32, i32) {
    %c0_i32 = arith.constant 0 : i32
    %c0_i32_0 = arith.constant 0 : i32
    %c0_i32_1 = arith.constant 0 : i32
    return %c0_i32, %c0_i32_0 : i32, i32
  }
  func.func @transform_1(%arg0: i32) -> (i32, i32) {
    %c0_i32 = arith.constant 0 : i32
    %c0_i32_0 = arith.constant 0 : i32
    return %arg0, %c0_i32 : i32, i32
  }
  func.func @transform_2(%arg0: i32) -> (i32, i32) {
    %c0_i32 = arith.constant 0 : i32
    %c0_i32_0 = arith.constant 0 : i32
    return %arg0, %c0_i32 : i32, i32
  }
  func.func @transform_3(%arg0: i32) -> (i32, i32) {
    %c0_i32 = arith.constant 0 : i32
    %c0_i32_0 = arith.constant 0 : i32
    return %arg0, %c0_i32 : i32, i32
  }
  func.func @transform_4(%arg0: i32) -> (i32, i32) {
    %c0_i32 = arith.constant 0 : i32
    %c0_i32_0 = arith.constant 0 : i32
    return %arg0, %c0_i32 : i32, i32
  }
  func.func @transform_5(%arg0: i32) -> (i32, i32) {
    %c0_i32 = arith.constant 0 : i32
    %c0_i32_0 = arith.constant 0 : i32
    return %arg0, %c0_i32 : i32, i32
  }
  func.func @transform_6(%arg0: i32) -> (i32, i32) {
    %c0_i32 = arith.constant 0 : i32
    %c0_i32_0 = arith.constant 0 : i32
    return %arg0, %c0_i32 : i32, i32
  }
  func.func @transform_7(%arg0: i32) -> (i32, i32) {
    %c0_i32 = arith.constant 0 : i32
    %c0_i32_0 = arith.constant 0 : i32
    return %arg0, %c0_i32 : i32, i32
  }
  func.func @transform_8(%arg0: i32) -> (i32, i32) {
    %c0_i32 = arith.constant 0 : i32
    %c0_i32_0 = arith.constant 0 : i32
    return %arg0, %c0_i32 : i32, i32
  }
}

module attributes {stable_mosaic.version = 11 : i64} {
  func.func @_dueling_epilogue_kernel(%arg0: memref<256x2xf32, #tpu.memory_space<vmem>>, %arg1: memref<256x2xf32, #tpu.memory_space<vmem>>, %arg2: memref<256x1xf32, #tpu.memory_space<vmem>>, %arg3: memref<256x1xf32, #tpu.memory_space<vmem>>, %arg4: memref<6x256xf32, #tpu.memory_space<vmem>>, %arg5: memref<6x1xf32, #tpu.memory_space<vmem>>, %arg6: memref<1x256xf32, #tpu.memory_space<vmem>>, %arg7: memref<1x1xf32, #tpu.memory_space<vmem>>, %arg8: memref<6x2xf32, #tpu.memory_space<vmem>>) attributes {dimension_semantics = [], scalar_prefetch = 0 : i64, scratch_operands = 0 : i64, tpu.core_type = #tpu.core_type<tc>} {
    %c0 = arith.constant 0 : index
    %c0_0 = arith.constant 0 : index
    %0 = vector.load %arg0[%c0, %c0_0] : memref<256x2xf32, #tpu.memory_space<vmem>>, vector<256x2xf32>
    %c0_1 = arith.constant 0 : index
    %c0_2 = arith.constant 0 : index
    %1 = vector.load %arg2[%c0_1, %c0_2] : memref<256x1xf32, #tpu.memory_space<vmem>>, vector<256x1xf32>
    %2 = vector.broadcast %1 : vector<256x1xf32> to vector<256x2xf32>
    %3 = arith.addf %0, %2 : vector<256x2xf32>
    %cst = arith.constant 0.000000e+00 : f32
    %4 = vector.broadcast %cst : f32 to vector<256x2xf32>
    %5 = arith.maximumf %3, %4 : vector<256x2xf32>
    %6 = arith.truncf %5 : vector<256x2xf32> to vector<256x2xbf16>
    %c0_3 = arith.constant 0 : index
    %c0_4 = arith.constant 0 : index
    %7 = vector.load %arg1[%c0_3, %c0_4] : memref<256x2xf32, #tpu.memory_space<vmem>>, vector<256x2xf32>
    %c0_5 = arith.constant 0 : index
    %c0_6 = arith.constant 0 : index
    %8 = vector.load %arg3[%c0_5, %c0_6] : memref<256x1xf32, #tpu.memory_space<vmem>>, vector<256x1xf32>
    %9 = vector.broadcast %8 : vector<256x1xf32> to vector<256x2xf32>
    %10 = arith.addf %7, %9 : vector<256x2xf32>
    %cst_7 = arith.constant 0.000000e+00 : f32
    %11 = vector.broadcast %cst_7 : f32 to vector<256x2xf32>
    %12 = arith.maximumf %10, %11 : vector<256x2xf32>
    %13 = arith.truncf %12 : vector<256x2xf32> to vector<256x2xbf16>
    %c0_8 = arith.constant 0 : index
    %c0_9 = arith.constant 0 : index
    %14 = vector.load %arg4[%c0_8, %c0_9] : memref<6x256xf32, #tpu.memory_space<vmem>>, vector<6x256xf32>
    %15 = arith.truncf %14 : vector<6x256xf32> to vector<6x256xbf16>
    %cst_10 = arith.constant dense<0.000000e+00> : vector<6x2xf32>
    %16 = tpu.matmul %15, %6, %cst_10 {dimension_numbers = #tpu.dot_dimension_numbers<[1], [0], [0], [1], [0, 0, 1, 1], [], []>} : vector<6x256xbf16>, vector<256x2xbf16>, vector<6x2xf32> -> vector<6x2xf32>
    %c0_11 = arith.constant 0 : index
    %c0_12 = arith.constant 0 : index
    %17 = vector.load %arg5[%c0_11, %c0_12] : memref<6x1xf32, #tpu.memory_space<vmem>>, vector<6x1xf32>
    %18 = vector.broadcast %17 : vector<6x1xf32> to vector<6x2xf32>
    %19 = arith.addf %16, %18 : vector<6x2xf32>
    %c0_13 = arith.constant 0 : index
    %c0_14 = arith.constant 0 : index
    %20 = vector.load %arg6[%c0_13, %c0_14] : memref<1x256xf32, #tpu.memory_space<vmem>>, vector<1x256xf32>
    %21 = arith.truncf %20 : vector<1x256xf32> to vector<1x256xbf16>
    %cst_15 = arith.constant dense<0.000000e+00> : vector<1x2xf32>
    %22 = tpu.matmul %21, %13, %cst_15 {dimension_numbers = #tpu.dot_dimension_numbers<[1], [0], [0], [1], [0, 0, 1, 1], [], []>} : vector<1x256xbf16>, vector<256x2xbf16>, vector<1x2xf32> -> vector<1x2xf32>
    %c0_16 = arith.constant 0 : index
    %c0_17 = arith.constant 0 : index
    %23 = vector.load %arg7[%c0_16, %c0_17] : memref<1x1xf32, #tpu.memory_space<vmem>>, vector<1x1xf32>
    %24 = vector.broadcast %23 : vector<1x1xf32> to vector<1x2xf32>
    %25 = arith.addf %22, %24 : vector<1x2xf32>
    %cst_18 = arith.constant dense<0.000000e+00> : vector<2xf32>
    %26 = vector.multi_reduction <add>, %19, %cst_18 [0] : vector<6x2xf32> to vector<2xf32>
    %27 = vector.shape_cast %26 : vector<2xf32> to vector<1x2xf32>
    %cst_19 = arith.constant 6.000000e+00 : f32
    %28 = vector.broadcast %cst_19 : f32 to vector<1x2xf32>
    %29 = arith.divf %27, %28 : vector<1x2xf32>
    %30 = vector.broadcast %29 : vector<1x2xf32> to vector<6x2xf32>
    %31 = arith.subf %19, %30 : vector<6x2xf32>
    %32 = vector.broadcast %25 : vector<1x2xf32> to vector<6x2xf32>
    %33 = arith.addf %32, %31 : vector<6x2xf32>
    %c0_20 = arith.constant 0 : index
    %c0_21 = arith.constant 0 : index
    %34 = vector.load %arg8[%c0_20, %c0_21] : memref<6x2xf32, #tpu.memory_space<vmem>>, vector<6x2xf32>
    tpu.vector_store %arg8[%c0_20, %c0_21], %33 {strides = array<i32>} : memref<6x2xf32, #tpu.memory_space<vmem>>, vector<6x2xf32>,
    return
  }
}

</mosaic_0001>

<llo_original>
// kernel: forward.5
$region0: #{forward.5}
  #allocation0 [shape = 'u32[]', space=smem, size = 0x4, offset = 0x4, fixed_abs, tag = 'smem constant byte address 0x4 - core index']
  #allocation1 [shape = 'u32[72,128]{1,0:T(1,128)}', space=vmem, size = 0x9000, scoped, tag = 'internal scratch']
  %s0 = inlined_call_operand.vmem [shape: bf16[800,64], index: 0, kind: input, shape index: {}]
  %s1 = inlined_call_operand.vmem [shape: bf16[64,32], index: 1, kind: input, shape index: {}]
  %s2 = inlined_call_operand.vmem [shape: f32[1,32], index: 2, kind: input, shape index: {}]
  %s3 = inlined_call_operand.vmem [shape: bf16[800,32], index: 3, kind: output, shape index: {}]
  %s4 = sld [smem:[#allocation0]]
  $region45: #{forward.5} parent=0
    _
  %s6 = ssub.s32 1, %s4
  %s7 = scalar_select 0, %s6, %s4
  loop: start=0, step=1, limit=4
  $region2: #{forward.5} parent=0 // loop_pre_header
    _
  $region3: #{forward.5} parent=0 // loop_header
    %s9 = sphi 0, %s13
    %p10 = scmp.ge.s32.totalorder %s9, 4
    %s19 = sphi 0, %s21
    %s22 = sphi 0, %s19
    %s23 = sphi 0, %s22
    %s39 = sphi 0, %s23
    %s43 = sphi 0, %s43
    %s45 = sphi 0, %s43
    %s46 = sphi 0, %s45
    %s60 = sphi 0, %s46
    %s64 = sphi 0, %s64
    %s66 = sphi 0, %s64
    %s67 = sphi 0, %s66
    %s81 = sphi 0, %s67
    %s87 = sphi 0, %s89
    %s90 = sphi 0, %s87
    %s91 = sphi 0, %s90
    %s107 = sphi 0, %s91
  $region4: #{forward.5} parent=0 // loop_header_branch
    %12 = sbr.rel (%p10) target = $region8
  $region5: #{forward.5} parent=0 // loop_body
    %s14 = ssub.s32 %s9, 1
    %s15 = ssub.s32 %s9, 2
    %s16 = sadd.s32 %s9, 1
    %s17 = ssub.s32 %s9, %s16
    %p18 = scmp.eq.s32.totalorder %s17, 0
    %s20 = sadd.s32 %s19, 1
    %s21 = scalar_select %p18, %s19, %s20
    %p24 = pneg %p18
    %p25 = scmp.eq.s32.totalorder %s9, 1
    %p26 = por %p24, %p25
    %p27 = scmp.ne.s32.totalorder %s19, %s22
    %p28 = scmp.eq.s32.totalorder %s9, 0
    %p29 = por %p27, %p28
    %p30 = scmp.ne.s32.totalorder %s19, %s22
    %p31 = scmp.eq.s32.totalorder %s14, 1
    %p32 = por %p30, %p31
    %p33 = scmp.ne.s32.totalorder %s22, %s23
    %p34 = scmp.eq.s32.totalorder %s14, 0
    %p35 = por %p33, %p34
    %p36 = scmp.ne.s32.totalorder %s22, %s23
    %p37 = scmp.eq.s32.totalorder %s15, 1
    %p38 = por %p36, %p37
    %p40 = scmp.ne.s32.totalorder %s23, %s39
    %p41 = scmp.eq.s32.totalorder %s15, 0
    %p42 = por %p40, %p41
    %s44 = sadd.s32 %s43, 1
    %p47 = scmp.eq.s32.totalorder %s9, 1
    %p48 = scmp.ne.s32.totalorder %s43, %s45
    %p49 = scmp.eq.s32.totalorder %s9, 0
    %p50 = por %p48, %p49
    %p51 = scmp.ne.s32.totalorder %s43, %s45
    %p52 = scmp.eq.s32.totalorder %s14, 1
    %p53 = por %p51, %p52
    %p54 = scmp.ne.s32.totalorder %s45, %s46
    %p55 = scmp.eq.s32.totalorder %s14, 0
    %p56 = por %p54, %p55
    %p57 = scmp.ne.s32.totalorder %s45, %s46
    %p58 = scmp.eq.s32.totalorder %s15, 1
    %p59 = por %p57, %p58
    %p61 = scmp.ne.s32.totalorder %s46, %s60
    %p62 = scmp.eq.s32.totalorder %s15, 0
    %p63 = por %p61, %p62
    %s65 = sadd.s32 %s64, 1
    %p68 = scmp.eq.s32.totalorder %s9, 1
    %p69 = scmp.ne.s32.totalorder %s64, %s66
    %p70 = scmp.eq.s32.totalorder %s9, 0
    %p71 = por %p69, %p70
    %p72 = scmp.ne.s32.totalorder %s64, %s66
    %p73 = scmp.eq.s32.totalorder %s14, 1
    %p74 = por %p72, %p73
    %p75 = scmp.ne.s32.totalorder %s66, %s67
    %p76 = scmp.eq.s32.totalorder %s14, 0
    %p77 = por %p75, %p76
    %p78 = scmp.ne.s32.totalorder %s66, %s67
    %p79 = scmp.eq.s32.totalorder %s15, 1
    %p80 = por %p78, %p79
    %p82 = scmp.ne.s32.totalorder %s67, %s81
    %p83 = scmp.eq.s32.totalorder %s15, 0
    %p84 = por %p82, %p83
    %s85 = ssub.s32 %s9, %s16
    %p86 = scmp.eq.s32.totalorder %s85, 0
    %s88 = sadd.s32 %s87, 1
    %s89 = scalar_select %p86, %s87, %s88
    %p92 = pneg %p86
    %p93 = scmp.eq.s32.totalorder %s9, 1
    %p94 = por %p92, %p93
    %p95 = scmp.ne.s32.totalorder %s87, %s90
    %p96 = scmp.eq.s32.totalorder %s9, 0
    %p97 = por %p95, %p96
    %p98 = scmp.ne.s32.totalorder %s87, %s90
    %p99 = scmp.eq.s32.totalorder %s14, 1
    %p100 = por %p98, %p99
    %p101 = scmp.ne.s32.totalorder %s90, %s91
    %p102 = scmp.eq.s32.totalorder %s14, 0
    %p103 = por %p101, %p102
    %p104 = scmp.ne.s32.totalorder %s90, %s91
    %p105 = scmp.eq.s32.totalorder %s15, 1
    %p106 = por %p104, %p105
    %p108 = scmp.ne.s32.totalorder %s91, %s107
    %p109 = scmp.eq.s32.totalorder %s15, 0
    %p110 = por %p108, %p109
    %p111 = scmp.le.s32.totalorder 1, %s9
    %p112 = scmp.lt.s32.totalorder %s9, 3
    %p113 = pnand %p111, %p112
    %p114 = pneg %p113
    // Predicated region
    $region9: #{forward.5} parent=5 // pred_check
      _
    $region10: #{forward.5} parent=5 // pred_check_branch
      %116 = sbr.rel (%p113) target = $region12
    $region11: #{forward.5} parent=5 // pred_region
      %s117 = ssub.s32 %s9, 1
      // Predicated region
      $region13: #{forward.5} parent=11 // pred_check
        %p118 = pneg %p56
      $region14: #{forward.5} parent=11 // pred_check_branch
        %120 = sbr.rel (%p118) target = $region16
      $region15: #{forward.5} parent=11 // pred_region
        _
      $region16: #{forward.5} parent=11 // pred_fallthru
        _
      // Predicated region
      $region17: #{forward.5} parent=11 // pred_check
        %p121 = pneg %p77
      $region18: #{forward.5} parent=11 // pred_check_branch
        %123 = sbr.rel (%p121) target = $region20
      $region19: #{forward.5} parent=11 // pred_region
        _
      $region20: #{forward.5} parent=11 // pred_fallthru
        _
    $region12: #{forward.5} parent=5 // pred_fallthru
      _
    %p124 = scmp.lt.s32.totalorder %s9, 2
    // Predicated region
    $region21: #{forward.5} parent=5 // pred_check
      %p125 = pneg %p124
    $region22: #{forward.5} parent=5 // pred_check_branch
      %127 = sbr.rel (%p125) target = $region24
    $region23: #{forward.5} parent=5 // pred_region
      // Predicated region
      $region25: #{forward.5} parent=23 // pred_check
        %p128 = pneg %p29
      $region26: #{forward.5} parent=23 // pred_check_branch
        %130 = sbr.rel (%p128) target = $region28
      $region27: #{forward.5} parent=23 // pred_region
        %s131 = smul.u32 50, %s9
        %p132 = scmp.lt.s32.totalorder %s131, 99
        %s133 = scalar_select %p132, %s131, 99
        %s134 = smul.addr %s133, 4
        %s135 = scalar_lea.vmem %s0, %s134
        %s136 = smul.u32 50, %s9
      $region28: #{forward.5} parent=23 // pred_fallthru
        _
    $region24: #{forward.5} parent=5 // pred_fallthru
      _
    %p137 = scmp.le.s32.totalorder 1, %s9
    %p138 = scmp.lt.s32.totalorder %s9, 3
    %p139 = pnand %p137, %p138
    %p140 = pneg %p139
    // Predicated region
    $region29: #{forward.5} parent=5 // pred_check
      _
    $region30: #{forward.5} parent=5 // pred_check_branch
      %142 = sbr.rel (%p139) target = $region32
    $region31: #{forward.5} parent=5 // pred_region
      %s143 = ssub.s32 %s9, 1
      %s144 = smul.u32 50, %s14
      %p145 = scmp.lt.s32.totalorder %s144, 99
      %s146 = scalar_select %p145, %s144, 99
      %s147 = smul.addr %s146, 4
      %s148 = scalar_lea.vmem %s0, %s147
      %p149 = pneg %p35
      %p150 = pneg %p32
      %p151 = pneg %p56
      %p152 = pneg %p53
      %p153 = pneg %p77
      %p154 = pneg %p74
      %p155 = pneg %p103
      %p156 = pneg %p100
      %s157 = smul.u32 50, %s14
      %p158 = scmp.lt.s32.totalorder %s157, 99
      %s159 = scalar_select %p158, %s157, 99
      %s160 = smul.addr %s159, 4
      %s161 = scalar_lea.vmem %s3, %s160
      %s162 = smul.u32 50, %s14
      %p163 = scmp.lt.s32.totalorder %s162, 99
      %s164 = scalar_select %p163, %s162, 99
      %s165 = smul.addr %s164, 4
      %s166 = scalar_lea.vmem %s0, %s165
      %s167 = smul.u32 50, %s14
      %s168 = smul.u32 50, %s14
      %p169 = scmp.lt.s32.totalorder %s168, 99
      %s170 = scalar_select %p169, %s168, 99
      %s171 = smul.addr %s170, 4
      %s172 = scalar_lea.vmem %s3, %s171
      %s173 = smul.u32 50, %s14
      %v175 = vld [vmem:[%s166] sm:$0xf]
      %v176 = vld [vmem:[%s166 + $0x4] sm:$0xf]
      %v177 = vld [vmem:[%s166 + $0x8] sm:$0xf]
      %v178 = vld [vmem:[%s166 + $0xc] sm:$0xf]
      %v179 = vld [vmem:[%s166 + $0x10] sm:$0xf]
      %v180 = vld [vmem:[%s166 + $0x14] sm:$0xf]
      %v181 = vld [vmem:[%s166 + $0x18] sm:$0xf]
      %v182 = vld [vmem:[%s166 + $0x1c] sm:$0xf]
      %v183 = vld [vmem:[%s166 + $0x20] sm:$0xf]
      %v184 = vld [vmem:[%s166 + $0x24] sm:$0xf]
      %v185 = vld [vmem:[%s166 + $0x28] sm:$0xf]
      %v186 = vld [vmem:[%s166 + $0x2c] sm:$0xf]
      %v187 = vld [vmem:[%s166 + $0x30] sm:$0xf]
      %v188 = vld [vmem:[%s166 + $0x34] sm:$0xf]
      %v189 = vld [vmem:[%s166 + $0x38] sm:$0xf]
      %v190 = vld [vmem:[%s166 + $0x3c] sm:$0xf]
      %v191 = vld [vmem:[%s166 + $0x40] sm:$0xf]
      %v192 = vld [vmem:[%s166 + $0x44] sm:$0xf]
      %v193 = vld [vmem:[%s166 + $0x48] sm:$0xf]
      %v194 = vld [vmem:[%s166 + $0x4c] sm:$0xf]
      %v195 = vld [vmem:[%s166 + $0x50] sm:$0xf]
      %v196 = vld [vmem:[%s166 + $0x54] sm:$0xf]
      %v197 = vld [vmem:[%s166 + $0x58] sm:$0xf]
      %v198 = vld [vmem:[%s166 + $0x5c] sm:$0xf]
      %v199 = vld [vmem:[%s166 + $0x60] sm:$0xf]
      %v200 = vld [vmem:[%s166 + $0x64] sm:$0xf]
      %v201 = vld [vmem:[%s166 + $0x68] sm:$0xf]
      %v202 = vld [vmem:[%s166 + $0x6c] sm:$0xf]
      %v203 = vld [vmem:[%s166 + $0x70] sm:$0xf]
      %v204 = vld [vmem:[%s166 + $0x74] sm:$0xf]
      %v205 = vld [vmem:[%s166 + $0x78] sm:$0xf]
      %v206 = vld [vmem:[%s166 + $0x7c] sm:$0xf]
      %v207 = vld [vmem:[%s166 + $0x80] sm:$0xf]
      %v208 = vld [vmem:[%s166 + $0x84] sm:$0xf]
      %v209 = vld [vmem:[%s166 + $0x88] sm:$0xf]
      %v210 = vld [vmem:[%s166 + $0x8c] sm:$0xf]
      %v211 = vld [vmem:[%s166 + $0x90] sm:$0xf]
      %v212 = vld [vmem:[%s166 + $0x94] sm:$0xf]
      %v213 = vld [vmem:[%s166 + $0x98] sm:$0xf]
      %v214 = vld [vmem:[%s166 + $0x9c] sm:$0xf]
      %v215 = vld [vmem:[%s166 + $0xa0] sm:$0xf]
      %v216 = vld [vmem:[%s166 + $0xa4] sm:$0xf]
      %v217 = vld [vmem:[%s166 + $0xa8] sm:$0xf]
      %v218 = vld [vmem:[%s166 + $0xac] sm:$0xf]
      %v219 = vld [vmem:[%s166 + $0xb0] sm:$0xf]
      %v220 = vld [vmem:[%s166 + $0xb4] sm:$0xf]
      %v221 = vld [vmem:[%s166 + $0xb8] sm:$0xf]
      %v222 = vld [vmem:[%s166 + $0xbc] sm:$0xf]
      %v223 = vld [vmem:[%s166 + $0xc0] sm:$0xf]
      %v224 = vld [vmem:[%s166 + $0xc4] sm:$0xf]
      %v225 = vld [vmem:[%s1] sm:$0xf]
      %v226 = vld [vmem:[%s1 + $0x4] sm:$0xf]
      %v227 = vld [vmem:[%s1 + $0x8] sm:$0xf]
      %v228 = vld [vmem:[%s1 + $0xc] sm:$0xf]
      %v229 = vld [vmem:[%s1 + $0x10] sm:$0xf]
      %v230 = vld [vmem:[%s1 + $0x14] sm:$0xf]
      %v231 = vld [vmem:[%s1 + $0x18] sm:$0xf]
      %v232 = vld [vmem:[%s1 + $0x1c] sm:$0xf]
      %v233 = vld [vmem:[%s2] sm:$0x1]
      %v235 = vperm.slane %v233, 0
      %v287 = vunpack.c.l.b16 %v175
      %v288 = vunpack.c.l.b16 %v176
      %v289 = vunpack.c.l.b16 %v177
      %v290 = vunpack.c.l.b16 %v178
      %v291 = vunpack.c.l.b16 %v179
      %v292 = vunpack.c.l.b16 %v180
      %v293 = vunpack.c.l.b16 %v181
      %v294 = vunpack.c.l.b16 %v182
      %v295 = vunpack.c.l.b16 %v183
      %v296 = vunpack.c.l.b16 %v184
      %v297 = vunpack.c.l.b16 %v185
      %v298 = vunpack.c.l.b16 %v186
      %v299 = vunpack.c.l.b16 %v187
      %v300 = vunpack.c.l.b16 %v188
      %v301 = vunpack.c.l.b16 %v189
      %v302 = vunpack.c.l.b16 %v190
      %v303 = vunpack.c.l.b16 %v191
      %v304 = vunpack.c.l.b16 %v192
      %v305 = vunpack.c.l.b16 %v193
      %v306 = vunpack.c.l.b16 %v194
      %v307 = vunpack.c.l.b16 %v195
      %v308 = vunpack.c.l.b16 %v196
      %v309 = vunpack.c.l.b16 %v197
      %v310 = vunpack.c.l.b16 %v198
      %v311 = vunpack.c.l.b16 %v199
      %v312 = vunpack.c.l.b16 %v200
      %v313 = vunpack.c.l.b16 %v201
      %v314 = vunpack.c.l.b16 %v202
      %v315 = vunpack.c.l.b16 %v203
      %v316 = vunpack.c.l.b16 %v204
      %v317 = vunpack.c.l.b16 %v205
      %v318 = vunpack.c.l.b16 %v206
      %v319 = vunpack.c.l.b16 %v207
      %v320 = vunpack.c.l.b16 %v208
      %v321 = vunpack.c.l.b16 %v209
      %v322 = vunpack.c.l.b16 %v210
      %v323 = vunpack.c.l.b16 %v211
      %v324 = vunpack.c.l.b16 %v212
      %v325 = vunpack.c.l.b16 %v213
      %v326 = vunpack.c.l.b16 %v214
      %v327 = vunpack.c.l.b16 %v215
      %v328 = vunpack.c.l.b16 %v216
      %v329 = vunpack.c.l.b16 %v217
      %v330 = vunpack.c.l.b16 %v218
      %v331 = vunpack.c.l.b16 %v219
      %v332 = vunpack.c.l.b16 %v220
      %v333 = vunpack.c.l.b16 %v221
      %v334 = vunpack.c.l.b16 %v222
      %v335 = vunpack.c.l.b16 %v223
      %v336 = vunpack.c.l.b16 %v224
      %v337 = vpack.c.b16 %v288, %v287
      %v338 = vpack.c.b16 %v290, %v289
      %v339 = vpack.c.b16 %v292, %v291
      %v340 = vpack.c.b16 %v294, %v293
      %v341 = vpack.c.b16 %v296, %v295
      %v342 = vpack.c.b16 %v298, %v297
      %v343 = vpack.c.b16 %v300, %v299
      %v344 = vpack.c.b16 %v302, %v301
      %v345 = vpack.c.b16 %v304, %v303
      %v346 = vpack.c.b16 %v306, %v305
      %v347 = vpack.c.b16 %v308, %v307
      %v348 = vpack.c.b16 %v310, %v309
      %v349 = vpack.c.b16 %v312, %v311
      %v350 = vpack.c.b16 %v314, %v313
      %v351 = vpack.c.b16 %v316, %v315
      %v352 = vpack.c.b16 %v318, %v317
      %v353 = vpack.c.b16 %v320, %v319
      %v354 = vpack.c.b16 %v322, %v321
      %v355 = vpack.c.b16 %v324, %v323
      %v356 = vpack.c.b16 %v326, %v325
      %v357 = vpack.c.b16 %v328, %v327
      %v358 = vpack.c.b16 %v330, %v329
      %v359 = vpack.c.b16 %v332, %v331
      %v360 = vpack.c.b16 %v334, %v333
      %v361 = vpack.c.b16 %v336, %v335
      %v370 = vunpack.c.l.b16 %v225
      %v371 = vunpack.c.l.b16 %v226
      %v372 = vunpack.c.l.b16 %v227
      %v373 = vunpack.c.l.b16 %v228
      %v374 = vunpack.c.l.b16 %v229
      %v375 = vunpack.c.l.b16 %v230
      %v376 = vunpack.c.l.b16 %v231
      %v377 = vunpack.c.l.b16 %v232
      %v378 = vpack.c.b16 %v371, %v370
      %v379 = vpack.c.b16 %v373, %v372
      %v380 = vpack.c.b16 %v375, %v374
      %v381 = vpack.c.b16 %v377, %v376
      %vm386 = vcmask 523264
      %v388 = vsel %vm386, %v337, 0
      %v391 = vsel %vm386, %v338, 0
      %v394 = vsel %vm386, %v339, 0
      %v397 = vsel %vm386, %v340, 0
      %v400 = vsel %vm386, %v341, 0
      %v403 = vsel %vm386, %v342, 0
      %v406 = vsel %vm386, %v343, 0
      %v409 = vsel %vm386, %v344, 0
      %v412 = vsel %vm386, %v345, 0
      %v415 = vsel %vm386, %v346, 0
      %v418 = vsel %vm386, %v347, 0
      %v421 = vsel %vm386, %v348, 0
      %v424 = vsel %vm386, %v349, 0
      %v427 = vsel %vm386, %v350, 0
      %v430 = vsel %vm386, %v351, 0
      %v433 = vsel %vm386, %v352, 0
      %v436 = vsel %vm386, %v353, 0
      %v439 = vsel %vm386, %v354, 0
      %v442 = vsel %vm386, %v355, 0
      %v445 = vsel %vm386, %v356, 0
      %v448 = vsel %vm386, %v357, 0
      %v451 = vsel %vm386, %v358, 0
      %v454 = vsel %vm386, %v359, 0
      %v457 = vsel %vm386, %v360, 0
      %v460 = vsel %vm386, %v361, 0
      %462 = vmatpush.bf16.msra.mxu0 0
      %463 = vmatpush.bf16.msra.mxu0 0
      %464 = vmatpush.bf16.msra.mxu0 0
      %465 = vmatpush.bf16.msra.mxu0 0
      %466 = vmatpush.bf16.msra.mxu0 %v381
      %467 = vmatpush.bf16.msra.mxu0 %v380
      %468 = vmatpush.bf16.msra.mxu0 %v379
      %469 = vmatpush.bf16.msra.mxu0 %v378
      %470 = vmatmul.bf16.gmra.mxu0 %v388
      %v471 = vpop.f32.mrf.mxu0
      %v472 = vadd.f32 %v235, %v471
      %v473 = vpop.f32.mrf.mxu0
      %v474 = vadd.f32 %v235, %v473
      %475 = vmatmul.bf16.gmra.mxu0 %v391
      %v476 = vpop.f32.mrf.mxu0
      %v477 = vadd.f32 %v235, %v476
      %v478 = vpop.f32.mrf.mxu0
      %v479 = vadd.f32 %v235, %v478
      %480 = vmatmul.bf16.gmra.mxu0 %v394
      %v481 = vpop.f32.mrf.mxu0
      %v482 = vadd.f32 %v235, %v481
      %v483 = vpop.f32.mrf.mxu0
      %v484 = vadd.f32 %v235, %v483
      %485 = vmatmul.bf16.gmra.mxu0 %v397
      %v486 = vpop.f32.mrf.mxu0
      %v487 = vadd.f32 %v235, %v486
      %v488 = vpop.f32.mrf.mxu0
      %v489 = vadd.f32 %v235, %v488
      %490 = vmatmul.bf16.gmra.mxu0 %v400
      %v491 = vpop.f32.mrf.mxu0
      %v492 = vadd.f32 %v235, %v491
      %v493 = vpop.f32.mrf.mxu0
      %v494 = vadd.f32 %v235, %v493
      %495 = vmatmul.bf16.gmra.mxu0 %v403
      %v496 = vpop.f32.mrf.mxu0
      %v497 = vadd.f32 %v235, %v496
      %v498 = vpop.f32.mrf.mxu0
      %v499 = vadd.f32 %v235, %v498
      %500 = vmatmul.bf16.gmra.mxu0 %v406
      %v501 = vpop.f32.mrf.mxu0
      %v502 = vadd.f32 %v235, %v501
      %v503 = vpop.f32.mrf.mxu0
      %v504 = vadd.f32 %v235, %v503
      %505 = vmatmul.bf16.gmra.mxu0 %v409
      %v506 = vpop.f32.mrf.mxu0
      %v507 = vadd.f32 %v235, %v506
      %v508 = vpop.f32.mrf.mxu0
      %v509 = vadd.f32 %v235, %v508
      %510 = vmatmul.bf16.gmra.mxu0 %v412
      %v511 = vpop.f32.mrf.mxu0
      %v512 = vadd.f32 %v235, %v511
      %v513 = vpop.f32.mrf.mxu0
      %v514 = vadd.f32 %v235, %v513
      %515 = vmatmul.bf16.gmra.mxu0 %v415
      %v516 = vpop.f32.mrf.mxu0
      %v517 = vadd.f32 %v235, %v516
      %v518 = vpop.f32.mrf.mxu0
      %v519 = vadd.f32 %v235, %v518
      %520 = vmatmul.bf16.gmra.mxu0 %v418
      %v521 = vpop.f32.mrf.mxu0
      %v522 = vadd.f32 %v235, %v521
      %v523 = vpop.f32.mrf.mxu0
      %v524 = vadd.f32 %v235, %v523
      %525 = vmatmul.bf16.gmra.mxu0 %v421
      %v526 = vpop.f32.mrf.mxu0
      %v527 = vadd.f32 %v235, %v526
      %v528 = vpop.f32.mrf.mxu0
      %v529 = vadd.f32 %v235, %v528
      %530 = vmatmul.bf16.gmra.mxu0 %v424
      %v531 = vpop.f32.mrf.mxu0
      %v532 = vadd.f32 %v235, %v531
      %v533 = vpop.f32.mrf.mxu0
      %v534 = vadd.f32 %v235, %v533
      %535 = vmatmul.bf16.gmra.mxu0 %v427
      %v536 = vpop.f32.mrf.mxu0
      %v537 = vadd.f32 %v235, %v536
      %v538 = vpop.f32.mrf.mxu0
      %v539 = vadd.f32 %v235, %v538
      %540 = vmatmul.bf16.gmra.mxu0 %v430
      %v541 = vpop.f32.mrf.mxu0
      %v542 = vadd.f32 %v235, %v541
      %v543 = vpop.f32.mrf.mxu0
      %v544 = vadd.f32 %v235, %v543
      %545 = vmatmul.bf16.gmra.mxu0 %v433
      %v546 = vpop.f32.mrf.mxu0
      %v547 = vadd.f32 %v235, %v546
      %v548 = vpop.f32.mrf.mxu0
      %v549 = vadd.f32 %v235, %v548
      %550 = vmatmul.bf16.gmra.mxu0 %v436
      %v551 = vpop.f32.mrf.mxu0
      %v552 = vadd.f32 %v235, %v551
      %v553 = vpop.f32.mrf.mxu0
      %v554 = vadd.f32 %v235, %v553
      %555 = vmatmul.bf16.gmra.mxu0 %v439
      %v556 = vpop.f32.mrf.mxu0
      %v557 = vadd.f32 %v235, %v556
      %v558 = vpop.f32.mrf.mxu0
      %v559 = vadd.f32 %v235, %v558
      %560 = vmatmul.bf16.gmra.mxu0 %v442
      %v561 = vpop.f32.mrf.mxu0
      %v562 = vadd.f32 %v235, %v561
      %v563 = vpop.f32.mrf.mxu0
      %v564 = vadd.f32 %v235, %v563
      %565 = vmatmul.bf16.gmra.mxu0 %v445
      %v566 = vpop.f32.mrf.mxu0
      %v567 = vadd.f32 %v235, %v566
      %v568 = vpop.f32.mrf.mxu0
      %v569 = vadd.f32 %v235, %v568
      %570 = vmatmul.bf16.gmra.mxu0 %v448
      %v571 = vpop.f32.mrf.mxu0
      %v572 = vadd.f32 %v235, %v571
      %v573 = vpop.f32.mrf.mxu0
      %v574 = vadd.f32 %v235, %v573
      %575 = vmatmul.bf16.gmra.mxu0 %v451
      %v576 = vpop.f32.mrf.mxu0
      %v577 = vadd.f32 %v235, %v576
      %v578 = vpop.f32.mrf.mxu0
      %v579 = vadd.f32 %v235, %v578
      %580 = vmatmul.bf16.gmra.mxu0 %v454
      %v581 = vpop.f32.mrf.mxu0
      %v582 = vadd.f32 %v235, %v581
      %v583 = vpop.f32.mrf.mxu0
      %v584 = vadd.f32 %v235, %v583
      %585 = vmatmul.bf16.gmra.mxu0 %v457
      %v586 = vpop.f32.mrf.mxu0
      %v587 = vadd.f32 %v235, %v586
      %v588 = vpop.f32.mrf.mxu0
      %v589 = vadd.f32 %v235, %v588
      %590 = vmatmul.bf16.gmra.mxu0 %v460
      %v591 = vpop.f32.mrf.mxu0
      %v592 = vadd.f32 %v235, %v591
      %v593 = vpop.f32.mrf.mxu0
      %v594 = vadd.f32 %v235, %v593
      %595 = vdwg.mxu0
      %v596 = vmax.f32 %v472, 0.0
      %v597 = vmax.f32 %v474, 0.0
      %v598 = vmax.f32 %v477, 0.0
      %v599 = vmax.f32 %v479, 0.0
      %v600 = vmax.f32 %v482, 0.0
      %v601 = vmax.f32 %v484, 0.0
      %v602 = vmax.f32 %v487, 0.0
      %v603 = vmax.f32 %v489, 0.0
      %v604 = vmax.f32 %v492, 0.0
      %v605 = vmax.f32 %v494, 0.0
      %v606 = vmax.f32 %v497, 0.0
      %v607 = vmax.f32 %v499, 0.0
      %v608 = vmax.f32 %v502, 0.0
      %v609 = vmax.f32 %v504, 0.0
      %v610 = vmax.f32 %v507, 0.0
      %v611 = vmax.f32 %v509, 0.0
      %v612 = vmax.f32 %v512, 0.0
      %v613 = vmax.f32 %v514, 0.0
      %v614 = vmax.f32 %v517, 0.0
      %v615 = vmax.f32 %v519, 0.0
      %v616 = vmax.f32 %v522, 0.0
      %v617 = vmax.f32 %v524, 0.0
      %v618 = vmax.f32 %v527, 0.0
      %v619 = vmax.f32 %v529, 0.0
      %v620 = vmax.f32 %v532, 0.0
      %v621 = vmax.f32 %v534, 0.0
      %v622 = vmax.f32 %v537, 0.0
      %v623 = vmax.f32 %v539, 0.0
      %v624 = vmax.f32 %v542, 0.0
      %v625 = vmax.f32 %v544, 0.0
      %v626 = vmax.f32 %v547, 0.0
      %v627 = vmax.f32 %v549, 0.0
      %v628 = vmax.f32 %v552, 0.0
      %v629 = vmax.f32 %v554, 0.0
      %v630 = vmax.f32 %v557, 0.0
      %v631 = vmax.f32 %v559, 0.0
      %v632 = vmax.f32 %v562, 0.0
      %v633 = vmax.f32 %v564, 0.0
      %v634 = vmax.f32 %v567, 0.0
      %v635 = vmax.f32 %v569, 0.0
      %v636 = vmax.f32 %v572, 0.0
      %v637 = vmax.f32 %v574, 0.0
      %v638 = vmax.f32 %v577, 0.0
      %v639 = vmax.f32 %v579, 0.0
      %v640 = vmax.f32 %v582, 0.0
      %v641 = vmax.f32 %v584, 0.0
      %v642 = vmax.f32 %v587, 0.0
      %v643 = vmax.f32 %v589, 0.0
      %v644 = vmax.f32 %v592, 0.0
      %v645 = vmax.f32 %v594, 0.0
      %v646 = vpack.c.bf16 %v596, %v596
      %v647 = vpack.c.bf16 %v597, %v597
      %v648 = vpack.c.bf16 %v598, %v598
      %v649 = vpack.c.bf16 %v599, %v599
      %v650 = vpack.c.bf16 %v600, %v600
      %v651 = vpack.c.bf16 %v601, %v601
      %v652 = vpack.c.bf16 %v602, %v602
      %v653 = vpack.c.bf16 %v603, %v603
      %v654 = vpack.c.bf16 %v604, %v604
      %v655 = vpack.c.bf16 %v605, %v605
      %v656 = vpack.c.bf16 %v606, %v606
      %v657 = vpack.c.bf16 %v607, %v607
      %v658 = vpack.c.bf16 %v608, %v608
      %v659 = vpack.c.bf16 %v609, %v609
      %v660 = vpack.c.bf16 %v610, %v610
      %v661 = vpack.c.bf16 %v611, %v611
      %v662 = vpack.c.bf16 %v612, %v612
      %v663 = vpack.c.bf16 %v613, %v613
      %v664 = vpack.c.bf16 %v614, %v614
      %v665 = vpack.c.bf16 %v615, %v615
      %v666 = vpack.c.bf16 %v616, %v616
      %v667 = vpack.c.bf16 %v617, %v617
      %v668 = vpack.c.bf16 %v618, %v618
      %v669 = vpack.c.bf16 %v619, %v619
      %v670 = vpack.c.bf16 %v620, %v620
      %v671 = vpack.c.bf16 %v621, %v621
      %v672 = vpack.c.bf16 %v622, %v622
      %v673 = vpack.c.bf16 %v623, %v623
      %v674 = vpack.c.bf16 %v624, %v624
      %v675 = vpack.c.bf16 %v625, %v625
      %v676 = vpack.c.bf16 %v626, %v626
      %v677 = vpack.c.bf16 %v627, %v627
      %v678 = vpack.c.bf16 %v628, %v628
      %v679 = vpack.c.bf16 %v629, %v629
      %v680 = vpack.c.bf16 %v630, %v630
      %v681 = vpack.c.bf16 %v631, %v631
      %v682 = vpack.c.bf16 %v632, %v632
      %v683 = vpack.c.bf16 %v633, %v633
      %v684 = vpack.c.bf16 %v634, %v634
      %v685 = vpack.c.bf16 %v635, %v635
      %v686 = vpack.c.bf16 %v636, %v636
      %v687 = vpack.c.bf16 %v637, %v637
      %v688 = vpack.c.bf16 %v638, %v638
      %v689 = vpack.c.bf16 %v639, %v639
      %v690 = vpack.c.bf16 %v640, %v640
      %v691 = vpack.c.bf16 %v641, %v641
      %v692 = vpack.c.bf16 %v642, %v642
      %v693 = vpack.c.bf16 %v643, %v643
      %v694 = vpack.c.bf16 %v644, %v644
      %v695 = vpack.c.bf16 %v645, %v645
      %vm696 = vcmask 257024
      %697 = vst.msk [vmem:[%s172] sm:$0xf] %vm696, %v646
      %698 = vst.msk [vmem:[%s172 + $0x4] sm:$0xf] %vm696, %v647
      %699 = vst.msk [vmem:[%s172 + $0x8] sm:$0xf] %vm696, %v648
      %700 = vst.msk [vmem:[%s172 + $0xc] sm:$0xf] %vm696, %v649
      %701 = vst.msk [vmem:[%s172 + $0x10] sm:$0xf] %vm696, %v650
      %702 = vst.msk [vmem:[%s172 + $0x14] sm:$0xf] %vm696, %v651
      %703 = vst.msk [vmem:[%s172 + $0x18] sm:$0xf] %vm696, %v652
      %704 = vst.msk [vmem:[%s172 + $0x1c] sm:$0xf] %vm696, %v653
      %705 = vst.msk [vmem:[%s172 + $0x20] sm:$0xf] %vm696, %v654
      %706 = vst.msk [vmem:[%s172 + $0x24] sm:$0xf] %vm696, %v655
      %707 = vst.msk [vmem:[%s172 + $0x28] sm:$0xf] %vm696, %v656
      %708 = vst.msk [vmem:[%s172 + $0x2c] sm:$0xf] %vm696, %v657
      %709 = vst.msk [vmem:[%s172 + $0x30] sm:$0xf] %vm696, %v658
      %710 = vst.msk [vmem:[%s172 + $0x34] sm:$0xf] %vm696, %v659
      %711 = vst.msk [vmem:[%s172 + $0x38] sm:$0xf] %vm696, %v660
      %712 = vst.msk [vmem:[%s172 + $0x3c] sm:$0xf] %vm696, %v661
      %713 = vst.msk [vmem:[%s172 + $0x40] sm:$0xf] %vm696, %v662
      %714 = vst.msk [vmem:[%s172 + $0x44] sm:$0xf] %vm696, %v663
      %715 = vst.msk [vmem:[%s172 + $0x48] sm:$0xf] %vm696, %v664
      %716 = vst.msk [vmem:[%s172 + $0x4c] sm:$0xf] %vm696, %v665
      %717 = vst.msk [vmem:[%s172 + $0x50] sm:$0xf] %vm696, %v666
      %718 = vst.msk [vmem:[%s172 + $0x54] sm:$0xf] %vm696, %v667
      %719 = vst.msk [vmem:[%s172 + $0x58] sm:$0xf] %vm696, %v668
      %720 = vst.msk [vmem:[%s172 + $0x5c] sm:$0xf] %vm696, %v669
      %721 = vst.msk [vmem:[%s172 + $0x60] sm:$0xf] %vm696, %v670
      %722 = vst.msk [vmem:[%s172 + $0x64] sm:$0xf] %vm696, %v671
      %723 = vst.msk [vmem:[%s172 + $0x68] sm:$0xf] %vm696, %v672
      %724 = vst.msk [vmem:[%s172 + $0x6c] sm:$0xf] %vm696, %v673
      %725 = vst.msk [vmem:[%s172 + $0x70] sm:$0xf] %vm696, %v674
      %726 = vst.msk [vmem:[%s172 + $0x74] sm:$0xf] %vm696, %v675
      %727 = vst.msk [vmem:[%s172 + $0x78] sm:$0xf] %vm696, %v676
      %728 = vst.msk [vmem:[%s172 + $0x7c] sm:$0xf] %vm696, %v677
      %729 = vst.msk [vmem:[%s172 + $0x80] sm:$0xf] %vm696, %v678
      %730 = vst.msk [vmem:[%s172 + $0x84] sm:$0xf] %vm696, %v679
      %731 = vst.msk [vmem:[%s172 + $0x88] sm:$0xf] %vm696, %v680
      %732 = vst.msk [vmem:[%s172 + $0x8c] sm:$0xf] %vm696, %v681
      %733 = vst.msk [vmem:[%s172 + $0x90] sm:$0xf] %vm696, %v682
      %734 = vst.msk [vmem:[%s172 + $0x94] sm:$0xf] %vm696, %v683
      %735 = vst.msk [vmem:[%s172 + $0x98] sm:$0xf] %vm696, %v684
      %736 = vst.msk [vmem:[%s172 + $0x9c] sm:$0xf] %vm696, %v685
      %737 = vst.msk [vmem:[%s172 + $0xa0] sm:$0xf] %vm696, %v686
      %738 = vst.msk [vmem:[%s172 + $0xa4] sm:$0xf] %vm696, %v687
      %739 = vst.msk [vmem:[%s172 + $0xa8] sm:$0xf] %vm696, %v688
      %740 = vst.msk [vmem:[%s172 + $0xac] sm:$0xf] %vm696, %v689
      %741 = vst.msk [vmem:[%s172 + $0xb0] sm:$0xf] %vm696, %v690
      %742 = vst.msk [vmem:[%s172 + $0xb4] sm:$0xf] %vm696, %v691
      %743 = vst.msk [vmem:[%s172 + $0xb8] sm:$0xf] %vm696, %v692
      %744 = vst.msk [vmem:[%s172 + $0xbc] sm:$0xf] %vm696, %v693
      %745 = vst.msk [vmem:[%s172 + $0xc0] sm:$0xf] %vm696, %v694
      %746 = vst.msk [vmem:[%s172 + $0xc4] sm:$0xf] %vm696, %v695
      %s747 = smul.u32 50, %s14
      %p748 = scmp.lt.s32.totalorder %s747, 99
      %s749 = scalar_select %p748, %s747, 99
      %s750 = smul.addr %s749, 4
      %s751 = scalar_lea.vmem %s3, %s750
      // Predicated region
      $region33: #{forward.5} parent=31 // pred_check
        %p752 = pneg %p100
      $region34: #{forward.5} parent=31 // pred_check_branch
        %754 = sbr.rel (%p752) target = $region36
      $region35: #{forward.5} parent=31 // pred_region
        %s755 = smul.u32 50, %s14
      $region36: #{forward.5} parent=31 // pred_fallthru
        _
    $region32: #{forward.5} parent=5 // pred_fallthru
      _
    %p756 = scmp.le.s32.totalorder 2, %s9
    // Predicated region
    $region37: #{forward.5} parent=5 // pred_check
      %p757 = pneg %p756
    $region38: #{forward.5} parent=5 // pred_check_branch
      %759 = sbr.rel (%p757) target = $region40
    $region39: #{forward.5} parent=5 // pred_region
      %s760 = ssub.s32 %s9, 2
      // Predicated region
      $region41: #{forward.5} parent=39 // pred_check
        %p761 = pneg %p106
      $region42: #{forward.5} parent=39 // pred_check_branch
        %763 = sbr.rel (%p761) target = $region44
      $region43: #{forward.5} parent=39 // pred_region
        %s764 = smul.u32 50, %s15
        %p765 = scmp.lt.s32.totalorder %s764, 99
        %s766 = scalar_select %p765, %s764, 99
        %s767 = smul.addr %s766, 4
        %s768 = scalar_lea.vmem %s3, %s767
      $region44: #{forward.5} parent=39 // pred_fallthru
        _
    $region40: #{forward.5} parent=5 // pred_fallthru
      _
  $region6: #{forward.5} parent=0 // loop_footer
    %s13 = sadd.s32 1, %s9
  $region7: #{forward.5} parent=0 // loop_footer_branch
    %8 = sbr.rel target = $region3
  $region8: #{forward.5} parent=0 // loop_exit
    _

// kernel: forward.6
$region0: #{forward.6}
  #allocation0 [shape = 'u32[]', space=smem, size = 0x4, offset = 0x4, fixed_abs, tag = 'smem constant byte address 0x4 - core index']
  #allocation1 [shape = 'u32[72,128]{1,0:T(1,128)}', space=vmem, size = 0x9000, scoped, tag = 'internal scratch']
  %s0 = inlined_call_operand.vmem [shape: bf16[162,512], index: 0, kind: input, shape index: {}]
  %s1 = inlined_call_operand.vmem [shape: bf16[512,64], index: 1, kind: input, shape index: {}]
  %s2 = inlined_call_operand.vmem [shape: f32[1,64], index: 2, kind: input, shape index: {}]
  %s3 = inlined_call_operand.vmem [shape: bf16[162,64], index: 3, kind: output, shape index: {}]
  %s4 = sld [smem:[#allocation0]]
  $region22: #{forward.6} parent=0
    _
  %s6 = ssub.s32 1, %s4
  %s7 = scalar_select 0, %s6, %s4
  // Predicated region
  $region2: #{forward.6} parent=0 // pred_check
    _
  $region3: #{forward.6} parent=0 // pred_check_branch
    %9 = sbr.rel (0) target = $region5
  $region4: #{forward.6} parent=0 // pred_region
    _
  $region5: #{forward.6} parent=0 // pred_fallthru
    _
  // Predicated region
  $region6: #{forward.6} parent=0 // pred_check
    _
  $region7: #{forward.6} parent=0 // pred_check_branch
    %11 = sbr.rel (0) target = $region9
  $region8: #{forward.6} parent=0 // pred_region
    _
  $region9: #{forward.6} parent=0 // pred_fallthru
    _
  // Predicated region
  $region10: #{forward.6} parent=0 // pred_check
    _
  $region11: #{forward.6} parent=0 // pred_check_branch
    %13 = sbr.rel (0) target = $region13
  $region12: #{forward.6} parent=0 // pred_region
    _
  $region13: #{forward.6} parent=0 // pred_fallthru
    _
  %v14 = vld [vmem:[%s0] sm:$0xff]
  %v15 = vld [vmem:[%s0 + $0x8] sm:$0xff]
  %v16 = vld [vmem:[%s0 + $0x10] sm:$0xff]
  %v17 = vld [vmem:[%s0 + $0x18] sm:$0xff]
  %v18 = vld [vmem:[%s0 + $0x20] sm:$0xff]
  %v19 = vld [vmem:[%s0 + $0x28] sm:$0xff]
  %v20 = vld [vmem:[%s0 + $0x30] sm:$0xff]
  %v21 = vld [vmem:[%s0 + $0x38] sm:$0xff]
  %v22 = vld [vmem:[%s0 + $0x40] sm:$0xff]
  %v23 = vld [vmem:[%s0 + $0x48] sm:$0xff]
  %v24 = vld [vmem:[%s0 + $0x50] sm:$0xff]
  %v25 = vld [vmem:[%s0 + $0x58] sm:$0xff]
  %v26 = vld [vmem:[%s0 + $0x60] sm:$0xff]
  %v27 = vld [vmem:[%s0 + $0x68] sm:$0xff]
  %v28 = vld [vmem:[%s0 + $0x70] sm:$0xff]
  %v29 = vld [vmem:[%s0 + $0x78] sm:$0xff]
  %v30 = vld [vmem:[%s0 + $0x80] sm:$0xff]
  %v31 = vld [vmem:[%s0 + $0x88] sm:$0xff]
  %v32 = vld [vmem:[%s0 + $0x90] sm:$0xff]
  %v33 = vld [vmem:[%s0 + $0x98] sm:$0xff]
  %v34 = vld [vmem:[%s0 + $0xa0] sm:$0xff]
  %v35 = vld [vmem:[%s0 + $0xa8] sm:$0xff]
  %v36 = vld [vmem:[%s0 + $0xb0] sm:$0xff]
  %v37 = vld [vmem:[%s0 + $0xb8] sm:$0xff]
  %v38 = vld [vmem:[%s0 + $0xc0] sm:$0xff]
  %v39 = vld [vmem:[%s0 + $0xc8] sm:$0xff]
  %v40 = vld [vmem:[%s0 + $0xd0] sm:$0xff]
  %v41 = vld [vmem:[%s0 + $0xd8] sm:$0xff]
  %v42 = vld [vmem:[%s0 + $0xe0] sm:$0xff]
  %v43 = vld [vmem:[%s0 + $0xe8] sm:$0xff]
  %v44 = vld [vmem:[%s0 + $0xf0] sm:$0xff]
  %v45 = vld [vmem:[%s0 + $0xf8] sm:$0xff]
  %v46 = vld [vmem:[%s0 + $0x100] sm:$0xff]
  %v47 = vld [vmem:[%s0 + $0x108] sm:$0xff]
  %v48 = vld [vmem:[%s0 + $0x110] sm:$0xff]
  %v49 = vld [vmem:[%s0 + $0x118] sm:$0xff]
  %v50 = vld [vmem:[%s0 + $0x120] sm:$0xff]
  %v51 = vld [vmem:[%s0 + $0x128] sm:$0xff]
  %v52 = vld [vmem:[%s0 + $0x130] sm:$0xff]
  %v53 = vld [vmem:[%s0 + $0x138] sm:$0xff]
  %v54 = vld [vmem:[%s0 + $0x140] sm:$0x11]
  %v55 = vld [vmem:[%s0 + $0x148] sm:$0x11]
  %v56 = vld [vmem:[%s1] sm:$0xf]
  %v57 = vld [vmem:[%s1 + $0x4] sm:$0xf]
  %v58 = vld [vmem:[%s1 + $0x8] sm:$0xf]
  %v59 = vld [vmem:[%s1 + $0xc] sm:$0xf]
  %v60 = vld [vmem:[%s1 + $0x10] sm:$0xf]
  %v61 = vld [vmem:[%s1 + $0x14] sm:$0xf]
  %v62 = vld [vmem:[%s1 + $0x18] sm:$0xf]
  %v63 = vld [vmem:[%s1 + $0x1c] sm:$0xf]
  %v64 = vld [vmem:[%s1 + $0x20] sm:$0xf]
  %v65 = vld [vmem:[%s1 + $0x24] sm:$0xf]
  %v66 = vld [vmem:[%s1 + $0x28] sm:$0xf]
  %v67 = vld [vmem:[%s1 + $0x2c] sm:$0xf]
  %v68 = vld [vmem:[%s1 + $0x30] sm:$0xf]
  %v69 = vld [vmem:[%s1 + $0x34] sm:$0xf]
  %v70 = vld [vmem:[%s1 + $0x38] sm:$0xf]
  %v71 = vld [vmem:[%s1 + $0x3c] sm:$0xf]
  %v72 = vld [vmem:[%s1 + $0x40] sm:$0xf]
  %v73 = vld [vmem:[%s1 + $0x44] sm:$0xf]
  %v74 = vld [vmem:[%s1 + $0x48] sm:$0xf]
  %v75 = vld [vmem:[%s1 + $0x4c] sm:$0xf]
  %v76 = vld [vmem:[%s1 + $0x50] sm:$0xf]
  %v77 = vld [vmem:[%s1 + $0x54] sm:$0xf]
  %v78 = vld [vmem:[%s1 + $0x58] sm:$0xf]
  %v79 = vld [vmem:[%s1 + $0x5c] sm:$0xf]
  %v80 = vld [vmem:[%s1 + $0x60] sm:$0xf]
  %v81 = vld [vmem:[%s1 + $0x64] sm:$0xf]
  %v82 = vld [vmem:[%s1 + $0x68] sm:$0xf]
  %v83 = vld [vmem:[%s1 + $0x6c] sm:$0xf]
  %v84 = vld [vmem:[%s1 + $0x70] sm:$0xf]
  %v85 = vld [vmem:[%s1 + $0x74] sm:$0xf]
  %v86 = vld [vmem:[%s1 + $0x78] sm:$0xf]
  %v87 = vld [vmem:[%s1 + $0x7c] sm:$0xf]
  %v88 = vld [vmem:[%s1 + $0x80] sm:$0xf]
  %v89 = vld [vmem:[%s1 + $0x84] sm:$0xf]
  %v90 = vld [vmem:[%s1 + $0x88] sm:$0xf]
  %v91 = vld [vmem:[%s1 + $0x8c] sm:$0xf]
  %v92 = vld [vmem:[%s1 + $0x90] sm:$0xf]
  %v93 = vld [vmem:[%s1 + $0x94] sm:$0xf]
  %v94 = vld [vmem:[%s1 + $0x98] sm:$0xf]
  %v95 = vld [vmem:[%s1 + $0x9c] sm:$0xf]
  %v96 = vld [vmem:[%s1 + $0xa0] sm:$0xf]
  %v97 = vld [vmem:[%s1 + $0xa4] sm:$0xf]
  %v98 = vld [vmem:[%s1 + $0xa8] sm:$0xf]
  %v99 = vld [vmem:[%s1 + $0xac] sm:$0xf]
  %v100 = vld [vmem:[%s1 + $0xb0] sm:$0xf]
  %v101 = vld [vmem:[%s1 + $0xb4] sm:$0xf]
  %v102 = vld [vmem:[%s1 + $0xb8] sm:$0xf]
  %v103 = vld [vmem:[%s1 + $0xbc] sm:$0xf]
  %v104 = vld [vmem:[%s1 + $0xc0] sm:$0xf]
  %v105 = vld [vmem:[%s1 + $0xc4] sm:$0xf]
  %v106 = vld [vmem:[%s1 + $0xc8] sm:$0xf]
  %v107 = vld [vmem:[%s1 + $0xcc] sm:$0xf]
  %v108 = vld [vmem:[%s1 + $0xd0] sm:$0xf]
  %v109 = vld [vmem:[%s1 + $0xd4] sm:$0xf]
  %v110 = vld [vmem:[%s1 + $0xd8] sm:$0xf]
  %v111 = vld [vmem:[%s1 + $0xdc] sm:$0xf]
  %v112 = vld [vmem:[%s1 + $0xe0] sm:$0xf]
  %v113 = vld [vmem:[%s1 + $0xe4] sm:$0xf]
  %v114 = vld [vmem:[%s1 + $0xe8] sm:$0xf]
  %v115 = vld [vmem:[%s1 + $0xec] sm:$0xf]
  %v116 = vld [vmem:[%s1 + $0xf0] sm:$0xf]
  %v117 = vld [vmem:[%s1 + $0xf4] sm:$0xf]
  %v118 = vld [vmem:[%s1 + $0xf8] sm:$0xf]
  %v119 = vld [vmem:[%s1 + $0xfc] sm:$0xf]
  %v120 = vld [vmem:[%s2] sm:$0x1]
  %v122 = vperm.slane %v120, 0
  %v166 = vunpack.c.l.b16 %v14
  %v167 = vunpack.c.h.b16 %v14
  %v168 = vunpack.c.l.b16 %v15
  %v169 = vunpack.c.h.b16 %v15
  %v170 = vunpack.c.l.b16 %v16
  %v171 = vunpack.c.h.b16 %v16
  %v172 = vunpack.c.l.b16 %v17
  %v173 = vunpack.c.h.b16 %v17
  %v174 = vunpack.c.l.b16 %v18
  %v175 = vunpack.c.h.b16 %v18
  %v176 = vunpack.c.l.b16 %v19
  %v177 = vunpack.c.h.b16 %v19
  %v178 = vunpack.c.l.b16 %v20
  %v179 = vunpack.c.h.b16 %v20
  %v180 = vunpack.c.l.b16 %v21
  %v181 = vunpack.c.h.b16 %v21
  %v182 = vunpack.c.l.b16 %v22
  %v183 = vunpack.c.h.b16 %v22
  %v184 = vunpack.c.l.b16 %v23
  %v185 = vunpack.c.h.b16 %v23
  %v186 = vunpack.c.l.b16 %v24
  %v187 = vunpack.c.h.b16 %v24
  %v188 = vunpack.c.l.b16 %v25
  %v189 = vunpack.c.h.b16 %v25
  %v190 = vunpack.c.l.b16 %v26
  %v191 = vunpack.c.h.b16 %v26
  %v192 = vunpack.c.l.b16 %v27
  %v193 = vunpack.c.h.b16 %v27
  %v194 = vunpack.c.l.b16 %v28
  %v195 = vunpack.c.h.b16 %v28
  %v196 = vunpack.c.l.b16 %v29
  %v197 = vunpack.c.h.b16 %v29
  %v198 = vunpack.c.l.b16 %v30
  %v199 = vunpack.c.h.b16 %v30
  %v200 = vunpack.c.l.b16 %v31
  %v201 = vunpack.c.h.b16 %v31
  %v202 = vunpack.c.l.b16 %v32
  %v203 = vunpack.c.h.b16 %v32
  %v204 = vunpack.c.l.b16 %v33
  %v205 = vunpack.c.h.b16 %v33
  %v206 = vunpack.c.l.b16 %v34
  %v207 = vunpack.c.h.b16 %v34
  %v208 = vunpack.c.l.b16 %v35
  %v209 = vunpack.c.h.b16 %v35
  %v210 = vunpack.c.l.b16 %v36
  %v211 = vunpack.c.h.b16 %v36
  %v212 = vunpack.c.l.b16 %v37
  %v213 = vunpack.c.h.b16 %v37
  %v214 = vunpack.c.l.b16 %v38
  %v215 = vunpack.c.h.b16 %v38
  %v216 = vunpack.c.l.b16 %v39
  %v217 = vunpack.c.h.b16 %v39
  %v218 = vunpack.c.l.b16 %v40
  %v219 = vunpack.c.h.b16 %v40
  %v220 = vunpack.c.l.b16 %v41
  %v221 = vunpack.c.h.b16 %v41
  %v222 = vunpack.c.l.b16 %v42
  %v223 = vunpack.c.h.b16 %v42
  %v224 = vunpack.c.l.b16 %v43
  %v225 = vunpack.c.h.b16 %v43
  %v226 = vunpack.c.l.b16 %v44
  %v227 = vunpack.c.h.b16 %v44
  %v228 = vunpack.c.l.b16 %v45
  %v229 = vunpack.c.h.b16 %v45
  %v230 = vunpack.c.l.b16 %v46
  %v231 = vunpack.c.h.b16 %v46
  %v232 = vunpack.c.l.b16 %v47
  %v233 = vunpack.c.h.b16 %v47
  %v234 = vunpack.c.l.b16 %v48
  %v235 = vunpack.c.h.b16 %v48
  %v236 = vunpack.c.l.b16 %v49
  %v237 = vunpack.c.h.b16 %v49
  %v238 = vunpack.c.l.b16 %v50
  %v239 = vunpack.c.h.b16 %v50
  %v240 = vunpack.c.l.b16 %v51
  %v241 = vunpack.c.h.b16 %v51
  %v242 = vunpack.c.l.b16 %v52
  %v243 = vunpack.c.h.b16 %v52
  %v244 = vunpack.c.l.b16 %v53
  %v245 = vunpack.c.h.b16 %v53
  %v246 = vunpack.c.l.b16 %v54
  %v247 = vunpack.c.h.b16 %v54
  %v248 = vunpack.c.l.b16 %v55
  %v249 = vunpack.c.h.b16 %v55
  %v250 = vpack.c.b16 %v170, %v166
  %v251 = vpack.c.b16 %v171, %v167
  %v252 = vpack.c.b16 %v172, %v168
  %v253 = vpack.c.b16 %v173, %v169
  %v254 = vpack.c.b16 %v178, %v174
  %v255 = vpack.c.b16 %v179, %v175
  %v256 = vpack.c.b16 %v180, %v176
  %v257 = vpack.c.b16 %v181, %v177
  %v258 = vpack.c.b16 %v186, %v182
  %v259 = vpack.c.b16 %v187, %v183
  %v260 = vpack.c.b16 %v188, %v184
  %v261 = vpack.c.b16 %v189, %v185
  %v262 = vpack.c.b16 %v194, %v190
  %v263 = vpack.c.b16 %v195, %v191
  %v264 = vpack.c.b16 %v196, %v192
  %v265 = vpack.c.b16 %v197, %v193
  %v266 = vpack.c.b16 %v202, %v198
  %v267 = vpack.c.b16 %v203, %v199
  %v268 = vpack.c.b16 %v204, %v200
  %v269 = vpack.c.b16 %v205, %v201
  %v270 = vpack.c.b16 %v210, %v206
  %v271 = vpack.c.b16 %v211, %v207
  %v272 = vpack.c.b16 %v212, %v208
  %v273 = vpack.c.b16 %v213, %v209
  %v274 = vpack.c.b16 %v218, %v214
  %v275 = vpack.c.b16 %v219, %v215
  %v276 = vpack.c.b16 %v220, %v216
  %v277 = vpack.c.b16 %v221, %v217
  %v278 = vpack.c.b16 %v226, %v222
  %v279 = vpack.c.b16 %v227, %v223
  %v280 = vpack.c.b16 %v228, %v224
  %v281 = vpack.c.b16 %v229, %v225
  %v282 = vpack.c.b16 %v234, %v230
  %v283 = vpack.c.b16 %v235, %v231
  %v284 = vpack.c.b16 %v236, %v232
  %v285 = vpack.c.b16 %v237, %v233
  %v286 = vpack.c.b16 %v242, %v238
  %v287 = vpack.c.b16 %v243, %v239
  %v288 = vpack.c.b16 %v244, %v240
  %v289 = vpack.c.b16 %v245, %v241
  %v290 = vpack.c.b16 %v246, %v246
  %v291 = vpack.c.b16 %v247, %v247
  %v292 = vpack.c.b16 %v248, %v248
  %v293 = vpack.c.b16 %v249, %v249
  %v402 = vunpack.c.l.b16 %v56
  %v403 = vunpack.c.l.b16 %v57
  %v404 = vunpack.c.l.b16 %v58
  %v405 = vunpack.c.l.b16 %v59
  %v406 = vunpack.c.l.b16 %v60
  %v407 = vunpack.c.l.b16 %v61
  %v408 = vunpack.c.l.b16 %v62
  %v409 = vunpack.c.l.b16 %v63
  %v410 = vunpack.c.l.b16 %v64
  %v411 = vunpack.c.l.b16 %v65
  %v412 = vunpack.c.l.b16 %v66
  %v413 = vunpack.c.l.b16 %v67
  %v414 = vunpack.c.l.b16 %v68
  %v415 = vunpack.c.l.b16 %v69
  %v416 = vunpack.c.l.b16 %v70
  %v417 = vunpack.c.l.b16 %v71
  %v418 = vunpack.c.l.b16 %v72
  %v419 = vunpack.c.l.b16 %v73
  %v420 = vunpack.c.l.b16 %v74
  %v421 = vunpack.c.l.b16 %v75
  %v422 = vunpack.c.l.b16 %v76
  %v423 = vunpack.c.l.b16 %v77
  %v424 = vunpack.c.l.b16 %v78
  %v425 = vunpack.c.l.b16 %v79
  %v426 = vunpack.c.l.b16 %v80
  %v427 = vunpack.c.l.b16 %v81
  %v428 = vunpack.c.l.b16 %v82
  %v429 = vunpack.c.l.b16 %v83
  %v430 = vunpack.c.l.b16 %v84
  %v431 = vunpack.c.l.b16 %v85
  %v432 = vunpack.c.l.b16 %v86
  %v433 = vunpack.c.l.b16 %v87
  %v434 = vunpack.c.l.b16 %v88
  %v435 = vunpack.c.l.b16 %v89
  %v436 = vunpack.c.l.b16 %v90
  %v437 = vunpack.c.l.b16 %v91
  %v438 = vunpack.c.l.b16 %v92
  %v439 = vunpack.c.l.b16 %v93
  %v440 = vunpack.c.l.b16 %v94
  %v441 = vunpack.c.l.b16 %v95
  %v442 = vunpack.c.l.b16 %v96
  %v443 = vunpack.c.l.b16 %v97
  %v444 = vunpack.c.l.b16 %v98
  %v445 = vunpack.c.l.b16 %v99
  %v446 = vunpack.c.l.b16 %v100
  %v447 = vunpack.c.l.b16 %v101
  %v448 = vunpack.c.l.b16 %v102
  %v449 = vunpack.c.l.b16 %v103
  %v450 = vunpack.c.l.b16 %v104
  %v451 = vunpack.c.l.b16 %v105
  %v452 = vunpack.c.l.b16 %v106
  %v453 = vunpack.c.l.b16 %v107
  %v454 = vunpack.c.l.b16 %v108
  %v455 = vunpack.c.l.b16 %v109
  %v456 = vunpack.c.l.b16 %v110
  %v457 = vunpack.c.l.b16 %v111
  %v458 = vunpack.c.l.b16 %v112
  %v459 = vunpack.c.l.b16 %v113
  %v460 = vunpack.c.l.b16 %v114
  %v461 = vunpack.c.l.b16 %v115
  %v462 = vunpack.c.l.b16 %v116
  %v463 = vunpack.c.l.b16 %v117
  %v464 = vunpack.c.l.b16 %v118
  %v465 = vunpack.c.l.b16 %v119
  %v466 = vpack.c.b16 %v403, %v402
  %v467 = vpack.c.b16 %v405, %v404
  %v468 = vpack.c.b16 %v407, %v406
  %v469 = vpack.c.b16 %v409, %v408
  %v470 = vpack.c.b16 %v411, %v410
  %v471 = vpack.c.b16 %v413, %v412
  %v472 = vpack.c.b16 %v415, %v414
  %v473 = vpack.c.b16 %v417, %v416
  %v474 = vpack.c.b16 %v419, %v418
  %v475 = vpack.c.b16 %v421, %v420
  %v476 = vpack.c.b16 %v423, %v422
  %v477 = vpack.c.b16 %v425, %v424
  %v478 = vpack.c.b16 %v427, %v426
  %v479 = vpack.c.b16 %v429, %v428
  %v480 = vpack.c.b16 %v431, %v430
  %v481 = vpack.c.b16 %v433, %v432
  %v482 = vpack.c.b16 %v435, %v434
  %v483 = vpack.c.b16 %v437, %v436
  %v484 = vpack.c.b16 %v439, %v438
  %v485 = vpack.c.b16 %v441, %v440
  %v486 = vpack.c.b16 %v443, %v442
  %v487 = vpack.c.b16 %v445, %v444
  %v488 = vpack.c.b16 %v447, %v446
  %v489 = vpack.c.b16 %v449, %v448
  %v490 = vpack.c.b16 %v451, %v450
  %v491 = vpack.c.b16 %v453, %v452
  %v492 = vpack.c.b16 %v455, %v454
  %v493 = vpack.c.b16 %v457, %v456
  %v494 = vpack.c.b16 %v459, %v458
  %v495 = vpack.c.b16 %v461, %v460
  %v496 = vpack.c.b16 %v463, %v462
  %v497 = vpack.c.b16 %v465, %v464
  %530 = vmatpush.bf16.msra.mxu0 %v473
  %531 = vmatpush.bf16.msra.mxu0 %v472
  %532 = vmatpush.bf16.msra.mxu0 %v471
  %533 = vmatpush.bf16.msra.mxu0 %v470
  %534 = vmatpush.bf16.msra.mxu0 %v469
  %535 = vmatpush.bf16.msra.mxu0 %v468
  %536 = vmatpush.bf16.msra.mxu0 %v467
  %537 = vmatpush.bf16.msra.mxu0 %v466
  %538 = vmatmul.bf16.gmra.mxu0 %v250
  %v539 = vpop.f32.mrf.mxu0
  %v540 = vadd.f32 %v122, %v539
  %v541 = vpop.f32.mrf.mxu0
  %v542 = vadd.f32 %v122, %v541
  %543 = vmatmul.bf16.gmra.mxu0 %v254
  %v544 = vpop.f32.mrf.mxu0
  %v545 = vadd.f32 %v122, %v544
  %v546 = vpop.f32.mrf.mxu0
  %v547 = vadd.f32 %v122, %v546
  %548 = vmatmul.bf16.gmra.mxu0 %v258
  %v549 = vpop.f32.mrf.mxu0
  %v550 = vadd.f32 %v122, %v549
  %v551 = vpop.f32.mrf.mxu0
  %v552 = vadd.f32 %v122, %v551
  %553 = vmatmul.bf16.gmra.mxu0 %v262
  %v554 = vpop.f32.mrf.mxu0
  %v555 = vadd.f32 %v122, %v554
  %v556 = vpop.f32.mrf.mxu0
  %v557 = vadd.f32 %v122, %v556
  %558 = vmatmul.bf16.gmra.mxu0 %v266
  %v559 = vpop.f32.mrf.mxu0
  %v560 = vadd.f32 %v122, %v559
  %v561 = vpop.f32.mrf.mxu0
  %v562 = vadd.f32 %v122, %v561
  %563 = vmatmul.bf16.gmra.mxu0 %v270
  %v564 = vpop.f32.mrf.mxu0
  %v565 = vadd.f32 %v122, %v564
  %v566 = vpop.f32.mrf.mxu0
  %v567 = vadd.f32 %v122, %v566
  %568 = vmatmul.bf16.gmra.mxu0 %v274
  %v569 = vpop.f32.mrf.mxu0
  %v570 = vadd.f32 %v122, %v569
  %v571 = vpop.f32.mrf.mxu0
  %v572 = vadd.f32 %v122, %v571
  %573 = vmatmul.bf16.gmra.mxu0 %v278
  %v574 = vpop.f32.mrf.mxu0
  %v575 = vadd.f32 %v122, %v574
  %v576 = vpop.f32.mrf.mxu0
  %v577 = vadd.f32 %v122, %v576
  %578 = vmatmul.bf16.gmra.mxu0 %v282
  %v579 = vpop.f32.mrf.mxu0
  %v580 = vadd.f32 %v122, %v579
  %v581 = vpop.f32.mrf.mxu0
  %v582 = vadd.f32 %v122, %v581
  %583 = vmatmul.bf16.gmra.mxu0 %v286
  %v584 = vpop.f32.mrf.mxu0
  %v585 = vadd.f32 %v122, %v584
  %v586 = vpop.f32.mrf.mxu0
  %v587 = vadd.f32 %v122, %v586
  %588 = vmatmul.bf16.gmra.mxu0 %v290
  %v589 = vpop.f32.mrf.mxu0
  %v590 = vadd.f32 %v122, %v589
  %v591 = vpop.f32.mrf.mxu0
  %592 = vdwg.mxu0
  %593 = vmatpush.bf16.msra.mxu0 %v481
  %594 = vmatpush.bf16.msra.mxu0 %v480
  %595 = vmatpush.bf16.msra.mxu0 %v479
  %596 = vmatpush.bf16.msra.mxu0 %v478
  %597 = vmatpush.bf16.msra.mxu0 %v477
  %598 = vmatpush.bf16.msra.mxu0 %v476
  %599 = vmatpush.bf16.msra.mxu0 %v475
  %600 = vmatpush.bf16.msra.mxu0 %v474
  %601 = vmatmul.bf16.gmra.mxu0 %v251
  %v602 = vpop.f32.mrf.mxu0
  %v603 = vadd.f32 %v540, %v602
  %v604 = vpop.f32.mrf.mxu0
  %v605 = vadd.f32 %v542, %v604
  %606 = vmatmul.bf16.gmra.mxu0 %v255
  %v607 = vpop.f32.mrf.mxu0
  %v608 = vadd.f32 %v545, %v607
  %v609 = vpop.f32.mrf.mxu0
  %v610 = vadd.f32 %v547, %v609
  %611 = vmatmul.bf16.gmra.mxu0 %v259
  %v612 = vpop.f32.mrf.mxu0
  %v613 = vadd.f32 %v550, %v612
  %v614 = vpop.f32.mrf.mxu0
  %v615 = vadd.f32 %v552, %v614
  %616 = vmatmul.bf16.gmra.mxu0 %v263
  %v617 = vpop.f32.mrf.mxu0
  %v618 = vadd.f32 %v555, %v617
  %v619 = vpop.f32.mrf.mxu0
  %v620 = vadd.f32 %v557, %v619
  %621 = vmatmul.bf16.gmra.mxu0 %v267
  %v622 = vpop.f32.mrf.mxu0
  %v623 = vadd.f32 %v560, %v622
  %v624 = vpop.f32.mrf.mxu0
  %v625 = vadd.f32 %v562, %v624
  %626 = vmatmul.bf16.gmra.mxu0 %v271
  %v627 = vpop.f32.mrf.mxu0
  %v628 = vadd.f32 %v565, %v627
  %v629 = vpop.f32.mrf.mxu0
  %v630 = vadd.f32 %v567, %v629
  %631 = vmatmul.bf16.gmra.mxu0 %v275
  %v632 = vpop.f32.mrf.mxu0
  %v633 = vadd.f32 %v570, %v632
  %v634 = vpop.f32.mrf.mxu0
  %v635 = vadd.f32 %v572, %v634
  %636 = vmatmul.bf16.gmra.mxu0 %v279
  %v637 = vpop.f32.mrf.mxu0
  %v638 = vadd.f32 %v575, %v637
  %v639 = vpop.f32.mrf.mxu0
  %v640 = vadd.f32 %v577, %v639
  %641 = vmatmul.bf16.gmra.mxu0 %v283
  %v642 = vpop.f32.mrf.mxu0
  %v643 = vadd.f32 %v580, %v642
  %v644 = vpop.f32.mrf.mxu0
  %v645 = vadd.f32 %v582, %v644
  %646 = vmatmul.bf16.gmra.mxu0 %v287
  %v647 = vpop.f32.mrf.mxu0
  %v648 = vadd.f32 %v585, %v647
  %v649 = vpop.f32.mrf.mxu0
  %v650 = vadd.f32 %v587, %v649
  %651 = vmatmul.bf16.gmra.mxu0 %v291
  %v652 = vpop.f32.mrf.mxu0
  %v653 = vadd.f32 %v590, %v652
  %v654 = vpop.f32.mrf.mxu0
  %655 = vdwg.mxu0
  %656 = vmatpush.bf16.msra.mxu0 %v489
  %657 = vmatpush.bf16.msra.mxu0 %v488
  %658 = vmatpush.bf16.msra.mxu0 %v487
  %659 = vmatpush.bf16.msra.mxu0 %v486
  %660 = vmatpush.bf16.msra.mxu0 %v485
  %661 = vmatpush.bf16.msra.mxu0 %v484
  %662 = vmatpush.bf16.msra.mxu0 %v483
  %663 = vmatpush.bf16.msra.mxu0 %v482
  %664 = vmatmul.bf16.gmra.mxu0 %v252
  %v665 = vpop.f32.mrf.mxu0
  %v666 = vadd.f32 %v603, %v665
  %v667 = vpop.f32.mrf.mxu0
  %v668 = vadd.f32 %v605, %v667
  %669 = vmatmul.bf16.gmra.mxu0 %v256
  %v670 = vpop.f32.mrf.mxu0
  %v671 = vadd.f32 %v608, %v670
  %v672 = vpop.f32.mrf.mxu0
  %v673 = vadd.f32 %v610, %v672
  %674 = vmatmul.bf16.gmra.mxu0 %v260
  %v675 = vpop.f32.mrf.mxu0
  %v676 = vadd.f32 %v613, %v675
  %v677 = vpop.f32.mrf.mxu0
  %v678 = vadd.f32 %v615, %v677
  %679 = vmatmul.bf16.gmra.mxu0 %v264
  %v680 = vpop.f32.mrf.mxu0
  %v681 = vadd.f32 %v618, %v680
  %v682 = vpop.f32.mrf.mxu0
  %v683 = vadd.f32 %v620, %v682
  %684 = vmatmul.bf16.gmra.mxu0 %v268
  %v685 = vpop.f32.mrf.mxu0
  %v686 = vadd.f32 %v623, %v685
  %v687 = vpop.f32.mrf.mxu0
  %v688 = vadd.f32 %v625, %v687
  %689 = vmatmul.bf16.gmra.mxu0 %v272
  %v690 = vpop.f32.mrf.mxu0
  %v691 = vadd.f32 %v628, %v690
  %v692 = vpop.f32.mrf.mxu0
  %v693 = vadd.f32 %v630, %v692
  %694 = vmatmul.bf16.gmra.mxu0 %v276
  %v695 = vpop.f32.mrf.mxu0
  %v696 = vadd.f32 %v633, %v695
  %v697 = vpop.f32.mrf.mxu0
  %v698 = vadd.f32 %v635, %v697
  %699 = vmatmul.bf16.gmra.mxu0 %v280
  %v700 = vpop.f32.mrf.mxu0
  %v701 = vadd.f32 %v638, %v700
  %v702 = vpop.f32.mrf.mxu0
  %v703 = vadd.f32 %v640, %v702
  %704 = vmatmul.bf16.gmra.mxu0 %v284
  %v705 = vpop.f32.mrf.mxu0
  %v706 = vadd.f32 %v643, %v705
  %v707 = vpop.f32.mrf.mxu0
  %v708 = vadd.f32 %v645, %v707
  %709 = vmatmul.bf16.gmra.mxu0 %v288
  %v710 = vpop.f32.mrf.mxu0
  %v711 = vadd.f32 %v648, %v710
  %v712 = vpop.f32.mrf.mxu0
  %v713 = vadd.f32 %v650, %v712
  %714 = vmatmul.bf16.gmra.mxu0 %v292
  %v715 = vpop.f32.mrf.mxu0
  %v716 = vadd.f32 %v653, %v715
  %v717 = vpop.f32.mrf.mxu0
  %718 = vdwg.mxu0
  %719 = vmatpush.bf16.msra.mxu0 %v497
  %720 = vmatpush.bf16.msra.mxu0 %v496
  %721 = vmatpush.bf16.msra.mxu0 %v495
  %722 = vmatpush.bf16.msra.mxu0 %v494
  %723 = vmatpush.bf16.msra.mxu0 %v493
  %724 = vmatpush.bf16.msra.mxu0 %v492
  %725 = vmatpush.bf16.msra.mxu0 %v491
  %726 = vmatpush.bf16.msra.mxu0 %v490
  %727 = vmatmul.bf16.gmra.mxu0 %v253
  %v728 = vpop.f32.mrf.mxu0
  %v729 = vadd.f32 %v666, %v728
  %v730 = vpop.f32.mrf.mxu0
  %v731 = vadd.f32 %v668, %v730
  %732 = vmatmul.bf16.gmra.mxu0 %v257
  %v733 = vpop.f32.mrf.mxu0
  %v734 = vadd.f32 %v671, %v733
  %v735 = vpop.f32.mrf.mxu0
  %v736 = vadd.f32 %v673, %v735
  %737 = vmatmul.bf16.gmra.mxu0 %v261
  %v738 = vpop.f32.mrf.mxu0
  %v739 = vadd.f32 %v676, %v738
  %v740 = vpop.f32.mrf.mxu0
  %v741 = vadd.f32 %v678, %v740
  %742 = vmatmul.bf16.gmra.mxu0 %v265
  %v743 = vpop.f32.mrf.mxu0
  %v744 = vadd.f32 %v681, %v743
  %v745 = vpop.f32.mrf.mxu0
  %v746 = vadd.f32 %v683, %v745
  %747 = vmatmul.bf16.gmra.mxu0 %v269
  %v748 = vpop.f32.mrf.mxu0
  %v749 = vadd.f32 %v686, %v748
  %v750 = vpop.f32.mrf.mxu0
  %v751 = vadd.f32 %v688, %v750
  %752 = vmatmul.bf16.gmra.mxu0 %v273
  %v753 = vpop.f32.mrf.mxu0
  %v754 = vadd.f32 %v691, %v753
  %v755 = vpop.f32.mrf.mxu0
  %v756 = vadd.f32 %v693, %v755
  %757 = vmatmul.bf16.gmra.mxu0 %v277
  %v758 = vpop.f32.mrf.mxu0
  %v759 = vadd.f32 %v696, %v758
  %v760 = vpop.f32.mrf.mxu0
  %v761 = vadd.f32 %v698, %v760
  %762 = vmatmul.bf16.gmra.mxu0 %v281
  %v763 = vpop.f32.mrf.mxu0
  %v764 = vadd.f32 %v701, %v763
  %v765 = vpop.f32.mrf.mxu0
  %v766 = vadd.f32 %v703, %v765
  %767 = vmatmul.bf16.gmra.mxu0 %v285
  %v768 = vpop.f32.mrf.mxu0
  %v769 = vadd.f32 %v706, %v768
  %v770 = vpop.f32.mrf.mxu0
  %v771 = vadd.f32 %v708, %v770
  %772 = vmatmul.bf16.gmra.mxu0 %v289
  %v773 = vpop.f32.mrf.mxu0
  %v774 = vadd.f32 %v711, %v773
  %v775 = vpop.f32.mrf.mxu0
  %v776 = vadd.f32 %v713, %v775
  %777 = vmatmul.bf16.gmra.mxu0 %v293
  %v778 = vpop.f32.mrf.mxu0
  %v779 = vadd.f32 %v716, %v778
  %v780 = vpop.f32.mrf.mxu0
  %781 = vdwg.mxu0
  %v782 = vmax.f32 %v729, 0.0
  %v783 = vmax.f32 %v731, 0.0
  %v784 = vmax.f32 %v734, 0.0
  %v785 = vmax.f32 %v736, 0.0
  %v786 = vmax.f32 %v739, 0.0
  %v787 = vmax.f32 %v741, 0.0
  %v788 = vmax.f32 %v744, 0.0
  %v789 = vmax.f32 %v746, 0.0
  %v790 = vmax.f32 %v749, 0.0
  %v791 = vmax.f32 %v751, 0.0
  %v792 = vmax.f32 %v754, 0.0
  %v793 = vmax.f32 %v756, 0.0
  %v794 = vmax.f32 %v759, 0.0
  %v795 = vmax.f32 %v761, 0.0
  %v796 = vmax.f32 %v764, 0.0
  %v797 = vmax.f32 %v766, 0.0
  %v798 = vmax.f32 %v769, 0.0
  %v799 = vmax.f32 %v771, 0.0
  %v800 = vmax.f32 %v774, 0.0
  %v801 = vmax.f32 %v776, 0.0
  %v802 = vmax.f32 %v779, 0.0
  %v803 = vpack.c.bf16 %v782, %v782
  %v804 = vpack.c.bf16 %v783, %v783
  %v805 = vpack.c.bf16 %v784, %v784
  %v806 = vpack.c.bf16 %v785, %v785
  %v807 = vpack.c.bf16 %v786, %v786
  %v808 = vpack.c.bf16 %v787, %v787
  %v809 = vpack.c.bf16 %v788, %v788
  %v810 = vpack.c.bf16 %v789, %v789
  %v811 = vpack.c.bf16 %v790, %v790
  %v812 = vpack.c.bf16 %v791, %v791
  %v813 = vpack.c.bf16 %v792, %v792
  %v814 = vpack.c.bf16 %v793, %v793
  %v815 = vpack.c.bf16 %v794, %v794
  %v816 = vpack.c.bf16 %v795, %v795
  %v817 = vpack.c.bf16 %v796, %v796
  %v818 = vpack.c.bf16 %v797, %v797
  %v819 = vpack.c.bf16 %v798, %v798
  %v820 = vpack.c.bf16 %v799, %v799
  %v821 = vpack.c.bf16 %v800, %v800
  %v822 = vpack.c.bf16 %v801, %v801
  %v823 = vpack.c.bf16 %v802, %v802
  %vm824 = vcmask 519168
  %825 = vst.msk [vmem:[%s3] sm:$0xf] %vm824, %v803
  %826 = vst.msk [vmem:[%s3 + $0x4] sm:$0xf] %vm824, %v804
  %827 = vst.msk [vmem:[%s3 + $0x8] sm:$0xf] %vm824, %v805
  %828 = vst.msk [vmem:[%s3 + $0xc] sm:$0xf] %vm824, %v806
  %829 = vst.msk [vmem:[%s3 + $0x10] sm:$0xf] %vm824, %v807
  %830 = vst.msk [vmem:[%s3 + $0x14] sm:$0xf] %vm824, %v808
  %831 = vst.msk [vmem:[%s3 + $0x18] sm:$0xf] %vm824, %v809
  %832 = vst.msk [vmem:[%s3 + $0x1c] sm:$0xf] %vm824, %v810
  %833 = vst.msk [vmem:[%s3 + $0x20] sm:$0xf] %vm824, %v811
  %834 = vst.msk [vmem:[%s3 + $0x24] sm:$0xf] %vm824, %v812
  %835 = vst.msk [vmem:[%s3 + $0x28] sm:$0xf] %vm824, %v813
  %836 = vst.msk [vmem:[%s3 + $0x2c] sm:$0xf] %vm824, %v814
  %837 = vst.msk [vmem:[%s3 + $0x30] sm:$0xf] %vm824, %v815
  %838 = vst.msk [vmem:[%s3 + $0x34] sm:$0xf] %vm824, %v816
  %839 = vst.msk [vmem:[%s3 + $0x38] sm:$0xf] %vm824, %v817
  %840 = vst.msk [vmem:[%s3 + $0x3c] sm:$0xf] %vm824, %v818
  %841 = vst.msk [vmem:[%s3 + $0x40] sm:$0xf] %vm824, %v819
  %842 = vst.msk [vmem:[%s3 + $0x44] sm:$0xf] %vm824, %v820
  %843 = vst.msk [vmem:[%s3 + $0x48] sm:$0xf] %vm824, %v821
  %844 = vst.msk [vmem:[%s3 + $0x4c] sm:$0xf] %vm824, %v822
  %vm845 = vcmask 516096
  %846 = vst.msk [vmem:[%s3 + $0x50] sm:$0x1] %vm845, %v823
  // Predicated region
  $region14: #{forward.6} parent=0 // pred_check
    _
  $region15: #{forward.6} parent=0 // pred_check_branch
    %848 = sbr.rel (0) target = $region17
  $region16: #{forward.6} parent=0 // pred_region
    _
  $region17: #{forward.6} parent=0 // pred_fallthru
    _
  // Predicated region
  $region18: #{forward.6} parent=0 // pred_check
    _
  $region19: #{forward.6} parent=0 // pred_check_branch
    %850 = sbr.rel (0) target = $region21
  $region20: #{forward.6} parent=0 // pred_region
    _
  $region21: #{forward.6} parent=0 // pred_fallthru
    _

// kernel: forward.7
$region0: #{forward.7}
  #allocation0 [shape = 'u32[]', space=smem, size = 0x4, offset = 0x4, fixed_abs, tag = 'smem constant byte address 0x4 - core index']
  #allocation1 [shape = 'u32[72,128]{1,0:T(1,128)}', space=vmem, size = 0x9000, scoped, tag = 'internal scratch']
  %s0 = inlined_call_operand.vmem [shape: bf16[98,576], index: 0, kind: input, shape index: {}]
  %s1 = inlined_call_operand.vmem [shape: bf16[576,64], index: 1, kind: input, shape index: {}]
  %s2 = inlined_call_operand.vmem [shape: f32[1,64], index: 2, kind: input, shape index: {}]
  %s3 = inlined_call_operand.vmem [shape: bf16[98,64], index: 3, kind: output, shape index: {}]
  %s4 = sld [smem:[#allocation0]]
  $region22: #{forward.7} parent=0
    _
  %s6 = ssub.s32 1, %s4
  %s7 = scalar_select 0, %s6, %s4
  // Predicated region
  $region2: #{forward.7} parent=0 // pred_check
    _
  $region3: #{forward.7} parent=0 // pred_check_branch
    %9 = sbr.rel (0) target = $region5
  $region4: #{forward.7} parent=0 // pred_region
    _
  $region5: #{forward.7} parent=0 // pred_fallthru
    _
  // Predicated region
  $region6: #{forward.7} parent=0 // pred_check
    _
  $region7: #{forward.7} parent=0 // pred_check_branch
    %11 = sbr.rel (0) target = $region9
  $region8: #{forward.7} parent=0 // pred_region
    _
  $region9: #{forward.7} parent=0 // pred_fallthru
    _
  // Predicated region
  $region10: #{forward.7} parent=0 // pred_check
    _
  $region11: #{forward.7} parent=0 // pred_check_branch
    %13 = sbr.rel (0) target = $region13
  $region12: #{forward.7} parent=0 // pred_region
    _
  $region13: #{forward.7} parent=0 // pred_fallthru
    _
  %v15 = vld [vmem:[%s0] sm:$0xff]
  %v16 = vld [vmem:[%s0 + $0x8] sm:$0xff]
  %v17 = vld [vmem:[%s0 + $0x10] sm:$0xf]
  %v18 = vld [vmem:[%s0 + $0x14] sm:$0xff]
  %v19 = vld [vmem:[%s0 + $0x1c] sm:$0xff]
  %v20 = vld [vmem:[%s0 + $0x24] sm:$0xf]
  %v21 = vld [vmem:[%s0 + $0x28] sm:$0xff]
  %v22 = vld [vmem:[%s0 + $0x30] sm:$0xff]
  %v23 = vld [vmem:[%s0 + $0x38] sm:$0xf]
  %v24 = vld [vmem:[%s0 + $0x3c] sm:$0xff]
  %v25 = vld [vmem:[%s0 + $0x44] sm:$0xff]
  %v26 = vld [vmem:[%s0 + $0x4c] sm:$0xf]
  %v27 = vld [vmem:[%s0 + $0x50] sm:$0xff]
  %v28 = vld [vmem:[%s0 + $0x58] sm:$0xff]
  %v29 = vld [vmem:[%s0 + $0x60] sm:$0xf]
  %v30 = vld [vmem:[%s0 + $0x64] sm:$0xff]
  %v31 = vld [vmem:[%s0 + $0x6c] sm:$0xff]
  %v32 = vld [vmem:[%s0 + $0x74] sm:$0xf]
  %v33 = vld [vmem:[%s0 + $0x78] sm:$0xff]
  %v34 = vld [vmem:[%s0 + $0x80] sm:$0xff]
  %v35 = vld [vmem:[%s0 + $0x88] sm:$0xf]
  %v36 = vld [vmem:[%s0 + $0x8c] sm:$0xff]
  %v37 = vld [vmem:[%s0 + $0x94] sm:$0xff]
  %v38 = vld [vmem:[%s0 + $0x9c] sm:$0xf]
  %v39 = vld [vmem:[%s0 + $0xa0] sm:$0xff]
  %v40 = vld [vmem:[%s0 + $0xa8] sm:$0xff]
  %v41 = vld [vmem:[%s0 + $0xb0] sm:$0xf]
  %v42 = vld [vmem:[%s0 + $0xb4] sm:$0xff]
  %v43 = vld [vmem:[%s0 + $0xbc] sm:$0xff]
  %v44 = vld [vmem:[%s0 + $0xc4] sm:$0xf]
  %v45 = vld [vmem:[%s0 + $0xc8] sm:$0xff]
  %v46 = vld [vmem:[%s0 + $0xd0] sm:$0xff]
  %v47 = vld [vmem:[%s0 + $0xd8] sm:$0xf]
  %v48 = vld [vmem:[%s0 + $0xdc] sm:$0xff]
  %v49 = vld [vmem:[%s0 + $0xe4] sm:$0xff]
  %v50 = vld [vmem:[%s0 + $0xec] sm:$0xf]
  %v51 = vld [vmem:[%s0 + $0xf0] sm:$0x11]
  %v52 = vld [vmem:[%s0 + $0xf8] sm:$0x11]
  %v53 = vld [vmem:[%s0 + $0x100] sm:$0x1]
  %v54 = vld [vmem:[%s1] sm:$0xf]
  %v55 = vld [vmem:[%s1 + $0x4] sm:$0xf]
  %v56 = vld [vmem:[%s1 + $0x8] sm:$0xf]
  %v57 = vld [vmem:[%s1 + $0xc] sm:$0xf]
  %v58 = vld [vmem:[%s1 + $0x10] sm:$0xf]
  %v59 = vld [vmem:[%s1 + $0x14] sm:$0xf]
  %v60 = vld [vmem:[%s1 + $0x18] sm:$0xf]
  %v61 = vld [vmem:[%s1 + $0x1c] sm:$0xf]
  %v62 = vld [vmem:[%s1 + $0x20] sm:$0xf]
  %v63 = vld [vmem:[%s1 + $0x24] sm:$0xf]
  %v64 = vld [vmem:[%s1 + $0x28] sm:$0xf]
  %v65 = vld [vmem:[%s1 + $0x2c] sm:$0xf]
  %v66 = vld [vmem:[%s1 + $0x30] sm:$0xf]
  %v67 = vld [vmem:[%s1 + $0x34] sm:$0xf]
  %v68 = vld [vmem:[%s1 + $0x38] sm:$0xf]
  %v69 = vld [vmem:[%s1 + $0x3c] sm:$0xf]
  %v70 = vld [vmem:[%s1 + $0x40] sm:$0xf]
  %v71 = vld [vmem:[%s1 + $0x44] sm:$0xf]
  %v72 = vld [vmem:[%s1 + $0x48] sm:$0xf]
  %v73 = vld [vmem:[%s1 + $0x4c] sm:$0xf]
  %v74 = vld [vmem:[%s1 + $0x50] sm:$0xf]
  %v75 = vld [vmem:[%s1 + $0x54] sm:$0xf]
  %v76 = vld [vmem:[%s1 + $0x58] sm:$0xf]
  %v77 = vld [vmem:[%s1 + $0x5c] sm:$0xf]
  %v78 = vld [vmem:[%s1 + $0x60] sm:$0xf]
  %v79 = vld [vmem:[%s1 + $0x64] sm:$0xf]
  %v80 = vld [vmem:[%s1 + $0x68] sm:$0xf]
  %v81 = vld [vmem:[%s1 + $0x6c] sm:$0xf]
  %v82 = vld [vmem:[%s1 + $0x70] sm:$0xf]
  %v83 = vld [vmem:[%s1 + $0x74] sm:$0xf]
  %v84 = vld [vmem:[%s1 + $0x78] sm:$0xf]
  %v85 = vld [vmem:[%s1 + $0x7c] sm:$0xf]
  %v86 = vld [vmem:[%s1 + $0x80] sm:$0xf]
  %v87 = vld [vmem:[%s1 + $0x84] sm:$0xf]
  %v88 = vld [vmem:[%s1 + $0x88] sm:$0xf]
  %v89 = vld [vmem:[%s1 + $0x8c] sm:$0xf]
  %v90 = vld [vmem:[%s1 + $0x90] sm:$0xf]
  %v91 = vld [vmem:[%s1 + $0x94] sm:$0xf]
  %v92 = vld [vmem:[%s1 + $0x98] sm:$0xf]
  %v93 = vld [vmem:[%s1 + $0x9c] sm:$0xf]
  %v94 = vld [vmem:[%s1 + $0xa0] sm:$0xf]
  %v95 = vld [vmem:[%s1 + $0xa4] sm:$0xf]
  %v96 = vld [vmem:[%s1 + $0xa8] sm:$0xf]
  %v97 = vld [vmem:[%s1 + $0xac] sm:$0xf]
  %v98 = vld [vmem:[%s1 + $0xb0] sm:$0xf]
  %v99 = vld [vmem:[%s1 + $0xb4] sm:$0xf]
  %v100 = vld [vmem:[%s1 + $0xb8] sm:$0xf]
  %v101 = vld [vmem:[%s1 + $0xbc] sm:$0xf]
  %v102 = vld [vmem:[%s1 + $0xc0] sm:$0xf]
  %v103 = vld [vmem:[%s1 + $0xc4] sm:$0xf]
  %v104 = vld [vmem:[%s1 + $0xc8] sm:$0xf]
  %v105 = vld [vmem:[%s1 + $0xcc] sm:$0xf]
  %v106 = vld [vmem:[%s1 + $0xd0] sm:$0xf]
  %v107 = vld [vmem:[%s1 + $0xd4] sm:$0xf]
  %v108 = vld [vmem:[%s1 + $0xd8] sm:$0xf]
  %v109 = vld [vmem:[%s1 + $0xdc] sm:$0xf]
  %v110 = vld [vmem:[%s1 + $0xe0] sm:$0xf]
  %v111 = vld [vmem:[%s1 + $0xe4] sm:$0xf]
  %v112 = vld [vmem:[%s1 + $0xe8] sm:$0xf]
  %v113 = vld [vmem:[%s1 + $0xec] sm:$0xf]
  %v114 = vld [vmem:[%s1 + $0xf0] sm:$0xf]
  %v115 = vld [vmem:[%s1 + $0xf4] sm:$0xf]
  %v116 = vld [vmem:[%s1 + $0xf8] sm:$0xf]
  %v117 = vld [vmem:[%s1 + $0xfc] sm:$0xf]
  %v118 = vld [vmem:[%s1 + $0x100] sm:$0xf]
  %v119 = vld [vmem:[%s1 + $0x104] sm:$0xf]
  %v120 = vld [vmem:[%s1 + $0x108] sm:$0xf]
  %v121 = vld [vmem:[%s1 + $0x10c] sm:$0xf]
  %v122 = vld [vmem:[%s1 + $0x110] sm:$0xf]
  %v123 = vld [vmem:[%s1 + $0x114] sm:$0xf]
  %v124 = vld [vmem:[%s1 + $0x118] sm:$0xf]
  %v125 = vld [vmem:[%s1 + $0x11c] sm:$0xf]
  %v126 = vld [vmem:[%s2] sm:$0x1]
  %v128 = vperm.slane %v126, 0
  %v169 = vunpack.c.l.b16 %v15
  %v170 = vunpack.c.h.b16 %v15
  %v171 = vunpack.c.l.b16 %v16
  %v172 = vunpack.c.h.b16 %v16
  %v173 = vunpack.c.l.b16 %v17
  %v174 = vunpack.c.l.b16 %v18
  %v175 = vunpack.c.h.b16 %v18
  %v176 = vunpack.c.l.b16 %v19
  %v177 = vunpack.c.h.b16 %v19
  %v178 = vunpack.c.l.b16 %v20
  %v179 = vunpack.c.l.b16 %v21
  %v180 = vunpack.c.h.b16 %v21
  %v181 = vunpack.c.l.b16 %v22
  %v182 = vunpack.c.h.b16 %v22
  %v183 = vunpack.c.l.b16 %v23
  %v184 = vunpack.c.l.b16 %v24
  %v185 = vunpack.c.h.b16 %v24
  %v186 = vunpack.c.l.b16 %v25
  %v187 = vunpack.c.h.b16 %v25
  %v188 = vunpack.c.l.b16 %v26
  %v189 = vunpack.c.l.b16 %v27
  %v190 = vunpack.c.h.b16 %v27
  %v191 = vunpack.c.l.b16 %v28
  %v192 = vunpack.c.h.b16 %v28
  %v193 = vunpack.c.l.b16 %v29
  %v194 = vunpack.c.l.b16 %v30
  %v195 = vunpack.c.h.b16 %v30
  %v196 = vunpack.c.l.b16 %v31
  %v197 = vunpack.c.h.b16 %v31
  %v198 = vunpack.c.l.b16 %v32
  %v199 = vunpack.c.l.b16 %v33
  %v200 = vunpack.c.h.b16 %v33
  %v201 = vunpack.c.l.b16 %v34
  %v202 = vunpack.c.h.b16 %v34
  %v203 = vunpack.c.l.b16 %v35
  %v204 = vunpack.c.l.b16 %v36
  %v205 = vunpack.c.h.b16 %v36
  %v206 = vunpack.c.l.b16 %v37
  %v207 = vunpack.c.h.b16 %v37
  %v208 = vunpack.c.l.b16 %v38
  %v209 = vunpack.c.l.b16 %v39
  %v210 = vunpack.c.h.b16 %v39
  %v211 = vunpack.c.l.b16 %v40
  %v212 = vunpack.c.h.b16 %v40
  %v213 = vunpack.c.l.b16 %v41
  %v214 = vunpack.c.l.b16 %v42
  %v215 = vunpack.c.h.b16 %v42
  %v216 = vunpack.c.l.b16 %v43
  %v217 = vunpack.c.h.b16 %v43
  %v218 = vunpack.c.l.b16 %v44
  %v219 = vunpack.c.l.b16 %v45
  %v220 = vunpack.c.h.b16 %v45
  %v221 = vunpack.c.l.b16 %v46
  %v222 = vunpack.c.h.b16 %v46
  %v223 = vunpack.c.l.b16 %v47
  %v224 = vunpack.c.l.b16 %v48
  %v225 = vunpack.c.h.b16 %v48
  %v226 = vunpack.c.l.b16 %v49
  %v227 = vunpack.c.h.b16 %v49
  %v228 = vunpack.c.l.b16 %v50
  %v229 = vunpack.c.l.b16 %v51
  %v230 = vunpack.c.h.b16 %v51
  %v231 = vunpack.c.l.b16 %v52
  %v232 = vunpack.c.h.b16 %v52
  %v233 = vunpack.c.l.b16 %v53
  %v234 = vpack.c.b16 %v174, %v169
  %v235 = vpack.c.b16 %v175, %v170
  %v236 = vpack.c.b16 %v176, %v171
  %v237 = vpack.c.b16 %v177, %v172
  %v238 = vpack.c.b16 %v178, %v173
  %v239 = vpack.c.b16 %v184, %v179
  %v240 = vpack.c.b16 %v185, %v180
  %v241 = vpack.c.b16 %v186, %v181
  %v242 = vpack.c.b16 %v187, %v182
  %v243 = vpack.c.b16 %v188, %v183
  %v244 = vpack.c.b16 %v194, %v189
  %v245 = vpack.c.b16 %v195, %v190
  %v246 = vpack.c.b16 %v196, %v191
  %v247 = vpack.c.b16 %v197, %v192
  %v248 = vpack.c.b16 %v198, %v193
  %v249 = vpack.c.b16 %v204, %v199
  %v250 = vpack.c.b16 %v205, %v200
  %v251 = vpack.c.b16 %v206, %v201
  %v252 = vpack.c.b16 %v207, %v202
  %v253 = vpack.c.b16 %v208, %v203
  %v254 = vpack.c.b16 %v214, %v209
  %v255 = vpack.c.b16 %v215, %v210
  %v256 = vpack.c.b16 %v216, %v211
  %v257 = vpack.c.b16 %v217, %v212
  %v258 = vpack.c.b16 %v218, %v213
  %v259 = vpack.c.b16 %v224, %v219
  %v260 = vpack.c.b16 %v225, %v220
  %v261 = vpack.c.b16 %v226, %v221
  %v262 = vpack.c.b16 %v227, %v222
  %v263 = vpack.c.b16 %v228, %v223
  %v264 = vpack.c.b16 %v229, %v229
  %v265 = vpack.c.b16 %v230, %v230
  %v266 = vpack.c.b16 %v231, %v231
  %v267 = vpack.c.b16 %v232, %v232
  %v268 = vpack.c.b16 %v233, %v233
  %v369 = vunpack.c.l.b16 %v54
  %v370 = vunpack.c.l.b16 %v55
  %v371 = vunpack.c.l.b16 %v56
  %v372 = vunpack.c.l.b16 %v57
  %v373 = vunpack.c.l.b16 %v58
  %v374 = vunpack.c.l.b16 %v59
  %v375 = vunpack.c.l.b16 %v60
  %v376 = vunpack.c.l.b16 %v61
  %v377 = vunpack.c.l.b16 %v62
  %v378 = vunpack.c.l.b16 %v63
  %v379 = vunpack.c.l.b16 %v64
  %v380 = vunpack.c.l.b16 %v65
  %v381 = vunpack.c.l.b16 %v66
  %v382 = vunpack.c.l.b16 %v67
  %v383 = vunpack.c.l.b16 %v68
  %v384 = vunpack.c.l.b16 %v69
  %v385 = vunpack.c.l.b16 %v70
  %v386 = vunpack.c.l.b16 %v71
  %v387 = vunpack.c.l.b16 %v72
  %v388 = vunpack.c.l.b16 %v73
  %v389 = vunpack.c.l.b16 %v74
  %v390 = vunpack.c.l.b16 %v75
  %v391 = vunpack.c.l.b16 %v76
  %v392 = vunpack.c.l.b16 %v77
  %v393 = vunpack.c.l.b16 %v78
  %v394 = vunpack.c.l.b16 %v79
  %v395 = vunpack.c.l.b16 %v80
  %v396 = vunpack.c.l.b16 %v81
  %v397 = vunpack.c.l.b16 %v82
  %v398 = vunpack.c.l.b16 %v83
  %v399 = vunpack.c.l.b16 %v84
  %v400 = vunpack.c.l.b16 %v85
  %v401 = vunpack.c.l.b16 %v86
  %v402 = vunpack.c.l.b16 %v87
  %v403 = vunpack.c.l.b16 %v88
  %v404 = vunpack.c.l.b16 %v89
  %v405 = vunpack.c.l.b16 %v90
  %v406 = vunpack.c.l.b16 %v91
  %v407 = vunpack.c.l.b16 %v92
  %v408 = vunpack.c.l.b16 %v93
  %v409 = vunpack.c.l.b16 %v94
  %v410 = vunpack.c.l.b16 %v95
  %v411 = vunpack.c.l.b16 %v96
  %v412 = vunpack.c.l.b16 %v97
  %v413 = vunpack.c.l.b16 %v98
  %v414 = vunpack.c.l.b16 %v99
  %v415 = vunpack.c.l.b16 %v100
  %v416 = vunpack.c.l.b16 %v101
  %v417 = vunpack.c.l.b16 %v102
  %v418 = vunpack.c.l.b16 %v103
  %v419 = vunpack.c.l.b16 %v104
  %v420 = vunpack.c.l.b16 %v105
  %v421 = vunpack.c.l.b16 %v106
  %v422 = vunpack.c.l.b16 %v107
  %v423 = vunpack.c.l.b16 %v108
  %v424 = vunpack.c.l.b16 %v109
  %v425 = vunpack.c.l.b16 %v110
  %v426 = vunpack.c.l.b16 %v111
  %v427 = vunpack.c.l.b16 %v112
  %v428 = vunpack.c.l.b16 %v113
  %v429 = vunpack.c.l.b16 %v114
  %v430 = vunpack.c.l.b16 %v115
  %v431 = vunpack.c.l.b16 %v116
  %v432 = vunpack.c.l.b16 %v117
  %v433 = vunpack.c.l.b16 %v118
  %v434 = vunpack.c.l.b16 %v119
  %v435 = vunpack.c.l.b16 %v120
  %v436 = vunpack.c.l.b16 %v121
  %v437 = vunpack.c.l.b16 %v122
  %v438 = vunpack.c.l.b16 %v123
  %v439 = vunpack.c.l.b16 %v124
  %v440 = vunpack.c.l.b16 %v125
  %v441 = vpack.c.b16 %v370, %v369
  %v442 = vpack.c.b16 %v372, %v371
  %v443 = vpack.c.b16 %v374, %v373
  %v444 = vpack.c.b16 %v376, %v375
  %v445 = vpack.c.b16 %v378, %v377
  %v446 = vpack.c.b16 %v380, %v379
  %v447 = vpack.c.b16 %v382, %v381
  %v448 = vpack.c.b16 %v384, %v383
  %v449 = vpack.c.b16 %v386, %v385
  %v450 = vpack.c.b16 %v388, %v387
  %v451 = vpack.c.b16 %v390, %v389
  %v452 = vpack.c.b16 %v392, %v391
  %v453 = vpack.c.b16 %v394, %v393
  %v454 = vpack.c.b16 %v396, %v395
  %v455 = vpack.c.b16 %v398, %v397
  %v456 = vpack.c.b16 %v400, %v399
  %v457 = vpack.c.b16 %v402, %v401
  %v458 = vpack.c.b16 %v404, %v403
  %v459 = vpack.c.b16 %v406, %v405
  %v460 = vpack.c.b16 %v408, %v407
  %v461 = vpack.c.b16 %v410, %v409
  %v462 = vpack.c.b16 %v412, %v411
  %v463 = vpack.c.b16 %v414, %v413
  %v464 = vpack.c.b16 %v416, %v415
  %v465 = vpack.c.b16 %v418, %v417
  %v466 = vpack.c.b16 %v420, %v419
  %v467 = vpack.c.b16 %v422, %v421
  %v468 = vpack.c.b16 %v424, %v423
  %v469 = vpack.c.b16 %v426, %v425
  %v470 = vpack.c.b16 %v428, %v427
  %v471 = vpack.c.b16 %v430, %v429
  %v472 = vpack.c.b16 %v432, %v431
  %v473 = vpack.c.b16 %v434, %v433
  %v474 = vpack.c.b16 %v436, %v435
  %v475 = vpack.c.b16 %v438, %v437
  %v476 = vpack.c.b16 %v440, %v439
  %vm513 = vcmask 523264
  %v515 = vsel %vm513, %v238, 0
  %v518 = vsel %vm513, %v243, 0
  %v521 = vsel %vm513, %v248, 0
  %v524 = vsel %vm513, %v253, 0
  %v527 = vsel %vm513, %v258, 0
  %v530 = vsel %vm513, %v263, 0
  %v533 = vsel %vm513, %v268, 0
  %535 = vmatpush.bf16.msra.mxu0 %v448
  %536 = vmatpush.bf16.msra.mxu0 %v447
  %537 = vmatpush.bf16.msra.mxu0 %v446
  %538 = vmatpush.bf16.msra.mxu0 %v445
  %539 = vmatpush.bf16.msra.mxu0 %v444
  %540 = vmatpush.bf16.msra.mxu0 %v443
  %541 = vmatpush.bf16.msra.mxu0 %v442
  %542 = vmatpush.bf16.msra.mxu0 %v441
  %543 = vmatmul.bf16.gmra.mxu0 %v234
  %v544 = vpop.f32.mrf.mxu0
  %v545 = vadd.f32 %v128, %v544
  %v546 = vpop.f32.mrf.mxu0
  %v547 = vadd.f32 %v128, %v546
  %548 = vmatmul.bf16.gmra.mxu0 %v239
  %v549 = vpop.f32.mrf.mxu0
  %v550 = vadd.f32 %v128, %v549
  %v551 = vpop.f32.mrf.mxu0
  %v552 = vadd.f32 %v128, %v551
  %553 = vmatmul.bf16.gmra.mxu0 %v244
  %v554 = vpop.f32.mrf.mxu0
  %v555 = vadd.f32 %v128, %v554
  %v556 = vpop.f32.mrf.mxu0
  %v557 = vadd.f32 %v128, %v556
  %558 = vmatmul.bf16.gmra.mxu0 %v249
  %v559 = vpop.f32.mrf.mxu0
  %v560 = vadd.f32 %v128, %v559
  %v561 = vpop.f32.mrf.mxu0
  %v562 = vadd.f32 %v128, %v561
  %563 = vmatmul.bf16.gmra.mxu0 %v254
  %v564 = vpop.f32.mrf.mxu0
  %v565 = vadd.f32 %v128, %v564
  %v566 = vpop.f32.mrf.mxu0
  %v567 = vadd.f32 %v128, %v566
  %568 = vmatmul.bf16.gmra.mxu0 %v259
  %v569 = vpop.f32.mrf.mxu0
  %v570 = vadd.f32 %v128, %v569
  %v571 = vpop.f32.mrf.mxu0
  %v572 = vadd.f32 %v128, %v571
  %573 = vmatmul.bf16.gmra.mxu0 %v264
  %v574 = vpop.f32.mrf.mxu0
  %v575 = vadd.f32 %v128, %v574
  %v576 = vpop.f32.mrf.mxu0
  %577 = vdwg.mxu0
  %578 = vmatpush.bf16.msra.mxu0 %v456
  %579 = vmatpush.bf16.msra.mxu0 %v455
  %580 = vmatpush.bf16.msra.mxu0 %v454
  %581 = vmatpush.bf16.msra.mxu0 %v453
  %582 = vmatpush.bf16.msra.mxu0 %v452
  %583 = vmatpush.bf16.msra.mxu0 %v451
  %584 = vmatpush.bf16.msra.mxu0 %v450
  %585 = vmatpush.bf16.msra.mxu0 %v449
  %586 = vmatmul.bf16.gmra.mxu0 %v235
  %v587 = vpop.f32.mrf.mxu0
  %v588 = vadd.f32 %v545, %v587
  %v589 = vpop.f32.mrf.mxu0
  %v590 = vadd.f32 %v547, %v589
  %591 = vmatmul.bf16.gmra.mxu0 %v240
  %v592 = vpop.f32.mrf.mxu0
  %v593 = vadd.f32 %v550, %v592
  %v594 = vpop.f32.mrf.mxu0
  %v595 = vadd.f32 %v552, %v594
  %596 = vmatmul.bf16.gmra.mxu0 %v245
  %v597 = vpop.f32.mrf.mxu0
  %v598 = vadd.f32 %v555, %v597
  %v599 = vpop.f32.mrf.mxu0
  %v600 = vadd.f32 %v557, %v599
  %601 = vmatmul.bf16.gmra.mxu0 %v250
  %v602 = vpop.f32.mrf.mxu0
  %v603 = vadd.f32 %v560, %v602
  %v604 = vpop.f32.mrf.mxu0
  %v605 = vadd.f32 %v562, %v604
  %606 = vmatmul.bf16.gmra.mxu0 %v255
  %v607 = vpop.f32.mrf.mxu0
  %v608 = vadd.f32 %v565, %v607
  %v609 = vpop.f32.mrf.mxu0
  %v610 = vadd.f32 %v567, %v609
  %611 = vmatmul.bf16.gmra.mxu0 %v260
  %v612 = vpop.f32.mrf.mxu0
  %v613 = vadd.f32 %v570, %v612
  %v614 = vpop.f32.mrf.mxu0
  %v615 = vadd.f32 %v572, %v614
  %616 = vmatmul.bf16.gmra.mxu0 %v265
  %v617 = vpop.f32.mrf.mxu0
  %v618 = vadd.f32 %v575, %v617
  %v619 = vpop.f32.mrf.mxu0
  %620 = vdwg.mxu0
  %621 = vmatpush.bf16.msra.mxu0 %v464
  %622 = vmatpush.bf16.msra.mxu0 %v463
  %623 = vmatpush.bf16.msra.mxu0 %v462
  %624 = vmatpush.bf16.msra.mxu0 %v461
  %625 = vmatpush.bf16.msra.mxu0 %v460
  %626 = vmatpush.bf16.msra.mxu0 %v459
  %627 = vmatpush.bf16.msra.mxu0 %v458
  %628 = vmatpush.bf16.msra.mxu0 %v457
  %629 = vmatmul.bf16.gmra.mxu0 %v236
  %v630 = vpop.f32.mrf.mxu0
  %v631 = vadd.f32 %v588, %v630
  %v632 = vpop.f32.mrf.mxu0
  %v633 = vadd.f32 %v590, %v632
  %634 = vmatmul.bf16.gmra.mxu0 %v241
  %v635 = vpop.f32.mrf.mxu0
  %v636 = vadd.f32 %v593, %v635
  %v637 = vpop.f32.mrf.mxu0
  %v638 = vadd.f32 %v595, %v637
  %639 = vmatmul.bf16.gmra.mxu0 %v246
  %v640 = vpop.f32.mrf.mxu0
  %v641 = vadd.f32 %v598, %v640
  %v642 = vpop.f32.mrf.mxu0
  %v643 = vadd.f32 %v600, %v642
  %644 = vmatmul.bf16.gmra.mxu0 %v251
  %v645 = vpop.f32.mrf.mxu0
  %v646 = vadd.f32 %v603, %v645
  %v647 = vpop.f32.mrf.mxu0
  %v648 = vadd.f32 %v605, %v647
  %649 = vmatmul.bf16.gmra.mxu0 %v256
  %v650 = vpop.f32.mrf.mxu0
  %v651 = vadd.f32 %v608, %v650
  %v652 = vpop.f32.mrf.mxu0
  %v653 = vadd.f32 %v610, %v652
  %654 = vmatmul.bf16.gmra.mxu0 %v261
  %v655 = vpop.f32.mrf.mxu0
  %v656 = vadd.f32 %v613, %v655
  %v657 = vpop.f32.mrf.mxu0
  %v658 = vadd.f32 %v615, %v657
  %659 = vmatmul.bf16.gmra.mxu0 %v266
  %v660 = vpop.f32.mrf.mxu0
  %v661 = vadd.f32 %v618, %v660
  %v662 = vpop.f32.mrf.mxu0
  %663 = vdwg.mxu0
  %664 = vmatpush.bf16.msra.mxu0 %v472
  %665 = vmatpush.bf16.msra.mxu0 %v471
  %666 = vmatpush.bf16.msra.mxu0 %v470
  %667 = vmatpush.bf16.msra.mxu0 %v469
  %668 = vmatpush.bf16.msra.mxu0 %v468
  %669 = vmatpush.bf16.msra.mxu0 %v467
  %670 = vmatpush.bf16.msra.mxu0 %v466
  %671 = vmatpush.bf16.msra.mxu0 %v465
  %672 = vmatmul.bf16.gmra.mxu0 %v237
  %v673 = vpop.f32.mrf.mxu0
  %v674 = vadd.f32 %v631, %v673
  %v675 = vpop.f32.mrf.mxu0
  %v676 = vadd.f32 %v633, %v675
  %677 = vmatmul.bf16.gmra.mxu0 %v242
  %v678 = vpop.f32.mrf.mxu0
  %v679 = vadd.f32 %v636, %v678
  %v680 = vpop.f32.mrf.mxu0
  %v681 = vadd.f32 %v638, %v680
  %682 = vmatmul.bf16.gmra.mxu0 %v247
  %v683 = vpop.f32.mrf.mxu0
  %v684 = vadd.f32 %v641, %v683
  %v685 = vpop.f32.mrf.mxu0
  %v686 = vadd.f32 %v643, %v685
  %687 = vmatmul.bf16.gmra.mxu0 %v252
  %v688 = vpop.f32.mrf.mxu0
  %v689 = vadd.f32 %v646, %v688
  %v690 = vpop.f32.mrf.mxu0
  %v691 = vadd.f32 %v648, %v690
  %692 = vmatmul.bf16.gmra.mxu0 %v257
  %v693 = vpop.f32.mrf.mxu0
  %v694 = vadd.f32 %v651, %v693
  %v695 = vpop.f32.mrf.mxu0
  %v696 = vadd.f32 %v653, %v695
  %697 = vmatmul.bf16.gmra.mxu0 %v262
  %v698 = vpop.f32.mrf.mxu0
  %v699 = vadd.f32 %v656, %v698
  %v700 = vpop.f32.mrf.mxu0
  %v701 = vadd.f32 %v658, %v700
  %702 = vmatmul.bf16.gmra.mxu0 %v267
  %v703 = vpop.f32.mrf.mxu0
  %v704 = vadd.f32 %v661, %v703
  %v705 = vpop.f32.mrf.mxu0
  %706 = vdwg.mxu0
  %707 = vmatpush.bf16.msra.mxu0 0
  %708 = vmatpush.bf16.msra.mxu0 0
  %709 = vmatpush.bf16.msra.mxu0 0
  %710 = vmatpush.bf16.msra.mxu0 0
  %711 = vmatpush.bf16.msra.mxu0 %v476
  %712 = vmatpush.bf16.msra.mxu0 %v475
  %713 = vmatpush.bf16.msra.mxu0 %v474
  %714 = vmatpush.bf16.msra.mxu0 %v473
  %715 = vmatmul.bf16.gmra.mxu0 %v515
  %v716 = vpop.f32.mrf.mxu0
  %v717 = vadd.f32 %v674, %v716
  %v718 = vpop.f32.mrf.mxu0
  %v719 = vadd.f32 %v676, %v718
  %720 = vmatmul.bf16.gmra.mxu0 %v518
  %v721 = vpop.f32.mrf.mxu0
  %v722 = vadd.f32 %v679, %v721
  %v723 = vpop.f32.mrf.mxu0
  %v724 = vadd.f32 %v681, %v723
  %725 = vmatmul.bf16.gmra.mxu0 %v521
  %v726 = vpop.f32.mrf.mxu0
  %v727 = vadd.f32 %v684, %v726
  %v728 = vpop.f32.mrf.mxu0
  %v729 = vadd.f32 %v686, %v728
  %730 = vmatmul.bf16.gmra.mxu0 %v524
  %v731 = vpop.f32.mrf.mxu0
  %v732 = vadd.f32 %v689, %v731
  %v733 = vpop.f32.mrf.mxu0
  %v734 = vadd.f32 %v691, %v733
  %735 = vmatmul.bf16.gmra.mxu0 %v527
  %v736 = vpop.f32.mrf.mxu0
  %v737 = vadd.f32 %v694, %v736
  %v738 = vpop.f32.mrf.mxu0
  %v739 = vadd.f32 %v696, %v738
  %740 = vmatmul.bf16.gmra.mxu0 %v530
  %v741 = vpop.f32.mrf.mxu0
  %v742 = vadd.f32 %v699, %v741
  %v743 = vpop.f32.mrf.mxu0
  %v744 = vadd.f32 %v701, %v743
  %745 = vmatmul.bf16.gmra.mxu0 %v533
  %v746 = vpop.f32.mrf.mxu0
  %v747 = vadd.f32 %v704, %v746
  %v748 = vpop.f32.mrf.mxu0
  %749 = vdwg.mxu0
  %v750 = vmax.f32 %v717, 0.0
  %v751 = vmax.f32 %v719, 0.0
  %v752 = vmax.f32 %v722, 0.0
  %v753 = vmax.f32 %v724, 0.0
  %v754 = vmax.f32 %v727, 0.0
  %v755 = vmax.f32 %v729, 0.0
  %v756 = vmax.f32 %v732, 0.0
  %v757 = vmax.f32 %v734, 0.0
  %v758 = vmax.f32 %v737, 0.0
  %v759 = vmax.f32 %v739, 0.0
  %v760 = vmax.f32 %v742, 0.0
  %v761 = vmax.f32 %v744, 0.0
  %v762 = vmax.f32 %v747, 0.0
  %v763 = vpack.c.bf16 %v750, %v750
  %v764 = vpack.c.bf16 %v751, %v751
  %v765 = vpack.c.bf16 %v752, %v752
  %v766 = vpack.c.bf16 %v753, %v753
  %v767 = vpack.c.bf16 %v754, %v754
  %v768 = vpack.c.bf16 %v755, %v755
  %v769 = vpack.c.bf16 %v756, %v756
  %v770 = vpack.c.bf16 %v757, %v757
  %v771 = vpack.c.bf16 %v758, %v758
  %v772 = vpack.c.bf16 %v759, %v759
  %v773 = vpack.c.bf16 %v760, %v760
  %v774 = vpack.c.bf16 %v761, %v761
  %v775 = vpack.c.bf16 %v762, %v762
  %vm776 = vcmask 519168
  %777 = vst.msk [vmem:[%s3] sm:$0xf] %vm776, %v763
  %778 = vst.msk [vmem:[%s3 + $0x4] sm:$0xf] %vm776, %v764
  %779 = vst.msk [vmem:[%s3 + $0x8] sm:$0xf] %vm776, %v765
  %780 = vst.msk [vmem:[%s3 + $0xc] sm:$0xf] %vm776, %v766
  %781 = vst.msk [vmem:[%s3 + $0x10] sm:$0xf] %vm776, %v767
  %782 = vst.msk [vmem:[%s3 + $0x14] sm:$0xf] %vm776, %v768
  %783 = vst.msk [vmem:[%s3 + $0x18] sm:$0xf] %vm776, %v769
  %784 = vst.msk [vmem:[%s3 + $0x1c] sm:$0xf] %vm776, %v770
  %785 = vst.msk [vmem:[%s3 + $0x20] sm:$0xf] %vm776, %v771
  %786 = vst.msk [vmem:[%s3 + $0x24] sm:$0xf] %vm776, %v772
  %787 = vst.msk [vmem:[%s3 + $0x28] sm:$0xf] %vm776, %v773
  %788 = vst.msk [vmem:[%s3 + $0x2c] sm:$0xf] %vm776, %v774
  %vm789 = vcmask 516096
  %790 = vst.msk [vmem:[%s3 + $0x30] sm:$0x1] %vm789, %v775
  // Predicated region
  $region14: #{forward.7} parent=0 // pred_check
    _
  $region15: #{forward.7} parent=0 // pred_check_branch
    %792 = sbr.rel (0) target = $region17
  $region16: #{forward.7} parent=0 // pred_region
    _
  $region17: #{forward.7} parent=0 // pred_fallthru
    _
  // Predicated region
  $region18: #{forward.7} parent=0 // pred_check
    _
  $region19: #{forward.7} parent=0 // pred_check_branch
    %794 = sbr.rel (0) target = $region21
  $region20: #{forward.7} parent=0 // pred_region
    _
  $region21: #{forward.7} parent=0 // pred_fallthru
    _

// kernel: forward.9
$region0: #{forward.9}
  #allocation0 [shape = 'u32[]', space=smem, size = 0x4, offset = 0x4, fixed_abs, tag = 'smem constant byte address 0x4 - core index']
  #allocation1 [shape = 'u32[72,128]{1,0:T(1,128)}', space=vmem, size = 0x9000, scoped, tag = 'internal scratch']
  #allocation2 [shape = 'f32[1,1]{1,0:T(1,128)S(1)}', space=vmem, size = 0x200, scoped, tag = 'scoped memory for forward.9']
  %s0 = inlined_call_operand.vmem [shape: f32[256,2], index: 0, kind: input, shape index: {}]
  %s1 = inlined_call_operand.vmem [shape: f32[256,2], index: 1, kind: input, shape index: {}]
  %s2 = inlined_call_operand.vmem [shape: f32[256,1], index: 2, kind: input, shape index: {}]
  %s3 = inlined_call_operand.vmem [shape: f32[256,1], index: 3, kind: input, shape index: {}]
  %s4 = inlined_call_operand.vmem [shape: f32[6,256], index: 4, kind: input, shape index: {}]
  %s5 = inlined_call_operand.vmem [shape: f32[6,1], index: 5, kind: input, shape index: {}]
  %s6 = inlined_call_operand.vmem [shape: f32[1,256], index: 6, kind: input, shape index: {}]
  %s7 = inlined_call_operand.<no memory space> [shape: f32[1,1], index: 7, kind: input, shape index: {}]
  %s8 = inlined_call_operand.vmem [shape: f32[6,2], index: 8, kind: output, shape index: {}]
  %s9 = sld [smem:[#allocation0]]
  $region42: #{forward.9} parent=0
    _
  %s11 = ssub.s32 1, %s9
  %s12 = scalar_select 0, %s11, %s9
  %v13 = vstv %s7
  %14 = vst [vmem:[#allocation2] sm:$0x1] %v13
  // Predicated region
  $region2: #{forward.9} parent=0 // pred_check
    _
  $region3: #{forward.9} parent=0 // pred_check_branch
    %16 = sbr.rel (0) target = $region5
  $region4: #{forward.9} parent=0 // pred_region
    _
  $region5: #{forward.9} parent=0 // pred_fallthru
    _
  // Predicated region
  $region6: #{forward.9} parent=0 // pred_check
    _
  $region7: #{forward.9} parent=0 // pred_check_branch
    %18 = sbr.rel (0) target = $region9
  $region8: #{forward.9} parent=0 // pred_region
    _
  $region9: #{forward.9} parent=0 // pred_fallthru
    _
  // Predicated region
  $region10: #{forward.9} parent=0 // pred_check
    _
  $region11: #{forward.9} parent=0 // pred_check_branch
    %20 = sbr.rel (0) target = $region13
  $region12: #{forward.9} parent=0 // pred_region
    _
  $region13: #{forward.9} parent=0 // pred_fallthru
    _
  // Predicated region
  $region14: #{forward.9} parent=0 // pred_check
    _
  $region15: #{forward.9} parent=0 // pred_check_branch
    %22 = sbr.rel (0) target = $region17
  $region16: #{forward.9} parent=0 // pred_region
    _
  $region17: #{forward.9} parent=0 // pred_fallthru
    _
  // Predicated region
  $region18: #{forward.9} parent=0 // pred_check
    _
  $region19: #{forward.9} parent=0 // pred_check_branch
    %24 = sbr.rel (0) target = $region21
  $region20: #{forward.9} parent=0 // pred_region
    _
  $region21: #{forward.9} parent=0 // pred_fallthru
    _
  // Predicated region
  $region22: #{forward.9} parent=0 // pred_check
    _
  $region23: #{forward.9} parent=0 // pred_check_branch
    %26 = sbr.rel (0) target = $region25
  $region24: #{forward.9} parent=0 // pred_region
    _
  $region25: #{forward.9} parent=0 // pred_fallthru
    _
  // Predicated region
  $region26: #{forward.9} parent=0 // pred_check
    _
  $region27: #{forward.9} parent=0 // pred_check_branch
    %28 = sbr.rel (0) target = $region29
  $region28: #{forward.9} parent=0 // pred_region
    _
  $region29: #{forward.9} parent=0 // pred_fallthru
    _
  // Predicated region
  $region30: #{forward.9} parent=0 // pred_check
    _
  $region31: #{forward.9} parent=0 // pred_check_branch
    %30 = sbr.rel (0) target = $region33
  $region32: #{forward.9} parent=0 // pred_region
    _
  $region33: #{forward.9} parent=0 // pred_fallthru
    _
  %v31 = vld [vmem:[%s0] sm:$0xff]
  %v32 = vld [vmem:[%s0 + $0x8] sm:$0xff]
  %v33 = vld [vmem:[%s0 + $0x10] sm:$0xff]
  %v34 = vld [vmem:[%s0 + $0x18] sm:$0xff]
  %v35 = vld [vmem:[%s0 + $0x20] sm:$0xff]
  %v36 = vld [vmem:[%s0 + $0x28] sm:$0xff]
  %v37 = vld [vmem:[%s0 + $0x30] sm:$0xff]
  %v38 = vld [vmem:[%s0 + $0x38] sm:$0xff]
  %v39 = vld [vmem:[%s0 + $0x40] sm:$0xff]
  %v40 = vld [vmem:[%s0 + $0x48] sm:$0xff]
  %v41 = vld [vmem:[%s0 + $0x50] sm:$0xff]
  %v42 = vld [vmem:[%s0 + $0x58] sm:$0xff]
  %v43 = vld [vmem:[%s0 + $0x60] sm:$0xff]
  %v44 = vld [vmem:[%s0 + $0x68] sm:$0xff]
  %v45 = vld [vmem:[%s0 + $0x70] sm:$0xff]
  %v46 = vld [vmem:[%s0 + $0x78] sm:$0xff]
  %v47 = vld [vmem:[%s0 + $0x80] sm:$0xff]
  %v48 = vld [vmem:[%s0 + $0x88] sm:$0xff]
  %v49 = vld [vmem:[%s0 + $0x90] sm:$0xff]
  %v50 = vld [vmem:[%s0 + $0x98] sm:$0xff]
  %v51 = vld [vmem:[%s0 + $0xa0] sm:$0xff]
  %v52 = vld [vmem:[%s0 + $0xa8] sm:$0xff]
  %v53 = vld [vmem:[%s0 + $0xb0] sm:$0xff]
  %v54 = vld [vmem:[%s0 + $0xb8] sm:$0xff]
  %v55 = vld [vmem:[%s0 + $0xc0] sm:$0xff]
  %v56 = vld [vmem:[%s0 + $0xc8] sm:$0xff]
  %v57 = vld [vmem:[%s0 + $0xd0] sm:$0xff]
  %v58 = vld [vmem:[%s0 + $0xd8] sm:$0xff]
  %v59 = vld [vmem:[%s0 + $0xe0] sm:$0xff]
  %v60 = vld [vmem:[%s0 + $0xe8] sm:$0xff]
  %v61 = vld [vmem:[%s0 + $0xf0] sm:$0xff]
  %v62 = vld [vmem:[%s0 + $0xf8] sm:$0xff]
  %v63 = vld [vmem:[%s2] sm:$0xff]
  %v64 = vld [vmem:[%s2 + $0x8] sm:$0xff]
  %v65 = vld [vmem:[%s2 + $0x10] sm:$0xff]
  %v66 = vld [vmem:[%s2 + $0x18] sm:$0xff]
  %v67 = vld [vmem:[%s2 + $0x20] sm:$0xff]
  %v68 = vld [vmem:[%s2 + $0x28] sm:$0xff]
  %v69 = vld [vmem:[%s2 + $0x30] sm:$0xff]
  %v70 = vld [vmem:[%s2 + $0x38] sm:$0xff]
  %v71 = vld [vmem:[%s2 + $0x40] sm:$0xff]
  %v72 = vld [vmem:[%s2 + $0x48] sm:$0xff]
  %v73 = vld [vmem:[%s2 + $0x50] sm:$0xff]
  %v74 = vld [vmem:[%s2 + $0x58] sm:$0xff]
  %v75 = vld [vmem:[%s2 + $0x60] sm:$0xff]
  %v76 = vld [vmem:[%s2 + $0x68] sm:$0xff]
  %v77 = vld [vmem:[%s2 + $0x70] sm:$0xff]
  %v78 = vld [vmem:[%s2 + $0x78] sm:$0xff]
  %v79 = vld [vmem:[%s2 + $0x80] sm:$0xff]
  %v80 = vld [vmem:[%s2 + $0x88] sm:$0xff]
  %v81 = vld [vmem:[%s2 + $0x90] sm:$0xff]
  %v82 = vld [vmem:[%s2 + $0x98] sm:$0xff]
  %v83 = vld [vmem:[%s2 + $0xa0] sm:$0xff]
  %v84 = vld [vmem:[%s2 + $0xa8] sm:$0xff]
  %v85 = vld [vmem:[%s2 + $0xb0] sm:$0xff]
  %v86 = vld [vmem:[%s2 + $0xb8] sm:$0xff]
  %v87 = vld [vmem:[%s2 + $0xc0] sm:$0xff]
  %v88 = vld [vmem:[%s2 + $0xc8] sm:$0xff]
  %v89 = vld [vmem:[%s2 + $0xd0] sm:$0xff]
  %v90 = vld [vmem:[%s2 + $0xd8] sm:$0xff]
  %v91 = vld [vmem:[%s2 + $0xe0] sm:$0xff]
  %v92 = vld [vmem:[%s2 + $0xe8] sm:$0xff]
  %v93 = vld [vmem:[%s2 + $0xf0] sm:$0xff]
  %v94 = vld [vmem:[%s2 + $0xf8] sm:$0xff]
  %96 = vset.pattern.permute.xlu0 0
  %97 = vperm.xlu0 %96, %v63
  %v98 = vpop.permute.xlu0 %97
  %101 = vset.pattern.permute.xlu0 0
  %102 = vperm.xlu0 %101, %v64
  %v103 = vpop.permute.xlu0 %102
  %106 = vset.pattern.permute.xlu0 0
  %107 = vperm.xlu0 %106, %v65
  %v108 = vpop.permute.xlu0 %107
  %111 = vset.pattern.permute.xlu0 0
  %112 = vperm.xlu0 %111, %v66
  %v113 = vpop.permute.xlu0 %112
  %116 = vset.pattern.permute.xlu0 0
  %117 = vperm.xlu0 %116, %v67
  %v118 = vpop.permute.xlu0 %117
  %121 = vset.pattern.permute.xlu0 0
  %122 = vperm.xlu0 %121, %v68
  %v123 = vpop.permute.xlu0 %122
  %126 = vset.pattern.permute.xlu0 0
  %127 = vperm.xlu0 %126, %v69
  %v128 = vpop.permute.xlu0 %127
  %131 = vset.pattern.permute.xlu0 0
  %132 = vperm.xlu0 %131, %v70
  %v133 = vpop.permute.xlu0 %132
  %136 = vset.pattern.permute.xlu0 0
  %137 = vperm.xlu0 %136, %v71
  %v138 = vpop.permute.xlu0 %137
  %141 = vset.pattern.permute.xlu0 0
  %142 = vperm.xlu0 %141, %v72
  %v143 = vpop.permute.xlu0 %142
  %146 = vset.pattern.permute.xlu0 0
  %147 = vperm.xlu0 %146, %v73
  %v148 = vpop.permute.xlu0 %147
  %151 = vset.pattern.permute.xlu0 0
  %152 = vperm.xlu0 %151, %v74
  %v153 = vpop.permute.xlu0 %152
  %156 = vset.pattern.permute.xlu0 0
  %157 = vperm.xlu0 %156, %v75
  %v158 = vpop.permute.xlu0 %157
  %161 = vset.pattern.permute.xlu0 0
  %162 = vperm.xlu0 %161, %v76
  %v163 = vpop.permute.xlu0 %162
  %166 = vset.pattern.permute.xlu0 0
  %167 = vperm.xlu0 %166, %v77
  %v168 = vpop.permute.xlu0 %167
  %171 = vset.pattern.permute.xlu0 0
  %172 = vperm.xlu0 %171, %v78
  %v173 = vpop.permute.xlu0 %172
  %176 = vset.pattern.permute.xlu0 0
  %177 = vperm.xlu0 %176, %v79
  %v178 = vpop.permute.xlu0 %177
  %181 = vset.pattern.permute.xlu0 0
  %182 = vperm.xlu0 %181, %v80
  %v183 = vpop.permute.xlu0 %182
  %186 = vset.pattern.permute.xlu0 0
  %187 = vperm.xlu0 %186, %v81
  %v188 = vpop.permute.xlu0 %187
  %191 = vset.pattern.permute.xlu0 0
  %192 = vperm.xlu0 %191, %v82
  %v193 = vpop.permute.xlu0 %192
  %196 = vset.pattern.permute.xlu0 0
  %197 = vperm.xlu0 %196, %v83
  %v198 = vpop.permute.xlu0 %197
  %201 = vset.pattern.permute.xlu0 0
  %202 = vperm.xlu0 %201, %v84
  %v203 = vpop.permute.xlu0 %202
  %206 = vset.pattern.permute.xlu0 0
  %207 = vperm.xlu0 %206, %v85
  %v208 = vpop.permute.xlu0 %207
  %211 = vset.pattern.permute.xlu0 0
  %212 = vperm.xlu0 %211, %v86
  %v213 = vpop.permute.xlu0 %212
  %216 = vset.pattern.permute.xlu0 0
  %217 = vperm.xlu0 %216, %v87
  %v218 = vpop.permute.xlu0 %217
  %221 = vset.pattern.permute.xlu0 0
  %222 = vperm.xlu0 %221, %v88
  %v223 = vpop.permute.xlu0 %222
  %226 = vset.pattern.permute.xlu0 0
  %227 = vperm.xlu0 %226, %v89
  %v228 = vpop.permute.xlu0 %227
  %231 = vset.pattern.permute.xlu0 0
  %232 = vperm.xlu0 %231, %v90
  %v233 = vpop.permute.xlu0 %232
  %236 = vset.pattern.permute.xlu0 0
  %237 = vperm.xlu0 %236, %v91
  %v238 = vpop.permute.xlu0 %237
  %241 = vset.pattern.permute.xlu0 0
  %242 = vperm.xlu0 %241, %v92
  %v243 = vpop.permute.xlu0 %242
  %246 = vset.pattern.permute.xlu0 0
  %247 = vperm.xlu0 %246, %v93
  %v248 = vpop.permute.xlu0 %247
  %251 = vset.pattern.permute.xlu0 0
  %252 = vperm.xlu0 %251, %v94
  %v253 = vpop.permute.xlu0 %252
  %v255 = vadd.f32 %v31, %v98
  %v256 = vadd.f32 %v32, %v103
  %v257 = vadd.f32 %v33, %v108
  %v258 = vadd.f32 %v34, %v113
  %v259 = vadd.f32 %v35, %v118
  %v260 = vadd.f32 %v36, %v123
  %v261 = vadd.f32 %v37, %v128
  %v262 = vadd.f32 %v38, %v133
  %v263 = vadd.f32 %v39, %v138
  %v264 = vadd.f32 %v40, %v143
  %v265 = vadd.f32 %v41, %v148
  %v266 = vadd.f32 %v42, %v153
  %v267 = vadd.f32 %v43, %v158
  %v268 = vadd.f32 %v44, %v163
  %v269 = vadd.f32 %v45, %v168
  %v270 = vadd.f32 %v46, %v173
  %v271 = vadd.f32 %v47, %v178
  %v272 = vadd.f32 %v48, %v183
  %v273 = vadd.f32 %v49, %v188
  %v274 = vadd.f32 %v50, %v193
  %v275 = vadd.f32 %v51, %v198
  %v276 = vadd.f32 %v52, %v203
  %v277 = vadd.f32 %v53, %v208
  %v278 = vadd.f32 %v54, %v213
  %v279 = vadd.f32 %v55, %v218
  %v280 = vadd.f32 %v56, %v223
  %v281 = vadd.f32 %v57, %v228
  %v282 = vadd.f32 %v58, %v233
  %v283 = vadd.f32 %v59, %v238
  %v284 = vadd.f32 %v60, %v243
  %v285 = vadd.f32 %v61, %v248
  %v286 = vadd.f32 %v62, %v253
  %v287 = vmax.f32 %v255, 0.0
  %v288 = vmax.f32 %v256, 0.0
  %v289 = vmax.f32 %v257, 0.0
  %v290 = vmax.f32 %v258, 0.0
  %v291 = vmax.f32 %v259, 0.0
  %v292 = vmax.f32 %v260, 0.0
  %v293 = vmax.f32 %v261, 0.0
  %v294 = vmax.f32 %v262, 0.0
  %v295 = vmax.f32 %v263, 0.0
  %v296 = vmax.f32 %v264, 0.0
  %v297 = vmax.f32 %v265, 0.0
  %v298 = vmax.f32 %v266, 0.0
  %v299 = vmax.f32 %v267, 0.0
  %v300 = vmax.f32 %v268, 0.0
  %v301 = vmax.f32 %v269, 0.0
  %v302 = vmax.f32 %v270, 0.0
  %v303 = vmax.f32 %v271, 0.0
  %v304 = vmax.f32 %v272, 0.0
  %v305 = vmax.f32 %v273, 0.0
  %v306 = vmax.f32 %v274, 0.0
  %v307 = vmax.f32 %v275, 0.0
  %v308 = vmax.f32 %v276, 0.0
  %v309 = vmax.f32 %v277, 0.0
  %v310 = vmax.f32 %v278, 0.0
  %v311 = vmax.f32 %v279, 0.0
  %v312 = vmax.f32 %v280, 0.0
  %v313 = vmax.f32 %v281, 0.0
  %v314 = vmax.f32 %v282, 0.0
  %v315 = vmax.f32 %v283, 0.0
  %v316 = vmax.f32 %v284, 0.0
  %v317 = vmax.f32 %v285, 0.0
  %v318 = vmax.f32 %v286, 0.0
  %v319 = vpack.c.bf16 %v288, %v287
  %v320 = vpack.c.bf16 %v290, %v289
  %v321 = vpack.c.bf16 %v292, %v291
  %v322 = vpack.c.bf16 %v294, %v293
  %v323 = vpack.c.bf16 %v296, %v295
  %v324 = vpack.c.bf16 %v298, %v297
  %v325 = vpack.c.bf16 %v300, %v299
  %v326 = vpack.c.bf16 %v302, %v301
  %v327 = vpack.c.bf16 %v304, %v303
  %v328 = vpack.c.bf16 %v306, %v305
  %v329 = vpack.c.bf16 %v308, %v307
  %v330 = vpack.c.bf16 %v310, %v309
  %v331 = vpack.c.bf16 %v312, %v311
  %v332 = vpack.c.bf16 %v314, %v313
  %v333 = vpack.c.bf16 %v316, %v315
  %v334 = vpack.c.bf16 %v318, %v317
  %v335 = vld [vmem:[%s1] sm:$0xff]
  %v336 = vld [vmem:[%s1 + $0x8] sm:$0xff]
  %v337 = vld [vmem:[%s1 + $0x10] sm:$0xff]
  %v338 = vld [vmem:[%s1 + $0x18] sm:$0xff]
  %v339 = vld [vmem:[%s1 + $0x20] sm:$0xff]
  %v340 = vld [vmem:[%s1 + $0x28] sm:$0xff]
  %v341 = vld [vmem:[%s1 + $0x30] sm:$0xff]
  %v342 = vld [vmem:[%s1 + $0x38] sm:$0xff]
  %v343 = vld [vmem:[%s1 + $0x40] sm:$0xff]
  %v344 = vld [vmem:[%s1 + $0x48] sm:$0xff]
  %v345 = vld [vmem:[%s1 + $0x50] sm:$0xff]
  %v346 = vld [vmem:[%s1 + $0x58] sm:$0xff]
  %v347 = vld [vmem:[%s1 + $0x60] sm:$0xff]
  %v348 = vld [vmem:[%s1 + $0x68] sm:$0xff]
  %v349 = vld [vmem:[%s1 + $0x70] sm:$0xff]
  %v350 = vld [vmem:[%s1 + $0x78] sm:$0xff]
  %v351 = vld [vmem:[%s1 + $0x80] sm:$0xff]
  %v352 = vld [vmem:[%s1 + $0x88] sm:$0xff]
  %v353 = vld [vmem:[%s1 + $0x90] sm:$0xff]
  %v354 = vld [vmem:[%s1 + $0x98] sm:$0xff]
  %v355 = vld [vmem:[%s1 + $0xa0] sm:$0xff]
  %v356 = vld [vmem:[%s1 + $0xa8] sm:$0xff]
  %v357 = vld [vmem:[%s1 + $0xb0] sm:$0xff]
  %v358 = vld [vmem:[%s1 + $0xb8] sm:$0xff]
  %v359 = vld [vmem:[%s1 + $0xc0] sm:$0xff]
  %v360 = vld [vmem:[%s1 + $0xc8] sm:$0xff]
  %v361 = vld [vmem:[%s1 + $0xd0] sm:$0xff]
  %v362 = vld [vmem:[%s1 + $0xd8] sm:$0xff]
  %v363 = vld [vmem:[%s1 + $0xe0] sm:$0xff]
  %v364 = vld [vmem:[%s1 + $0xe8] sm:$0xff]
  %v365 = vld [vmem:[%s1 + $0xf0] sm:$0xff]
  %v366 = vld [vmem:[%s1 + $0xf8] sm:$0xff]
  %v367 = vld [vmem:[%s3] sm:$0xff]
  %v368 = vld [vmem:[%s3 + $0x8] sm:$0xff]
  %v369 = vld [vmem:[%s3 + $0x10] sm:$0xff]
  %v370 = vld [vmem:[%s3 + $0x18] sm:$0xff]
  %v371 = vld [vmem:[%s3 + $0x20] sm:$0xff]
  %v372 = vld [vmem:[%s3 + $0x28] sm:$0xff]
  %v373 = vld [vmem:[%s3 + $0x30] sm:$0xff]
  %v374 = vld [vmem:[%s3 + $0x38] sm:$0xff]
  %v375 = vld [vmem:[%s3 + $0x40] sm:$0xff]
  %v376 = vld [vmem:[%s3 + $0x48] sm:$0xff]
  %v377 = vld [vmem:[%s3 + $0x50] sm:$0xff]
  %v378 = vld [vmem:[%s3 + $0x58] sm:$0xff]
  %v379 = vld [vmem:[%s3 + $0x60] sm:$0xff]
  %v380 = vld [vmem:[%s3 + $0x68] sm:$0xff]
  %v381 = vld [vmem:[%s3 + $0x70] sm:$0xff]
  %v382 = vld [vmem:[%s3 + $0x78] sm:$0xff]
  %v383 = vld [vmem:[%s3 + $0x80] sm:$0xff]
  %v384 = vld [vmem:[%s3 + $0x88] sm:$0xff]
  %v385 = vld [vmem:[%s3 + $0x90] sm:$0xff]
  %v386 = vld [vmem:[%s3 + $0x98] sm:$0xff]
  %v387 = vld [vmem:[%s3 + $0xa0] sm:$0xff]
  %v388 = vld [vmem:[%s3 + $0xa8] sm:$0xff]
  %v389 = vld [vmem:[%s3 + $0xb0] sm:$0xff]
  %v390 = vld [vmem:[%s3 + $0xb8] sm:$0xff]
  %v391 = vld [vmem:[%s3 + $0xc0] sm:$0xff]
  %v392 = vld [vmem:[%s3 + $0xc8] sm:$0xff]
  %v393 = vld [vmem:[%s3 + $0xd0] sm:$0xff]
  %v394 = vld [vmem:[%s3 + $0xd8] sm:$0xff]
  %v395 = vld [vmem:[%s3 + $0xe0] sm:$0xff]
  %v396 = vld [vmem:[%s3 + $0xe8] sm:$0xff]
  %v397 = vld [vmem:[%s3 + $0xf0] sm:$0xff]
  %v398 = vld [vmem:[%s3 + $0xf8] sm:$0xff]
  %400 = vset.pattern.permute.xlu0 0
  %401 = vperm.xlu0 %400, %v367
  %v402 = vpop.permute.xlu0 %401
  %405 = vset.pattern.permute.xlu0 0
  %406 = vperm.xlu0 %405, %v368
  %v407 = vpop.permute.xlu0 %406
  %410 = vset.pattern.permute.xlu0 0
  %411 = vperm.xlu0 %410, %v369
  %v412 = vpop.permute.xlu0 %411
  %415 = vset.pattern.permute.xlu0 0
  %416 = vperm.xlu0 %415, %v370
  %v417 = vpop.permute.xlu0 %416
  %420 = vset.pattern.permute.xlu0 0
  %421 = vperm.xlu0 %420, %v371
  %v422 = vpop.permute.xlu0 %421
  %425 = vset.pattern.permute.xlu0 0
  %426 = vperm.xlu0 %425, %v372
  %v427 = vpop.permute.xlu0 %426
  %430 = vset.pattern.permute.xlu0 0
  %431 = vperm.xlu0 %430, %v373
  %v432 = vpop.permute.xlu0 %431
  %435 = vset.pattern.permute.xlu0 0
  %436 = vperm.xlu0 %435, %v374
  %v437 = vpop.permute.xlu0 %436
  %440 = vset.pattern.permute.xlu0 0
  %441 = vperm.xlu0 %440, %v375
  %v442 = vpop.permute.xlu0 %441
  %445 = vset.pattern.permute.xlu0 0
  %446 = vperm.xlu0 %445, %v376
  %v447 = vpop.permute.xlu0 %446
  %450 = vset.pattern.permute.xlu0 0
  %451 = vperm.xlu0 %450, %v377
  %v452 = vpop.permute.xlu0 %451
  %455 = vset.pattern.permute.xlu0 0
  %456 = vperm.xlu0 %455, %v378
  %v457 = vpop.permute.xlu0 %456
  %460 = vset.pattern.permute.xlu0 0
  %461 = vperm.xlu0 %460, %v379
  %v462 = vpop.permute.xlu0 %461
  %465 = vset.pattern.permute.xlu0 0
  %466 = vperm.xlu0 %465, %v380
  %v467 = vpop.permute.xlu0 %466
  %470 = vset.pattern.permute.xlu0 0
  %471 = vperm.xlu0 %470, %v381
  %v472 = vpop.permute.xlu0 %471
  %475 = vset.pattern.permute.xlu0 0
  %476 = vperm.xlu0 %475, %v382
  %v477 = vpop.permute.xlu0 %476
  %480 = vset.pattern.permute.xlu0 0
  %481 = vperm.xlu0 %480, %v383
  %v482 = vpop.permute.xlu0 %481
  %485 = vset.pattern.permute.xlu0 0
  %486 = vperm.xlu0 %485, %v384
  %v487 = vpop.permute.xlu0 %486
  %490 = vset.pattern.permute.xlu0 0
  %491 = vperm.xlu0 %490, %v385
  %v492 = vpop.permute.xlu0 %491
  %495 = vset.pattern.permute.xlu0 0
  %496 = vperm.xlu0 %495, %v386
  %v497 = vpop.permute.xlu0 %496
  %500 = vset.pattern.permute.xlu0 0
  %501 = vperm.xlu0 %500, %v387
  %v502 = vpop.permute.xlu0 %501
  %505 = vset.pattern.permute.xlu0 0
  %506 = vperm.xlu0 %505, %v388
  %v507 = vpop.permute.xlu0 %506
  %510 = vset.pattern.permute.xlu0 0
  %511 = vperm.xlu0 %510, %v389
  %v512 = vpop.permute.xlu0 %511
  %515 = vset.pattern.permute.xlu0 0
  %516 = vperm.xlu0 %515, %v390
  %v517 = vpop.permute.xlu0 %516
  %520 = vset.pattern.permute.xlu0 0
  %521 = vperm.xlu0 %520, %v391
  %v522 = vpop.permute.xlu0 %521
  %525 = vset.pattern.permute.xlu0 0
  %526 = vperm.xlu0 %525, %v392
  %v527 = vpop.permute.xlu0 %526
  %530 = vset.pattern.permute.xlu0 0
  %531 = vperm.xlu0 %530, %v393
  %v532 = vpop.permute.xlu0 %531
  %535 = vset.pattern.permute.xlu0 0
  %536 = vperm.xlu0 %535, %v394
  %v537 = vpop.permute.xlu0 %536
  %540 = vset.pattern.permute.xlu0 0
  %541 = vperm.xlu0 %540, %v395
  %v542 = vpop.permute.xlu0 %541
  %545 = vset.pattern.permute.xlu0 0
  %546 = vperm.xlu0 %545, %v396
  %v547 = vpop.permute.xlu0 %546
  %550 = vset.pattern.permute.xlu0 0
  %551 = vperm.xlu0 %550, %v397
  %v552 = vpop.permute.xlu0 %551
  %555 = vset.pattern.permute.xlu0 0
  %556 = vperm.xlu0 %555, %v398
  %v557 = vpop.permute.xlu0 %556
  %v559 = vadd.f32 %v335, %v402
  %v560 = vadd.f32 %v336, %v407
  %v561 = vadd.f32 %v337, %v412
  %v562 = vadd.f32 %v338, %v417
  %v563 = vadd.f32 %v339, %v422
  %v564 = vadd.f32 %v340, %v427
  %v565 = vadd.f32 %v341, %v432
  %v566 = vadd.f32 %v342, %v437
  %v567 = vadd.f32 %v343, %v442
  %v568 = vadd.f32 %v344, %v447
  %v569 = vadd.f32 %v345, %v452
  %v570 = vadd.f32 %v346, %v457
  %v571 = vadd.f32 %v347, %v462
  %v572 = vadd.f32 %v348, %v467
  %v573 = vadd.f32 %v349, %v472
  %v574 = vadd.f32 %v350, %v477
  %v575 = vadd.f32 %v351, %v482
  %v576 = vadd.f32 %v352, %v487
  %v577 = vadd.f32 %v353, %v492
  %v578 = vadd.f32 %v354, %v497
  %v579 = vadd.f32 %v355, %v502
  %v580 = vadd.f32 %v356, %v507
  %v581 = vadd.f32 %v357, %v512
  %v582 = vadd.f32 %v358, %v517
  %v583 = vadd.f32 %v359, %v522
  %v584 = vadd.f32 %v360, %v527
  %v585 = vadd.f32 %v361, %v532
  %v586 = vadd.f32 %v362, %v537
  %v587 = vadd.f32 %v363, %v542
  %v588 = vadd.f32 %v364, %v547
  %v589 = vadd.f32 %v365, %v552
  %v590 = vadd.f32 %v366, %v557
  %v591 = vmax.f32 %v559, 0.0
  %v592 = vmax.f32 %v560, 0.0
  %v593 = vmax.f32 %v561, 0.0
  %v594 = vmax.f32 %v562, 0.0
  %v595 = vmax.f32 %v563, 0.0
  %v596 = vmax.f32 %v564, 0.0
  %v597 = vmax.f32 %v565, 0.0
  %v598 = vmax.f32 %v566, 0.0
  %v599 = vmax.f32 %v567, 0.0
  %v600 = vmax.f32 %v568, 0.0
  %v601 = vmax.f32 %v569, 0.0
  %v602 = vmax.f32 %v570, 0.0
  %v603 = vmax.f32 %v571, 0.0
  %v604 = vmax.f32 %v572, 0.0
  %v605 = vmax.f32 %v573, 0.0
  %v606 = vmax.f32 %v574, 0.0
  %v607 = vmax.f32 %v575, 0.0
  %v608 = vmax.f32 %v576, 0.0
  %v609 = vmax.f32 %v577, 0.0
  %v610 = vmax.f32 %v578, 0.0
  %v611 = vmax.f32 %v579, 0.0
  %v612 = vmax.f32 %v580, 0.0
  %v613 = vmax.f32 %v581, 0.0
  %v614 = vmax.f32 %v582, 0.0
  %v615 = vmax.f32 %v583, 0.0
  %v616 = vmax.f32 %v584, 0.0
  %v617 = vmax.f32 %v585, 0.0
  %v618 = vmax.f32 %v586, 0.0
  %v619 = vmax.f32 %v587, 0.0
  %v620 = vmax.f32 %v588, 0.0
  %v621 = vmax.f32 %v589, 0.0
  %v622 = vmax.f32 %v590, 0.0
  %v623 = vpack.c.bf16 %v592, %v591
  %v624 = vpack.c.bf16 %v594, %v593
  %v625 = vpack.c.bf16 %v596, %v595
  %v626 = vpack.c.bf16 %v598, %v597
  %v627 = vpack.c.bf16 %v600, %v599
  %v628 = vpack.c.bf16 %v602, %v601
  %v629 = vpack.c.bf16 %v604, %v603
  %v630 = vpack.c.bf16 %v606, %v605
  %v631 = vpack.c.bf16 %v608, %v607
  %v632 = vpack.c.bf16 %v610, %v609
  %v633 = vpack.c.bf16 %v612, %v611
  %v634 = vpack.c.bf16 %v614, %v613
  %v635 = vpack.c.bf16 %v616, %v615
  %v636 = vpack.c.bf16 %v618, %v617
  %v637 = vpack.c.bf16 %v620, %v619
  %v638 = vpack.c.bf16 %v622, %v621
  %v639 = vld [vmem:[%s4] sm:$0x3f]
  %v640 = vld [vmem:[%s4 + $0x8] sm:$0x3f]
  %v641 = vpack.c.bf16 %v639, %v639
  %v642 = vpack.c.bf16 %v640, %v640
  %v643 = vld [vmem:[%s5] sm:$0x3f]
  %645 = vset.pattern.permute.xlu0 0
  %646 = vperm.xlu0 %645, %v643
  %v647 = vpop.permute.xlu0 %646
  %649 = vmatpush.bf16.msra.mxu0 %v326
  %650 = vmatpush.bf16.msra.mxu0 %v325
  %651 = vmatpush.bf16.msra.mxu0 %v324
  %652 = vmatpush.bf16.msra.mxu0 %v323
  %653 = vmatpush.bf16.msra.mxu0 %v322
  %654 = vmatpush.bf16.msra.mxu0 %v321
  %655 = vmatpush.bf16.msra.mxu0 %v320
  %656 = vmatpush.bf16.msra.mxu0 %v319
  %657 = vmatmul.bf16.gmra.mxu0 %v641
  %v658 = vpop.f32.mrf.mxu0
  %v659 = vadd.f32 %v647, %v658
  %v660 = vpop.f32.mrf.mxu0
  %661 = vdwg.mxu0
  %662 = vmatpush.bf16.msra.mxu0 %v334
  %663 = vmatpush.bf16.msra.mxu0 %v333
  %664 = vmatpush.bf16.msra.mxu0 %v332
  %665 = vmatpush.bf16.msra.mxu0 %v331
  %666 = vmatpush.bf16.msra.mxu0 %v330
  %667 = vmatpush.bf16.msra.mxu0 %v329
  %668 = vmatpush.bf16.msra.mxu0 %v328
  %669 = vmatpush.bf16.msra.mxu0 %v327
  %670 = vmatmul.bf16.gmra.mxu0 %v642
  %v671 = vpop.f32.mrf.mxu0
  %v672 = vadd.f32 %v659, %v671
  %v673 = vpop.f32.mrf.mxu0
  %674 = vdwg.mxu0
  %v675 = vld [vmem:[%s6] sm:$0x3]
  %v677 = vperm.slane %v675, 0
  %v678 = vperm.slane %v675, 1
  %v681 = vpack.c.bf16 %v677, %v677
  %v682 = vpack.c.bf16 %v678, %v678
  %v683 = vld [vmem:[#allocation2] sm:$0x1]
  %685 = vset.pattern.permute.xlu0 0
  %686 = vperm.xlu0 %685, %v683
  %v687 = vpop.permute.xlu0 %686
  %v689 = vperm.slane %v687, 0
  %690 = vmatpush.bf16.msra.mxu0 %v630
  %691 = vmatpush.bf16.msra.mxu0 %v629
  %692 = vmatpush.bf16.msra.mxu0 %v628
  %693 = vmatpush.bf16.msra.mxu0 %v627
  %694 = vmatpush.bf16.msra.mxu0 %v626
  %695 = vmatpush.bf16.msra.mxu0 %v625
  %696 = vmatpush.bf16.msra.mxu0 %v624
  %697 = vmatpush.bf16.msra.mxu0 %v623
  %698 = vmatmul.bf16.gmra.mxu0 %v681
  %v699 = vpop.f32.mrf.mxu0
  %v700 = vadd.f32 %v689, %v699
  %v701 = vpop.f32.mrf.mxu0
  %702 = vdwg.mxu0
  %703 = vmatpush.bf16.msra.mxu0 %v638
  %704 = vmatpush.bf16.msra.mxu0 %v637
  %705 = vmatpush.bf16.msra.mxu0 %v636
  %706 = vmatpush.bf16.msra.mxu0 %v635
  %707 = vmatpush.bf16.msra.mxu0 %v634
  %708 = vmatpush.bf16.msra.mxu0 %v633
  %709 = vmatpush.bf16.msra.mxu0 %v632
  %710 = vmatpush.bf16.msra.mxu0 %v631
  %711 = vmatmul.bf16.gmra.mxu0 %v682
  %v712 = vpop.f32.mrf.mxu0
  %v713 = vadd.f32 %v700, %v712
  %v714 = vpop.f32.mrf.mxu0
  %715 = vdwg.mxu0
  %vm716 = vcmask 13312
  %v717 = vsel %vm716, %v672, 0.0
  %v718 = vrot.slane %v717, 4
  %v719 = vadd.f32 %v717, %v718
  %v720 = vrot.slane %v719, 2
  %v721 = vadd.f32 %v719, %v720
  %v722 = vrot.slane %v721, 1
  %v723 = vadd.f32 %v721, %v722
  %v724 = vrcp.pop 6.0
  %v725 = vmul.f32 6.0, %v724
  %v726 = vsub.f32 1.0, %v725
  %v727 = vmul.f32 %v724, %v726
  %v728 = vadd.f32 %v724, %v727
  %vm729 = vweird.f32 %v724
  %v730 = vsel %vm729, %v724, %v728
  %v731 = vmul.f32 %v723, %v730
  %v732 = vsub.f32 %v672, %v731
  %v733 = vperm.slane %v713, 0
  %v734 = vadd.f32 %v733, %v732
  %735 = vst.msk [vmem:[%s8] sm:$0x3f] %vm716, %v734
  // Predicated region
  $region34: #{forward.9} parent=0 // pred_check
    _
  $region35: #{forward.9} parent=0 // pred_check_branch
    %737 = sbr.rel (0) target = $region37
  $region36: #{forward.9} parent=0 // pred_region
    _
  $region37: #{forward.9} parent=0 // pred_fallthru
    _
  // Predicated region
  $region38: #{forward.9} parent=0 // pred_check
    _
  $region39: #{forward.9} parent=0 // pred_check_branch
    %739 = sbr.rel (0) target = $region41
  $region40: #{forward.9} parent=0 // pred_region
    _
  $region41: #{forward.9} parent=0 // pred_fallthru
    _

// kernel: forward.8
$region0: #{forward.8}
  #allocation0 [shape = 'u32[]', space=smem, size = 0x4, offset = 0x4, fixed_abs, tag = 'smem constant byte address 0x4 - core index']
  #allocation1 [shape = 'u32[72,128]{1,0:T(1,128)}', space=vmem, size = 0x9000, scoped, tag = 'internal scratch']
  %s0 = inlined_call_operand.vmem [shape: bf16[3136,2], index: 0, kind: input, shape index: {}]
  %s1 = inlined_call_operand.vmem [shape: bf16[256,3136], index: 1, kind: input, shape index: {}]
  %s2 = inlined_call_operand.vmem [shape: bf16[256,3136], index: 2, kind: input, shape index: {}]
  %s3 = inlined_call_operand.vmem [shape: bf16[256,3136], index: 3, kind: input, shape index: {}]
  %s4 = inlined_call_operand.vmem [shape: bf16[256,3136], index: 4, kind: input, shape index: {}]
  %s5 = inlined_call_operand.vmem [shape: bf16[256,3136], index: 5, kind: input, shape index: {}]
  %s6 = inlined_call_operand.vmem [shape: bf16[256,3136], index: 6, kind: input, shape index: {}]
  %s7 = inlined_call_operand.vmem [shape: f32[256,2], index: 7, kind: output, shape index: {0}]
  %s8 = inlined_call_operand.vmem [shape: f32[256,2], index: 8, kind: output, shape index: {1}]
  %9 = xla_tuple %s7, %s8
  %s10 = sld [smem:[#allocation0]]
  $region69: #{forward.8} parent=0
    _
  %s12 = ssub.s32 1, %s10
  %s13 = scalar_select 0, %s12, %s10
  loop: start=0, step=1, limit=6
  $region2: #{forward.8} parent=0 // loop_pre_header
    _
  $region3: #{forward.8} parent=0 // loop_header
    %s15 = sphi 0, %s19
    %p16 = scmp.ge.s32.totalorder %s15, 6
    %s23 = sphi 0, %s23
    %s25 = sphi 0, %s23
    %s26 = sphi 0, %s25
    %s40 = sphi 0, %s26
    %s46 = sphi 0, %s48
    %s49 = sphi 0, %s46
    %s50 = sphi 0, %s49
    %s66 = sphi 0, %s50
    %s72 = sphi 0, %s74
    %s75 = sphi 0, %s72
    %s76 = sphi 0, %s75
    %s92 = sphi 0, %s76
    %s98 = sphi 0, %s100
    %s101 = sphi 0, %s98
    %s102 = sphi 0, %s101
    %s118 = sphi 0, %s102
    %s124 = sphi 0, %s126
    %s127 = sphi 0, %s124
    %s128 = sphi 0, %s127
    %s144 = sphi 0, %s128
    %s150 = sphi 0, %s152
    %s153 = sphi 0, %s150
    %s154 = sphi 0, %s153
    %s170 = sphi 0, %s154
    %s176 = sphi 0, %s178
    %s179 = sphi 0, %s176
    %s180 = sphi 0, %s179
    %s196 = sphi 0, %s180
    %s202 = sphi 0, %s204
    %s205 = sphi 0, %s202
    %s206 = sphi 0, %s205
    %s222 = sphi 0, %s206
    %s228 = sphi 0, %s230
    %s231 = sphi 0, %s228
    %s232 = sphi 0, %s231
    %s248 = sphi 0, %s232
  $region4: #{forward.8} parent=0 // loop_header_branch
    %18 = sbr.rel (%p16) target = $region8
  $region5: #{forward.8} parent=0 // loop_body
    %s20 = ssub.s32 %s15, 1
    %s21 = ssub.s32 %s15, 2
    %s22 = sadd.s32 %s15, 1
    %s24 = sadd.s32 %s23, 1
    %p27 = scmp.eq.s32.totalorder %s15, 3
    %p28 = scmp.ne.s32.totalorder %s23, %s25
    %p29 = scmp.eq.s32.totalorder %s15, 0
    %p30 = por %p28, %p29
    %p31 = scmp.ne.s32.totalorder %s23, %s25
    %p32 = scmp.eq.s32.totalorder %s20, 3
    %p33 = por %p31, %p32
    %p34 = scmp.ne.s32.totalorder %s25, %s26
    %p35 = scmp.eq.s32.totalorder %s20, 0
    %p36 = por %p34, %p35
    %p37 = scmp.ne.s32.totalorder %s25, %s26
    %p38 = scmp.eq.s32.totalorder %s21, 3
    %p39 = por %p37, %p38
    %p41 = scmp.ne.s32.totalorder %s26, %s40
    %p42 = scmp.eq.s32.totalorder %s21, 0
    %p43 = por %p41, %p42
    %s44 = ssub.s32 %s15, %s22
    %p45 = scmp.eq.s32.totalorder %s44, 0
    %s47 = sadd.s32 %s46, 1
    %s48 = scalar_select %p45, %s46, %s47
    %p51 = pneg %p45
    %p52 = scmp.eq.s32.totalorder %s15, 3
    %p53 = por %p51, %p52
    %p54 = scmp.ne.s32.totalorder %s46, %s49
    %p55 = scmp.eq.s32.totalorder %s15, 0
    %p56 = por %p54, %p55
    %p57 = scmp.ne.s32.totalorder %s46, %s49
    %p58 = scmp.eq.s32.totalorder %s20, 3
    %p59 = por %p57, %p58
    %p60 = scmp.ne.s32.totalorder %s49, %s50
    %p61 = scmp.eq.s32.totalorder %s20, 0
    %p62 = por %p60, %p61
    %p63 = scmp.ne.s32.totalorder %s49, %s50
    %p64 = scmp.eq.s32.totalorder %s21, 3
    %p65 = por %p63, %p64
    %p67 = scmp.ne.s32.totalorder %s50, %s66
    %p68 = scmp.eq.s32.totalorder %s21, 0
    %p69 = por %p67, %p68
    %s70 = ssub.s32 %s15, %s22
    %p71 = scmp.eq.s32.totalorder %s70, 0
    %s73 = sadd.s32 %s72, 1
    %s74 = scalar_select %p71, %s72, %s73
    %p77 = pneg %p71
    %p78 = scmp.eq.s32.totalorder %s15, 3
    %p79 = por %p77, %p78
    %p80 = scmp.ne.s32.totalorder %s72, %s75
    %p81 = scmp.eq.s32.totalorder %s15, 0
    %p82 = por %p80, %p81
    %p83 = scmp.ne.s32.totalorder %s72, %s75
    %p84 = scmp.eq.s32.totalorder %s20, 3
    %p85 = por %p83, %p84
    %p86 = scmp.ne.s32.totalorder %s75, %s76
    %p87 = scmp.eq.s32.totalorder %s20, 0
    %p88 = por %p86, %p87
    %p89 = scmp.ne.s32.totalorder %s75, %s76
    %p90 = scmp.eq.s32.totalorder %s21, 3
    %p91 = por %p89, %p90
    %p93 = scmp.ne.s32.totalorder %s76, %s92
    %p94 = scmp.eq.s32.totalorder %s21, 0
    %p95 = por %p93, %p94
    %s96 = ssub.s32 %s15, %s22
    %p97 = scmp.eq.s32.totalorder %s96, 0
    %s99 = sadd.s32 %s98, 1
    %s100 = scalar_select %p97, %s98, %s99
    %p103 = pneg %p97
    %p104 = scmp.eq.s32.totalorder %s15, 3
    %p105 = por %p103, %p104
    %p106 = scmp.ne.s32.totalorder %s98, %s101
    %p107 = scmp.eq.s32.totalorder %s15, 0
    %p108 = por %p106, %p107
    %p109 = scmp.ne.s32.totalorder %s98, %s101
    %p110 = scmp.eq.s32.totalorder %s20, 3
    %p111 = por %p109, %p110
    %p112 = scmp.ne.s32.totalorder %s101, %s102
    %p113 = scmp.eq.s32.totalorder %s20, 0
    %p114 = por %p112, %p113
    %p115 = scmp.ne.s32.totalorder %s101, %s102
    %p116 = scmp.eq.s32.totalorder %s21, 3
    %p117 = por %p115, %p116
    %p119 = scmp.ne.s32.totalorder %s102, %s118
    %p120 = scmp.eq.s32.totalorder %s21, 0
    %p121 = por %p119, %p120
    %s122 = ssub.s32 %s15, %s22
    %p123 = scmp.eq.s32.totalorder %s122, 0
    %s125 = sadd.s32 %s124, 1
    %s126 = scalar_select %p123, %s124, %s125
    %p129 = pneg %p123
    %p130 = scmp.eq.s32.totalorder %s15, 3
    %p131 = por %p129, %p130
    %p132 = scmp.ne.s32.totalorder %s124, %s127
    %p133 = scmp.eq.s32.totalorder %s15, 0
    %p134 = por %p132, %p133
    %p135 = scmp.ne.s32.totalorder %s124, %s127
    %p136 = scmp.eq.s32.totalorder %s20, 3
    %p137 = por %p135, %p136
    %p138 = scmp.ne.s32.totalorder %s127, %s128
    %p139 = scmp.eq.s32.totalorder %s20, 0
    %p140 = por %p138, %p139
    %p141 = scmp.ne.s32.totalorder %s127, %s128
    %p142 = scmp.eq.s32.totalorder %s21, 3
    %p143 = por %p141, %p142
    %p145 = scmp.ne.s32.totalorder %s128, %s144
    %p146 = scmp.eq.s32.totalorder %s21, 0
    %p147 = por %p145, %p146
    %s148 = ssub.s32 %s15, %s22
    %p149 = scmp.eq.s32.totalorder %s148, 0
    %s151 = sadd.s32 %s150, 1
    %s152 = scalar_select %p149, %s150, %s151
    %p155 = pneg %p149
    %p156 = scmp.eq.s32.totalorder %s15, 3
    %p157 = por %p155, %p156
    %p158 = scmp.ne.s32.totalorder %s150, %s153
    %p159 = scmp.eq.s32.totalorder %s15, 0
    %p160 = por %p158, %p159
    %p161 = scmp.ne.s32.totalorder %s150, %s153
    %p162 = scmp.eq.s32.totalorder %s20, 3
    %p163 = por %p161, %p162
    %p164 = scmp.ne.s32.totalorder %s153, %s154
    %p165 = scmp.eq.s32.totalorder %s20, 0
    %p166 = por %p164, %p165
    %p167 = scmp.ne.s32.totalorder %s153, %s154
    %p168 = scmp.eq.s32.totalorder %s21, 3
    %p169 = por %p167, %p168
    %p171 = scmp.ne.s32.totalorder %s154, %s170
    %p172 = scmp.eq.s32.totalorder %s21, 0
    %p173 = por %p171, %p172
    %s174 = ssub.s32 %s15, %s22
    %p175 = scmp.eq.s32.totalorder %s174, 0
    %s177 = sadd.s32 %s176, 1
    %s178 = scalar_select %p175, %s176, %s177
    %p181 = pneg %p175
    %p182 = scmp.eq.s32.totalorder %s15, 3
    %p183 = por %p181, %p182
    %p184 = scmp.ne.s32.totalorder %s176, %s179
    %p185 = scmp.eq.s32.totalorder %s15, 0
    %p186 = por %p184, %p185
    %p187 = scmp.ne.s32.totalorder %s176, %s179
    %p188 = scmp.eq.s32.totalorder %s20, 3
    %p189 = por %p187, %p188
    %p190 = scmp.ne.s32.totalorder %s179, %s180
    %p191 = scmp.eq.s32.totalorder %s20, 0
    %p192 = por %p190, %p191
    %p193 = scmp.ne.s32.totalorder %s179, %s180
    %p194 = scmp.eq.s32.totalorder %s21, 3
    %p195 = por %p193, %p194
    %p197 = scmp.ne.s32.totalorder %s180, %s196
    %p198 = scmp.eq.s32.totalorder %s21, 0
    %p199 = por %p197, %p198
    %s200 = ssub.s32 %s15, %s22
    %p201 = scmp.eq.s32.totalorder %s200, 0
    %s203 = sadd.s32 %s202, 1
    %s204 = scalar_select %p201, %s202, %s203
    %p207 = pneg %p201
    %p208 = scmp.eq.s32.totalorder %s15, 3
    %p209 = por %p207, %p208
    %p210 = scmp.ne.s32.totalorder %s202, %s205
    %p211 = scmp.eq.s32.totalorder %s15, 0
    %p212 = por %p210, %p211
    %p213 = scmp.ne.s32.totalorder %s202, %s205
    %p214 = scmp.eq.s32.totalorder %s20, 3
    %p215 = por %p213, %p214
    %p216 = scmp.ne.s32.totalorder %s205, %s206
    %p217 = scmp.eq.s32.totalorder %s20, 0
    %p218 = por %p216, %p217
    %p219 = scmp.ne.s32.totalorder %s205, %s206
    %p220 = scmp.eq.s32.totalorder %s21, 3
    %p221 = por %p219, %p220
    %p223 = scmp.ne.s32.totalorder %s206, %s222
    %p224 = scmp.eq.s32.totalorder %s21, 0
    %p225 = por %p223, %p224
    %s226 = ssub.s32 %s15, %s22
    %p227 = scmp.eq.s32.totalorder %s226, 0
    %s229 = sadd.s32 %s228, 1
    %s230 = scalar_select %p227, %s228, %s229
    %p233 = pneg %p227
    %p234 = scmp.eq.s32.totalorder %s15, 3
    %p235 = por %p233, %p234
    %p236 = scmp.ne.s32.totalorder %s228, %s231
    %p237 = scmp.eq.s32.totalorder %s15, 0
    %p238 = por %p236, %p237
    %p239 = scmp.ne.s32.totalorder %s228, %s231
    %p240 = scmp.eq.s32.totalorder %s20, 3
    %p241 = por %p239, %p240
    %p242 = scmp.ne.s32.totalorder %s231, %s232
    %p243 = scmp.eq.s32.totalorder %s20, 0
    %p244 = por %p242, %p243
    %p245 = scmp.ne.s32.totalorder %s231, %s232
    %p246 = scmp.eq.s32.totalorder %s21, 3
    %p247 = por %p245, %p246
    %p249 = scmp.ne.s32.totalorder %s232, %s248
    %p250 = scmp.eq.s32.totalorder %s21, 0
    %p251 = por %p249, %p250
    %p252 = scmp.le.s32.totalorder 1, %s15
    %p253 = scmp.lt.s32.totalorder %s15, 5
    %p254 = pnand %p252, %p253
    %p255 = pneg %p254
    // Predicated region
    $region9: #{forward.8} parent=5 // pred_check
      _
    $region10: #{forward.8} parent=5 // pred_check_branch
      %257 = sbr.rel (%p254) target = $region12
    $region11: #{forward.8} parent=5 // pred_region
      %s258 = ssub.s32 %s15, 1
      // Predicated region
      $region13: #{forward.8} parent=11 // pred_check
        %p259 = pneg %p36
      $region14: #{forward.8} parent=11 // pred_check_branch
        %261 = sbr.rel (%p259) target = $region16
      $region15: #{forward.8} parent=11 // pred_region
        _
      $region16: #{forward.8} parent=11 // pred_fallthru
        _
    $region12: #{forward.8} parent=5 // pred_fallthru
      _
    %p262 = scmp.lt.s32.totalorder %s15, 4
    // Predicated region
    $region17: #{forward.8} parent=5 // pred_check
      %p263 = pneg %p262
    $region18: #{forward.8} parent=5 // pred_check_branch
      %265 = sbr.rel (%p263) target = $region20
    $region19: #{forward.8} parent=5 // pred_region
      // Predicated region
      $region21: #{forward.8} parent=19 // pred_check
        %p266 = pneg %p56
      $region22: #{forward.8} parent=19 // pred_check_branch
        %268 = sbr.rel (%p266) target = $region24
      $region23: #{forward.8} parent=19 // pred_region
        %s269 = smul.u32 8, %s15
        %p270 = scmp.lt.s32.totalorder %s269, 31
        %s271 = scalar_select %p270, %s269, 31
        %s272 = smul.addr %s271, 25
        %s273 = smul.addr %s272, 4
        %s274 = scalar_lea.vmem %s1, %s273
        %s275 = smul.u32 8, %s15
      $region24: #{forward.8} parent=19 // pred_fallthru
        _
      // Predicated region
      $region25: #{forward.8} parent=19 // pred_check
        %p276 = pneg %p82
      $region26: #{forward.8} parent=19 // pred_check_branch
        %278 = sbr.rel (%p276) target = $region28
      $region27: #{forward.8} parent=19 // pred_region
        %s279 = smul.u32 8, %s15
        %p280 = scmp.lt.s32.totalorder %s279, 31
        %s281 = scalar_select %p280, %s279, 31
        %s282 = smul.addr %s281, 25
        %s283 = smul.addr %s282, 4
        %s284 = scalar_lea.vmem %s2, %s283
        %s285 = smul.u32 8, %s15
      $region28: #{forward.8} parent=19 // pred_fallthru
        _
      // Predicated region
      $region29: #{forward.8} parent=19 // pred_check
        %p286 = pneg %p108
      $region30: #{forward.8} parent=19 // pred_check_branch
        %288 = sbr.rel (%p286) target = $region32
      $region31: #{forward.8} parent=19 // pred_region
        %s289 = smul.u32 8, %s15
        %p290 = scmp.lt.s32.totalorder %s289, 31
        %s291 = scalar_select %p290, %s289, 31
        %s292 = smul.addr %s291, 25
        %s293 = smul.addr %s292, 4
        %s294 = scalar_lea.vmem %s3, %s293
        %s295 = smul.u32 8, %s15
      $region32: #{forward.8} parent=19 // pred_fallthru
        _
      // Predicated region
      $region33: #{forward.8} parent=19 // pred_check
        %p296 = pneg %p134
      $region34: #{forward.8} parent=19 // pred_check_branch
        %298 = sbr.rel (%p296) target = $region36
      $region35: #{forward.8} parent=19 // pred_region
        %s299 = smul.u32 8, %s15
        %p300 = scmp.lt.s32.totalorder %s299, 31
        %s301 = scalar_select %p300, %s299, 31
        %s302 = smul.addr %s301, 25
        %s303 = smul.addr %s302, 4
        %s304 = scalar_lea.vmem %s4, %s303
        %s305 = smul.u32 8, %s15
      $region36: #{forward.8} parent=19 // pred_fallthru
        _
      // Predicated region
      $region37: #{forward.8} parent=19 // pred_check
        %p306 = pneg %p160
      $region38: #{forward.8} parent=19 // pred_check_branch
        %308 = sbr.rel (%p306) target = $region40
      $region39: #{forward.8} parent=19 // pred_region
        %s309 = smul.u32 8, %s15
        %p310 = scmp.lt.s32.totalorder %s309, 31
        %s311 = scalar_select %p310, %s309, 31
        %s312 = smul.addr %s311, 25
        %s313 = smul.addr %s312, 4
        %s314 = scalar_lea.vmem %s5, %s313
        %s315 = smul.u32 8, %s15
      $region40: #{forward.8} parent=19 // pred_fallthru
        _
      // Predicated region
      $region41: #{forward.8} parent=19 // pred_check
        %p316 = pneg %p186
      $region42: #{forward.8} parent=19 // pred_check_branch
        %318 = sbr.rel (%p316) target = $region44
      $region43: #{forward.8} parent=19 // pred_region
        %s319 = smul.u32 8, %s15
        %p320 = scmp.lt.s32.totalorder %s319, 31
        %s321 = scalar_select %p320, %s319, 31
        %s322 = smul.addr %s321, 25
        %s323 = smul.addr %s322, 4
        %s324 = scalar_lea.vmem %s6, %s323
        %s325 = smul.u32 8, %s15
      $region44: #{forward.8} parent=19 // pred_fallthru
        _
    $region20: #{forward.8} parent=5 // pred_fallthru
      _
    %p326 = scmp.le.s32.totalorder 1, %s15
    %p327 = scmp.lt.s32.totalorder %s15, 5
    %p328 = pnand %p326, %p327
    %p329 = pneg %p328
    // Predicated region
    $region45: #{forward.8} parent=5 // pred_check
      _
    $region46: #{forward.8} parent=5 // pred_check_branch
      %331 = sbr.rel (%p328) target = $region48
    $region47: #{forward.8} parent=5 // pred_region
      %s332 = ssub.s32 %s15, 1
      %p333 = pneg %p36
      %p334 = pneg %p33
      %s335 = smul.u32 8, %s20
      %p336 = scmp.lt.s32.totalorder %s335, 31
      %s337 = scalar_select %p336, %s335, 31
      %s338 = smul.addr %s337, 25
      %s339 = smul.addr %s338, 4
      %s340 = scalar_lea.vmem %s1, %s339
      %p341 = pneg %p62
      %p342 = pneg %p59
      %s343 = smul.u32 8, %s20
      %p344 = scmp.lt.s32.totalorder %s343, 31
      %s345 = scalar_select %p344, %s343, 31
      %s346 = smul.addr %s345, 25
      %s347 = smul.addr %s346, 4
      %s348 = scalar_lea.vmem %s2, %s347
      %p349 = pneg %p88
      %p350 = pneg %p85
      %s351 = smul.u32 8, %s20
      %p352 = scmp.lt.s32.totalorder %s351, 31
      %s353 = scalar_select %p352, %s351, 31
      %s354 = smul.addr %s353, 25
      %s355 = smul.addr %s354, 4
      %s356 = scalar_lea.vmem %s3, %s355
      %p357 = pneg %p114
      %p358 = pneg %p111
      %s359 = smul.u32 8, %s20
      %p360 = scmp.lt.s32.totalorder %s359, 31
      %s361 = scalar_select %p360, %s359, 31
      %s362 = smul.addr %s361, 25
      %s363 = smul.addr %s362, 4
      %s364 = scalar_lea.vmem %s4, %s363
      %p365 = pneg %p140
      %p366 = pneg %p137
      %s367 = smul.u32 8, %s20
      %p368 = scmp.lt.s32.totalorder %s367, 31
      %s369 = scalar_select %p368, %s367, 31
      %s370 = smul.addr %s369, 25
      %s371 = smul.addr %s370, 4
      %s372 = scalar_lea.vmem %s5, %s371
      %p373 = pneg %p166
      %p374 = pneg %p163
      %s375 = smul.u32 8, %s20
      %p376 = scmp.lt.s32.totalorder %s375, 31
      %s377 = scalar_select %p376, %s375, 31
      %s378 = smul.addr %s377, 25
      %s379 = smul.addr %s378, 4
      %s380 = scalar_lea.vmem %s6, %s379
      %p381 = pneg %p192
      %p382 = pneg %p189
      %p383 = pneg %p218
      %p384 = pneg %p215
      %s385 = smul.u32 8, %s20
      %p386 = scmp.lt.s32.totalorder %s385, 31
      %s387 = scalar_select %p386, %s385, 31
      %s388 = smul.addr %s387, 8
      %s389 = scalar_lea.vmem %s7, %s388
      %p390 = pneg %p244
      %p391 = pneg %p241
      %s392 = smul.u32 8, %s20
      %p393 = scmp.lt.s32.totalorder %s392, 31
      %s394 = scalar_select %p393, %s392, 31
      %s395 = smul.addr %s394, 8
      %s396 = scalar_lea.vmem %s8, %s395
      %s397 = smul.u32 8, %s20
      %p398 = scmp.lt.s32.totalorder %s397, 31
      %s399 = scalar_select %p398, %s397, 31
      %s400 = smul.addr %s399, 25
      %s401 = smul.addr %s400, 4
      %s402 = scalar_lea.vmem %s1, %s401
      %s403 = smul.u32 8, %s20
      %s404 = smul.u32 8, %s20
      %p405 = scmp.lt.s32.totalorder %s404, 31
      %s406 = scalar_select %p405, %s404, 31
      %s407 = smul.addr %s406, 25
      %s408 = smul.addr %s407, 4
      %s409 = scalar_lea.vmem %s2, %s408
      %s410 = smul.u32 8, %s20
      %s411 = smul.u32 8, %s20
      %p412 = scmp.lt.s32.totalorder %s411, 31
      %s413 = scalar_select %p412, %s411, 31
      %s414 = smul.addr %s413, 25
      %s415 = smul.addr %s414, 4
      %s416 = scalar_lea.vmem %s3, %s415
      %s417 = smul.u32 8, %s20
      %s418 = smul.u32 8, %s20
      %p419 = scmp.lt.s32.totalorder %s418, 31
      %s420 = scalar_select %p419, %s418, 31
      %s421 = smul.addr %s420, 25
      %s422 = smul.addr %s421, 4
      %s423 = scalar_lea.vmem %s4, %s422
      %s424 = smul.u32 8, %s20
      %s425 = smul.u32 8, %s20
      %p426 = scmp.lt.s32.totalorder %s425, 31
      %s427 = scalar_select %p426, %s425, 31
      %s428 = smul.addr %s427, 25
      %s429 = smul.addr %s428, 4
      %s430 = scalar_lea.vmem %s5, %s429
      %s431 = smul.u32 8, %s20
      %s432 = smul.u32 8, %s20
      %p433 = scmp.lt.s32.totalorder %s432, 31
      %s434 = scalar_select %p433, %s432, 31
      %s435 = smul.addr %s434, 25
      %s436 = smul.addr %s435, 4
      %s437 = scalar_lea.vmem %s6, %s436
      %s438 = smul.u32 8, %s20
      %s439 = smul.u32 8, %s20
      %p440 = scmp.lt.s32.totalorder %s439, 31
      %s441 = scalar_select %p440, %s439, 31
      %s442 = smul.addr %s441, 8
      %s443 = scalar_lea.vmem %s7, %s442
      %s444 = smul.u32 8, %s20
      %s445 = smul.u32 8, %s20
      %p446 = scmp.lt.s32.totalorder %s445, 31
      %s447 = scalar_select %p446, %s445, 31
      %s448 = smul.addr %s447, 8
      %s449 = scalar_lea.vmem %s8, %s448
      %s450 = smul.u32 8, %s20
      %v452 = vld [vmem:[%s0] sm:$0xf]
      %v453 = vld [vmem:[%s0 + $0x4] sm:$0xf]
      %v454 = vld [vmem:[%s0 + $0x8] sm:$0xf]
      %v455 = vld [vmem:[%s0 + $0xc] sm:$0xf]
      %v456 = vld [vmem:[%s0 + $0x10] sm:$0xf]
      %v457 = vld [vmem:[%s0 + $0x14] sm:$0xf]
      %v458 = vld [vmem:[%s0 + $0x18] sm:$0xf]
      %v459 = vld [vmem:[%s0 + $0x1c] sm:$0xf]
      %v460 = vld [vmem:[%s0 + $0x20] sm:$0xf]
      %v461 = vld [vmem:[%s0 + $0x24] sm:$0xf]
      %v462 = vld [vmem:[%s0 + $0x28] sm:$0xf]
      %v463 = vld [vmem:[%s0 + $0x2c] sm:$0xf]
      %v464 = vld [vmem:[%s0 + $0x30] sm:$0xf]
      %v465 = vld [vmem:[%s0 + $0x34] sm:$0xf]
      %v466 = vld [vmem:[%s0 + $0x38] sm:$0xf]
      %v467 = vld [vmem:[%s0 + $0x3c] sm:$0xf]
      %v468 = vld [vmem:[%s0 + $0x40] sm:$0xf]
      %v469 = vld [vmem:[%s0 + $0x44] sm:$0xf]
      %v470 = vld [vmem:[%s0 + $0x48] sm:$0xf]
      %v471 = vld [vmem:[%s0 + $0x4c] sm:$0xf]
      %v472 = vld [vmem:[%s0 + $0x50] sm:$0xf]
      %v473 = vld [vmem:[%s0 + $0x54] sm:$0xf]
      %v474 = vld [vmem:[%s0 + $0x58] sm:$0xf]
      %v475 = vld [vmem:[%s0 + $0x5c] sm:$0xf]
      %v476 = vld [vmem:[%s0 + $0x60] sm:$0xf]
      %v477 = vld [vmem:[%s0 + $0x64] sm:$0xf]
      %v478 = vld [vmem:[%s0 + $0x68] sm:$0xf]
      %v479 = vld [vmem:[%s0 + $0x6c] sm:$0xf]
      %v480 = vld [vmem:[%s0 + $0x70] sm:$0xf]
      %v481 = vld [vmem:[%s0 + $0x74] sm:$0xf]
      %v482 = vld [vmem:[%s0 + $0x78] sm:$0xf]
      %v483 = vld [vmem:[%s0 + $0x7c] sm:$0xf]
      %v484 = vld [vmem:[%s0 + $0x80] sm:$0xf]
      %v485 = vld [vmem:[%s0 + $0x84] sm:$0xf]
      %v486 = vld [vmem:[%s0 + $0x88] sm:$0xf]
      %v487 = vld [vmem:[%s0 + $0x8c] sm:$0xf]
      %v488 = vld [vmem:[%s0 + $0x90] sm:$0xf]
      %v489 = vld [vmem:[%s0 + $0x94] sm:$0xf]
      %v490 = vld [vmem:[%s0 + $0x98] sm:$0xf]
      %v491 = vld [vmem:[%s0 + $0x9c] sm:$0xf]
      %v492 = vld [vmem:[%s0 + $0xa0] sm:$0xf]
      %v493 = vld [vmem:[%s0 + $0xa4] sm:$0xf]
      %v494 = vld [vmem:[%s0 + $0xa8] sm:$0xf]
      %v495 = vld [vmem:[%s0 + $0xac] sm:$0xf]
      %v496 = vld [vmem:[%s0 + $0xb0] sm:$0xf]
      %v497 = vld [vmem:[%s0 + $0xb4] sm:$0xf]
      %v498 = vld [vmem:[%s0 + $0xb8] sm:$0xf]
      %v499 = vld [vmem:[%s0 + $0xbc] sm:$0xf]
      %v500 = vld [vmem:[%s0 + $0xc0] sm:$0xf]
      %v501 = vld [vmem:[%s0 + $0xc4] sm:$0xf]
      %v502 = vld [vmem:[%s0 + $0xc8] sm:$0xf]
      %v503 = vld [vmem:[%s0 + $0xcc] sm:$0xf]
      %v504 = vld [vmem:[%s0 + $0xd0] sm:$0xf]
      %v505 = vld [vmem:[%s0 + $0xd4] sm:$0xf]
      %v506 = vld [vmem:[%s0 + $0xd8] sm:$0xf]
      %v507 = vld [vmem:[%s0 + $0xdc] sm:$0xf]
      %v508 = vld [vmem:[%s0 + $0xe0] sm:$0xf]
      %v509 = vld [vmem:[%s0 + $0xe4] sm:$0xf]
      %v510 = vld [vmem:[%s0 + $0xe8] sm:$0xf]
      %v511 = vld [vmem:[%s0 + $0xec] sm:$0xf]
      %v512 = vld [vmem:[%s0 + $0xf0] sm:$0xf]
      %v513 = vld [vmem:[%s0 + $0xf4] sm:$0xf]
      %v514 = vld [vmem:[%s0 + $0xf8] sm:$0xf]
      %v515 = vld [vmem:[%s0 + $0xfc] sm:$0xf]
      %v516 = vld [vmem:[%s0 + $0x100] sm:$0xf]
      %v517 = vld [vmem:[%s0 + $0x104] sm:$0xf]
      %v518 = vld [vmem:[%s0 + $0x108] sm:$0xf]
      %v519 = vld [vmem:[%s0 + $0x10c] sm:$0xf]
      %v520 = vld [vmem:[%s0 + $0x110] sm:$0xf]
      %v521 = vld [vmem:[%s0 + $0x114] sm:$0xf]
      %v522 = vld [vmem:[%s0 + $0x118] sm:$0xf]
      %v523 = vld [vmem:[%s0 + $0x11c] sm:$0xf]
      %v524 = vld [vmem:[%s0 + $0x120] sm:$0xf]
      %v525 = vld [vmem:[%s0 + $0x124] sm:$0xf]
      %v526 = vld [vmem:[%s0 + $0x128] sm:$0xf]
      %v527 = vld [vmem:[%s0 + $0x12c] sm:$0xf]
      %v528 = vld [vmem:[%s0 + $0x130] sm:$0xf]
      %v529 = vld [vmem:[%s0 + $0x134] sm:$0xf]
      %v530 = vld [vmem:[%s0 + $0x138] sm:$0xf]
      %v531 = vld [vmem:[%s0 + $0x13c] sm:$0xf]
      %v532 = vld [vmem:[%s0 + $0x140] sm:$0xf]
      %v533 = vld [vmem:[%s0 + $0x144] sm:$0xf]
      %v534 = vld [vmem:[%s0 + $0x148] sm:$0xf]
      %v535 = vld [vmem:[%s0 + $0x14c] sm:$0xf]
      %v536 = vld [vmem:[%s0 + $0x150] sm:$0xf]
      %v537 = vld [vmem:[%s0 + $0x154] sm:$0xf]
      %v538 = vld [vmem:[%s0 + $0x158] sm:$0xf]
      %v539 = vld [vmem:[%s0 + $0x15c] sm:$0xf]
      %v540 = vld [vmem:[%s0 + $0x160] sm:$0xf]
      %v541 = vld [vmem:[%s0 + $0x164] sm:$0xf]
      %v542 = vld [vmem:[%s0 + $0x168] sm:$0xf]
      %v543 = vld [vmem:[%s0 + $0x16c] sm:$0xf]
      %v544 = vld [vmem:[%s0 + $0x170] sm:$0xf]
      %v545 = vld [vmem:[%s0 + $0x174] sm:$0xf]
      %v546 = vld [vmem:[%s0 + $0x178] sm:$0xf]
      %v547 = vld [vmem:[%s0 + $0x17c] sm:$0xf]
      %v548 = vld [vmem:[%s0 + $0x180] sm:$0xf]
      %v549 = vld [vmem:[%s0 + $0x184] sm:$0xf]
      %v550 = vld [vmem:[%s0 + $0x188] sm:$0xf]
      %v551 = vld [vmem:[%s0 + $0x18c] sm:$0xf]
      %v552 = vld [vmem:[%s0 + $0x190] sm:$0xf]
      %v553 = vld [vmem:[%s0 + $0x194] sm:$0xf]
      %v554 = vld [vmem:[%s0 + $0x198] sm:$0xf]
      %v555 = vld [vmem:[%s0 + $0x19c] sm:$0xf]
      %v556 = vld [vmem:[%s0 + $0x1a0] sm:$0xf]
      %v557 = vld [vmem:[%s0 + $0x1a4] sm:$0xf]
      %v558 = vld [vmem:[%s0 + $0x1a8] sm:$0xf]
      %v559 = vld [vmem:[%s0 + $0x1ac] sm:$0xf]
      %v560 = vld [vmem:[%s0 + $0x1b0] sm:$0xf]
      %v561 = vld [vmem:[%s0 + $0x1b4] sm:$0xf]
      %v562 = vld [vmem:[%s0 + $0x1b8] sm:$0xf]
      %v563 = vld [vmem:[%s0 + $0x1bc] sm:$0xf]
      %v564 = vld [vmem:[%s0 + $0x1c0] sm:$0xf]
      %v565 = vld [vmem:[%s0 + $0x1c4] sm:$0xf]
      %v566 = vld [vmem:[%s0 + $0x1c8] sm:$0xf]
      %v567 = vld [vmem:[%s0 + $0x1cc] sm:$0xf]
      %v568 = vld [vmem:[%s0 + $0x1d0] sm:$0xf]
      %v569 = vld [vmem:[%s0 + $0x1d4] sm:$0xf]
      %v570 = vld [vmem:[%s0 + $0x1d8] sm:$0xf]
      %v571 = vld [vmem:[%s0 + $0x1dc] sm:$0xf]
      %v572 = vld [vmem:[%s0 + $0x1e0] sm:$0xf]
      %v573 = vld [vmem:[%s0 + $0x1e4] sm:$0xf]
      %v574 = vld [vmem:[%s0 + $0x1e8] sm:$0xf]
      %v575 = vld [vmem:[%s0 + $0x1ec] sm:$0xf]
      %v576 = vld [vmem:[%s0 + $0x1f0] sm:$0xf]
      %v577 = vld [vmem:[%s0 + $0x1f4] sm:$0xf]
      %v578 = vld [vmem:[%s0 + $0x1f8] sm:$0xf]
      %v579 = vld [vmem:[%s0 + $0x1fc] sm:$0xf]
      %v580 = vld [vmem:[%s0 + $0x200] sm:$0xf]
      %v581 = vld [vmem:[%s0 + $0x204] sm:$0xf]
      %v582 = vld [vmem:[%s0 + $0x208] sm:$0xf]
      %v583 = vld [vmem:[%s0 + $0x20c] sm:$0xf]
      %v584 = vld [vmem:[%s0 + $0x210] sm:$0xf]
      %v585 = vld [vmem:[%s0 + $0x214] sm:$0xf]
      %v586 = vld [vmem:[%s0 + $0x218] sm:$0xf]
      %v587 = vld [vmem:[%s0 + $0x21c] sm:$0xf]
      %v588 = vld [vmem:[%s0 + $0x220] sm:$0xf]
      %v589 = vld [vmem:[%s0 + $0x224] sm:$0xf]
      %v590 = vld [vmem:[%s0 + $0x228] sm:$0xf]
      %v591 = vld [vmem:[%s0 + $0x22c] sm:$0xf]
      %v592 = vld [vmem:[%s0 + $0x230] sm:$0xf]
      %v593 = vld [vmem:[%s0 + $0x234] sm:$0xf]
      %v594 = vld [vmem:[%s0 + $0x238] sm:$0xf]
      %v595 = vld [vmem:[%s0 + $0x23c] sm:$0xf]
      %v596 = vld [vmem:[%s0 + $0x240] sm:$0xf]
      %v597 = vld [vmem:[%s0 + $0x244] sm:$0xf]
      %v598 = vld [vmem:[%s0 + $0x248] sm:$0xf]
      %v599 = vld [vmem:[%s0 + $0x24c] sm:$0xf]
      %v600 = vld [vmem:[%s0 + $0x250] sm:$0xf]
      %v601 = vld [vmem:[%s0 + $0x254] sm:$0xf]
      %v602 = vld [vmem:[%s0 + $0x258] sm:$0xf]
      %v603 = vld [vmem:[%s0 + $0x25c] sm:$0xf]
      %v604 = vld [vmem:[%s0 + $0x260] sm:$0xf]
      %v605 = vld [vmem:[%s0 + $0x264] sm:$0xf]
      %v606 = vld [vmem:[%s0 + $0x268] sm:$0xf]
      %v607 = vld [vmem:[%s0 + $0x26c] sm:$0xf]
      %v608 = vld [vmem:[%s0 + $0x270] sm:$0xf]
      %v609 = vld [vmem:[%s0 + $0x274] sm:$0xf]
      %v610 = vld [vmem:[%s0 + $0x278] sm:$0xf]
      %v611 = vld [vmem:[%s0 + $0x27c] sm:$0xf]
      %v612 = vld [vmem:[%s0 + $0x280] sm:$0xf]
      %v613 = vld [vmem:[%s0 + $0x284] sm:$0xf]
      %v614 = vld [vmem:[%s0 + $0x288] sm:$0xf]
      %v615 = vld [vmem:[%s0 + $0x28c] sm:$0xf]
      %v616 = vld [vmem:[%s0 + $0x290] sm:$0xf]
      %v617 = vld [vmem:[%s0 + $0x294] sm:$0xf]
      %v618 = vld [vmem:[%s0 + $0x298] sm:$0xf]
      %v619 = vld [vmem:[%s0 + $0x29c] sm:$0xf]
      %v620 = vld [vmem:[%s0 + $0x2a0] sm:$0xf]
      %v621 = vld [vmem:[%s0 + $0x2a4] sm:$0xf]
      %v622 = vld [vmem:[%s0 + $0x2a8] sm:$0xf]
      %v623 = vld [vmem:[%s0 + $0x2ac] sm:$0xf]
      %v624 = vld [vmem:[%s0 + $0x2b0] sm:$0xf]
      %v625 = vld [vmem:[%s0 + $0x2b4] sm:$0xf]
      %v626 = vld [vmem:[%s0 + $0x2b8] sm:$0xf]
      %v627 = vld [vmem:[%s0 + $0x2bc] sm:$0xf]
      %v628 = vld [vmem:[%s0 + $0x2c0] sm:$0xf]
      %v629 = vld [vmem:[%s0 + $0x2c4] sm:$0xf]
      %v630 = vld [vmem:[%s0 + $0x2c8] sm:$0xf]
      %v631 = vld [vmem:[%s0 + $0x2cc] sm:$0xf]
      %v632 = vld [vmem:[%s0 + $0x2d0] sm:$0xf]
      %v633 = vld [vmem:[%s0 + $0x2d4] sm:$0xf]
      %v634 = vld [vmem:[%s0 + $0x2d8] sm:$0xf]
      %v635 = vld [vmem:[%s0 + $0x2dc] sm:$0xf]
      %v636 = vld [vmem:[%s0 + $0x2e0] sm:$0xf]
      %v637 = vld [vmem:[%s0 + $0x2e4] sm:$0xf]
      %v638 = vld [vmem:[%s0 + $0x2e8] sm:$0xf]
      %v639 = vld [vmem:[%s0 + $0x2ec] sm:$0xf]
      %v640 = vld [vmem:[%s0 + $0x2f0] sm:$0xf]
      %v641 = vld [vmem:[%s0 + $0x2f4] sm:$0xf]
      %v642 = vld [vmem:[%s0 + $0x2f8] sm:$0xf]
      %v643 = vld [vmem:[%s0 + $0x2fc] sm:$0xf]
      %v644 = vld [vmem:[%s0 + $0x300] sm:$0xf]
      %v645 = vld [vmem:[%s0 + $0x304] sm:$0xf]
      %v646 = vld [vmem:[%s0 + $0x308] sm:$0xf]
      %v647 = vld [vmem:[%s0 + $0x30c] sm:$0xf]
      %v648 = vld [vmem:[%s0 + $0x310] sm:$0xf]
      %v649 = vld [vmem:[%s0 + $0x314] sm:$0xf]
      %v650 = vld [vmem:[%s0 + $0x318] sm:$0xf]
      %v651 = vld [vmem:[%s0 + $0x31c] sm:$0xf]
      %v652 = vld [vmem:[%s0 + $0x320] sm:$0xf]
      %v653 = vld [vmem:[%s0 + $0x324] sm:$0xf]
      %v654 = vld [vmem:[%s0 + $0x328] sm:$0xf]
      %v655 = vld [vmem:[%s0 + $0x32c] sm:$0xf]
      %v656 = vld [vmem:[%s0 + $0x330] sm:$0xf]
      %v657 = vld [vmem:[%s0 + $0x334] sm:$0xf]
      %v658 = vld [vmem:[%s0 + $0x338] sm:$0xf]
      %v659 = vld [vmem:[%s0 + $0x33c] sm:$0xf]
      %v660 = vld [vmem:[%s0 + $0x340] sm:$0xf]
      %v661 = vld [vmem:[%s0 + $0x344] sm:$0xf]
      %v662 = vld [vmem:[%s0 + $0x348] sm:$0xf]
      %v663 = vld [vmem:[%s0 + $0x34c] sm:$0xf]
      %v664 = vld [vmem:[%s0 + $0x350] sm:$0xf]
      %v665 = vld [vmem:[%s0 + $0x354] sm:$0xf]
      %v666 = vld [vmem:[%s0 + $0x358] sm:$0xf]
      %v667 = vld [vmem:[%s0 + $0x35c] sm:$0xf]
      %v668 = vld [vmem:[%s0 + $0x360] sm:$0xf]
      %v669 = vld [vmem:[%s0 + $0x364] sm:$0xf]
      %v670 = vld [vmem:[%s0 + $0x368] sm:$0xf]
      %v671 = vld [vmem:[%s0 + $0x36c] sm:$0xf]
      %v672 = vld [vmem:[%s0 + $0x370] sm:$0xf]
      %v673 = vld [vmem:[%s0 + $0x374] sm:$0xf]
      %v674 = vld [vmem:[%s0 + $0x378] sm:$0xf]
      %v675 = vld [vmem:[%s0 + $0x37c] sm:$0xf]
      %v676 = vld [vmem:[%s0 + $0x380] sm:$0xf]
      %v677 = vld [vmem:[%s0 + $0x384] sm:$0xf]
      %v678 = vld [vmem:[%s0 + $0x388] sm:$0xf]
      %v679 = vld [vmem:[%s0 + $0x38c] sm:$0xf]
      %v680 = vld [vmem:[%s0 + $0x390] sm:$0xf]
      %v681 = vld [vmem:[%s0 + $0x394] sm:$0xf]
      %v682 = vld [vmem:[%s0 + $0x398] sm:$0xf]
      %v683 = vld [vmem:[%s0 + $0x39c] sm:$0xf]
      %v684 = vld [vmem:[%s0 + $0x3a0] sm:$0xf]
      %v685 = vld [vmem:[%s0 + $0x3a4] sm:$0xf]
      %v686 = vld [vmem:[%s0 + $0x3a8] sm:$0xf]
      %v687 = vld [vmem:[%s0 + $0x3ac] sm:$0xf]
      %v688 = vld [vmem:[%s0 + $0x3b0] sm:$0xf]
      %v689 = vld [vmem:[%s0 + $0x3b4] sm:$0xf]
      %v690 = vld [vmem:[%s0 + $0x3b8] sm:$0xf]
      %v691 = vld [vmem:[%s0 + $0x3bc] sm:$0xf]
      %v692 = vld [vmem:[%s0 + $0x3c0] sm:$0xf]
      %v693 = vld [vmem:[%s0 + $0x3c4] sm:$0xf]
      %v694 = vld [vmem:[%s0 + $0x3c8] sm:$0xf]
      %v695 = vld [vmem:[%s0 + $0x3cc] sm:$0xf]
      %v696 = vld [vmem:[%s0 + $0x3d0] sm:$0xf]
      %v697 = vld [vmem:[%s0 + $0x3d4] sm:$0xf]
      %v698 = vld [vmem:[%s0 + $0x3d8] sm:$0xf]
      %v699 = vld [vmem:[%s0 + $0x3dc] sm:$0xf]
      %v700 = vld [vmem:[%s0 + $0x3e0] sm:$0xf]
      %v701 = vld [vmem:[%s0 + $0x3e4] sm:$0xf]
      %v702 = vld [vmem:[%s0 + $0x3e8] sm:$0xf]
      %v703 = vld [vmem:[%s0 + $0x3ec] sm:$0xf]
      %v704 = vld [vmem:[%s0 + $0x3f0] sm:$0xf]
      %v705 = vld [vmem:[%s0 + $0x3f4] sm:$0xf]
      %v706 = vld [vmem:[%s0 + $0x3f8] sm:$0xf]
      %v707 = vld [vmem:[%s0 + $0x3fc] sm:$0xf]
      %v708 = vld [vmem:[%s0 + $0x400] sm:$0xf]
      %v709 = vld [vmem:[%s0 + $0x404] sm:$0xf]
      %v710 = vld [vmem:[%s0 + $0x408] sm:$0xf]
      %v711 = vld [vmem:[%s0 + $0x40c] sm:$0xf]
      %v712 = vld [vmem:[%s0 + $0x410] sm:$0xf]
      %v713 = vld [vmem:[%s0 + $0x414] sm:$0xf]
      %v714 = vld [vmem:[%s0 + $0x418] sm:$0xf]
      %v715 = vld [vmem:[%s0 + $0x41c] sm:$0xf]
      %v716 = vld [vmem:[%s0 + $0x420] sm:$0xf]
      %v717 = vld [vmem:[%s0 + $0x424] sm:$0xf]
      %v718 = vld [vmem:[%s0 + $0x428] sm:$0xf]
      %v719 = vld [vmem:[%s0 + $0x42c] sm:$0xf]
      %v720 = vld [vmem:[%s0 + $0x430] sm:$0xf]
      %v721 = vld [vmem:[%s0 + $0x434] sm:$0xf]
      %v722 = vld [vmem:[%s0 + $0x438] sm:$0xf]
      %v723 = vld [vmem:[%s0 + $0x43c] sm:$0xf]
      %v724 = vld [vmem:[%s0 + $0x440] sm:$0xf]
      %v725 = vld [vmem:[%s0 + $0x444] sm:$0xf]
      %v726 = vld [vmem:[%s0 + $0x448] sm:$0xf]
      %v727 = vld [vmem:[%s0 + $0x44c] sm:$0xf]
      %v728 = vld [vmem:[%s0 + $0x450] sm:$0xf]
      %v729 = vld [vmem:[%s0 + $0x454] sm:$0xf]
      %v730 = vld [vmem:[%s0 + $0x458] sm:$0xf]
      %v731 = vld [vmem:[%s0 + $0x45c] sm:$0xf]
      %v732 = vld [vmem:[%s0 + $0x460] sm:$0xf]
      %v733 = vld [vmem:[%s0 + $0x464] sm:$0xf]
      %v734 = vld [vmem:[%s0 + $0x468] sm:$0xf]
      %v735 = vld [vmem:[%s0 + $0x46c] sm:$0xf]
      %v736 = vld [vmem:[%s0 + $0x470] sm:$0xf]
      %v737 = vld [vmem:[%s0 + $0x474] sm:$0xf]
      %v738 = vld [vmem:[%s0 + $0x478] sm:$0xf]
      %v739 = vld [vmem:[%s0 + $0x47c] sm:$0xf]
      %v740 = vld [vmem:[%s0 + $0x480] sm:$0xf]
      %v741 = vld [vmem:[%s0 + $0x484] sm:$0xf]
      %v742 = vld [vmem:[%s0 + $0x488] sm:$0xf]
      %v743 = vld [vmem:[%s0 + $0x48c] sm:$0xf]
      %v744 = vld [vmem:[%s0 + $0x490] sm:$0xf]
      %v745 = vld [vmem:[%s0 + $0x494] sm:$0xf]
      %v746 = vld [vmem:[%s0 + $0x498] sm:$0xf]
      %v747 = vld [vmem:[%s0 + $0x49c] sm:$0xf]
      %v748 = vld [vmem:[%s0 + $0x4a0] sm:$0xf]
      %v749 = vld [vmem:[%s0 + $0x4a4] sm:$0xf]
      %v750 = vld [vmem:[%s0 + $0x4a8] sm:$0xf]
      %v751 = vld [vmem:[%s0 + $0x4ac] sm:$0xf]
      %v752 = vld [vmem:[%s0 + $0x4b0] sm:$0xf]
      %v753 = vld [vmem:[%s0 + $0x4b4] sm:$0xf]
      %v754 = vld [vmem:[%s0 + $0x4b8] sm:$0xf]
      %v755 = vld [vmem:[%s0 + $0x4bc] sm:$0xf]
      %v756 = vld [vmem:[%s0 + $0x4c0] sm:$0xf]
      %v757 = vld [vmem:[%s0 + $0x4c4] sm:$0xf]
      %v758 = vld [vmem:[%s0 + $0x4c8] sm:$0xf]
      %v759 = vld [vmem:[%s0 + $0x4cc] sm:$0xf]
      %v760 = vld [vmem:[%s0 + $0x4d0] sm:$0xf]
      %v761 = vld [vmem:[%s0 + $0x4d4] sm:$0xf]
      %v762 = vld [vmem:[%s0 + $0x4d8] sm:$0xf]
      %v763 = vld [vmem:[%s0 + $0x4dc] sm:$0xf]
      %v764 = vld [vmem:[%s0 + $0x4e0] sm:$0xf]
      %v765 = vld [vmem:[%s0 + $0x4e4] sm:$0xf]
      %v766 = vld [vmem:[%s0 + $0x4e8] sm:$0xf]
      %v767 = vld [vmem:[%s0 + $0x4ec] sm:$0xf]
      %v768 = vld [vmem:[%s0 + $0x4f0] sm:$0xf]
      %v769 = vld [vmem:[%s0 + $0x4f4] sm:$0xf]
      %v770 = vld [vmem:[%s0 + $0x4f8] sm:$0xf]
      %v771 = vld [vmem:[%s0 + $0x4fc] sm:$0xf]
      %v772 = vld [vmem:[%s0 + $0x500] sm:$0xf]
      %v773 = vld [vmem:[%s0 + $0x504] sm:$0xf]
      %v774 = vld [vmem:[%s0 + $0x508] sm:$0xf]
      %v775 = vld [vmem:[%s0 + $0x50c] sm:$0xf]
      %v776 = vld [vmem:[%s0 + $0x510] sm:$0xf]
      %v777 = vld [vmem:[%s0 + $0x514] sm:$0xf]
      %v778 = vld [vmem:[%s0 + $0x518] sm:$0xf]
      %v779 = vld [vmem:[%s0 + $0x51c] sm:$0xf]
      %v780 = vld [vmem:[%s0 + $0x520] sm:$0xf]
      %v781 = vld [vmem:[%s0 + $0x524] sm:$0xf]
      %v782 = vld [vmem:[%s0 + $0x528] sm:$0xf]
      %v783 = vld [vmem:[%s0 + $0x52c] sm:$0xf]
      %v784 = vld [vmem:[%s0 + $0x530] sm:$0xf]
      %v785 = vld [vmem:[%s0 + $0x534] sm:$0xf]
      %v786 = vld [vmem:[%s0 + $0x538] sm:$0xf]
      %v787 = vld [vmem:[%s0 + $0x53c] sm:$0xf]
      %v788 = vld [vmem:[%s0 + $0x540] sm:$0xf]
      %v789 = vld [vmem:[%s0 + $0x544] sm:$0xf]
      %v790 = vld [vmem:[%s0 + $0x548] sm:$0xf]
      %v791 = vld [vmem:[%s0 + $0x54c] sm:$0xf]
      %v792 = vld [vmem:[%s0 + $0x550] sm:$0xf]
      %v793 = vld [vmem:[%s0 + $0x554] sm:$0xf]
      %v794 = vld [vmem:[%s0 + $0x558] sm:$0xf]
      %v795 = vld [vmem:[%s0 + $0x55c] sm:$0xf]
      %v796 = vld [vmem:[%s0 + $0x560] sm:$0xf]
      %v797 = vld [vmem:[%s0 + $0x564] sm:$0xf]
      %v798 = vld [vmem:[%s0 + $0x568] sm:$0xf]
      %v799 = vld [vmem:[%s0 + $0x56c] sm:$0xf]
      %v800 = vld [vmem:[%s0 + $0x570] sm:$0xf]
      %v801 = vld [vmem:[%s0 + $0x574] sm:$0xf]
      %v802 = vld [vmem:[%s0 + $0x578] sm:$0xf]
      %v803 = vld [vmem:[%s0 + $0x57c] sm:$0xf]
      %v804 = vld [vmem:[%s0 + $0x580] sm:$0xf]
      %v805 = vld [vmem:[%s0 + $0x584] sm:$0xf]
      %v806 = vld [vmem:[%s0 + $0x588] sm:$0xf]
      %v807 = vld [vmem:[%s0 + $0x58c] sm:$0xf]
      %v808 = vld [vmem:[%s0 + $0x590] sm:$0xf]
      %v809 = vld [vmem:[%s0 + $0x594] sm:$0xf]
      %v810 = vld [vmem:[%s0 + $0x598] sm:$0xf]
      %v811 = vld [vmem:[%s0 + $0x59c] sm:$0xf]
      %v812 = vld [vmem:[%s0 + $0x5a0] sm:$0xf]
      %v813 = vld [vmem:[%s0 + $0x5a4] sm:$0xf]
      %v814 = vld [vmem:[%s0 + $0x5a8] sm:$0xf]
      %v815 = vld [vmem:[%s0 + $0x5ac] sm:$0xf]
      %v816 = vld [vmem:[%s0 + $0x5b0] sm:$0xf]
      %v817 = vld [vmem:[%s0 + $0x5b4] sm:$0xf]
      %v818 = vld [vmem:[%s0 + $0x5b8] sm:$0xf]
      %v819 = vld [vmem:[%s0 + $0x5bc] sm:$0xf]
      %v820 = vld [vmem:[%s0 + $0x5c0] sm:$0xf]
      %v821 = vld [vmem:[%s0 + $0x5c4] sm:$0xf]
      %v822 = vld [vmem:[%s0 + $0x5c8] sm:$0xf]
      %v823 = vld [vmem:[%s0 + $0x5cc] sm:$0xf]
      %v824 = vld [vmem:[%s0 + $0x5d0] sm:$0xf]
      %v825 = vld [vmem:[%s0 + $0x5d4] sm:$0xf]
      %v826 = vld [vmem:[%s0 + $0x5d8] sm:$0xf]
      %v827 = vld [vmem:[%s0 + $0x5dc] sm:$0xf]
      %v828 = vld [vmem:[%s0 + $0x5e0] sm:$0xf]
      %v829 = vld [vmem:[%s0 + $0x5e4] sm:$0xf]
      %v830 = vld [vmem:[%s0 + $0x5e8] sm:$0xf]
      %v831 = vld [vmem:[%s0 + $0x5ec] sm:$0xf]
      %v832 = vld [vmem:[%s0 + $0x5f0] sm:$0xf]
      %v833 = vld [vmem:[%s0 + $0x5f4] sm:$0xf]
      %v834 = vld [vmem:[%s0 + $0x5f8] sm:$0xf]
      %v835 = vld [vmem:[%s0 + $0x5fc] sm:$0xf]
      %v836 = vld [vmem:[%s0 + $0x600] sm:$0xf]
      %v837 = vld [vmem:[%s0 + $0x604] sm:$0xf]
      %v838 = vld [vmem:[%s0 + $0x608] sm:$0xf]
      %v839 = vld [vmem:[%s0 + $0x60c] sm:$0xf]
      %v840 = vld [vmem:[%s0 + $0x610] sm:$0xf]
      %v841 = vld [vmem:[%s0 + $0x614] sm:$0xf]
      %v842 = vld [vmem:[%s0 + $0x618] sm:$0xf]
      %v843 = vld [vmem:[%s0 + $0x61c] sm:$0xf]
      %v844 = vld [vmem:[%s402] sm:$0xff]
      %v845 = vld [vmem:[%s402 + $0x8] sm:$0xff]
      %v846 = vld [vmem:[%s402 + $0x10] sm:$0xff]
      %v847 = vld [vmem:[%s402 + $0x18] sm:$0xff]
      %v848 = vld [vmem:[%s402 + $0x20] sm:$0xff]
      %v849 = vld [vmem:[%s402 + $0x28] sm:$0xff]
      %v850 = vld [vmem:[%s402 + $0x30] sm:$0xff]
      %v851 = vld [vmem:[%s402 + $0x38] sm:$0xff]
      %v852 = vld [vmem:[%s402 + $0x40] sm:$0xff]
      %v853 = vld [vmem:[%s402 + $0x48] sm:$0xff]
      %v854 = vld [vmem:[%s402 + $0x50] sm:$0xff]
      %v855 = vld [vmem:[%s402 + $0x58] sm:$0xff]
      %v856 = vld [vmem:[%s402 + $0x60] sm:$0xf]
      %v857 = vld [vmem:[%s402 + $0x64] sm:$0xff]
      %v858 = vld [vmem:[%s402 + $0x6c] sm:$0xff]
      %v859 = vld [vmem:[%s402 + $0x74] sm:$0xff]
      %v860 = vld [vmem:[%s402 + $0x7c] sm:$0xff]
      %v861 = vld [vmem:[%s402 + $0x84] sm:$0xff]
      %v862 = vld [vmem:[%s402 + $0x8c] sm:$0xff]
      %v863 = vld [vmem:[%s402 + $0x94] sm:$0xff]
      %v864 = vld [vmem:[%s402 + $0x9c] sm:$0xff]
      %v865 = vld [vmem:[%s402 + $0xa4] sm:$0xff]
      %v866 = vld [vmem:[%s402 + $0xac] sm:$0xff]
      %v867 = vld [vmem:[%s402 + $0xb4] sm:$0xff]
      %v868 = vld [vmem:[%s402 + $0xbc] sm:$0xff]
      %v869 = vld [vmem:[%s402 + $0xc4] sm:$0xf]
      %v870 = vld [vmem:[%s402 + $0xc8] sm:$0xff]
      %v871 = vld [vmem:[%s402 + $0xd0] sm:$0xff]
      %v872 = vld [vmem:[%s402 + $0xd8] sm:$0xff]
      %v873 = vld [vmem:[%s402 + $0xe0] sm:$0xff]
      %v874 = vld [vmem:[%s402 + $0xe8] sm:$0xff]
      %v875 = vld [vmem:[%s402 + $0xf0] sm:$0xff]
      %v876 = vld [vmem:[%s402 + $0xf8] sm:$0xff]
      %v877 = vld [vmem:[%s402 + $0x100] sm:$0xff]
      %v878 = vld [vmem:[%s402 + $0x108] sm:$0xff]
      %v879 = vld [vmem:[%s402 + $0x110] sm:$0xff]
      %v880 = vld [vmem:[%s402 + $0x118] sm:$0xff]
      %v881 = vld [vmem:[%s402 + $0x120] sm:$0xff]
      %v882 = vld [vmem:[%s402 + $0x128] sm:$0xf]
      %v883 = vld [vmem:[%s402 + $0x12c] sm:$0xff]
      %v884 = vld [vmem:[%s402 + $0x134] sm:$0xff]
      %v885 = vld [vmem:[%s402 + $0x13c] sm:$0xff]
      %v886 = vld [vmem:[%s402 + $0x144] sm:$0xff]
      %v887 = vld [vmem:[%s402 + $0x14c] sm:$0xff]
      %v888 = vld [vmem:[%s402 + $0x154] sm:$0xff]
      %v889 = vld [vmem:[%s402 + $0x15c] sm:$0xff]
      %v890 = vld [vmem:[%s402 + $0x164] sm:$0xff]
      %v891 = vld [vmem:[%s402 + $0x16c] sm:$0xff]
      %v892 = vld [vmem:[%s402 + $0x174] sm:$0xff]
      %v893 = vld [vmem:[%s402 + $0x17c] sm:$0xff]
      %v894 = vld [vmem:[%s402 + $0x184] sm:$0xff]
      %v895 = vld [vmem:[%s402 + $0x18c] sm:$0xf]
      %v896 = vld [vmem:[%s402 + $0x190] sm:$0xff]
      %v897 = vld [vmem:[%s402 + $0x198] sm:$0xff]
      %v898 = vld [vmem:[%s402 + $0x1a0] sm:$0xff]
      %v899 = vld [vmem:[%s402 + $0x1a8] sm:$0xff]
      %v900 = vld [vmem:[%s402 + $0x1b0] sm:$0xff]
      %v901 = vld [vmem:[%s402 + $0x1b8] sm:$0xff]
      %v902 = vld [vmem:[%s402 + $0x1c0] sm:$0xff]
      %v903 = vld [vmem:[%s402 + $0x1c8] sm:$0xff]
      %v904 = vld [vmem:[%s402 + $0x1d0] sm:$0xff]
      %v905 = vld [vmem:[%s402 + $0x1d8] sm:$0xff]
      %v906 = vld [vmem:[%s402 + $0x1e0] sm:$0xff]
      %v907 = vld [vmem:[%s402 + $0x1e8] sm:$0xff]
      %v908 = vld [vmem:[%s402 + $0x1f0] sm:$0xf]
      %v909 = vld [vmem:[%s402 + $0x1f4] sm:$0xff]
      %v910 = vld [vmem:[%s402 + $0x1fc] sm:$0xff]
      %v911 = vld [vmem:[%s402 + $0x204] sm:$0xff]
      %v912 = vld [vmem:[%s402 + $0x20c] sm:$0xff]
      %v913 = vld [vmem:[%s402 + $0x214] sm:$0xff]
      %v914 = vld [vmem:[%s402 + $0x21c] sm:$0xff]
      %v915 = vld [vmem:[%s402 + $0x224] sm:$0xff]
      %v916 = vld [vmem:[%s402 + $0x22c] sm:$0xff]
      %v917 = vld [vmem:[%s402 + $0x234] sm:$0xff]
      %v918 = vld [vmem:[%s402 + $0x23c] sm:$0xff]
      %v919 = vld [vmem:[%s402 + $0x244] sm:$0xff]
      %v920 = vld [vmem:[%s402 + $0x24c] sm:$0xff]
      %v921 = vld [vmem:[%s402 + $0x254] sm:$0xf]
      %v922 = vld [vmem:[%s402 + $0x258] sm:$0xff]
      %v923 = vld [vmem:[%s402 + $0x260] sm:$0xff]
      %v924 = vld [vmem:[%s402 + $0x268] sm:$0xff]
      %v925 = vld [vmem:[%s402 + $0x270] sm:$0xff]
      %v926 = vld [vmem:[%s402 + $0x278] sm:$0xff]
      %v927 = vld [vmem:[%s402 + $0x280] sm:$0xff]
      %v928 = vld [vmem:[%s402 + $0x288] sm:$0xff]
      %v929 = vld [vmem:[%s402 + $0x290] sm:$0xff]
      %v930 = vld [vmem:[%s402 + $0x298] sm:$0xff]
      %v931 = vld [vmem:[%s402 + $0x2a0] sm:$0xff]
      %v932 = vld [vmem:[%s402 + $0x2a8] sm:$0xff]
      %v933 = vld [vmem:[%s402 + $0x2b0] sm:$0xff]
      %v934 = vld [vmem:[%s402 + $0x2b8] sm:$0xf]
      %v935 = vld [vmem:[%s402 + $0x2bc] sm:$0xff]
      %v936 = vld [vmem:[%s402 + $0x2c4] sm:$0xff]
      %v937 = vld [vmem:[%s402 + $0x2cc] sm:$0xff]
      %v938 = vld [vmem:[%s402 + $0x2d4] sm:$0xff]
      %v939 = vld [vmem:[%s402 + $0x2dc] sm:$0xff]
      %v940 = vld [vmem:[%s402 + $0x2e4] sm:$0xff]
      %v941 = vld [vmem:[%s402 + $0x2ec] sm:$0xff]
      %v942 = vld [vmem:[%s402 + $0x2f4] sm:$0xff]
      %v943 = vld [vmem:[%s402 + $0x2fc] sm:$0xff]
      %v944 = vld [vmem:[%s402 + $0x304] sm:$0xff]
      %v945 = vld [vmem:[%s402 + $0x30c] sm:$0xff]
      %v946 = vld [vmem:[%s402 + $0x314] sm:$0xff]
      %v947 = vld [vmem:[%s402 + $0x31c] sm:$0xf]
      %v948 = vunpack.c.l.bf16 %v844
      %v949 = vunpack.c.h.bf16 %v844
      %v950 = vunpack.c.l.bf16 %v845
      %v951 = vunpack.c.h.bf16 %v845
      %v952 = vunpack.c.l.bf16 %v846
      %v953 = vunpack.c.h.bf16 %v846
      %v954 = vunpack.c.l.bf16 %v847
      %v955 = vunpack.c.h.bf16 %v847
      %v956 = vunpack.c.l.bf16 %v848
      %v957 = vunpack.c.h.bf16 %v848
      %v958 = vunpack.c.l.bf16 %v849
      %v959 = vunpack.c.h.bf16 %v849
      %v960 = vunpack.c.l.bf16 %v850
      %v961 = vunpack.c.h.bf16 %v850
      %v962 = vunpack.c.l.bf16 %v851
      %v963 = vunpack.c.h.bf16 %v851
      %v964 = vunpack.c.l.bf16 %v852
      %v965 = vunpack.c.h.bf16 %v852
      %v966 = vunpack.c.l.bf16 %v853
      %v967 = vunpack.c.h.bf16 %v853
      %v968 = vunpack.c.l.bf16 %v854
      %v969 = vunpack.c.h.bf16 %v854
      %v970 = vunpack.c.l.bf16 %v855
      %v971 = vunpack.c.h.bf16 %v855
      %v972 = vunpack.c.l.bf16 %v856
      %v973 = vunpack.c.l.bf16 %v857
      %v974 = vunpack.c.h.bf16 %v857
      %v975 = vunpack.c.l.bf16 %v858
      %v976 = vunpack.c.h.bf16 %v858
      %v977 = vunpack.c.l.bf16 %v859
      %v978 = vunpack.c.h.bf16 %v859
      %v979 = vunpack.c.l.bf16 %v860
      %v980 = vunpack.c.h.bf16 %v860
      %v981 = vunpack.c.l.bf16 %v861
      %v982 = vunpack.c.h.bf16 %v861
      %v983 = vunpack.c.l.bf16 %v862
      %v984 = vunpack.c.h.bf16 %v862
      %v985 = vunpack.c.l.bf16 %v863
      %v986 = vunpack.c.h.bf16 %v863
      %v987 = vunpack.c.l.bf16 %v864
      %v988 = vunpack.c.h.bf16 %v864
      %v989 = vunpack.c.l.bf16 %v865
      %v990 = vunpack.c.h.bf16 %v865
      %v991 = vunpack.c.l.bf16 %v866
      %v992 = vunpack.c.h.bf16 %v866
      %v993 = vunpack.c.l.bf16 %v867
      %v994 = vunpack.c.h.bf16 %v867
      %v995 = vunpack.c.l.bf16 %v868
      %v996 = vunpack.c.h.bf16 %v868
      %v997 = vunpack.c.l.bf16 %v869
      %v998 = vunpack.c.l.bf16 %v870
      %v999 = vunpack.c.h.bf16 %v870
      %v1000 = vunpack.c.l.bf16 %v871
      %v1001 = vunpack.c.h.bf16 %v871
      %v1002 = vunpack.c.l.bf16 %v872
      %v1003 = vunpack.c.h.bf16 %v872
      %v1004 = vunpack.c.l.bf16 %v873
      %v1005 = vunpack.c.h.bf16 %v873
      %v1006 = vunpack.c.l.bf16 %v874
      %v1007 = vunpack.c.h.bf16 %v874
      %v1008 = vunpack.c.l.bf16 %v875
      %v1009 = vunpack.c.h.bf16 %v875
      %v1010 = vunpack.c.l.bf16 %v876
      %v1011 = vunpack.c.h.bf16 %v876
      %v1012 = vunpack.c.l.bf16 %v877
      %v1013 = vunpack.c.h.bf16 %v877
      %v1014 = vunpack.c.l.bf16 %v878
      %v1015 = vunpack.c.h.bf16 %v878
      %v1016 = vunpack.c.l.bf16 %v879
      %v1017 = vunpack.c.h.bf16 %v879
      %v1018 = vunpack.c.l.bf16 %v880
      %v1019 = vunpack.c.h.bf16 %v880
      %v1020 = vunpack.c.l.bf16 %v881
      %v1021 = vunpack.c.h.bf16 %v881
      %v1022 = vunpack.c.l.bf16 %v882
      %v1023 = vunpack.c.l.bf16 %v883
      %v1024 = vunpack.c.h.bf16 %v883
      %v1025 = vunpack.c.l.bf16 %v884
      %v1026 = vunpack.c.h.bf16 %v884
      %v1027 = vunpack.c.l.bf16 %v885
      %v1028 = vunpack.c.h.bf16 %v885
      %v1029 = vunpack.c.l.bf16 %v886
      %v1030 = vunpack.c.h.bf16 %v886
      %v1031 = vunpack.c.l.bf16 %v887
      %v1032 = vunpack.c.h.bf16 %v887
      %v1033 = vunpack.c.l.bf16 %v888
      %v1034 = vunpack.c.h.bf16 %v888
      %v1035 = vunpack.c.l.bf16 %v889
      %v1036 = vunpack.c.h.bf16 %v889
      %v1037 = vunpack.c.l.bf16 %v890
      %v1038 = vunpack.c.h.bf16 %v890
      %v1039 = vunpack.c.l.bf16 %v891
      %v1040 = vunpack.c.h.bf16 %v891
      %v1041 = vunpack.c.l.bf16 %v892
      %v1042 = vunpack.c.h.bf16 %v892
      %v1043 = vunpack.c.l.bf16 %v893
      %v1044 = vunpack.c.h.bf16 %v893
      %v1045 = vunpack.c.l.bf16 %v894
      %v1046 = vunpack.c.h.bf16 %v894
      %v1047 = vunpack.c.l.bf16 %v895
      %v1048 = vunpack.c.l.bf16 %v896
      %v1049 = vunpack.c.h.bf16 %v896
      %v1050 = vunpack.c.l.bf16 %v897
      %v1051 = vunpack.c.h.bf16 %v897
      %v1052 = vunpack.c.l.bf16 %v898
      %v1053 = vunpack.c.h.bf16 %v898
      %v1054 = vunpack.c.l.bf16 %v899
      %v1055 = vunpack.c.h.bf16 %v899
      %v1056 = vunpack.c.l.bf16 %v900
      %v1057 = vunpack.c.h.bf16 %v900
      %v1058 = vunpack.c.l.bf16 %v901
      %v1059 = vunpack.c.h.bf16 %v901
      %v1060 = vunpack.c.l.bf16 %v902
      %v1061 = vunpack.c.h.bf16 %v902
      %v1062 = vunpack.c.l.bf16 %v903
      %v1063 = vunpack.c.h.bf16 %v903
      %v1064 = vunpack.c.l.bf16 %v904
      %v1065 = vunpack.c.h.bf16 %v904
      %v1066 = vunpack.c.l.bf16 %v905
      %v1067 = vunpack.c.h.bf16 %v905
      %v1068 = vunpack.c.l.bf16 %v906
      %v1069 = vunpack.c.h.bf16 %v906
      %v1070 = vunpack.c.l.bf16 %v907
      %v1071 = vunpack.c.h.bf16 %v907
      %v1072 = vunpack.c.l.bf16 %v908
      %v1073 = vunpack.c.l.bf16 %v909
      %v1074 = vunpack.c.h.bf16 %v909
      %v1075 = vunpack.c.l.bf16 %v910
      %v1076 = vunpack.c.h.bf16 %v910
      %v1077 = vunpack.c.l.bf16 %v911
      %v1078 = vunpack.c.h.bf16 %v911
      %v1079 = vunpack.c.l.bf16 %v912
      %v1080 = vunpack.c.h.bf16 %v912
      %v1081 = vunpack.c.l.bf16 %v913
      %v1082 = vunpack.c.h.bf16 %v913
      %v1083 = vunpack.c.l.bf16 %v914
      %v1084 = vunpack.c.h.bf16 %v914
      %v1085 = vunpack.c.l.bf16 %v915
      %v1086 = vunpack.c.h.bf16 %v915
      %v1087 = vunpack.c.l.bf16 %v916
      %v1088 = vunpack.c.h.bf16 %v916
      %v1089 = vunpack.c.l.bf16 %v917
      %v1090 = vunpack.c.h.bf16 %v917
      %v1091 = vunpack.c.l.bf16 %v918
      %v1092 = vunpack.c.h.bf16 %v918
      %v1093 = vunpack.c.l.bf16 %v919
      %v1094 = vunpack.c.h.bf16 %v919
      %v1095 = vunpack.c.l.bf16 %v920
      %v1096 = vunpack.c.h.bf16 %v920
      %v1097 = vunpack.c.l.bf16 %v921
      %v1098 = vunpack.c.l.bf16 %v922
      %v1099 = vunpack.c.h.bf16 %v922
      %v1100 = vunpack.c.l.bf16 %v923
      %v1101 = vunpack.c.h.bf16 %v923
      %v1102 = vunpack.c.l.bf16 %v924
      %v1103 = vunpack.c.h.bf16 %v924
      %v1104 = vunpack.c.l.bf16 %v925
      %v1105 = vunpack.c.h.bf16 %v925
      %v1106 = vunpack.c.l.bf16 %v926
      %v1107 = vunpack.c.h.bf16 %v926
      %v1108 = vunpack.c.l.bf16 %v927
      %v1109 = vunpack.c.h.bf16 %v927
      %v1110 = vunpack.c.l.bf16 %v928
      %v1111 = vunpack.c.h.bf16 %v928
      %v1112 = vunpack.c.l.bf16 %v929
      %v1113 = vunpack.c.h.bf16 %v929
      %v1114 = vunpack.c.l.bf16 %v930
      %v1115 = vunpack.c.h.bf16 %v930
      %v1116 = vunpack.c.l.bf16 %v931
      %v1117 = vunpack.c.h.bf16 %v931
      %v1118 = vunpack.c.l.bf16 %v932
      %v1119 = vunpack.c.h.bf16 %v932
      %v1120 = vunpack.c.l.bf16 %v933
      %v1121 = vunpack.c.h.bf16 %v933
      %v1122 = vunpack.c.l.bf16 %v934
      %v1123 = vunpack.c.l.bf16 %v935
      %v1124 = vunpack.c.h.bf16 %v935
      %v1125 = vunpack.c.l.bf16 %v936
      %v1126 = vunpack.c.h.bf16 %v936
      %v1127 = vunpack.c.l.bf16 %v937
      %v1128 = vunpack.c.h.bf16 %v937
      %v1129 = vunpack.c.l.bf16 %v938
      %v1130 = vunpack.c.h.bf16 %v938
      %v1131 = vunpack.c.l.bf16 %v939
      %v1132 = vunpack.c.h.bf16 %v939
      %v1133 = vunpack.c.l.bf16 %v940
      %v1134 = vunpack.c.h.bf16 %v940
      %v1135 = vunpack.c.l.bf16 %v941
      %v1136 = vunpack.c.h.bf16 %v941
      %v1137 = vunpack.c.l.bf16 %v942
      %v1138 = vunpack.c.h.bf16 %v942
      %v1139 = vunpack.c.l.bf16 %v943
      %v1140 = vunpack.c.h.bf16 %v943
      %v1141 = vunpack.c.l.bf16 %v944
      %v1142 = vunpack.c.h.bf16 %v944
      %v1143 = vunpack.c.l.bf16 %v945
      %v1144 = vunpack.c.h.bf16 %v945
      %v1145 = vunpack.c.l.bf16 %v946
      %v1146 = vunpack.c.h.bf16 %v946
      %v1147 = vunpack.c.l.bf16 %v947
      %v1148 = vld [vmem:[%s409] sm:$0xff]
      %v1149 = vld [vmem:[%s409 + $0x8] sm:$0xff]
      %v1150 = vld [vmem:[%s409 + $0x10] sm:$0xff]
      %v1151 = vld [vmem:[%s409 + $0x18] sm:$0xff]
      %v1152 = vld [vmem:[%s409 + $0x20] sm:$0xff]
      %v1153 = vld [vmem:[%s409 + $0x28] sm:$0xff]
      %v1154 = vld [vmem:[%s409 + $0x30] sm:$0xff]
      %v1155 = vld [vmem:[%s409 + $0x38] sm:$0xff]
      %v1156 = vld [vmem:[%s409 + $0x40] sm:$0xff]
      %v1157 = vld [vmem:[%s409 + $0x48] sm:$0xff]
      %v1158 = vld [vmem:[%s409 + $0x50] sm:$0xff]
      %v1159 = vld [vmem:[%s409 + $0x58] sm:$0xff]
      %v1160 = vld [vmem:[%s409 + $0x60] sm:$0xf]
      %v1161 = vld [vmem:[%s409 + $0x64] sm:$0xff]
      %v1162 = vld [vmem:[%s409 + $0x6c] sm:$0xff]
      %v1163 = vld [vmem:[%s409 + $0x74] sm:$0xff]
      %v1164 = vld [vmem:[%s409 + $0x7c] sm:$0xff]
      %v1165 = vld [vmem:[%s409 + $0x84] sm:$0xff]
      %v1166 = vld [vmem:[%s409 + $0x8c] sm:$0xff]
      %v1167 = vld [vmem:[%s409 + $0x94] sm:$0xff]
      %v1168 = vld [vmem:[%s409 + $0x9c] sm:$0xff]
      %v1169 = vld [vmem:[%s409 + $0xa4] sm:$0xff]
      %v1170 = vld [vmem:[%s409 + $0xac] sm:$0xff]
      %v1171 = vld [vmem:[%s409 + $0xb4] sm:$0xff]
      %v1172 = vld [vmem:[%s409 + $0xbc] sm:$0xff]
      %v1173 = vld [vmem:[%s409 + $0xc4] sm:$0xf]
      %v1174 = vld [vmem:[%s409 + $0xc8] sm:$0xff]
      %v1175 = vld [vmem:[%s409 + $0xd0] sm:$0xff]
      %v1176 = vld [vmem:[%s409 + $0xd8] sm:$0xff]
      %v1177 = vld [vmem:[%s409 + $0xe0] sm:$0xff]
      %v1178 = vld [vmem:[%s409 + $0xe8] sm:$0xff]
      %v1179 = vld [vmem:[%s409 + $0xf0] sm:$0xff]
      %v1180 = vld [vmem:[%s409 + $0xf8] sm:$0xff]
      %v1181 = vld [vmem:[%s409 + $0x100] sm:$0xff]
      %v1182 = vld [vmem:[%s409 + $0x108] sm:$0xff]
      %v1183 = vld [vmem:[%s409 + $0x110] sm:$0xff]
      %v1184 = vld [vmem:[%s409 + $0x118] sm:$0xff]
      %v1185 = vld [vmem:[%s409 + $0x120] sm:$0xff]
      %v1186 = vld [vmem:[%s409 + $0x128] sm:$0xf]
      %v1187 = vld [vmem:[%s409 + $0x12c] sm:$0xff]
      %v1188 = vld [vmem:[%s409 + $0x134] sm:$0xff]
      %v1189 = vld [vmem:[%s409 + $0x13c] sm:$0xff]
      %v1190 = vld [vmem:[%s409 + $0x144] sm:$0xff]
      %v1191 = vld [vmem:[%s409 + $0x14c] sm:$0xff]
      %v1192 = vld [vmem:[%s409 + $0x154] sm:$0xff]
      %v1193 = vld [vmem:[%s409 + $0x15c] sm:$0xff]
      %v1194 = vld [vmem:[%s409 + $0x164] sm:$0xff]
      %v1195 = vld [vmem:[%s409 + $0x16c] sm:$0xff]
      %v1196 = vld [vmem:[%s409 + $0x174] sm:$0xff]
      %v1197 = vld [vmem:[%s409 + $0x17c] sm:$0xff]
      %v1198 = vld [vmem:[%s409 + $0x184] sm:$0xff]
      %v1199 = vld [vmem:[%s409 + $0x18c] sm:$0xf]
      %v1200 = vld [vmem:[%s409 + $0x190] sm:$0xff]
      %v1201 = vld [vmem:[%s409 + $0x198] sm:$0xff]
      %v1202 = vld [vmem:[%s409 + $0x1a0] sm:$0xff]
      %v1203 = vld [vmem:[%s409 + $0x1a8] sm:$0xff]
      %v1204 = vld [vmem:[%s409 + $0x1b0] sm:$0xff]
      %v1205 = vld [vmem:[%s409 + $0x1b8] sm:$0xff]
      %v1206 = vld [vmem:[%s409 + $0x1c0] sm:$0xff]
      %v1207 = vld [vmem:[%s409 + $0x1c8] sm:$0xff]
      %v1208 = vld [vmem:[%s409 + $0x1d0] sm:$0xff]
      %v1209 = vld [vmem:[%s409 + $0x1d8] sm:$0xff]
      %v1210 = vld [vmem:[%s409 + $0x1e0] sm:$0xff]
      %v1211 = vld [vmem:[%s409 + $0x1e8] sm:$0xff]
      %v1212 = vld [vmem:[%s409 + $0x1f0] sm:$0xf]
      %v1213 = vld [vmem:[%s409 + $0x1f4] sm:$0xff]
      %v1214 = vld [vmem:[%s409 + $0x1fc] sm:$0xff]
      %v1215 = vld [vmem:[%s409 + $0x204] sm:$0xff]
      %v1216 = vld [vmem:[%s409 + $0x20c] sm:$0xff]
      %v1217 = vld [vmem:[%s409 + $0x214] sm:$0xff]
      %v1218 = vld [vmem:[%s409 + $0x21c] sm:$0xff]
      %v1219 = vld [vmem:[%s409 + $0x224] sm:$0xff]
      %v1220 = vld [vmem:[%s409 + $0x22c] sm:$0xff]
      %v1221 = vld [vmem:[%s409 + $0x234] sm:$0xff]
      %v1222 = vld [vmem:[%s409 + $0x23c] sm:$0xff]
      %v1223 = vld [vmem:[%s409 + $0x244] sm:$0xff]
      %v1224 = vld [vmem:[%s409 + $0x24c] sm:$0xff]
      %v1225 = vld [vmem:[%s409 + $0x254] sm:$0xf]
      %v1226 = vld [vmem:[%s409 + $0x258] sm:$0xff]
      %v1227 = vld [vmem:[%s409 + $0x260] sm:$0xff]
      %v1228 = vld [vmem:[%s409 + $0x268] sm:$0xff]
      %v1229 = vld [vmem:[%s409 + $0x270] sm:$0xff]
      %v1230 = vld [vmem:[%s409 + $0x278] sm:$0xff]
      %v1231 = vld [vmem:[%s409 + $0x280] sm:$0xff]
      %v1232 = vld [vmem:[%s409 + $0x288] sm:$0xff]
      %v1233 = vld [vmem:[%s409 + $0x290] sm:$0xff]
      %v1234 = vld [vmem:[%s409 + $0x298] sm:$0xff]
      %v1235 = vld [vmem:[%s409 + $0x2a0] sm:$0xff]
      %v1236 = vld [vmem:[%s409 + $0x2a8] sm:$0xff]
      %v1237 = vld [vmem:[%s409 + $0x2b0] sm:$0xff]
      %v1238 = vld [vmem:[%s409 + $0x2b8] sm:$0xf]
      %v1239 = vld [vmem:[%s409 + $0x2bc] sm:$0xff]
      %v1240 = vld [vmem:[%s409 + $0x2c4] sm:$0xff]
      %v1241 = vld [vmem:[%s409 + $0x2cc] sm:$0xff]
      %v1242 = vld [vmem:[%s409 + $0x2d4] sm:$0xff]
      %v1243 = vld [vmem:[%s409 + $0x2dc] sm:$0xff]
      %v1244 = vld [vmem:[%s409 + $0x2e4] sm:$0xff]
      %v1245 = vld [vmem:[%s409 + $0x2ec] sm:$0xff]
      %v1246 = vld [vmem:[%s409 + $0x2f4] sm:$0xff]
      %v1247 = vld [vmem:[%s409 + $0x2fc] sm:$0xff]
      %v1248 = vld [vmem:[%s409 + $0x304] sm:$0xff]
      %v1249 = vld [vmem:[%s409 + $0x30c] sm:$0xff]
      %v1250 = vld [vmem:[%s409 + $0x314] sm:$0xff]
      %v1251 = vld [vmem:[%s409 + $0x31c] sm:$0xf]
      %v1252 = vunpack.c.l.bf16 %v1148
      %v1253 = vunpack.c.h.bf16 %v1148
      %v1254 = vunpack.c.l.bf16 %v1149
      %v1255 = vunpack.c.h.bf16 %v1149
      %v1256 = vunpack.c.l.bf16 %v1150
      %v1257 = vunpack.c.h.bf16 %v1150
      %v1258 = vunpack.c.l.bf16 %v1151
      %v1259 = vunpack.c.h.bf16 %v1151
      %v1260 = vunpack.c.l.bf16 %v1152
      %v1261 = vunpack.c.h.bf16 %v1152
      %v1262 = vunpack.c.l.bf16 %v1153
      %v1263 = vunpack.c.h.bf16 %v1153
      %v1264 = vunpack.c.l.bf16 %v1154
      %v1265 = vunpack.c.h.bf16 %v1154
      %v1266 = vunpack.c.l.bf16 %v1155
      %v1267 = vunpack.c.h.bf16 %v1155
      %v1268 = vunpack.c.l.bf16 %v1156
      %v1269 = vunpack.c.h.bf16 %v1156
      %v1270 = vunpack.c.l.bf16 %v1157
      %v1271 = vunpack.c.h.bf16 %v1157
      %v1272 = vunpack.c.l.bf16 %v1158
      %v1273 = vunpack.c.h.bf16 %v1158
      %v1274 = vunpack.c.l.bf16 %v1159
      %v1275 = vunpack.c.h.bf16 %v1159
      %v1276 = vunpack.c.l.bf16 %v1160
      %v1277 = vunpack.c.l.bf16 %v1161
      %v1278 = vunpack.c.h.bf16 %v1161
      %v1279 = vunpack.c.l.bf16 %v1162
      %v1280 = vunpack.c.h.bf16 %v1162
      %v1281 = vunpack.c.l.bf16 %v1163
      %v1282 = vunpack.c.h.bf16 %v1163
      %v1283 = vunpack.c.l.bf16 %v1164
      %v1284 = vunpack.c.h.bf16 %v1164
      %v1285 = vunpack.c.l.bf16 %v1165
      %v1286 = vunpack.c.h.bf16 %v1165
      %v1287 = vunpack.c.l.bf16 %v1166
      %v1288 = vunpack.c.h.bf16 %v1166
      %v1289 = vunpack.c.l.bf16 %v1167
      %v1290 = vunpack.c.h.bf16 %v1167
      %v1291 = vunpack.c.l.bf16 %v1168
      %v1292 = vunpack.c.h.bf16 %v1168
      %v1293 = vunpack.c.l.bf16 %v1169
      %v1294 = vunpack.c.h.bf16 %v1169
      %v1295 = vunpack.c.l.bf16 %v1170
      %v1296 = vunpack.c.h.bf16 %v1170
      %v1297 = vunpack.c.l.bf16 %v1171
      %v1298 = vunpack.c.h.bf16 %v1171
      %v1299 = vunpack.c.l.bf16 %v1172
      %v1300 = vunpack.c.h.bf16 %v1172
      %v1301 = vunpack.c.l.bf16 %v1173
      %v1302 = vunpack.c.l.bf16 %v1174
      %v1303 = vunpack.c.h.bf16 %v1174
      %v1304 = vunpack.c.l.bf16 %v1175
      %v1305 = vunpack.c.h.bf16 %v1175
      %v1306 = vunpack.c.l.bf16 %v1176
      %v1307 = vunpack.c.h.bf16 %v1176
      %v1308 = vunpack.c.l.bf16 %v1177
      %v1309 = vunpack.c.h.bf16 %v1177
      %v1310 = vunpack.c.l.bf16 %v1178
      %v1311 = vunpack.c.h.bf16 %v1178
      %v1312 = vunpack.c.l.bf16 %v1179
      %v1313 = vunpack.c.h.bf16 %v1179
      %v1314 = vunpack.c.l.bf16 %v1180
      %v1315 = vunpack.c.h.bf16 %v1180
      %v1316 = vunpack.c.l.bf16 %v1181
      %v1317 = vunpack.c.h.bf16 %v1181
      %v1318 = vunpack.c.l.bf16 %v1182
      %v1319 = vunpack.c.h.bf16 %v1182
      %v1320 = vunpack.c.l.bf16 %v1183
      %v1321 = vunpack.c.h.bf16 %v1183
      %v1322 = vunpack.c.l.bf16 %v1184
      %v1323 = vunpack.c.h.bf16 %v1184
      %v1324 = vunpack.c.l.bf16 %v1185
      %v1325 = vunpack.c.h.bf16 %v1185
      %v1326 = vunpack.c.l.bf16 %v1186
      %v1327 = vunpack.c.l.bf16 %v1187
      %v1328 = vunpack.c.h.bf16 %v1187
      %v1329 = vunpack.c.l.bf16 %v1188
      %v1330 = vunpack.c.h.bf16 %v1188
      %v1331 = vunpack.c.l.bf16 %v1189
      %v1332 = vunpack.c.h.bf16 %v1189
      %v1333 = vunpack.c.l.bf16 %v1190
      %v1334 = vunpack.c.h.bf16 %v1190
      %v1335 = vunpack.c.l.bf16 %v1191
      %v1336 = vunpack.c.h.bf16 %v1191
      %v1337 = vunpack.c.l.bf16 %v1192
      %v1338 = vunpack.c.h.bf16 %v1192
      %v1339 = vunpack.c.l.bf16 %v1193
      %v1340 = vunpack.c.h.bf16 %v1193
      %v1341 = vunpack.c.l.bf16 %v1194
      %v1342 = vunpack.c.h.bf16 %v1194
      %v1343 = vunpack.c.l.bf16 %v1195
      %v1344 = vunpack.c.h.bf16 %v1195
      %v1345 = vunpack.c.l.bf16 %v1196
      %v1346 = vunpack.c.h.bf16 %v1196
      %v1347 = vunpack.c.l.bf16 %v1197
      %v1348 = vunpack.c.h.bf16 %v1197
      %v1349 = vunpack.c.l.bf16 %v1198
      %v1350 = vunpack.c.h.bf16 %v1198
      %v1351 = vunpack.c.l.bf16 %v1199
      %v1352 = vunpack.c.l.bf16 %v1200
      %v1353 = vunpack.c.h.bf16 %v1200
      %v1354 = vunpack.c.l.bf16 %v1201
      %v1355 = vunpack.c.h.bf16 %v1201
      %v1356 = vunpack.c.l.bf16 %v1202
      %v1357 = vunpack.c.h.bf16 %v1202
      %v1358 = vunpack.c.l.bf16 %v1203
      %v1359 = vunpack.c.h.bf16 %v1203
      %v1360 = vunpack.c.l.bf16 %v1204
      %v1361 = vunpack.c.h.bf16 %v1204
      %v1362 = vunpack.c.l.bf16 %v1205
      %v1363 = vunpack.c.h.bf16 %v1205
      %v1364 = vunpack.c.l.bf16 %v1206
      %v1365 = vunpack.c.h.bf16 %v1206
      %v1366 = vunpack.c.l.bf16 %v1207
      %v1367 = vunpack.c.h.bf16 %v1207
      %v1368 = vunpack.c.l.bf16 %v1208
      %v1369 = vunpack.c.h.bf16 %v1208
      %v1370 = vunpack.c.l.bf16 %v1209
      %v1371 = vunpack.c.h.bf16 %v1209
      %v1372 = vunpack.c.l.bf16 %v1210
      %v1373 = vunpack.c.h.bf16 %v1210
      %v1374 = vunpack.c.l.bf16 %v1211
      %v1375 = vunpack.c.h.bf16 %v1211
      %v1376 = vunpack.c.l.bf16 %v1212
      %v1377 = vunpack.c.l.bf16 %v1213
      %v1378 = vunpack.c.h.bf16 %v1213
      %v1379 = vunpack.c.l.bf16 %v1214
      %v1380 = vunpack.c.h.bf16 %v1214
      %v1381 = vunpack.c.l.bf16 %v1215
      %v1382 = vunpack.c.h.bf16 %v1215
      %v1383 = vunpack.c.l.bf16 %v1216
      %v1384 = vunpack.c.h.bf16 %v1216
      %v1385 = vunpack.c.l.bf16 %v1217
      %v1386 = vunpack.c.h.bf16 %v1217
      %v1387 = vunpack.c.l.bf16 %v1218
      %v1388 = vunpack.c.h.bf16 %v1218
      %v1389 = vunpack.c.l.bf16 %v1219
      %v1390 = vunpack.c.h.bf16 %v1219
      %v1391 = vunpack.c.l.bf16 %v1220
      %v1392 = vunpack.c.h.bf16 %v1220
      %v1393 = vunpack.c.l.bf16 %v1221
      %v1394 = vunpack.c.h.bf16 %v1221
      %v1395 = vunpack.c.l.bf16 %v1222
      %v1396 = vunpack.c.h.bf16 %v1222
      %v1397 = vunpack.c.l.bf16 %v1223
      %v1398 = vunpack.c.h.bf16 %v1223
      %v1399 = vunpack.c.l.bf16 %v1224
      %v1400 = vunpack.c.h.bf16 %v1224
      %v1401 = vunpack.c.l.bf16 %v1225
      %v1402 = vunpack.c.l.bf16 %v1226
      %v1403 = vunpack.c.h.bf16 %v1226
      %v1404 = vunpack.c.l.bf16 %v1227
      %v1405 = vunpack.c.h.bf16 %v1227
      %v1406 = vunpack.c.l.bf16 %v1228
      %v1407 = vunpack.c.h.bf16 %v1228
      %v1408 = vunpack.c.l.bf16 %v1229
      %v1409 = vunpack.c.h.bf16 %v1229
      %v1410 = vunpack.c.l.bf16 %v1230
      %v1411 = vunpack.c.h.bf16 %v1230
      %v1412 = vunpack.c.l.bf16 %v1231
      %v1413 = vunpack.c.h.bf16 %v1231
      %v1414 = vunpack.c.l.bf16 %v1232
      %v1415 = vunpack.c.h.bf16 %v1232
      %v1416 = vunpack.c.l.bf16 %v1233
      %v1417 = vunpack.c.h.bf16 %v1233
      %v1418 = vunpack.c.l.bf16 %v1234
      %v1419 = vunpack.c.h.bf16 %v1234
      %v1420 = vunpack.c.l.bf16 %v1235
      %v1421 = vunpack.c.h.bf16 %v1235
      %v1422 = vunpack.c.l.bf16 %v1236
      %v1423 = vunpack.c.h.bf16 %v1236
      %v1424 = vunpack.c.l.bf16 %v1237
      %v1425 = vunpack.c.h.bf16 %v1237
      %v1426 = vunpack.c.l.bf16 %v1238
      %v1427 = vunpack.c.l.bf16 %v1239
      %v1428 = vunpack.c.h.bf16 %v1239
      %v1429 = vunpack.c.l.bf16 %v1240
      %v1430 = vunpack.c.h.bf16 %v1240
      %v1431 = vunpack.c.l.bf16 %v1241
      %v1432 = vunpack.c.h.bf16 %v1241
      %v1433 = vunpack.c.l.bf16 %v1242
      %v1434 = vunpack.c.h.bf16 %v1242
      %v1435 = vunpack.c.l.bf16 %v1243
      %v1436 = vunpack.c.h.bf16 %v1243
      %v1437 = vunpack.c.l.bf16 %v1244
      %v1438 = vunpack.c.h.bf16 %v1244
      %v1439 = vunpack.c.l.bf16 %v1245
      %v1440 = vunpack.c.h.bf16 %v1245
      %v1441 = vunpack.c.l.bf16 %v1246
      %v1442 = vunpack.c.h.bf16 %v1246
      %v1443 = vunpack.c.l.bf16 %v1247
      %v1444 = vunpack.c.h.bf16 %v1247
      %v1445 = vunpack.c.l.bf16 %v1248
      %v1446 = vunpack.c.h.bf16 %v1248
      %v1447 = vunpack.c.l.bf16 %v1249
      %v1448 = vunpack.c.h.bf16 %v1249
      %v1449 = vunpack.c.l.bf16 %v1250
      %v1450 = vunpack.c.h.bf16 %v1250
      %v1451 = vunpack.c.l.bf16 %v1251
      %v1452 = vld [vmem:[%s416] sm:$0xff]
      %v1453 = vld [vmem:[%s416 + $0x8] sm:$0xff]
      %v1454 = vld [vmem:[%s416 + $0x10] sm:$0xff]
      %v1455 = vld [vmem:[%s416 + $0x18] sm:$0xff]
      %v1456 = vld [vmem:[%s416 + $0x20] sm:$0xff]
      %v1457 = vld [vmem:[%s416 + $0x28] sm:$0xff]
      %v1458 = vld [vmem:[%s416 + $0x30] sm:$0xff]
      %v1459 = vld [vmem:[%s416 + $0x38] sm:$0xff]
      %v1460 = vld [vmem:[%s416 + $0x40] sm:$0xff]
      %v1461 = vld [vmem:[%s416 + $0x48] sm:$0xff]
      %v1462 = vld [vmem:[%s416 + $0x50] sm:$0xff]
      %v1463 = vld [vmem:[%s416 + $0x58] sm:$0xff]
      %v1464 = vld [vmem:[%s416 + $0x60] sm:$0xf]
      %v1465 = vld [vmem:[%s416 + $0x64] sm:$0xff]
      %v1466 = vld [vmem:[%s416 + $0x6c] sm:$0xff]
      %v1467 = vld [vmem:[%s416 + $0x74] sm:$0xff]
      %v1468 = vld [vmem:[%s416 + $0x7c] sm:$0xff]
      %v1469 = vld [vmem:[%s416 + $0x84] sm:$0xff]
      %v1470 = vld [vmem:[%s416 + $0x8c] sm:$0xff]
      %v1471 = vld [vmem:[%s416 + $0x94] sm:$0xff]
      %v1472 = vld [vmem:[%s416 + $0x9c] sm:$0xff]
      %v1473 = vld [vmem:[%s416 + $0xa4] sm:$0xff]
      %v1474 = vld [vmem:[%s416 + $0xac] sm:$0xff]
      %v1475 = vld [vmem:[%s416 + $0xb4] sm:$0xff]
      %v1476 = vld [vmem:[%s416 + $0xbc] sm:$0xff]
      %v1477 = vld [vmem:[%s416 + $0xc4] sm:$0xf]
      %v1478 = vld [vmem:[%s416 + $0xc8] sm:$0xff]
      %v1479 = vld [vmem:[%s416 + $0xd0] sm:$0xff]
      %v1480 = vld [vmem:[%s416 + $0xd8] sm:$0xff]
      %v1481 = vld [vmem:[%s416 + $0xe0] sm:$0xff]
      %v1482 = vld [vmem:[%s416 + $0xe8] sm:$0xff]
      %v1483 = vld [vmem:[%s416 + $0xf0] sm:$0xff]
      %v1484 = vld [vmem:[%s416 + $0xf8] sm:$0xff]
      %v1485 = vld [vmem:[%s416 + $0x100] sm:$0xff]
      %v1486 = vld [vmem:[%s416 + $0x108] sm:$0xff]
      %v1487 = vld [vmem:[%s416 + $0x110] sm:$0xff]
      %v1488 = vld [vmem:[%s416 + $0x118] sm:$0xff]
      %v1489 = vld [vmem:[%s416 + $0x120] sm:$0xff]
      %v1490 = vld [vmem:[%s416 + $0x128] sm:$0xf]
      %v1491 = vld [vmem:[%s416 + $0x12c] sm:$0xff]
      %v1492 = vld [vmem:[%s416 + $0x134] sm:$0xff]
      %v1493 = vld [vmem:[%s416 + $0x13c] sm:$0xff]
      %v1494 = vld [vmem:[%s416 + $0x144] sm:$0xff]
      %v1495 = vld [vmem:[%s416 + $0x14c] sm:$0xff]
      %v1496 = vld [vmem:[%s416 + $0x154] sm:$0xff]
      %v1497 = vld [vmem:[%s416 + $0x15c] sm:$0xff]
      %v1498 = vld [vmem:[%s416 + $0x164] sm:$0xff]
      %v1499 = vld [vmem:[%s416 + $0x16c] sm:$0xff]
      %v1500 = vld [vmem:[%s416 + $0x174] sm:$0xff]
      %v1501 = vld [vmem:[%s416 + $0x17c] sm:$0xff]
      %v1502 = vld [vmem:[%s416 + $0x184] sm:$0xff]
      %v1503 = vld [vmem:[%s416 + $0x18c] sm:$0xf]
      %v1504 = vld [vmem:[%s416 + $0x190] sm:$0xff]
      %v1505 = vld [vmem:[%s416 + $0x198] sm:$0xff]
      %v1506 = vld [vmem:[%s416 + $0x1a0] sm:$0xff]
      %v1507 = vld [vmem:[%s416 + $0x1a8] sm:$0xff]
      %v1508 = vld [vmem:[%s416 + $0x1b0] sm:$0xff]
      %v1509 = vld [vmem:[%s416 + $0x1b8] sm:$0xff]
      %v1510 = vld [vmem:[%s416 + $0x1c0] sm:$0xff]
      %v1511 = vld [vmem:[%s416 + $0x1c8] sm:$0xff]
      %v1512 = vld [vmem:[%s416 + $0x1d0] sm:$0xff]
      %v1513 = vld [vmem:[%s416 + $0x1d8] sm:$0xff]
      %v1514 = vld [vmem:[%s416 + $0x1e0] sm:$0xff]
      %v1515 = vld [vmem:[%s416 + $0x1e8] sm:$0xff]
      %v1516 = vld [vmem:[%s416 + $0x1f0] sm:$0xf]
      %v1517 = vld [vmem:[%s416 + $0x1f4] sm:$0xff]
      %v1518 = vld [vmem:[%s416 + $0x1fc] sm:$0xff]
      %v1519 = vld [vmem:[%s416 + $0x204] sm:$0xff]
      %v1520 = vld [vmem:[%s416 + $0x20c] sm:$0xff]
      %v1521 = vld [vmem:[%s416 + $0x214] sm:$0xff]
      %v1522 = vld [vmem:[%s416 + $0x21c] sm:$0xff]
      %v1523 = vld [vmem:[%s416 + $0x224] sm:$0xff]
      %v1524 = vld [vmem:[%s416 + $0x22c] sm:$0xff]
      %v1525 = vld [vmem:[%s416 + $0x234] sm:$0xff]
      %v1526 = vld [vmem:[%s416 + $0x23c] sm:$0xff]
      %v1527 = vld [vmem:[%s416 + $0x244] sm:$0xff]
      %v1528 = vld [vmem:[%s416 + $0x24c] sm:$0xff]
      %v1529 = vld [vmem:[%s416 + $0x254] sm:$0xf]
      %v1530 = vld [vmem:[%s416 + $0x258] sm:$0xff]
      %v1531 = vld [vmem:[%s416 + $0x260] sm:$0xff]
      %v1532 = vld [vmem:[%s416 + $0x268] sm:$0xff]
      %v1533 = vld [vmem:[%s416 + $0x270] sm:$0xff]
      %v1534 = vld [vmem:[%s416 + $0x278] sm:$0xff]
      %v1535 = vld [vmem:[%s416 + $0x280] sm:$0xff]
      %v1536 = vld [vmem:[%s416 + $0x288] sm:$0xff]
      %v1537 = vld [vmem:[%s416 + $0x290] sm:$0xff]
      %v1538 = vld [vmem:[%s416 + $0x298] sm:$0xff]
      %v1539 = vld [vmem:[%s416 + $0x2a0] sm:$0xff]
      %v1540 = vld [vmem:[%s416 + $0x2a8] sm:$0xff]
      %v1541 = vld [vmem:[%s416 + $0x2b0] sm:$0xff]
      %v1542 = vld [vmem:[%s416 + $0x2b8] sm:$0xf]
      %v1543 = vld [vmem:[%s416 + $0x2bc] sm:$0xff]
      %v1544 = vld [vmem:[%s416 + $0x2c4] sm:$0xff]
      %v1545 = vld [vmem:[%s416 + $0x2cc] sm:$0xff]
      %v1546 = vld [vmem:[%s416 + $0x2d4] sm:$0xff]
      %v1547 = vld [vmem:[%s416 + $0x2dc] sm:$0xff]
      %v1548 = vld [vmem:[%s416 + $0x2e4] sm:$0xff]
      %v1549 = vld [vmem:[%s416 + $0x2ec] sm:$0xff]
      %v1550 = vld [vmem:[%s416 + $0x2f4] sm:$0xff]
      %v1551 = vld [vmem:[%s416 + $0x2fc] sm:$0xff]
      %v1552 = vld [vmem:[%s416 + $0x304] sm:$0xff]
      %v1553 = vld [vmem:[%s416 + $0x30c] sm:$0xff]
      %v1554 = vld [vmem:[%s416 + $0x314] sm:$0xff]
      %v1555 = vld [vmem:[%s416 + $0x31c] sm:$0xf]
      %v1556 = vunpack.c.l.bf16 %v1452
      %v1557 = vunpack.c.h.bf16 %v1452
      %v1558 = vunpack.c.l.bf16 %v1453
      %v1559 = vunpack.c.h.bf16 %v1453
      %v1560 = vunpack.c.l.bf16 %v1454
      %v1561 = vunpack.c.h.bf16 %v1454
      %v1562 = vunpack.c.l.bf16 %v1455
      %v1563 = vunpack.c.h.bf16 %v1455
      %v1564 = vunpack.c.l.bf16 %v1456
      %v1565 = vunpack.c.h.bf16 %v1456
      %v1566 = vunpack.c.l.bf16 %v1457
      %v1567 = vunpack.c.h.bf16 %v1457
      %v1568 = vunpack.c.l.bf16 %v1458
      %v1569 = vunpack.c.h.bf16 %v1458
      %v1570 = vunpack.c.l.bf16 %v1459
      %v1571 = vunpack.c.h.bf16 %v1459
      %v1572 = vunpack.c.l.bf16 %v1460
      %v1573 = vunpack.c.h.bf16 %v1460
      %v1574 = vunpack.c.l.bf16 %v1461
      %v1575 = vunpack.c.h.bf16 %v1461
      %v1576 = vunpack.c.l.bf16 %v1462
      %v1577 = vunpack.c.h.bf16 %v1462
      %v1578 = vunpack.c.l.bf16 %v1463
      %v1579 = vunpack.c.h.bf16 %v1463
      %v1580 = vunpack.c.l.bf16 %v1464
      %v1581 = vunpack.c.l.bf16 %v1465
      %v1582 = vunpack.c.h.bf16 %v1465
      %v1583 = vunpack.c.l.bf16 %v1466
      %v1584 = vunpack.c.h.bf16 %v1466
      %v1585 = vunpack.c.l.bf16 %v1467
      %v1586 = vunpack.c.h.bf16 %v1467
      %v1587 = vunpack.c.l.bf16 %v1468
      %v1588 = vunpack.c.h.bf16 %v1468
      %v1589 = vunpack.c.l.bf16 %v1469
      %v1590 = vunpack.c.h.bf16 %v1469
      %v1591 = vunpack.c.l.bf16 %v1470
      %v1592 = vunpack.c.h.bf16 %v1470
      %v1593 = vunpack.c.l.bf16 %v1471
      %v1594 = vunpack.c.h.bf16 %v1471
      %v1595 = vunpack.c.l.bf16 %v1472
      %v1596 = vunpack.c.h.bf16 %v1472
      %v1597 = vunpack.c.l.bf16 %v1473
      %v1598 = vunpack.c.h.bf16 %v1473
      %v1599 = vunpack.c.l.bf16 %v1474
      %v1600 = vunpack.c.h.bf16 %v1474
      %v1601 = vunpack.c.l.bf16 %v1475
      %v1602 = vunpack.c.h.bf16 %v1475
      %v1603 = vunpack.c.l.bf16 %v1476
      %v1604 = vunpack.c.h.bf16 %v1476
      %v1605 = vunpack.c.l.bf16 %v1477
      %v1606 = vunpack.c.l.bf16 %v1478
      %v1607 = vunpack.c.h.bf16 %v1478
      %v1608 = vunpack.c.l.bf16 %v1479
      %v1609 = vunpack.c.h.bf16 %v1479
      %v1610 = vunpack.c.l.bf16 %v1480
      %v1611 = vunpack.c.h.bf16 %v1480
      %v1612 = vunpack.c.l.bf16 %v1481
      %v1613 = vunpack.c.h.bf16 %v1481
      %v1614 = vunpack.c.l.bf16 %v1482
      %v1615 = vunpack.c.h.bf16 %v1482
      %v1616 = vunpack.c.l.bf16 %v1483
      %v1617 = vunpack.c.h.bf16 %v1483
      %v1618 = vunpack.c.l.bf16 %v1484
      %v1619 = vunpack.c.h.bf16 %v1484
      %v1620 = vunpack.c.l.bf16 %v1485
      %v1621 = vunpack.c.h.bf16 %v1485
      %v1622 = vunpack.c.l.bf16 %v1486
      %v1623 = vunpack.c.h.bf16 %v1486
      %v1624 = vunpack.c.l.bf16 %v1487
      %v1625 = vunpack.c.h.bf16 %v1487
      %v1626 = vunpack.c.l.bf16 %v1488
      %v1627 = vunpack.c.h.bf16 %v1488
      %v1628 = vunpack.c.l.bf16 %v1489
      %v1629 = vunpack.c.h.bf16 %v1489
      %v1630 = vunpack.c.l.bf16 %v1490
      %v1631 = vunpack.c.l.bf16 %v1491
      %v1632 = vunpack.c.h.bf16 %v1491
      %v1633 = vunpack.c.l.bf16 %v1492
      %v1634 = vunpack.c.h.bf16 %v1492
      %v1635 = vunpack.c.l.bf16 %v1493
      %v1636 = vunpack.c.h.bf16 %v1493
      %v1637 = vunpack.c.l.bf16 %v1494
      %v1638 = vunpack.c.h.bf16 %v1494
      %v1639 = vunpack.c.l.bf16 %v1495
      %v1640 = vunpack.c.h.bf16 %v1495
      %v1641 = vunpack.c.l.bf16 %v1496
      %v1642 = vunpack.c.h.bf16 %v1496
      %v1643 = vunpack.c.l.bf16 %v1497
      %v1644 = vunpack.c.h.bf16 %v1497
      %v1645 = vunpack.c.l.bf16 %v1498
      %v1646 = vunpack.c.h.bf16 %v1498
      %v1647 = vunpack.c.l.bf16 %v1499
      %v1648 = vunpack.c.h.bf16 %v1499
      %v1649 = vunpack.c.l.bf16 %v1500
      %v1650 = vunpack.c.h.bf16 %v1500
      %v1651 = vunpack.c.l.bf16 %v1501
      %v1652 = vunpack.c.h.bf16 %v1501
      %v1653 = vunpack.c.l.bf16 %v1502
      %v1654 = vunpack.c.h.bf16 %v1502
      %v1655 = vunpack.c.l.bf16 %v1503
      %v1656 = vunpack.c.l.bf16 %v1504
      %v1657 = vunpack.c.h.bf16 %v1504
      %v1658 = vunpack.c.l.bf16 %v1505
      %v1659 = vunpack.c.h.bf16 %v1505
      %v1660 = vunpack.c.l.bf16 %v1506
      %v1661 = vunpack.c.h.bf16 %v1506
      %v1662 = vunpack.c.l.bf16 %v1507
      %v1663 = vunpack.c.h.bf16 %v1507
      %v1664 = vunpack.c.l.bf16 %v1508
      %v1665 = vunpack.c.h.bf16 %v1508
      %v1666 = vunpack.c.l.bf16 %v1509
      %v1667 = vunpack.c.h.bf16 %v1509
      %v1668 = vunpack.c.l.bf16 %v1510
      %v1669 = vunpack.c.h.bf16 %v1510
      %v1670 = vunpack.c.l.bf16 %v1511
      %v1671 = vunpack.c.h.bf16 %v1511
      %v1672 = vunpack.c.l.bf16 %v1512
      %v1673 = vunpack.c.h.bf16 %v1512
      %v1674 = vunpack.c.l.bf16 %v1513
      %v1675 = vunpack.c.h.bf16 %v1513
      %v1676 = vunpack.c.l.bf16 %v1514
      %v1677 = vunpack.c.h.bf16 %v1514
      %v1678 = vunpack.c.l.bf16 %v1515
      %v1679 = vunpack.c.h.bf16 %v1515
      %v1680 = vunpack.c.l.bf16 %v1516
      %v1681 = vunpack.c.l.bf16 %v1517
      %v1682 = vunpack.c.h.bf16 %v1517
      %v1683 = vunpack.c.l.bf16 %v1518
      %v1684 = vunpack.c.h.bf16 %v1518
      %v1685 = vunpack.c.l.bf16 %v1519
      %v1686 = vunpack.c.h.bf16 %v1519
      %v1687 = vunpack.c.l.bf16 %v1520
      %v1688 = vunpack.c.h.bf16 %v1520
      %v1689 = vunpack.c.l.bf16 %v1521
      %v1690 = vunpack.c.h.bf16 %v1521
      %v1691 = vunpack.c.l.bf16 %v1522
      %v1692 = vunpack.c.h.bf16 %v1522
      %v1693 = vunpack.c.l.bf16 %v1523
      %v1694 = vunpack.c.h.bf16 %v1523
      %v1695 = vunpack.c.l.bf16 %v1524
      %v1696 = vunpack.c.h.bf16 %v1524
      %v1697 = vunpack.c.l.bf16 %v1525
      %v1698 = vunpack.c.h.bf16 %v1525
      %v1699 = vunpack.c.l.bf16 %v1526
      %v1700 = vunpack.c.h.bf16 %v1526
      %v1701 = vunpack.c.l.bf16 %v1527
      %v1702 = vunpack.c.h.bf16 %v1527
      %v1703 = vunpack.c.l.bf16 %v1528
      %v1704 = vunpack.c.h.bf16 %v1528
      %v1705 = vunpack.c.l.bf16 %v1529
      %v1706 = vunpack.c.l.bf16 %v1530
      %v1707 = vunpack.c.h.bf16 %v1530
      %v1708 = vunpack.c.l.bf16 %v1531
      %v1709 = vunpack.c.h.bf16 %v1531
      %v1710 = vunpack.c.l.bf16 %v1532
      %v1711 = vunpack.c.h.bf16 %v1532
      %v1712 = vunpack.c.l.bf16 %v1533
      %v1713 = vunpack.c.h.bf16 %v1533
      %v1714 = vunpack.c.l.bf16 %v1534
      %v1715 = vunpack.c.h.bf16 %v1534
      %v1716 = vunpack.c.l.bf16 %v1535
      %v1717 = vunpack.c.h.bf16 %v1535
      %v1718 = vunpack.c.l.bf16 %v1536
      %v1719 = vunpack.c.h.bf16 %v1536
      %v1720 = vunpack.c.l.bf16 %v1537
      %v1721 = vunpack.c.h.bf16 %v1537
      %v1722 = vunpack.c.l.bf16 %v1538
      %v1723 = vunpack.c.h.bf16 %v1538
      %v1724 = vunpack.c.l.bf16 %v1539
      %v1725 = vunpack.c.h.bf16 %v1539
      %v1726 = vunpack.c.l.bf16 %v1540
      %v1727 = vunpack.c.h.bf16 %v1540
      %v1728 = vunpack.c.l.bf16 %v1541
      %v1729 = vunpack.c.h.bf16 %v1541
      %v1730 = vunpack.c.l.bf16 %v1542
      %v1731 = vunpack.c.l.bf16 %v1543
      %v1732 = vunpack.c.h.bf16 %v1543
      %v1733 = vunpack.c.l.bf16 %v1544
      %v1734 = vunpack.c.h.bf16 %v1544
      %v1735 = vunpack.c.l.bf16 %v1545
      %v1736 = vunpack.c.h.bf16 %v1545
      %v1737 = vunpack.c.l.bf16 %v1546
      %v1738 = vunpack.c.h.bf16 %v1546
      %v1739 = vunpack.c.l.bf16 %v1547
      %v1740 = vunpack.c.h.bf16 %v1547
      %v1741 = vunpack.c.l.bf16 %v1548
      %v1742 = vunpack.c.h.bf16 %v1548
      %v1743 = vunpack.c.l.bf16 %v1549
      %v1744 = vunpack.c.h.bf16 %v1549
      %v1745 = vunpack.c.l.bf16 %v1550
      %v1746 = vunpack.c.h.bf16 %v1550
      %v1747 = vunpack.c.l.bf16 %v1551
      %v1748 = vunpack.c.h.bf16 %v1551
      %v1749 = vunpack.c.l.bf16 %v1552
      %v1750 = vunpack.c.h.bf16 %v1552
      %v1751 = vunpack.c.l.bf16 %v1553
      %v1752 = vunpack.c.h.bf16 %v1553
      %v1753 = vunpack.c.l.bf16 %v1554
      %v1754 = vunpack.c.h.bf16 %v1554
      %v1755 = vunpack.c.l.bf16 %v1555
      %v1756 = vmul.f32 %v1252, %v1556
      %v1757 = vmul.f32 %v1253, %v1557
      %v1758 = vmul.f32 %v1254, %v1558
      %v1759 = vmul.f32 %v1255, %v1559
      %v1760 = vmul.f32 %v1256, %v1560
      %v1761 = vmul.f32 %v1257, %v1561
      %v1762 = vmul.f32 %v1258, %v1562
      %v1763 = vmul.f32 %v1259, %v1563
      %v1764 = vmul.f32 %v1260, %v1564
      %v1765 = vmul.f32 %v1261, %v1565
      %v1766 = vmul.f32 %v1262, %v1566
      %v1767 = vmul.f32 %v1263, %v1567
      %v1768 = vmul.f32 %v1264, %v1568
      %v1769 = vmul.f32 %v1265, %v1569
      %v1770 = vmul.f32 %v1266, %v1570
      %v1771 = vmul.f32 %v1267, %v1571
      %v1772 = vmul.f32 %v1268, %v1572
      %v1773 = vmul.f32 %v1269, %v1573
      %v1774 = vmul.f32 %v1270, %v1574
      %v1775 = vmul.f32 %v1271, %v1575
      %v1776 = vmul.f32 %v1272, %v1576
      %v1777 = vmul.f32 %v1273, %v1577
      %v1778 = vmul.f32 %v1274, %v1578
      %v1779 = vmul.f32 %v1275, %v1579
      %v1780 = vmul.f32 %v1276, %v1580
      %v1781 = vmul.f32 %v1277, %v1581
      %v1782 = vmul.f32 %v1278, %v1582
      %v1783 = vmul.f32 %v1279, %v1583
      %v1784 = vmul.f32 %v1280, %v1584
      %v1785 = vmul.f32 %v1281, %v1585
      %v1786 = vmul.f32 %v1282, %v1586
      %v1787 = vmul.f32 %v1283, %v1587
      %v1788 = vmul.f32 %v1284, %v1588
      %v1789 = vmul.f32 %v1285, %v1589
      %v1790 = vmul.f32 %v1286, %v1590
      %v1791 = vmul.f32 %v1287, %v1591
      %v1792 = vmul.f32 %v1288, %v1592
      %v1793 = vmul.f32 %v1289, %v1593
      %v1794 = vmul.f32 %v1290, %v1594
      %v1795 = vmul.f32 %v1291, %v1595
      %v1796 = vmul.f32 %v1292, %v1596
      %v1797 = vmul.f32 %v1293, %v1597
      %v1798 = vmul.f32 %v1294, %v1598
      %v1799 = vmul.f32 %v1295, %v1599
      %v1800 = vmul.f32 %v1296, %v1600
      %v1801 = vmul.f32 %v1297, %v1601
      %v1802 = vmul.f32 %v1298, %v1602
      %v1803 = vmul.f32 %v1299, %v1603
      %v1804 = vmul.f32 %v1300, %v1604
      %v1805 = vmul.f32 %v1301, %v1605
      %v1806 = vmul.f32 %v1302, %v1606
      %v1807 = vmul.f32 %v1303, %v1607
      %v1808 = vmul.f32 %v1304, %v1608
      %v1809 = vmul.f32 %v1305, %v1609
      %v1810 = vmul.f32 %v1306, %v1610
      %v1811 = vmul.f32 %v1307, %v1611
      %v1812 = vmul.f32 %v1308, %v1612
      %v1813 = vmul.f32 %v1309, %v1613
      %v1814 = vmul.f32 %v1310, %v1614
      %v1815 = vmul.f32 %v1311, %v1615
      %v1816 = vmul.f32 %v1312, %v1616
      %v1817 = vmul.f32 %v1313, %v1617
      %v1818 = vmul.f32 %v1314, %v1618
      %v1819 = vmul.f32 %v1315, %v1619
      %v1820 = vmul.f32 %v1316, %v1620
      %v1821 = vmul.f32 %v1317, %v1621
      %v1822 = vmul.f32 %v1318, %v1622
      %v1823 = vmul.f32 %v1319, %v1623
      %v1824 = vmul.f32 %v1320, %v1624
      %v1825 = vmul.f32 %v1321, %v1625
      %v1826 = vmul.f32 %v1322, %v1626
      %v1827 = vmul.f32 %v1323, %v1627
      %v1828 = vmul.f32 %v1324, %v1628
      %v1829 = vmul.f32 %v1325, %v1629
      %v1830 = vmul.f32 %v1326, %v1630
      %v1831 = vmul.f32 %v1327, %v1631
      %v1832 = vmul.f32 %v1328, %v1632
      %v1833 = vmul.f32 %v1329, %v1633
      %v1834 = vmul.f32 %v1330, %v1634
      %v1835 = vmul.f32 %v1331, %v1635
      %v1836 = vmul.f32 %v1332, %v1636
      %v1837 = vmul.f32 %v1333, %v1637
      %v1838 = vmul.f32 %v1334, %v1638
      %v1839 = vmul.f32 %v1335, %v1639
      %v1840 = vmul.f32 %v1336, %v1640
      %v1841 = vmul.f32 %v1337, %v1641
      %v1842 = vmul.f32 %v1338, %v1642
      %v1843 = vmul.f32 %v1339, %v1643
      %v1844 = vmul.f32 %v1340, %v1644
      %v1845 = vmul.f32 %v1341, %v1645
      %v1846 = vmul.f32 %v1342, %v1646
      %v1847 = vmul.f32 %v1343, %v1647
      %v1848 = vmul.f32 %v1344, %v1648
      %v1849 = vmul.f32 %v1345, %v1649
      %v1850 = vmul.f32 %v1346, %v1650
      %v1851 = vmul.f32 %v1347, %v1651
      %v1852 = vmul.f32 %v1348, %v1652
      %v1853 = vmul.f32 %v1349, %v1653
      %v1854 = vmul.f32 %v1350, %v1654
      %v1855 = vmul.f32 %v1351, %v1655
      %v1856 = vmul.f32 %v1352, %v1656
      %v1857 = vmul.f32 %v1353, %v1657
      %v1858 = vmul.f32 %v1354, %v1658
      %v1859 = vmul.f32 %v1355, %v1659
      %v1860 = vmul.f32 %v1356, %v1660
      %v1861 = vmul.f32 %v1357, %v1661
      %v1862 = vmul.f32 %v1358, %v1662
      %v1863 = vmul.f32 %v1359, %v1663
      %v1864 = vmul.f32 %v1360, %v1664
      %v1865 = vmul.f32 %v1361, %v1665
      %v1866 = vmul.f32 %v1362, %v1666
      %v1867 = vmul.f32 %v1363, %v1667
      %v1868 = vmul.f32 %v1364, %v1668
      %v1869 = vmul.f32 %v1365, %v1669
      %v1870 = vmul.f32 %v1366, %v1670
      %v1871 = vmul.f32 %v1367, %v1671
      %v1872 = vmul.f32 %v1368, %v1672
      %v1873 = vmul.f32 %v1369, %v1673
      %v1874 = vmul.f32 %v1370, %v1674
      %v1875 = vmul.f32 %v1371, %v1675
      %v1876 = vmul.f32 %v1372, %v1676
      %v1877 = vmul.f32 %v1373, %v1677
      %v1878 = vmul.f32 %v1374, %v1678
      %v1879 = vmul.f32 %v1375, %v1679
      %v1880 = vmul.f32 %v1376, %v1680
      %v1881 = vmul.f32 %v1377, %v1681
      %v1882 = vmul.f32 %v1378, %v1682
      %v1883 = vmul.f32 %v1379, %v1683
      %v1884 = vmul.f32 %v1380, %v1684
      %v1885 = vmul.f32 %v1381, %v1685
      %v1886 = vmul.f32 %v1382, %v1686
      %v1887 = vmul.f32 %v1383, %v1687
      %v1888 = vmul.f32 %v1384, %v1688
      %v1889 = vmul.f32 %v1385, %v1689
      %v1890 = vmul.f32 %v1386, %v1690
      %v1891 = vmul.f32 %v1387, %v1691
      %v1892 = vmul.f32 %v1388, %v1692
      %v1893 = vmul.f32 %v1389, %v1693
      %v1894 = vmul.f32 %v1390, %v1694
      %v1895 = vmul.f32 %v1391, %v1695
      %v1896 = vmul.f32 %v1392, %v1696
      %v1897 = vmul.f32 %v1393, %v1697
      %v1898 = vmul.f32 %v1394, %v1698
      %v1899 = vmul.f32 %v1395, %v1699
      %v1900 = vmul.f32 %v1396, %v1700
      %v1901 = vmul.f32 %v1397, %v1701
      %v1902 = vmul.f32 %v1398, %v1702
      %v1903 = vmul.f32 %v1399, %v1703
      %v1904 = vmul.f32 %v1400, %v1704
      %v1905 = vmul.f32 %v1401, %v1705
      %v1906 = vmul.f32 %v1402, %v1706
      %v1907 = vmul.f32 %v1403, %v1707
      %v1908 = vmul.f32 %v1404, %v1708
      %v1909 = vmul.f32 %v1405, %v1709
      %v1910 = vmul.f32 %v1406, %v1710
      %v1911 = vmul.f32 %v1407, %v1711
      %v1912 = vmul.f32 %v1408, %v1712
      %v1913 = vmul.f32 %v1409, %v1713
      %v1914 = vmul.f32 %v1410, %v1714
      %v1915 = vmul.f32 %v1411, %v1715
      %v1916 = vmul.f32 %v1412, %v1716
      %v1917 = vmul.f32 %v1413, %v1717
      %v1918 = vmul.f32 %v1414, %v1718
      %v1919 = vmul.f32 %v1415, %v1719
      %v1920 = vmul.f32 %v1416, %v1720
      %v1921 = vmul.f32 %v1417, %v1721
      %v1922 = vmul.f32 %v1418, %v1722
      %v1923 = vmul.f32 %v1419, %v1723
      %v1924 = vmul.f32 %v1420, %v1724
      %v1925 = vmul.f32 %v1421, %v1725
      %v1926 = vmul.f32 %v1422, %v1726
      %v1927 = vmul.f32 %v1423, %v1727
      %v1928 = vmul.f32 %v1424, %v1728
      %v1929 = vmul.f32 %v1425, %v1729
      %v1930 = vmul.f32 %v1426, %v1730
      %v1931 = vmul.f32 %v1427, %v1731
      %v1932 = vmul.f32 %v1428, %v1732
      %v1933 = vmul.f32 %v1429, %v1733
      %v1934 = vmul.f32 %v1430, %v1734
      %v1935 = vmul.f32 %v1431, %v1735
      %v1936 = vmul.f32 %v1432, %v1736
      %v1937 = vmul.f32 %v1433, %v1737
      %v1938 = vmul.f32 %v1434, %v1738
      %v1939 = vmul.f32 %v1435, %v1739
      %v1940 = vmul.f32 %v1436, %v1740
      %v1941 = vmul.f32 %v1437, %v1741
      %v1942 = vmul.f32 %v1438, %v1742
      %v1943 = vmul.f32 %v1439, %v1743
      %v1944 = vmul.f32 %v1440, %v1744
      %v1945 = vmul.f32 %v1441, %v1745
      %v1946 = vmul.f32 %v1442, %v1746
      %v1947 = vmul.f32 %v1443, %v1747
      %v1948 = vmul.f32 %v1444, %v1748
      %v1949 = vmul.f32 %v1445, %v1749
      %v1950 = vmul.f32 %v1446, %v1750
      %v1951 = vmul.f32 %v1447, %v1751
      %v1952 = vmul.f32 %v1448, %v1752
      %v1953 = vmul.f32 %v1449, %v1753
      %v1954 = vmul.f32 %v1450, %v1754
      %v1955 = vmul.f32 %v1451, %v1755
      %v1956 = vadd.f32 %v948, %v1756
      %v1957 = vadd.f32 %v949, %v1757
      %v1958 = vadd.f32 %v950, %v1758
      %v1959 = vadd.f32 %v951, %v1759
      %v1960 = vadd.f32 %v952, %v1760
      %v1961 = vadd.f32 %v953, %v1761
      %v1962 = vadd.f32 %v954, %v1762
      %v1963 = vadd.f32 %v955, %v1763
      %v1964 = vadd.f32 %v956, %v1764
      %v1965 = vadd.f32 %v957, %v1765
      %v1966 = vadd.f32 %v958, %v1766
      %v1967 = vadd.f32 %v959, %v1767
      %v1968 = vadd.f32 %v960, %v1768
      %v1969 = vadd.f32 %v961, %v1769
      %v1970 = vadd.f32 %v962, %v1770
      %v1971 = vadd.f32 %v963, %v1771
      %v1972 = vadd.f32 %v964, %v1772
      %v1973 = vadd.f32 %v965, %v1773
      %v1974 = vadd.f32 %v966, %v1774
      %v1975 = vadd.f32 %v967, %v1775
      %v1976 = vadd.f32 %v968, %v1776
      %v1977 = vadd.f32 %v969, %v1777
      %v1978 = vadd.f32 %v970, %v1778
      %v1979 = vadd.f32 %v971, %v1779
      %v1980 = vadd.f32 %v972, %v1780
      %v1981 = vadd.f32 %v973, %v1781
      %v1982 = vadd.f32 %v974, %v1782
      %v1983 = vadd.f32 %v975, %v1783
      %v1984 = vadd.f32 %v976, %v1784
      %v1985 = vadd.f32 %v977, %v1785
      %v1986 = vadd.f32 %v978, %v1786
      %v1987 = vadd.f32 %v979, %v1787
      %v1988 = vadd.f32 %v980, %v1788
      %v1989 = vadd.f32 %v981, %v1789
      %v1990 = vadd.f32 %v982, %v1790
      %v1991 = vadd.f32 %v983, %v1791
      %v1992 = vadd.f32 %v984, %v1792
      %v1993 = vadd.f32 %v985, %v1793
      %v1994 = vadd.f32 %v986, %v1794
      %v1995 = vadd.f32 %v987, %v1795
      %v1996 = vadd.f32 %v988, %v1796
      %v1997 = vadd.f32 %v989, %v1797
      %v1998 = vadd.f32 %v990, %v1798
      %v1999 = vadd.f32 %v991, %v1799
      %v2000 = vadd.f32 %v992, %v1800
      %v2001 = vadd.f32 %v993, %v1801
      %v2002 = vadd.f32 %v994, %v1802
      %v2003 = vadd.f32 %v995, %v1803
      %v2004 = vadd.f32 %v996, %v1804
      %v2005 = vadd.f32 %v997, %v1805
      %v2006 = vadd.f32 %v998, %v1806
      %v2007 = vadd.f32 %v999, %v1807
      %v2008 = vadd.f32 %v1000, %v1808
      %v2009 = vadd.f32 %v1001, %v1809
      %v2010 = vadd.f32 %v1002, %v1810
      %v2011 = vadd.f32 %v1003, %v1811
      %v2012 = vadd.f32 %v1004, %v1812
      %v2013 = vadd.f32 %v1005, %v1813
      %v2014 = vadd.f32 %v1006, %v1814
      %v2015 = vadd.f32 %v1007, %v1815
      %v2016 = vadd.f32 %v1008, %v1816
      %v2017 = vadd.f32 %v1009, %v1817
      %v2018 = vadd.f32 %v1010, %v1818
      %v2019 = vadd.f32 %v1011, %v1819
      %v2020 = vadd.f32 %v1012, %v1820
      %v2021 = vadd.f32 %v1013, %v1821
      %v2022 = vadd.f32 %v1014, %v1822
      %v2023 = vadd.f32 %v1015, %v1823
      %v2024 = vadd.f32 %v1016, %v1824
      %v2025 = vadd.f32 %v1017, %v1825
      %v2026 = vadd.f32 %v1018, %v1826
      %v2027 = vadd.f32 %v1019, %v1827
      %v2028 = vadd.f32 %v1020, %v1828
      %v2029 = vadd.f32 %v1021, %v1829
      %v2030 = vadd.f32 %v1022, %v1830
      %v2031 = vadd.f32 %v1023, %v1831
      %v2032 = vadd.f32 %v1024, %v1832
      %v2033 = vadd.f32 %v1025, %v1833
      %v2034 = vadd.f32 %v1026, %v1834
      %v2035 = vadd.f32 %v1027, %v1835
      %v2036 = vadd.f32 %v1028, %v1836
      %v2037 = vadd.f32 %v1029, %v1837
      %v2038 = vadd.f32 %v1030, %v1838
      %v2039 = vadd.f32 %v1031, %v1839
      %v2040 = vadd.f32 %v1032, %v1840
      %v2041 = vadd.f32 %v1033, %v1841
      %v2042 = vadd.f32 %v1034, %v1842
      %v2043 = vadd.f32 %v1035, %v1843
      %v2044 = vadd.f32 %v1036, %v1844
      %v2045 = vadd.f32 %v1037, %v1845
      %v2046 = vadd.f32 %v1038, %v1846
      %v2047 = vadd.f32 %v1039, %v1847
      %v2048 = vadd.f32 %v1040, %v1848
      %v2049 = vadd.f32 %v1041, %v1849
      %v2050 = vadd.f32 %v1042, %v1850
      %v2051 = vadd.f32 %v1043, %v1851
      %v2052 = vadd.f32 %v1044, %v1852
      %v2053 = vadd.f32 %v1045, %v1853
      %v2054 = vadd.f32 %v1046, %v1854
      %v2055 = vadd.f32 %v1047, %v1855
      %v2056 = vadd.f32 %v1048, %v1856
      %v2057 = vadd.f32 %v1049, %v1857
      %v2058 = vadd.f32 %v1050, %v1858
      %v2059 = vadd.f32 %v1051, %v1859
      %v2060 = vadd.f32 %v1052, %v1860
      %v2061 = vadd.f32 %v1053, %v1861
      %v2062 = vadd.f32 %v1054, %v1862
      %v2063 = vadd.f32 %v1055, %v1863
      %v2064 = vadd.f32 %v1056, %v1864
      %v2065 = vadd.f32 %v1057, %v1865
      %v2066 = vadd.f32 %v1058, %v1866
      %v2067 = vadd.f32 %v1059, %v1867
      %v2068 = vadd.f32 %v1060, %v1868
      %v2069 = vadd.f32 %v1061, %v1869
      %v2070 = vadd.f32 %v1062, %v1870
      %v2071 = vadd.f32 %v1063, %v1871
      %v2072 = vadd.f32 %v1064, %v1872
      %v2073 = vadd.f32 %v1065, %v1873
      %v2074 = vadd.f32 %v1066, %v1874
      %v2075 = vadd.f32 %v1067, %v1875
      %v2076 = vadd.f32 %v1068, %v1876
      %v2077 = vadd.f32 %v1069, %v1877
      %v2078 = vadd.f32 %v1070, %v1878
      %v2079 = vadd.f32 %v1071, %v1879
      %v2080 = vadd.f32 %v1072, %v1880
      %v2081 = vadd.f32 %v1073, %v1881
      %v2082 = vadd.f32 %v1074, %v1882
      %v2083 = vadd.f32 %v1075, %v1883
      %v2084 = vadd.f32 %v1076, %v1884
      %v2085 = vadd.f32 %v1077, %v1885
      %v2086 = vadd.f32 %v1078, %v1886
      %v2087 = vadd.f32 %v1079, %v1887
      %v2088 = vadd.f32 %v1080, %v1888
      %v2089 = vadd.f32 %v1081, %v1889
      %v2090 = vadd.f32 %v1082, %v1890
      %v2091 = vadd.f32 %v1083, %v1891
      %v2092 = vadd.f32 %v1084, %v1892
      %v2093 = vadd.f32 %v1085, %v1893
      %v2094 = vadd.f32 %v1086, %v1894
      %v2095 = vadd.f32 %v1087, %v1895
      %v2096 = vadd.f32 %v1088, %v1896
      %v2097 = vadd.f32 %v1089, %v1897
      %v2098 = vadd.f32 %v1090, %v1898
      %v2099 = vadd.f32 %v1091, %v1899
      %v2100 = vadd.f32 %v1092, %v1900
      %v2101 = vadd.f32 %v1093, %v1901
      %v2102 = vadd.f32 %v1094, %v1902
      %v2103 = vadd.f32 %v1095, %v1903
      %v2104 = vadd.f32 %v1096, %v1904
      %v2105 = vadd.f32 %v1097, %v1905
      %v2106 = vadd.f32 %v1098, %v1906
      %v2107 = vadd.f32 %v1099, %v1907
      %v2108 = vadd.f32 %v1100, %v1908
      %v2109 = vadd.f32 %v1101, %v1909
      %v2110 = vadd.f32 %v1102, %v1910
      %v2111 = vadd.f32 %v1103, %v1911
      %v2112 = vadd.f32 %v1104, %v1912
      %v2113 = vadd.f32 %v1105, %v1913
      %v2114 = vadd.f32 %v1106, %v1914
      %v2115 = vadd.f32 %v1107, %v1915
      %v2116 = vadd.f32 %v1108, %v1916
      %v2117 = vadd.f32 %v1109, %v1917
      %v2118 = vadd.f32 %v1110, %v1918
      %v2119 = vadd.f32 %v1111, %v1919
      %v2120 = vadd.f32 %v1112, %v1920
      %v2121 = vadd.f32 %v1113, %v1921
      %v2122 = vadd.f32 %v1114, %v1922
      %v2123 = vadd.f32 %v1115, %v1923
      %v2124 = vadd.f32 %v1116, %v1924
      %v2125 = vadd.f32 %v1117, %v1925
      %v2126 = vadd.f32 %v1118, %v1926
      %v2127 = vadd.f32 %v1119, %v1927
      %v2128 = vadd.f32 %v1120, %v1928
      %v2129 = vadd.f32 %v1121, %v1929
      %v2130 = vadd.f32 %v1122, %v1930
      %v2131 = vadd.f32 %v1123, %v1931
      %v2132 = vadd.f32 %v1124, %v1932
      %v2133 = vadd.f32 %v1125, %v1933
      %v2134 = vadd.f32 %v1126, %v1934
      %v2135 = vadd.f32 %v1127, %v1935
      %v2136 = vadd.f32 %v1128, %v1936
      %v2137 = vadd.f32 %v1129, %v1937
      %v2138 = vadd.f32 %v1130, %v1938
      %v2139 = vadd.f32 %v1131, %v1939
      %v2140 = vadd.f32 %v1132, %v1940
      %v2141 = vadd.f32 %v1133, %v1941
      %v2142 = vadd.f32 %v1134, %v1942
      %v2143 = vadd.f32 %v1135, %v1943
      %v2144 = vadd.f32 %v1136, %v1944
      %v2145 = vadd.f32 %v1137, %v1945
      %v2146 = vadd.f32 %v1138, %v1946
      %v2147 = vadd.f32 %v1139, %v1947
      %v2148 = vadd.f32 %v1140, %v1948
      %v2149 = vadd.f32 %v1141, %v1949
      %v2150 = vadd.f32 %v1142, %v1950
      %v2151 = vadd.f32 %v1143, %v1951
      %v2152 = vadd.f32 %v1144, %v1952
      %v2153 = vadd.f32 %v1145, %v1953
      %v2154 = vadd.f32 %v1146, %v1954
      %v2155 = vadd.f32 %v1147, %v1955
      %v2156 = vpack.c.bf16 %v1981, %v1956
      %v2157 = vpack.c.bf16 %v1982, %v1957
      %v2158 = vpack.c.bf16 %v1983, %v1958
      %v2159 = vpack.c.bf16 %v1984, %v1959
      %v2160 = vpack.c.bf16 %v1985, %v1960
      %v2161 = vpack.c.bf16 %v1986, %v1961
      %v2162 = vpack.c.bf16 %v1987, %v1962
      %v2163 = vpack.c.bf16 %v1988, %v1963
      %v2164 = vpack.c.bf16 %v1989, %v1964
      %v2165 = vpack.c.bf16 %v1990, %v1965
      %v2166 = vpack.c.bf16 %v1991, %v1966
      %v2167 = vpack.c.bf16 %v1992, %v1967
      %v2168 = vpack.c.bf16 %v1993, %v1968
      %v2169 = vpack.c.bf16 %v1994, %v1969
      %v2170 = vpack.c.bf16 %v1995, %v1970
      %v2171 = vpack.c.bf16 %v1996, %v1971
      %v2172 = vpack.c.bf16 %v1997, %v1972
      %v2173 = vpack.c.bf16 %v1998, %v1973
      %v2174 = vpack.c.bf16 %v1999, %v1974
      %v2175 = vpack.c.bf16 %v2000, %v1975
      %v2176 = vpack.c.bf16 %v2001, %v1976
      %v2177 = vpack.c.bf16 %v2002, %v1977
      %v2178 = vpack.c.bf16 %v2003, %v1978
      %v2179 = vpack.c.bf16 %v2004, %v1979
      %v2180 = vpack.c.bf16 %v2005, %v1980
      %v2181 = vpack.c.bf16 %v2031, %v2006
      %v2182 = vpack.c.bf16 %v2032, %v2007
      %v2183 = vpack.c.bf16 %v2033, %v2008
      %v2184 = vpack.c.bf16 %v2034, %v2009
      %v2185 = vpack.c.bf16 %v2035, %v2010
      %v2186 = vpack.c.bf16 %v2036, %v2011
      %v2187 = vpack.c.bf16 %v2037, %v2012
      %v2188 = vpack.c.bf16 %v2038, %v2013
      %v2189 = vpack.c.bf16 %v2039, %v2014
      %v2190 = vpack.c.bf16 %v2040, %v2015
      %v2191 = vpack.c.bf16 %v2041, %v2016
      %v2192 = vpack.c.bf16 %v2042, %v2017
      %v2193 = vpack.c.bf16 %v2043, %v2018
      %v2194 = vpack.c.bf16 %v2044, %v2019
      %v2195 = vpack.c.bf16 %v2045, %v2020
      %v2196 = vpack.c.bf16 %v2046, %v2021
      %v2197 = vpack.c.bf16 %v2047, %v2022
      %v2198 = vpack.c.bf16 %v2048, %v2023
      %v2199 = vpack.c.bf16 %v2049, %v2024
      %v2200 = vpack.c.bf16 %v2050, %v2025
      %v2201 = vpack.c.bf16 %v2051, %v2026
      %v2202 = vpack.c.bf16 %v2052, %v2027
      %v2203 = vpack.c.bf16 %v2053, %v2028
      %v2204 = vpack.c.bf16 %v2054, %v2029
      %v2205 = vpack.c.bf16 %v2055, %v2030
      %v2206 = vpack.c.bf16 %v2081, %v2056
      %v2207 = vpack.c.bf16 %v2082, %v2057
      %v2208 = vpack.c.bf16 %v2083, %v2058
      %v2209 = vpack.c.bf16 %v2084, %v2059
      %v2210 = vpack.c.bf16 %v2085, %v2060
      %v2211 = vpack.c.bf16 %v2086, %v2061
      %v2212 = vpack.c.bf16 %v2087, %v2062
      %v2213 = vpack.c.bf16 %v2088, %v2063
      %v2214 = vpack.c.bf16 %v2089, %v2064
      %v2215 = vpack.c.bf16 %v2090, %v2065
      %v2216 = vpack.c.bf16 %v2091, %v2066
      %v2217 = vpack.c.bf16 %v2092, %v2067
      %v2218 = vpack.c.bf16 %v2093, %v2068
      %v2219 = vpack.c.bf16 %v2094, %v2069
      %v2220 = vpack.c.bf16 %v2095, %v2070
      %v2221 = vpack.c.bf16 %v2096, %v2071
      %v2222 = vpack.c.bf16 %v2097, %v2072
      %v2223 = vpack.c.bf16 %v2098, %v2073
      %v2224 = vpack.c.bf16 %v2099, %v2074
      %v2225 = vpack.c.bf16 %v2100, %v2075
      %v2226 = vpack.c.bf16 %v2101, %v2076
      %v2227 = vpack.c.bf16 %v2102, %v2077
      %v2228 = vpack.c.bf16 %v2103, %v2078
      %v2229 = vpack.c.bf16 %v2104, %v2079
      %v2230 = vpack.c.bf16 %v2105, %v2080
      %v2231 = vpack.c.bf16 %v2131, %v2106
      %v2232 = vpack.c.bf16 %v2132, %v2107
      %v2233 = vpack.c.bf16 %v2133, %v2108
      %v2234 = vpack.c.bf16 %v2134, %v2109
      %v2235 = vpack.c.bf16 %v2135, %v2110
      %v2236 = vpack.c.bf16 %v2136, %v2111
      %v2237 = vpack.c.bf16 %v2137, %v2112
      %v2238 = vpack.c.bf16 %v2138, %v2113
      %v2239 = vpack.c.bf16 %v2139, %v2114
      %v2240 = vpack.c.bf16 %v2140, %v2115
      %v2241 = vpack.c.bf16 %v2141, %v2116
      %v2242 = vpack.c.bf16 %v2142, %v2117
      %v2243 = vpack.c.bf16 %v2143, %v2118
      %v2244 = vpack.c.bf16 %v2144, %v2119
      %v2245 = vpack.c.bf16 %v2145, %v2120
      %v2246 = vpack.c.bf16 %v2146, %v2121
      %v2247 = vpack.c.bf16 %v2147, %v2122
      %v2248 = vpack.c.bf16 %v2148, %v2123
      %v2249 = vpack.c.bf16 %v2149, %v2124
      %v2250 = vpack.c.bf16 %v2150, %v2125
      %v2251 = vpack.c.bf16 %v2151, %v2126
      %v2252 = vpack.c.bf16 %v2152, %v2127
      %v2253 = vpack.c.bf16 %v2153, %v2128
      %v2254 = vpack.c.bf16 %v2154, %v2129
      %v2255 = vpack.c.bf16 %v2155, %v2130
      %v2256 = vld [vmem:[%s423] sm:$0xff]
      %v2257 = vld [vmem:[%s423 + $0x8] sm:$0xff]
      %v2258 = vld [vmem:[%s423 + $0x10] sm:$0xff]
      %v2259 = vld [vmem:[%s423 + $0x18] sm:$0xff]
      %v2260 = vld [vmem:[%s423 + $0x20] sm:$0xff]
      %v2261 = vld [vmem:[%s423 + $0x28] sm:$0xff]
      %v2262 = vld [vmem:[%s423 + $0x30] sm:$0xff]
      %v2263 = vld [vmem:[%s423 + $0x38] sm:$0xff]
      %v2264 = vld [vmem:[%s423 + $0x40] sm:$0xff]
      %v2265 = vld [vmem:[%s423 + $0x48] sm:$0xff]
      %v2266 = vld [vmem:[%s423 + $0x50] sm:$0xff]
      %v2267 = vld [vmem:[%s423 + $0x58] sm:$0xff]
      %v2268 = vld [vmem:[%s423 + $0x60] sm:$0xf]
      %v2269 = vld [vmem:[%s423 + $0x64] sm:$0xff]
      %v2270 = vld [vmem:[%s423 + $0x6c] sm:$0xff]
      %v2271 = vld [vmem:[%s423 + $0x74] sm:$0xff]
      %v2272 = vld [vmem:[%s423 + $0x7c] sm:$0xff]
      %v2273 = vld [vmem:[%s423 + $0x84] sm:$0xff]
      %v2274 = vld [vmem:[%s423 + $0x8c] sm:$0xff]
      %v2275 = vld [vmem:[%s423 + $0x94] sm:$0xff]
      %v2276 = vld [vmem:[%s423 + $0x9c] sm:$0xff]
      %v2277 = vld [vmem:[%s423 + $0xa4] sm:$0xff]
      %v2278 = vld [vmem:[%s423 + $0xac] sm:$0xff]
      %v2279 = vld [vmem:[%s423 + $0xb4] sm:$0xff]
      %v2280 = vld [vmem:[%s423 + $0xbc] sm:$0xff]
      %v2281 = vld [vmem:[%s423 + $0xc4] sm:$0xf]
      %v2282 = vld [vmem:[%s423 + $0xc8] sm:$0xff]
      %v2283 = vld [vmem:[%s423 + $0xd0] sm:$0xff]
      %v2284 = vld [vmem:[%s423 + $0xd8] sm:$0xff]
      %v2285 = vld [vmem:[%s423 + $0xe0] sm:$0xff]
      %v2286 = vld [vmem:[%s423 + $0xe8] sm:$0xff]
      %v2287 = vld [vmem:[%s423 + $0xf0] sm:$0xff]
      %v2288 = vld [vmem:[%s423 + $0xf8] sm:$0xff]
      %v2289 = vld [vmem:[%s423 + $0x100] sm:$0xff]
      %v2290 = vld [vmem:[%s423 + $0x108] sm:$0xff]
      %v2291 = vld [vmem:[%s423 + $0x110] sm:$0xff]
      %v2292 = vld [vmem:[%s423 + $0x118] sm:$0xff]
      %v2293 = vld [vmem:[%s423 + $0x120] sm:$0xff]
      %v2294 = vld [vmem:[%s423 + $0x128] sm:$0xf]
      %v2295 = vld [vmem:[%s423 + $0x12c] sm:$0xff]
      %v2296 = vld [vmem:[%s423 + $0x134] sm:$0xff]
      %v2297 = vld [vmem:[%s423 + $0x13c] sm:$0xff]
      %v2298 = vld [vmem:[%s423 + $0x144] sm:$0xff]
      %v2299 = vld [vmem:[%s423 + $0x14c] sm:$0xff]
      %v2300 = vld [vmem:[%s423 + $0x154] sm:$0xff]
      %v2301 = vld [vmem:[%s423 + $0x15c] sm:$0xff]
      %v2302 = vld [vmem:[%s423 + $0x164] sm:$0xff]
      %v2303 = vld [vmem:[%s423 + $0x16c] sm:$0xff]
      %v2304 = vld [vmem:[%s423 + $0x174] sm:$0xff]
      %v2305 = vld [vmem:[%s423 + $0x17c] sm:$0xff]
      %v2306 = vld [vmem:[%s423 + $0x184] sm:$0xff]
      %v2307 = vld [vmem:[%s423 + $0x18c] sm:$0xf]
      %v2308 = vld [vmem:[%s423 + $0x190] sm:$0xff]
      %v2309 = vld [vmem:[%s423 + $0x198] sm:$0xff]
      %v2310 = vld [vmem:[%s423 + $0x1a0] sm:$0xff]
      %v2311 = vld [vmem:[%s423 + $0x1a8] sm:$0xff]
      %v2312 = vld [vmem:[%s423 + $0x1b0] sm:$0xff]
      %v2313 = vld [vmem:[%s423 + $0x1b8] sm:$0xff]
      %v2314 = vld [vmem:[%s423 + $0x1c0] sm:$0xff]
      %v2315 = vld [vmem:[%s423 + $0x1c8] sm:$0xff]
      %v2316 = vld [vmem:[%s423 + $0x1d0] sm:$0xff]
      %v2317 = vld [vmem:[%s423 + $0x1d8] sm:$0xff]
      %v2318 = vld [vmem:[%s423 + $0x1e0] sm:$0xff]
      %v2319 = vld [vmem:[%s423 + $0x1e8] sm:$0xff]
      %v2320 = vld [vmem:[%s423 + $0x1f0] sm:$0xf]
      %v2321 = vld [vmem:[%s423 + $0x1f4] sm:$0xff]
      %v2322 = vld [vmem:[%s423 + $0x1fc] sm:$0xff]
      %v2323 = vld [vmem:[%s423 + $0x204] sm:$0xff]
      %v2324 = vld [vmem:[%s423 + $0x20c] sm:$0xff]
      %v2325 = vld [vmem:[%s423 + $0x214] sm:$0xff]
      %v2326 = vld [vmem:[%s423 + $0x21c] sm:$0xff]
      %v2327 = vld [vmem:[%s423 + $0x224] sm:$0xff]
      %v2328 = vld [vmem:[%s423 + $0x22c] sm:$0xff]
      %v2329 = vld [vmem:[%s423 + $0x234] sm:$0xff]
      %v2330 = vld [vmem:[%s423 + $0x23c] sm:$0xff]
      %v2331 = vld [vmem:[%s423 + $0x244] sm:$0xff]
      %v2332 = vld [vmem:[%s423 + $0x24c] sm:$0xff]
      %v2333 = vld [vmem:[%s423 + $0x254] sm:$0xf]
      %v2334 = vld [vmem:[%s423 + $0x258] sm:$0xff]
      %v2335 = vld [vmem:[%s423 + $0x260] sm:$0xff]
      %v2336 = vld [vmem:[%s423 + $0x268] sm:$0xff]
      %v2337 = vld [vmem:[%s423 + $0x270] sm:$0xff]
      %v2338 = vld [vmem:[%s423 + $0x278] sm:$0xff]
      %v2339 = vld [vmem:[%s423 + $0x280] sm:$0xff]
      %v2340 = vld [vmem:[%s423 + $0x288] sm:$0xff]
      %v2341 = vld [vmem:[%s423 + $0x290] sm:$0xff]
      %v2342 = vld [vmem:[%s423 + $0x298] sm:$0xff]
      %v2343 = vld [vmem:[%s423 + $0x2a0] sm:$0xff]
      %v2344 = vld [vmem:[%s423 + $0x2a8] sm:$0xff]
      %v2345 = vld [vmem:[%s423 + $0x2b0] sm:$0xff]
      %v2346 = vld [vmem:[%s423 + $0x2b8] sm:$0xf]
      %v2347 = vld [vmem:[%s423 + $0x2bc] sm:$0xff]
      %v2348 = vld [vmem:[%s423 + $0x2c4] sm:$0xff]
      %v2349 = vld [vmem:[%s423 + $0x2cc] sm:$0xff]
      %v2350 = vld [vmem:[%s423 + $0x2d4] sm:$0xff]
      %v2351 = vld [vmem:[%s423 + $0x2dc] sm:$0xff]
      %v2352 = vld [vmem:[%s423 + $0x2e4] sm:$0xff]
      %v2353 = vld [vmem:[%s423 + $0x2ec] sm:$0xff]
      %v2354 = vld [vmem:[%s423 + $0x2f4] sm:$0xff]
      %v2355 = vld [vmem:[%s423 + $0x2fc] sm:$0xff]
      %v2356 = vld [vmem:[%s423 + $0x304] sm:$0xff]
      %v2357 = vld [vmem:[%s423 + $0x30c] sm:$0xff]
      %v2358 = vld [vmem:[%s423 + $0x314] sm:$0xff]
      %v2359 = vld [vmem:[%s423 + $0x31c] sm:$0xf]
      %v2360 = vunpack.c.l.bf16 %v2256
      %v2361 = vunpack.c.h.bf16 %v2256
      %v2362 = vunpack.c.l.bf16 %v2257
      %v2363 = vunpack.c.h.bf16 %v2257
      %v2364 = vunpack.c.l.bf16 %v2258
      %v2365 = vunpack.c.h.bf16 %v2258
      %v2366 = vunpack.c.l.bf16 %v2259
      %v2367 = vunpack.c.h.bf16 %v2259
      %v2368 = vunpack.c.l.bf16 %v2260
      %v2369 = vunpack.c.h.bf16 %v2260
      %v2370 = vunpack.c.l.bf16 %v2261
      %v2371 = vunpack.c.h.bf16 %v2261
      %v2372 = vunpack.c.l.bf16 %v2262
      %v2373 = vunpack.c.h.bf16 %v2262
      %v2374 = vunpack.c.l.bf16 %v2263
      %v2375 = vunpack.c.h.bf16 %v2263
      %v2376 = vunpack.c.l.bf16 %v2264
      %v2377 = vunpack.c.h.bf16 %v2264
      %v2378 = vunpack.c.l.bf16 %v2265
      %v2379 = vunpack.c.h.bf16 %v2265
      %v2380 = vunpack.c.l.bf16 %v2266
      %v2381 = vunpack.c.h.bf16 %v2266
      %v2382 = vunpack.c.l.bf16 %v2267
      %v2383 = vunpack.c.h.bf16 %v2267
      %v2384 = vunpack.c.l.bf16 %v2268
      %v2385 = vunpack.c.l.bf16 %v2269
      %v2386 = vunpack.c.h.bf16 %v2269
      %v2387 = vunpack.c.l.bf16 %v2270
      %v2388 = vunpack.c.h.bf16 %v2270
      %v2389 = vunpack.c.l.bf16 %v2271
      %v2390 = vunpack.c.h.bf16 %v2271
      %v2391 = vunpack.c.l.bf16 %v2272
      %v2392 = vunpack.c.h.bf16 %v2272
      %v2393 = vunpack.c.l.bf16 %v2273
      %v2394 = vunpack.c.h.bf16 %v2273
      %v2395 = vunpack.c.l.bf16 %v2274
      %v2396 = vunpack.c.h.bf16 %v2274
      %v2397 = vunpack.c.l.bf16 %v2275
      %v2398 = vunpack.c.h.bf16 %v2275
      %v2399 = vunpack.c.l.bf16 %v2276
      %v2400 = vunpack.c.h.bf16 %v2276
      %v2401 = vunpack.c.l.bf16 %v2277
      %v2402 = vunpack.c.h.bf16 %v2277
      %v2403 = vunpack.c.l.bf16 %v2278
      %v2404 = vunpack.c.h.bf16 %v2278
      %v2405 = vunpack.c.l.bf16 %v2279
      %v2406 = vunpack.c.h.bf16 %v2279
      %v2407 = vunpack.c.l.bf16 %v2280
      %v2408 = vunpack.c.h.bf16 %v2280
      %v2409 = vunpack.c.l.bf16 %v2281
      %v2410 = vunpack.c.l.bf16 %v2282
      %v2411 = vunpack.c.h.bf16 %v2282
      %v2412 = vunpack.c.l.bf16 %v2283
      %v2413 = vunpack.c.h.bf16 %v2283
      %v2414 = vunpack.c.l.bf16 %v2284
      %v2415 = vunpack.c.h.bf16 %v2284
      %v2416 = vunpack.c.l.bf16 %v2285
      %v2417 = vunpack.c.h.bf16 %v2285
      %v2418 = vunpack.c.l.bf16 %v2286
      %v2419 = vunpack.c.h.bf16 %v2286
      %v2420 = vunpack.c.l.bf16 %v2287
      %v2421 = vunpack.c.h.bf16 %v2287
      %v2422 = vunpack.c.l.bf16 %v2288
      %v2423 = vunpack.c.h.bf16 %v2288
      %v2424 = vunpack.c.l.bf16 %v2289
      %v2425 = vunpack.c.h.bf16 %v2289
      %v2426 = vunpack.c.l.bf16 %v2290
      %v2427 = vunpack.c.h.bf16 %v2290
      %v2428 = vunpack.c.l.bf16 %v2291
      %v2429 = vunpack.c.h.bf16 %v2291
      %v2430 = vunpack.c.l.bf16 %v2292
      %v2431 = vunpack.c.h.bf16 %v2292
      %v2432 = vunpack.c.l.bf16 %v2293
      %v2433 = vunpack.c.h.bf16 %v2293
      %v2434 = vunpack.c.l.bf16 %v2294
      %v2435 = vunpack.c.l.bf16 %v2295
      %v2436 = vunpack.c.h.bf16 %v2295
      %v2437 = vunpack.c.l.bf16 %v2296
      %v2438 = vunpack.c.h.bf16 %v2296
      %v2439 = vunpack.c.l.bf16 %v2297
      %v2440 = vunpack.c.h.bf16 %v2297
      %v2441 = vunpack.c.l.bf16 %v2298
      %v2442 = vunpack.c.h.bf16 %v2298
      %v2443 = vunpack.c.l.bf16 %v2299
      %v2444 = vunpack.c.h.bf16 %v2299
      %v2445 = vunpack.c.l.bf16 %v2300
      %v2446 = vunpack.c.h.bf16 %v2300
      %v2447 = vunpack.c.l.bf16 %v2301
      %v2448 = vunpack.c.h.bf16 %v2301
      %v2449 = vunpack.c.l.bf16 %v2302
      %v2450 = vunpack.c.h.bf16 %v2302
      %v2451 = vunpack.c.l.bf16 %v2303
      %v2452 = vunpack.c.h.bf16 %v2303
      %v2453 = vunpack.c.l.bf16 %v2304
      %v2454 = vunpack.c.h.bf16 %v2304
      %v2455 = vunpack.c.l.bf16 %v2305
      %v2456 = vunpack.c.h.bf16 %v2305
      %v2457 = vunpack.c.l.bf16 %v2306
      %v2458 = vunpack.c.h.bf16 %v2306
      %v2459 = vunpack.c.l.bf16 %v2307
      %v2460 = vunpack.c.l.bf16 %v2308
      %v2461 = vunpack.c.h.bf16 %v2308
      %v2462 = vunpack.c.l.bf16 %v2309
      %v2463 = vunpack.c.h.bf16 %v2309
      %v2464 = vunpack.c.l.bf16 %v2310
      %v2465 = vunpack.c.h.bf16 %v2310
      %v2466 = vunpack.c.l.bf16 %v2311
      %v2467 = vunpack.c.h.bf16 %v2311
      %v2468 = vunpack.c.l.bf16 %v2312
      %v2469 = vunpack.c.h.bf16 %v2312
      %v2470 = vunpack.c.l.bf16 %v2313
      %v2471 = vunpack.c.h.bf16 %v2313
      %v2472 = vunpack.c.l.bf16 %v2314
      %v2473 = vunpack.c.h.bf16 %v2314
      %v2474 = vunpack.c.l.bf16 %v2315
      %v2475 = vunpack.c.h.bf16 %v2315
      %v2476 = vunpack.c.l.bf16 %v2316
      %v2477 = vunpack.c.h.bf16 %v2316
      %v2478 = vunpack.c.l.bf16 %v2317
      %v2479 = vunpack.c.h.bf16 %v2317
      %v2480 = vunpack.c.l.bf16 %v2318
      %v2481 = vunpack.c.h.bf16 %v2318
      %v2482 = vunpack.c.l.bf16 %v2319
      %v2483 = vunpack.c.h.bf16 %v2319
      %v2484 = vunpack.c.l.bf16 %v2320
      %v2485 = vunpack.c.l.bf16 %v2321
      %v2486 = vunpack.c.h.bf16 %v2321
      %v2487 = vunpack.c.l.bf16 %v2322
      %v2488 = vunpack.c.h.bf16 %v2322
      %v2489 = vunpack.c.l.bf16 %v2323
      %v2490 = vunpack.c.h.bf16 %v2323
      %v2491 = vunpack.c.l.bf16 %v2324
      %v2492 = vunpack.c.h.bf16 %v2324
      %v2493 = vunpack.c.l.bf16 %v2325
      %v2494 = vunpack.c.h.bf16 %v2325
      %v2495 = vunpack.c.l.bf16 %v2326
      %v2496 = vunpack.c.h.bf16 %v2326
      %v2497 = vunpack.c.l.bf16 %v2327
      %v2498 = vunpack.c.h.bf16 %v2327
      %v2499 = vunpack.c.l.bf16 %v2328
      %v2500 = vunpack.c.h.bf16 %v2328
      %v2501 = vunpack.c.l.bf16 %v2329
      %v2502 = vunpack.c.h.bf16 %v2329
      %v2503 = vunpack.c.l.bf16 %v2330
      %v2504 = vunpack.c.h.bf16 %v2330
      %v2505 = vunpack.c.l.bf16 %v2331
      %v2506 = vunpack.c.h.bf16 %v2331
      %v2507 = vunpack.c.l.bf16 %v2332
      %v2508 = vunpack.c.h.bf16 %v2332
      %v2509 = vunpack.c.l.bf16 %v2333
      %v2510 = vunpack.c.l.bf16 %v2334
      %v2511 = vunpack.c.h.bf16 %v2334
      %v2512 = vunpack.c.l.bf16 %v2335
      %v2513 = vunpack.c.h.bf16 %v2335
      %v2514 = vunpack.c.l.bf16 %v2336
      %v2515 = vunpack.c.h.bf16 %v2336
      %v2516 = vunpack.c.l.bf16 %v2337
      %v2517 = vunpack.c.h.bf16 %v2337
      %v2518 = vunpack.c.l.bf16 %v2338
      %v2519 = vunpack.c.h.bf16 %v2338
      %v2520 = vunpack.c.l.bf16 %v2339
      %v2521 = vunpack.c.h.bf16 %v2339
      %v2522 = vunpack.c.l.bf16 %v2340
      %v2523 = vunpack.c.h.bf16 %v2340
      %v2524 = vunpack.c.l.bf16 %v2341
      %v2525 = vunpack.c.h.bf16 %v2341
      %v2526 = vunpack.c.l.bf16 %v2342
      %v2527 = vunpack.c.h.bf16 %v2342
      %v2528 = vunpack.c.l.bf16 %v2343
      %v2529 = vunpack.c.h.bf16 %v2343
      %v2530 = vunpack.c.l.bf16 %v2344
      %v2531 = vunpack.c.h.bf16 %v2344
      %v2532 = vunpack.c.l.bf16 %v2345
      %v2533 = vunpack.c.h.bf16 %v2345
      %v2534 = vunpack.c.l.bf16 %v2346
      %v2535 = vunpack.c.l.bf16 %v2347
      %v2536 = vunpack.c.h.bf16 %v2347
      %v2537 = vunpack.c.l.bf16 %v2348
      %v2538 = vunpack.c.h.bf16 %v2348
      %v2539 = vunpack.c.l.bf16 %v2349
      %v2540 = vunpack.c.h.bf16 %v2349
      %v2541 = vunpack.c.l.bf16 %v2350
      %v2542 = vunpack.c.h.bf16 %v2350
      %v2543 = vunpack.c.l.bf16 %v2351
      %v2544 = vunpack.c.h.bf16 %v2351
      %v2545 = vunpack.c.l.bf16 %v2352
      %v2546 = vunpack.c.h.bf16 %v2352
      %v2547 = vunpack.c.l.bf16 %v2353
      %v2548 = vunpack.c.h.bf16 %v2353
      %v2549 = vunpack.c.l.bf16 %v2354
      %v2550 = vunpack.c.h.bf16 %v2354
      %v2551 = vunpack.c.l.bf16 %v2355
      %v2552 = vunpack.c.h.bf16 %v2355
      %v2553 = vunpack.c.l.bf16 %v2356
      %v2554 = vunpack.c.h.bf16 %v2356
      %v2555 = vunpack.c.l.bf16 %v2357
      %v2556 = vunpack.c.h.bf16 %v2357
      %v2557 = vunpack.c.l.bf16 %v2358
      %v2558 = vunpack.c.h.bf16 %v2358
      %v2559 = vunpack.c.l.bf16 %v2359
      %v2560 = vld [vmem:[%s430] sm:$0xff]
      %v2561 = vld [vmem:[%s430 + $0x8] sm:$0xff]
      %v2562 = vld [vmem:[%s430 + $0x10] sm:$0xff]
      %v2563 = vld [vmem:[%s430 + $0x18] sm:$0xff]
      %v2564 = vld [vmem:[%s430 + $0x20] sm:$0xff]
      %v2565 = vld [vmem:[%s430 + $0x28] sm:$0xff]
      %v2566 = vld [vmem:[%s430 + $0x30] sm:$0xff]
      %v2567 = vld [vmem:[%s430 + $0x38] sm:$0xff]
      %v2568 = vld [vmem:[%s430 + $0x40] sm:$0xff]
      %v2569 = vld [vmem:[%s430 + $0x48] sm:$0xff]
      %v2570 = vld [vmem:[%s430 + $0x50] sm:$0xff]
      %v2571 = vld [vmem:[%s430 + $0x58] sm:$0xff]
      %v2572 = vld [vmem:[%s430 + $0x60] sm:$0xf]
      %v2573 = vld [vmem:[%s430 + $0x64] sm:$0xff]
      %v2574 = vld [vmem:[%s430 + $0x6c] sm:$0xff]
      %v2575 = vld [vmem:[%s430 + $0x74] sm:$0xff]
      %v2576 = vld [vmem:[%s430 + $0x7c] sm:$0xff]
      %v2577 = vld [vmem:[%s430 + $0x84] sm:$0xff]
      %v2578 = vld [vmem:[%s430 + $0x8c] sm:$0xff]
      %v2579 = vld [vmem:[%s430 + $0x94] sm:$0xff]
      %v2580 = vld [vmem:[%s430 + $0x9c] sm:$0xff]
      %v2581 = vld [vmem:[%s430 + $0xa4] sm:$0xff]
      %v2582 = vld [vmem:[%s430 + $0xac] sm:$0xff]
      %v2583 = vld [vmem:[%s430 + $0xb4] sm:$0xff]
      %v2584 = vld [vmem:[%s430 + $0xbc] sm:$0xff]
      %v2585 = vld [vmem:[%s430 + $0xc4] sm:$0xf]
      %v2586 = vld [vmem:[%s430 + $0xc8] sm:$0xff]
      %v2587 = vld [vmem:[%s430 + $0xd0] sm:$0xff]
      %v2588 = vld [vmem:[%s430 + $0xd8] sm:$0xff]
      %v2589 = vld [vmem:[%s430 + $0xe0] sm:$0xff]
      %v2590 = vld [vmem:[%s430 + $0xe8] sm:$0xff]
      %v2591 = vld [vmem:[%s430 + $0xf0] sm:$0xff]
      %v2592 = vld [vmem:[%s430 + $0xf8] sm:$0xff]
      %v2593 = vld [vmem:[%s430 + $0x100] sm:$0xff]
      %v2594 = vld [vmem:[%s430 + $0x108] sm:$0xff]
      %v2595 = vld [vmem:[%s430 + $0x110] sm:$0xff]
      %v2596 = vld [vmem:[%s430 + $0x118] sm:$0xff]
      %v2597 = vld [vmem:[%s430 + $0x120] sm:$0xff]
      %v2598 = vld [vmem:[%s430 + $0x128] sm:$0xf]
      %v2599 = vld [vmem:[%s430 + $0x12c] sm:$0xff]
      %v2600 = vld [vmem:[%s430 + $0x134] sm:$0xff]
      %v2601 = vld [vmem:[%s430 + $0x13c] sm:$0xff]
      %v2602 = vld [vmem:[%s430 + $0x144] sm:$0xff]
      %v2603 = vld [vmem:[%s430 + $0x14c] sm:$0xff]
      %v2604 = vld [vmem:[%s430 + $0x154] sm:$0xff]
      %v2605 = vld [vmem:[%s430 + $0x15c] sm:$0xff]
      %v2606 = vld [vmem:[%s430 + $0x164] sm:$0xff]
      %v2607 = vld [vmem:[%s430 + $0x16c] sm:$0xff]
      %v2608 = vld [vmem:[%s430 + $0x174] sm:$0xff]
      %v2609 = vld [vmem:[%s430 + $0x17c] sm:$0xff]
      %v2610 = vld [vmem:[%s430 + $0x184] sm:$0xff]
      %v2611 = vld [vmem:[%s430 + $0x18c] sm:$0xf]
      %v2612 = vld [vmem:[%s430 + $0x190] sm:$0xff]
      %v2613 = vld [vmem:[%s430 + $0x198] sm:$0xff]
      %v2614 = vld [vmem:[%s430 + $0x1a0] sm:$0xff]
      %v2615 = vld [vmem:[%s430 + $0x1a8] sm:$0xff]
      %v2616 = vld [vmem:[%s430 + $0x1b0] sm:$0xff]
      %v2617 = vld [vmem:[%s430 + $0x1b8] sm:$0xff]
      %v2618 = vld [vmem:[%s430 + $0x1c0] sm:$0xff]
      %v2619 = vld [vmem:[%s430 + $0x1c8] sm:$0xff]
      %v2620 = vld [vmem:[%s430 + $0x1d0] sm:$0xff]
      %v2621 = vld [vmem:[%s430 + $0x1d8] sm:$0xff]
      %v2622 = vld [vmem:[%s430 + $0x1e0] sm:$0xff]
      %v2623 = vld [vmem:[%s430 + $0x1e8] sm:$0xff]
      %v2624 = vld [vmem:[%s430 + $0x1f0] sm:$0xf]
      %v2625 = vld [vmem:[%s430 + $0x1f4] sm:$0xff]
      %v2626 = vld [vmem:[%s430 + $0x1fc] sm:$0xff]
      %v2627 = vld [vmem:[%s430 + $0x204] sm:$0xff]
      %v2628 = vld [vmem:[%s430 + $0x20c] sm:$0xff]
      %v2629 = vld [vmem:[%s430 + $0x214] sm:$0xff]
      %v2630 = vld [vmem:[%s430 + $0x21c] sm:$0xff]
      %v2631 = vld [vmem:[%s430 + $0x224] sm:$0xff]
      %v2632 = vld [vmem:[%s430 + $0x22c] sm:$0xff]
      %v2633 = vld [vmem:[%s430 + $0x234] sm:$0xff]
      %v2634 = vld [vmem:[%s430 + $0x23c] sm:$0xff]
      %v2635 = vld [vmem:[%s430 + $0x244] sm:$0xff]
      %v2636 = vld [vmem:[%s430 + $0x24c] sm:$0xff]
      %v2637 = vld [vmem:[%s430 + $0x254] sm:$0xf]
      %v2638 = vld [vmem:[%s430 + $0x258] sm:$0xff]
      %v2639 = vld [vmem:[%s430 + $0x260] sm:$0xff]
      %v2640 = vld [vmem:[%s430 + $0x268] sm:$0xff]
      %v2641 = vld [vmem:[%s430 + $0x270] sm:$0xff]
      %v2642 = vld [vmem:[%s430 + $0x278] sm:$0xff]
      %v2643 = vld [vmem:[%s430 + $0x280] sm:$0xff]
      %v2644 = vld [vmem:[%s430 + $0x288] sm:$0xff]
      %v2645 = vld [vmem:[%s430 + $0x290] sm:$0xff]
      %v2646 = vld [vmem:[%s430 + $0x298] sm:$0xff]
      %v2647 = vld [vmem:[%s430 + $0x2a0] sm:$0xff]
      %v2648 = vld [vmem:[%s430 + $0x2a8] sm:$0xff]
      %v2649 = vld [vmem:[%s430 + $0x2b0] sm:$0xff]
      %v2650 = vld [vmem:[%s430 + $0x2b8] sm:$0xf]
      %v2651 = vld [vmem:[%s430 + $0x2bc] sm:$0xff]
      %v2652 = vld [vmem:[%s430 + $0x2c4] sm:$0xff]
      %v2653 = vld [vmem:[%s430 + $0x2cc] sm:$0xff]
      %v2654 = vld [vmem:[%s430 + $0x2d4] sm:$0xff]
      %v2655 = vld [vmem:[%s430 + $0x2dc] sm:$0xff]
      %v2656 = vld [vmem:[%s430 + $0x2e4] sm:$0xff]
      %v2657 = vld [vmem:[%s430 + $0x2ec] sm:$0xff]
      %v2658 = vld [vmem:[%s430 + $0x2f4] sm:$0xff]
      %v2659 = vld [vmem:[%s430 + $0x2fc] sm:$0xff]
      %v2660 = vld [vmem:[%s430 + $0x304] sm:$0xff]
      %v2661 = vld [vmem:[%s430 + $0x30c] sm:$0xff]
      %v2662 = vld [vmem:[%s430 + $0x314] sm:$0xff]
      %v2663 = vld [vmem:[%s430 + $0x31c] sm:$0xf]
      %v2664 = vunpack.c.l.bf16 %v2560
      %v2665 = vunpack.c.h.bf16 %v2560
      %v2666 = vunpack.c.l.bf16 %v2561
      %v2667 = vunpack.c.h.bf16 %v2561
      %v2668 = vunpack.c.l.bf16 %v2562
      %v2669 = vunpack.c.h.bf16 %v2562
      %v2670 = vunpack.c.l.bf16 %v2563
      %v2671 = vunpack.c.h.bf16 %v2563
      %v2672 = vunpack.c.l.bf16 %v2564
      %v2673 = vunpack.c.h.bf16 %v2564
      %v2674 = vunpack.c.l.bf16 %v2565
      %v2675 = vunpack.c.h.bf16 %v2565
      %v2676 = vunpack.c.l.bf16 %v2566
      %v2677 = vunpack.c.h.bf16 %v2566
      %v2678 = vunpack.c.l.bf16 %v2567
      %v2679 = vunpack.c.h.bf16 %v2567
      %v2680 = vunpack.c.l.bf16 %v2568
      %v2681 = vunpack.c.h.bf16 %v2568
      %v2682 = vunpack.c.l.bf16 %v2569
      %v2683 = vunpack.c.h.bf16 %v2569
      %v2684 = vunpack.c.l.bf16 %v2570
      %v2685 = vunpack.c.h.bf16 %v2570
      %v2686 = vunpack.c.l.bf16 %v2571
      %v2687 = vunpack.c.h.bf16 %v2571
      %v2688 = vunpack.c.l.bf16 %v2572
      %v2689 = vunpack.c.l.bf16 %v2573
      %v2690 = vunpack.c.h.bf16 %v2573
      %v2691 = vunpack.c.l.bf16 %v2574
      %v2692 = vunpack.c.h.bf16 %v2574
      %v2693 = vunpack.c.l.bf16 %v2575
      %v2694 = vunpack.c.h.bf16 %v2575
      %v2695 = vunpack.c.l.bf16 %v2576
      %v2696 = vunpack.c.h.bf16 %v2576
      %v2697 = vunpack.c.l.bf16 %v2577
      %v2698 = vunpack.c.h.bf16 %v2577
      %v2699 = vunpack.c.l.bf16 %v2578
      %v2700 = vunpack.c.h.bf16 %v2578
      %v2701 = vunpack.c.l.bf16 %v2579
      %v2702 = vunpack.c.h.bf16 %v2579
      %v2703 = vunpack.c.l.bf16 %v2580
      %v2704 = vunpack.c.h.bf16 %v2580
      %v2705 = vunpack.c.l.bf16 %v2581
      %v2706 = vunpack.c.h.bf16 %v2581
      %v2707 = vunpack.c.l.bf16 %v2582
      %v2708 = vunpack.c.h.bf16 %v2582
      %v2709 = vunpack.c.l.bf16 %v2583
      %v2710 = vunpack.c.h.bf16 %v2583
      %v2711 = vunpack.c.l.bf16 %v2584
      %v2712 = vunpack.c.h.bf16 %v2584
      %v2713 = vunpack.c.l.bf16 %v2585
      %v2714 = vunpack.c.l.bf16 %v2586
      %v2715 = vunpack.c.h.bf16 %v2586
      %v2716 = vunpack.c.l.bf16 %v2587
      %v2717 = vunpack.c.h.bf16 %v2587
      %v2718 = vunpack.c.l.bf16 %v2588
      %v2719 = vunpack.c.h.bf16 %v2588
      %v2720 = vunpack.c.l.bf16 %v2589
      %v2721 = vunpack.c.h.bf16 %v2589
      %v2722 = vunpack.c.l.bf16 %v2590
      %v2723 = vunpack.c.h.bf16 %v2590
      %v2724 = vunpack.c.l.bf16 %v2591
      %v2725 = vunpack.c.h.bf16 %v2591
      %v2726 = vunpack.c.l.bf16 %v2592
      %v2727 = vunpack.c.h.bf16 %v2592
      %v2728 = vunpack.c.l.bf16 %v2593
      %v2729 = vunpack.c.h.bf16 %v2593
      %v2730 = vunpack.c.l.bf16 %v2594
      %v2731 = vunpack.c.h.bf16 %v2594
      %v2732 = vunpack.c.l.bf16 %v2595
      %v2733 = vunpack.c.h.bf16 %v2595
      %v2734 = vunpack.c.l.bf16 %v2596
      %v2735 = vunpack.c.h.bf16 %v2596
      %v2736 = vunpack.c.l.bf16 %v2597
      %v2737 = vunpack.c.h.bf16 %v2597
      %v2738 = vunpack.c.l.bf16 %v2598
      %v2739 = vunpack.c.l.bf16 %v2599
      %v2740 = vunpack.c.h.bf16 %v2599
      %v2741 = vunpack.c.l.bf16 %v2600
      %v2742 = vunpack.c.h.bf16 %v2600
      %v2743 = vunpack.c.l.bf16 %v2601
      %v2744 = vunpack.c.h.bf16 %v2601
      %v2745 = vunpack.c.l.bf16 %v2602
      %v2746 = vunpack.c.h.bf16 %v2602
      %v2747 = vunpack.c.l.bf16 %v2603
      %v2748 = vunpack.c.h.bf16 %v2603
      %v2749 = vunpack.c.l.bf16 %v2604
      %v2750 = vunpack.c.h.bf16 %v2604
      %v2751 = vunpack.c.l.bf16 %v2605
      %v2752 = vunpack.c.h.bf16 %v2605
      %v2753 = vunpack.c.l.bf16 %v2606
      %v2754 = vunpack.c.h.bf16 %v2606
      %v2755 = vunpack.c.l.bf16 %v2607
      %v2756 = vunpack.c.h.bf16 %v2607
      %v2757 = vunpack.c.l.bf16 %v2608
      %v2758 = vunpack.c.h.bf16 %v2608
      %v2759 = vunpack.c.l.bf16 %v2609
      %v2760 = vunpack.c.h.bf16 %v2609
      %v2761 = vunpack.c.l.bf16 %v2610
      %v2762 = vunpack.c.h.bf16 %v2610
      %v2763 = vunpack.c.l.bf16 %v2611
      %v2764 = vunpack.c.l.bf16 %v2612
      %v2765 = vunpack.c.h.bf16 %v2612
      %v2766 = vunpack.c.l.bf16 %v2613
      %v2767 = vunpack.c.h.bf16 %v2613
      %v2768 = vunpack.c.l.bf16 %v2614
      %v2769 = vunpack.c.h.bf16 %v2614
      %v2770 = vunpack.c.l.bf16 %v2615
      %v2771 = vunpack.c.h.bf16 %v2615
      %v2772 = vunpack.c.l.bf16 %v2616
      %v2773 = vunpack.c.h.bf16 %v2616
      %v2774 = vunpack.c.l.bf16 %v2617
      %v2775 = vunpack.c.h.bf16 %v2617
      %v2776 = vunpack.c.l.bf16 %v2618
      %v2777 = vunpack.c.h.bf16 %v2618
      %v2778 = vunpack.c.l.bf16 %v2619
      %v2779 = vunpack.c.h.bf16 %v2619
      %v2780 = vunpack.c.l.bf16 %v2620
      %v2781 = vunpack.c.h.bf16 %v2620
      %v2782 = vunpack.c.l.bf16 %v2621
      %v2783 = vunpack.c.h.bf16 %v2621
      %v2784 = vunpack.c.l.bf16 %v2622
      %v2785 = vunpack.c.h.bf16 %v2622
      %v2786 = vunpack.c.l.bf16 %v2623
      %v2787 = vunpack.c.h.bf16 %v2623
      %v2788 = vunpack.c.l.bf16 %v2624
      %v2789 = vunpack.c.l.bf16 %v2625
      %v2790 = vunpack.c.h.bf16 %v2625
      %v2791 = vunpack.c.l.bf16 %v2626
      %v2792 = vunpack.c.h.bf16 %v2626
      %v2793 = vunpack.c.l.bf16 %v2627
      %v2794 = vunpack.c.h.bf16 %v2627
      %v2795 = vunpack.c.l.bf16 %v2628
      %v2796 = vunpack.c.h.bf16 %v2628
      %v2797 = vunpack.c.l.bf16 %v2629
      %v2798 = vunpack.c.h.bf16 %v2629
      %v2799 = vunpack.c.l.bf16 %v2630
      %v2800 = vunpack.c.h.bf16 %v2630
      %v2801 = vunpack.c.l.bf16 %v2631
      %v2802 = vunpack.c.h.bf16 %v2631
      %v2803 = vunpack.c.l.bf16 %v2632
      %v2804 = vunpack.c.h.bf16 %v2632
      %v2805 = vunpack.c.l.bf16 %v2633
      %v2806 = vunpack.c.h.bf16 %v2633
      %v2807 = vunpack.c.l.bf16 %v2634
      %v2808 = vunpack.c.h.bf16 %v2634
      %v2809 = vunpack.c.l.bf16 %v2635
      %v2810 = vunpack.c.h.bf16 %v2635
      %v2811 = vunpack.c.l.bf16 %v2636
      %v2812 = vunpack.c.h.bf16 %v2636
      %v2813 = vunpack.c.l.bf16 %v2637
      %v2814 = vunpack.c.l.bf16 %v2638
      %v2815 = vunpack.c.h.bf16 %v2638
      %v2816 = vunpack.c.l.bf16 %v2639
      %v2817 = vunpack.c.h.bf16 %v2639
      %v2818 = vunpack.c.l.bf16 %v2640
      %v2819 = vunpack.c.h.bf16 %v2640
      %v2820 = vunpack.c.l.bf16 %v2641
      %v2821 = vunpack.c.h.bf16 %v2641
      %v2822 = vunpack.c.l.bf16 %v2642
      %v2823 = vunpack.c.h.bf16 %v2642
      %v2824 = vunpack.c.l.bf16 %v2643
      %v2825 = vunpack.c.h.bf16 %v2643
      %v2826 = vunpack.c.l.bf16 %v2644
      %v2827 = vunpack.c.h.bf16 %v2644
      %v2828 = vunpack.c.l.bf16 %v2645
      %v2829 = vunpack.c.h.bf16 %v2645
      %v2830 = vunpack.c.l.bf16 %v2646
      %v2831 = vunpack.c.h.bf16 %v2646
      %v2832 = vunpack.c.l.bf16 %v2647
      %v2833 = vunpack.c.h.bf16 %v2647
      %v2834 = vunpack.c.l.bf16 %v2648
      %v2835 = vunpack.c.h.bf16 %v2648
      %v2836 = vunpack.c.l.bf16 %v2649
      %v2837 = vunpack.c.h.bf16 %v2649
      %v2838 = vunpack.c.l.bf16 %v2650
      %v2839 = vunpack.c.l.bf16 %v2651
      %v2840 = vunpack.c.h.bf16 %v2651
      %v2841 = vunpack.c.l.bf16 %v2652
      %v2842 = vunpack.c.h.bf16 %v2652
      %v2843 = vunpack.c.l.bf16 %v2653
      %v2844 = vunpack.c.h.bf16 %v2653
      %v2845 = vunpack.c.l.bf16 %v2654
      %v2846 = vunpack.c.h.bf16 %v2654
      %v2847 = vunpack.c.l.bf16 %v2655
      %v2848 = vunpack.c.h.bf16 %v2655
      %v2849 = vunpack.c.l.bf16 %v2656
      %v2850 = vunpack.c.h.bf16 %v2656
      %v2851 = vunpack.c.l.bf16 %v2657
      %v2852 = vunpack.c.h.bf16 %v2657
      %v2853 = vunpack.c.l.bf16 %v2658
      %v2854 = vunpack.c.h.bf16 %v2658
      %v2855 = vunpack.c.l.bf16 %v2659
      %v2856 = vunpack.c.h.bf16 %v2659
      %v2857 = vunpack.c.l.bf16 %v2660
      %v2858 = vunpack.c.h.bf16 %v2660
      %v2859 = vunpack.c.l.bf16 %v2661
      %v2860 = vunpack.c.h.bf16 %v2661
      %v2861 = vunpack.c.l.bf16 %v2662
      %v2862 = vunpack.c.h.bf16 %v2662
      %v2863 = vunpack.c.l.bf16 %v2663
      %v2864 = vld [vmem:[%s437] sm:$0xff]
      %v2865 = vld [vmem:[%s437 + $0x8] sm:$0xff]
      %v2866 = vld [vmem:[%s437 + $0x10] sm:$0xff]
      %v2867 = vld [vmem:[%s437 + $0x18] sm:$0xff]
      %v2868 = vld [vmem:[%s437 + $0x20] sm:$0xff]
      %v2869 = vld [vmem:[%s437 + $0x28] sm:$0xff]
      %v2870 = vld [vmem:[%s437 + $0x30] sm:$0xff]
      %v2871 = vld [vmem:[%s437 + $0x38] sm:$0xff]
      %v2872 = vld [vmem:[%s437 + $0x40] sm:$0xff]
      %v2873 = vld [vmem:[%s437 + $0x48] sm:$0xff]
      %v2874 = vld [vmem:[%s437 + $0x50] sm:$0xff]
      %v2875 = vld [vmem:[%s437 + $0x58] sm:$0xff]
      %v2876 = vld [vmem:[%s437 + $0x60] sm:$0xf]
      %v2877 = vld [vmem:[%s437 + $0x64] sm:$0xff]
      %v2878 = vld [vmem:[%s437 + $0x6c] sm:$0xff]
      %v2879 = vld [vmem:[%s437 + $0x74] sm:$0xff]
      %v2880 = vld [vmem:[%s437 + $0x7c] sm:$0xff]
      %v2881 = vld [vmem:[%s437 + $0x84] sm:$0xff]
      %v2882 = vld [vmem:[%s437 + $0x8c] sm:$0xff]
      %v2883 = vld [vmem:[%s437 + $0x94] sm:$0xff]
      %v2884 = vld [vmem:[%s437 + $0x9c] sm:$0xff]
      %v2885 = vld [vmem:[%s437 + $0xa4] sm:$0xff]
      %v2886 = vld [vmem:[%s437 + $0xac] sm:$0xff]
      %v2887 = vld [vmem:[%s437 + $0xb4] sm:$0xff]
      %v2888 = vld [vmem:[%s437 + $0xbc] sm:$0xff]
      %v2889 = vld [vmem:[%s437 + $0xc4] sm:$0xf]
      %v2890 = vld [vmem:[%s437 + $0xc8] sm:$0xff]
      %v2891 = vld [vmem:[%s437 + $0xd0] sm:$0xff]
      %v2892 = vld [vmem:[%s437 + $0xd8] sm:$0xff]
      %v2893 = vld [vmem:[%s437 + $0xe0] sm:$0xff]
      %v2894 = vld [vmem:[%s437 + $0xe8] sm:$0xff]
      %v2895 = vld [vmem:[%s437 + $0xf0] sm:$0xff]
      %v2896 = vld [vmem:[%s437 + $0xf8] sm:$0xff]
      %v2897 = vld [vmem:[%s437 + $0x100] sm:$0xff]
      %v2898 = vld [vmem:[%s437 + $0x108] sm:$0xff]
      %v2899 = vld [vmem:[%s437 + $0x110] sm:$0xff]
      %v2900 = vld [vmem:[%s437 + $0x118] sm:$0xff]
      %v2901 = vld [vmem:[%s437 + $0x120] sm:$0xff]
      %v2902 = vld [vmem:[%s437 + $0x128] sm:$0xf]
      %v2903 = vld [vmem:[%s437 + $0x12c] sm:$0xff]
      %v2904 = vld [vmem:[%s437 + $0x134] sm:$0xff]
      %v2905 = vld [vmem:[%s437 + $0x13c] sm:$0xff]
      %v2906 = vld [vmem:[%s437 + $0x144] sm:$0xff]
      %v2907 = vld [vmem:[%s437 + $0x14c] sm:$0xff]
      %v2908 = vld [vmem:[%s437 + $0x154] sm:$0xff]
      %v2909 = vld [vmem:[%s437 + $0x15c] sm:$0xff]
      %v2910 = vld [vmem:[%s437 + $0x164] sm:$0xff]
      %v2911 = vld [vmem:[%s437 + $0x16c] sm:$0xff]
      %v2912 = vld [vmem:[%s437 + $0x174] sm:$0xff]
      %v2913 = vld [vmem:[%s437 + $0x17c] sm:$0xff]
      %v2914 = vld [vmem:[%s437 + $0x184] sm:$0xff]
      %v2915 = vld [vmem:[%s437 + $0x18c] sm:$0xf]
      %v2916 = vld [vmem:[%s437 + $0x190] sm:$0xff]
      %v2917 = vld [vmem:[%s437 + $0x198] sm:$0xff]
      %v2918 = vld [vmem:[%s437 + $0x1a0] sm:$0xff]
      %v2919 = vld [vmem:[%s437 + $0x1a8] sm:$0xff]
      %v2920 = vld [vmem:[%s437 + $0x1b0] sm:$0xff]
      %v2921 = vld [vmem:[%s437 + $0x1b8] sm:$0xff]
      %v2922 = vld [vmem:[%s437 + $0x1c0] sm:$0xff]
      %v2923 = vld [vmem:[%s437 + $0x1c8] sm:$0xff]
      %v2924 = vld [vmem:[%s437 + $0x1d0] sm:$0xff]
      %v2925 = vld [vmem:[%s437 + $0x1d8] sm:$0xff]
      %v2926 = vld [vmem:[%s437 + $0x1e0] sm:$0xff]
      %v2927 = vld [vmem:[%s437 + $0x1e8] sm:$0xff]
      %v2928 = vld [vmem:[%s437 + $0x1f0] sm:$0xf]
      %v2929 = vld [vmem:[%s437 + $0x1f4] sm:$0xff]
      %v2930 = vld [vmem:[%s437 + $0x1fc] sm:$0xff]
      %v2931 = vld [vmem:[%s437 + $0x204] sm:$0xff]
      %v2932 = vld [vmem:[%s437 + $0x20c] sm:$0xff]
      %v2933 = vld [vmem:[%s437 + $0x214] sm:$0xff]
      %v2934 = vld [vmem:[%s437 + $0x21c] sm:$0xff]
      %v2935 = vld [vmem:[%s437 + $0x224] sm:$0xff]
      %v2936 = vld [vmem:[%s437 + $0x22c] sm:$0xff]
      %v2937 = vld [vmem:[%s437 + $0x234] sm:$0xff]
      %v2938 = vld [vmem:[%s437 + $0x23c] sm:$0xff]
      %v2939 = vld [vmem:[%s437 + $0x244] sm:$0xff]
      %v2940 = vld [vmem:[%s437 + $0x24c] sm:$0xff]
      %v2941 = vld [vmem:[%s437 + $0x254] sm:$0xf]
      %v2942 = vld [vmem:[%s437 + $0x258] sm:$0xff]
      %v2943 = vld [vmem:[%s437 + $0x260] sm:$0xff]
      %v2944 = vld [vmem:[%s437 + $0x268] sm:$0xff]
      %v2945 = vld [vmem:[%s437 + $0x270] sm:$0xff]
      %v2946 = vld [vmem:[%s437 + $0x278] sm:$0xff]
      %v2947 = vld [vmem:[%s437 + $0x280] sm:$0xff]
      %v2948 = vld [vmem:[%s437 + $0x288] sm:$0xff]
      %v2949 = vld [vmem:[%s437 + $0x290] sm:$0xff]
      %v2950 = vld [vmem:[%s437 + $0x298] sm:$0xff]
      %v2951 = vld [vmem:[%s437 + $0x2a0] sm:$0xff]
      %v2952 = vld [vmem:[%s437 + $0x2a8] sm:$0xff]
      %v2953 = vld [vmem:[%s437 + $0x2b0] sm:$0xff]
      %v2954 = vld [vmem:[%s437 + $0x2b8] sm:$0xf]
      %v2955 = vld [vmem:[%s437 + $0x2bc] sm:$0xff]
      %v2956 = vld [vmem:[%s437 + $0x2c4] sm:$0xff]
      %v2957 = vld [vmem:[%s437 + $0x2cc] sm:$0xff]
      %v2958 = vld [vmem:[%s437 + $0x2d4] sm:$0xff]
      %v2959 = vld [vmem:[%s437 + $0x2dc] sm:$0xff]
      %v2960 = vld [vmem:[%s437 + $0x2e4] sm:$0xff]
      %v2961 = vld [vmem:[%s437 + $0x2ec] sm:$0xff]
      %v2962 = vld [vmem:[%s437 + $0x2f4] sm:$0xff]
      %v2963 = vld [vmem:[%s437 + $0x2fc] sm:$0xff]
      %v2964 = vld [vmem:[%s437 + $0x304] sm:$0xff]
      %v2965 = vld [vmem:[%s437 + $0x30c] sm:$0xff]
      %v2966 = vld [vmem:[%s437 + $0x314] sm:$0xff]
      %v2967 = vld [vmem:[%s437 + $0x31c] sm:$0xf]
      %v2968 = vunpack.c.l.bf16 %v2864
      %v2969 = vunpack.c.h.bf16 %v2864
      %v2970 = vunpack.c.l.bf16 %v2865
      %v2971 = vunpack.c.h.bf16 %v2865
      %v2972 = vunpack.c.l.bf16 %v2866
      %v2973 = vunpack.c.h.bf16 %v2866
      %v2974 = vunpack.c.l.bf16 %v2867
      %v2975 = vunpack.c.h.bf16 %v2867
      %v2976 = vunpack.c.l.bf16 %v2868
      %v2977 = vunpack.c.h.bf16 %v2868
      %v2978 = vunpack.c.l.bf16 %v2869
      %v2979 = vunpack.c.h.bf16 %v2869
      %v2980 = vunpack.c.l.bf16 %v2870
      %v2981 = vunpack.c.h.bf16 %v2870
      %v2982 = vunpack.c.l.bf16 %v2871
      %v2983 = vunpack.c.h.bf16 %v2871
      %v2984 = vunpack.c.l.bf16 %v2872
      %v2985 = vunpack.c.h.bf16 %v2872
      %v2986 = vunpack.c.l.bf16 %v2873
      %v2987 = vunpack.c.h.bf16 %v2873
      %v2988 = vunpack.c.l.bf16 %v2874
      %v2989 = vunpack.c.h.bf16 %v2874
      %v2990 = vunpack.c.l.bf16 %v2875
      %v2991 = vunpack.c.h.bf16 %v2875
      %v2992 = vunpack.c.l.bf16 %v2876
      %v2993 = vunpack.c.l.bf16 %v2877
      %v2994 = vunpack.c.h.bf16 %v2877
      %v2995 = vunpack.c.l.bf16 %v2878
      %v2996 = vunpack.c.h.bf16 %v2878
      %v2997 = vunpack.c.l.bf16 %v2879
      %v2998 = vunpack.c.h.bf16 %v2879
      %v2999 = vunpack.c.l.bf16 %v2880
      %v3000 = vunpack.c.h.bf16 %v2880
      %v3001 = vunpack.c.l.bf16 %v2881
      %v3002 = vunpack.c.h.bf16 %v2881
      %v3003 = vunpack.c.l.bf16 %v2882
      %v3004 = vunpack.c.h.bf16 %v2882
      %v3005 = vunpack.c.l.bf16 %v2883
      %v3006 = vunpack.c.h.bf16 %v2883
      %v3007 = vunpack.c.l.bf16 %v2884
      %v3008 = vunpack.c.h.bf16 %v2884
      %v3009 = vunpack.c.l.bf16 %v2885
      %v3010 = vunpack.c.h.bf16 %v2885
      %v3011 = vunpack.c.l.bf16 %v2886
      %v3012 = vunpack.c.h.bf16 %v2886
      %v3013 = vunpack.c.l.bf16 %v2887
      %v3014 = vunpack.c.h.bf16 %v2887
      %v3015 = vunpack.c.l.bf16 %v2888
      %v3016 = vunpack.c.h.bf16 %v2888
      %v3017 = vunpack.c.l.bf16 %v2889
      %v3018 = vunpack.c.l.bf16 %v2890
      %v3019 = vunpack.c.h.bf16 %v2890
      %v3020 = vunpack.c.l.bf16 %v2891
      %v3021 = vunpack.c.h.bf16 %v2891
      %v3022 = vunpack.c.l.bf16 %v2892
      %v3023 = vunpack.c.h.bf16 %v2892
      %v3024 = vunpack.c.l.bf16 %v2893
      %v3025 = vunpack.c.h.bf16 %v2893
      %v3026 = vunpack.c.l.bf16 %v2894
      %v3027 = vunpack.c.h.bf16 %v2894
      %v3028 = vunpack.c.l.bf16 %v2895
      %v3029 = vunpack.c.h.bf16 %v2895
      %v3030 = vunpack.c.l.bf16 %v2896
      %v3031 = vunpack.c.h.bf16 %v2896
      %v3032 = vunpack.c.l.bf16 %v2897
      %v3033 = vunpack.c.h.bf16 %v2897
      %v3034 = vunpack.c.l.bf16 %v2898
      %v3035 = vunpack.c.h.bf16 %v2898
      %v3036 = vunpack.c.l.bf16 %v2899
      %v3037 = vunpack.c.h.bf16 %v2899
      %v3038 = vunpack.c.l.bf16 %v2900
      %v3039 = vunpack.c.h.bf16 %v2900
      %v3040 = vunpack.c.l.bf16 %v2901
      %v3041 = vunpack.c.h.bf16 %v2901
      %v3042 = vunpack.c.l.bf16 %v2902
      %v3043 = vunpack.c.l.bf16 %v2903
      %v3044 = vunpack.c.h.bf16 %v2903
      %v3045 = vunpack.c.l.bf16 %v2904
      %v3046 = vunpack.c.h.bf16 %v2904
      %v3047 = vunpack.c.l.bf16 %v2905
      %v3048 = vunpack.c.h.bf16 %v2905
      %v3049 = vunpack.c.l.bf16 %v2906
      %v3050 = vunpack.c.h.bf16 %v2906
      %v3051 = vunpack.c.l.bf16 %v2907
      %v3052 = vunpack.c.h.bf16 %v2907
      %v3053 = vunpack.c.l.bf16 %v2908
      %v3054 = vunpack.c.h.bf16 %v2908
      %v3055 = vunpack.c.l.bf16 %v2909
      %v3056 = vunpack.c.h.bf16 %v2909
      %v3057 = vunpack.c.l.bf16 %v2910
      %v3058 = vunpack.c.h.bf16 %v2910
      %v3059 = vunpack.c.l.bf16 %v2911
      %v3060 = vunpack.c.h.bf16 %v2911
      %v3061 = vunpack.c.l.bf16 %v2912
      %v3062 = vunpack.c.h.bf16 %v2912
      %v3063 = vunpack.c.l.bf16 %v2913
      %v3064 = vunpack.c.h.bf16 %v2913
      %v3065 = vunpack.c.l.bf16 %v2914
      %v3066 = vunpack.c.h.bf16 %v2914
      %v3067 = vunpack.c.l.bf16 %v2915
      %v3068 = vunpack.c.l.bf16 %v2916
      %v3069 = vunpack.c.h.bf16 %v2916
      %v3070 = vunpack.c.l.bf16 %v2917
      %v3071 = vunpack.c.h.bf16 %v2917
      %v3072 = vunpack.c.l.bf16 %v2918
      %v3073 = vunpack.c.h.bf16 %v2918
      %v3074 = vunpack.c.l.bf16 %v2919
      %v3075 = vunpack.c.h.bf16 %v2919
      %v3076 = vunpack.c.l.bf16 %v2920
      %v3077 = vunpack.c.h.bf16 %v2920
      %v3078 = vunpack.c.l.bf16 %v2921
      %v3079 = vunpack.c.h.bf16 %v2921
      %v3080 = vunpack.c.l.bf16 %v2922
      %v3081 = vunpack.c.h.bf16 %v2922
      %v3082 = vunpack.c.l.bf16 %v2923
      %v3083 = vunpack.c.h.bf16 %v2923
      %v3084 = vunpack.c.l.bf16 %v2924
      %v3085 = vunpack.c.h.bf16 %v2924
      %v3086 = vunpack.c.l.bf16 %v2925
      %v3087 = vunpack.c.h.bf16 %v2925
      %v3088 = vunpack.c.l.bf16 %v2926
      %v3089 = vunpack.c.h.bf16 %v2926
      %v3090 = vunpack.c.l.bf16 %v2927
      %v3091 = vunpack.c.h.bf16 %v2927
      %v3092 = vunpack.c.l.bf16 %v2928
      %v3093 = vunpack.c.l.bf16 %v2929
      %v3094 = vunpack.c.h.bf16 %v2929
      %v3095 = vunpack.c.l.bf16 %v2930
      %v3096 = vunpack.c.h.bf16 %v2930
      %v3097 = vunpack.c.l.bf16 %v2931
      %v3098 = vunpack.c.h.bf16 %v2931
      %v3099 = vunpack.c.l.bf16 %v2932
      %v3100 = vunpack.c.h.bf16 %v2932
      %v3101 = vunpack.c.l.bf16 %v2933
      %v3102 = vunpack.c.h.bf16 %v2933
      %v3103 = vunpack.c.l.bf16 %v2934
      %v3104 = vunpack.c.h.bf16 %v2934
      %v3105 = vunpack.c.l.bf16 %v2935
      %v3106 = vunpack.c.h.bf16 %v2935
      %v3107 = vunpack.c.l.bf16 %v2936
      %v3108 = vunpack.c.h.bf16 %v2936
      %v3109 = vunpack.c.l.bf16 %v2937
      %v3110 = vunpack.c.h.bf16 %v2937
      %v3111 = vunpack.c.l.bf16 %v2938
      %v3112 = vunpack.c.h.bf16 %v2938
      %v3113 = vunpack.c.l.bf16 %v2939
      %v3114 = vunpack.c.h.bf16 %v2939
      %v3115 = vunpack.c.l.bf16 %v2940
      %v3116 = vunpack.c.h.bf16 %v2940
      %v3117 = vunpack.c.l.bf16 %v2941
      %v3118 = vunpack.c.l.bf16 %v2942
      %v3119 = vunpack.c.h.bf16 %v2942
      %v3120 = vunpack.c.l.bf16 %v2943
      %v3121 = vunpack.c.h.bf16 %v2943
      %v3122 = vunpack.c.l.bf16 %v2944
      %v3123 = vunpack.c.h.bf16 %v2944
      %v3124 = vunpack.c.l.bf16 %v2945
      %v3125 = vunpack.c.h.bf16 %v2945
      %v3126 = vunpack.c.l.bf16 %v2946
      %v3127 = vunpack.c.h.bf16 %v2946
      %v3128 = vunpack.c.l.bf16 %v2947
      %v3129 = vunpack.c.h.bf16 %v2947
      %v3130 = vunpack.c.l.bf16 %v2948
      %v3131 = vunpack.c.h.bf16 %v2948
      %v3132 = vunpack.c.l.bf16 %v2949
      %v3133 = vunpack.c.h.bf16 %v2949
      %v3134 = vunpack.c.l.bf16 %v2950
      %v3135 = vunpack.c.h.bf16 %v2950
      %v3136 = vunpack.c.l.bf16 %v2951
      %v3137 = vunpack.c.h.bf16 %v2951
      %v3138 = vunpack.c.l.bf16 %v2952
      %v3139 = vunpack.c.h.bf16 %v2952
      %v3140 = vunpack.c.l.bf16 %v2953
      %v3141 = vunpack.c.h.bf16 %v2953
      %v3142 = vunpack.c.l.bf16 %v2954
      %v3143 = vunpack.c.l.bf16 %v2955
      %v3144 = vunpack.c.h.bf16 %v2955
      %v3145 = vunpack.c.l.bf16 %v2956
      %v3146 = vunpack.c.h.bf16 %v2956
      %v3147 = vunpack.c.l.bf16 %v2957
      %v3148 = vunpack.c.h.bf16 %v2957
      %v3149 = vunpack.c.l.bf16 %v2958
      %v3150 = vunpack.c.h.bf16 %v2958
      %v3151 = vunpack.c.l.bf16 %v2959
      %v3152 = vunpack.c.h.bf16 %v2959
      %v3153 = vunpack.c.l.bf16 %v2960
      %v3154 = vunpack.c.h.bf16 %v2960
      %v3155 = vunpack.c.l.bf16 %v2961
      %v3156 = vunpack.c.h.bf16 %v2961
      %v3157 = vunpack.c.l.bf16 %v2962
      %v3158 = vunpack.c.h.bf16 %v2962
      %v3159 = vunpack.c.l.bf16 %v2963
      %v3160 = vunpack.c.h.bf16 %v2963
      %v3161 = vunpack.c.l.bf16 %v2964
      %v3162 = vunpack.c.h.bf16 %v2964
      %v3163 = vunpack.c.l.bf16 %v2965
      %v3164 = vunpack.c.h.bf16 %v2965
      %v3165 = vunpack.c.l.bf16 %v2966
      %v3166 = vunpack.c.h.bf16 %v2966
      %v3167 = vunpack.c.l.bf16 %v2967
      %v3168 = vmul.f32 %v2664, %v2968
      %v3169 = vmul.f32 %v2665, %v2969
      %v3170 = vmul.f32 %v2666, %v2970
      %v3171 = vmul.f32 %v2667, %v2971
      %v3172 = vmul.f32 %v2668, %v2972
      %v3173 = vmul.f32 %v2669, %v2973
      %v3174 = vmul.f32 %v2670, %v2974
      %v3175 = vmul.f32 %v2671, %v2975
      %v3176 = vmul.f32 %v2672, %v2976
      %v3177 = vmul.f32 %v2673, %v2977
      %v3178 = vmul.f32 %v2674, %v2978
      %v3179 = vmul.f32 %v2675, %v2979
      %v3180 = vmul.f32 %v2676, %v2980
      %v3181 = vmul.f32 %v2677, %v2981
      %v3182 = vmul.f32 %v2678, %v2982
      %v3183 = vmul.f32 %v2679, %v2983
      %v3184 = vmul.f32 %v2680, %v2984
      %v3185 = vmul.f32 %v2681, %v2985
      %v3186 = vmul.f32 %v2682, %v2986
      %v3187 = vmul.f32 %v2683, %v2987
      %v3188 = vmul.f32 %v2684, %v2988
      %v3189 = vmul.f32 %v2685, %v2989
      %v3190 = vmul.f32 %v2686, %v2990
      %v3191 = vmul.f32 %v2687, %v2991
      %v3192 = vmul.f32 %v2688, %v2992
      %v3193 = vmul.f32 %v2689, %v2993
      %v3194 = vmul.f32 %v2690, %v2994
      %v3195 = vmul.f32 %v2691, %v2995
      %v3196 = vmul.f32 %v2692, %v2996
      %v3197 = vmul.f32 %v2693, %v2997
      %v3198 = vmul.f32 %v2694, %v2998
      %v3199 = vmul.f32 %v2695, %v2999
      %v3200 = vmul.f32 %v2696, %v3000
      %v3201 = vmul.f32 %v2697, %v3001
      %v3202 = vmul.f32 %v2698, %v3002
      %v3203 = vmul.f32 %v2699, %v3003
      %v3204 = vmul.f32 %v2700, %v3004
      %v3205 = vmul.f32 %v2701, %v3005
      %v3206 = vmul.f32 %v2702, %v3006
      %v3207 = vmul.f32 %v2703, %v3007
      %v3208 = vmul.f32 %v2704, %v3008
      %v3209 = vmul.f32 %v2705, %v3009
      %v3210 = vmul.f32 %v2706, %v3010
      %v3211 = vmul.f32 %v2707, %v3011
      %v3212 = vmul.f32 %v2708, %v3012
      %v3213 = vmul.f32 %v2709, %v3013
      %v3214 = vmul.f32 %v2710, %v3014
      %v3215 = vmul.f32 %v2711, %v3015
      %v3216 = vmul.f32 %v2712, %v3016
      %v3217 = vmul.f32 %v2713, %v3017
      %v3218 = vmul.f32 %v2714, %v3018
      %v3219 = vmul.f32 %v2715, %v3019
      %v3220 = vmul.f32 %v2716, %v3020
      %v3221 = vmul.f32 %v2717, %v3021
      %v3222 = vmul.f32 %v2718, %v3022
      %v3223 = vmul.f32 %v2719, %v3023
      %v3224 = vmul.f32 %v2720, %v3024
      %v3225 = vmul.f32 %v2721, %v3025
      %v3226 = vmul.f32 %v2722, %v3026
      %v3227 = vmul.f32 %v2723, %v3027
      %v3228 = vmul.f32 %v2724, %v3028
      %v3229 = vmul.f32 %v2725, %v3029
      %v3230 = vmul.f32 %v2726, %v3030
      %v3231 = vmul.f32 %v2727, %v3031
      %v3232 = vmul.f32 %v2728, %v3032
      %v3233 = vmul.f32 %v2729, %v3033
      %v3234 = vmul.f32 %v2730, %v3034
      %v3235 = vmul.f32 %v2731, %v3035
      %v3236 = vmul.f32 %v2732, %v3036
      %v3237 = vmul.f32 %v2733, %v3037
      %v3238 = vmul.f32 %v2734, %v3038
      %v3239 = vmul.f32 %v2735, %v3039
      %v3240 = vmul.f32 %v2736, %v3040
      %v3241 = vmul.f32 %v2737, %v3041
      %v3242 = vmul.f32 %v2738, %v3042
      %v3243 = vmul.f32 %v2739, %v3043
      %v3244 = vmul.f32 %v2740, %v3044
      %v3245 = vmul.f32 %v2741, %v3045
      %v3246 = vmul.f32 %v2742, %v3046
      %v3247 = vmul.f32 %v2743, %v3047
      %v3248 = vmul.f32 %v2744, %v3048
      %v3249 = vmul.f32 %v2745, %v3049
      %v3250 = vmul.f32 %v2746, %v3050
      %v3251 = vmul.f32 %v2747, %v3051
      %v3252 = vmul.f32 %v2748, %v3052
      %v3253 = vmul.f32 %v2749, %v3053
      %v3254 = vmul.f32 %v2750, %v3054
      %v3255 = vmul.f32 %v2751, %v3055
      %v3256 = vmul.f32 %v2752, %v3056
      %v3257 = vmul.f32 %v2753, %v3057
      %v3258 = vmul.f32 %v2754, %v3058
      %v3259 = vmul.f32 %v2755, %v3059
      %v3260 = vmul.f32 %v2756, %v3060
      %v3261 = vmul.f32 %v2757, %v3061
      %v3262 = vmul.f32 %v2758, %v3062
      %v3263 = vmul.f32 %v2759, %v3063
      %v3264 = vmul.f32 %v2760, %v3064
      %v3265 = vmul.f32 %v2761, %v3065
      %v3266 = vmul.f32 %v2762, %v3066
      %v3267 = vmul.f32 %v2763, %v3067
      %v3268 = vmul.f32 %v2764, %v3068
      %v3269 = vmul.f32 %v2765, %v3069
      %v3270 = vmul.f32 %v2766, %v3070
      %v3271 = vmul.f32 %v2767, %v3071
      %v3272 = vmul.f32 %v2768, %v3072
      %v3273 = vmul.f32 %v2769, %v3073
      %v3274 = vmul.f32 %v2770, %v3074
      %v3275 = vmul.f32 %v2771, %v3075
      %v3276 = vmul.f32 %v2772, %v3076
      %v3277 = vmul.f32 %v2773, %v3077
      %v3278 = vmul.f32 %v2774, %v3078
      %v3279 = vmul.f32 %v2775, %v3079
      %v3280 = vmul.f32 %v2776, %v3080
      %v3281 = vmul.f32 %v2777, %v3081
      %v3282 = vmul.f32 %v2778, %v3082
      %v3283 = vmul.f32 %v2779, %v3083
      %v3284 = vmul.f32 %v2780, %v3084
      %v3285 = vmul.f32 %v2781, %v3085
      %v3286 = vmul.f32 %v2782, %v3086
      %v3287 = vmul.f32 %v2783, %v3087
      %v3288 = vmul.f32 %v2784, %v3088
      %v3289 = vmul.f32 %v2785, %v3089
      %v3290 = vmul.f32 %v2786, %v3090
      %v3291 = vmul.f32 %v2787, %v3091
      %v3292 = vmul.f32 %v2788, %v3092
      %v3293 = vmul.f32 %v2789, %v3093
      %v3294 = vmul.f32 %v2790, %v3094
      %v3295 = vmul.f32 %v2791, %v3095
      %v3296 = vmul.f32 %v2792, %v3096
      %v3297 = vmul.f32 %v2793, %v3097
      %v3298 = vmul.f32 %v2794, %v3098
      %v3299 = vmul.f32 %v2795, %v3099
      %v3300 = vmul.f32 %v2796, %v3100
      %v3301 = vmul.f32 %v2797, %v3101
      %v3302 = vmul.f32 %v2798, %v3102
      %v3303 = vmul.f32 %v2799, %v3103
      %v3304 = vmul.f32 %v2800, %v3104
      %v3305 = vmul.f32 %v2801, %v3105
      %v3306 = vmul.f32 %v2802, %v3106
      %v3307 = vmul.f32 %v2803, %v3107
      %v3308 = vmul.f32 %v2804, %v3108
      %v3309 = vmul.f32 %v2805, %v3109
      %v3310 = vmul.f32 %v2806, %v3110
      %v3311 = vmul.f32 %v2807, %v3111
      %v3312 = vmul.f32 %v2808, %v3112
      %v3313 = vmul.f32 %v2809, %v3113
      %v3314 = vmul.f32 %v2810, %v3114
      %v3315 = vmul.f32 %v2811, %v3115
      %v3316 = vmul.f32 %v2812, %v3116
      %v3317 = vmul.f32 %v2813, %v3117
      %v3318 = vmul.f32 %v2814, %v3118
      %v3319 = vmul.f32 %v2815, %v3119
      %v3320 = vmul.f32 %v2816, %v3120
      %v3321 = vmul.f32 %v2817, %v3121
      %v3322 = vmul.f32 %v2818, %v3122
      %v3323 = vmul.f32 %v2819, %v3123
      %v3324 = vmul.f32 %v2820, %v3124
      %v3325 = vmul.f32 %v2821, %v3125
      %v3326 = vmul.f32 %v2822, %v3126
      %v3327 = vmul.f32 %v2823, %v3127
      %v3328 = vmul.f32 %v2824, %v3128
      %v3329 = vmul.f32 %v2825, %v3129
      %v3330 = vmul.f32 %v2826, %v3130
      %v3331 = vmul.f32 %v2827, %v3131
      %v3332 = vmul.f32 %v2828, %v3132
      %v3333 = vmul.f32 %v2829, %v3133
      %v3334 = vmul.f32 %v2830, %v3134
      %v3335 = vmul.f32 %v2831, %v3135
      %v3336 = vmul.f32 %v2832, %v3136
      %v3337 = vmul.f32 %v2833, %v3137
      %v3338 = vmul.f32 %v2834, %v3138
      %v3339 = vmul.f32 %v2835, %v3139
      %v3340 = vmul.f32 %v2836, %v3140
      %v3341 = vmul.f32 %v2837, %v3141
      %v3342 = vmul.f32 %v2838, %v3142
      %v3343 = vmul.f32 %v2839, %v3143
      %v3344 = vmul.f32 %v2840, %v3144
      %v3345 = vmul.f32 %v2841, %v3145
      %v3346 = vmul.f32 %v2842, %v3146
      %v3347 = vmul.f32 %v2843, %v3147
      %v3348 = vmul.f32 %v2844, %v3148
      %v3349 = vmul.f32 %v2845, %v3149
      %v3350 = vmul.f32 %v2846, %v3150
      %v3351 = vmul.f32 %v2847, %v3151
      %v3352 = vmul.f32 %v2848, %v3152
      %v3353 = vmul.f32 %v2849, %v3153
      %v3354 = vmul.f32 %v2850, %v3154
      %v3355 = vmul.f32 %v2851, %v3155
      %v3356 = vmul.f32 %v2852, %v3156
      %v3357 = vmul.f32 %v2853, %v3157
      %v3358 = vmul.f32 %v2854, %v3158
      %v3359 = vmul.f32 %v2855, %v3159
      %v3360 = vmul.f32 %v2856, %v3160
      %v3361 = vmul.f32 %v2857, %v3161
      %v3362 = vmul.f32 %v2858, %v3162
      %v3363 = vmul.f32 %v2859, %v3163
      %v3364 = vmul.f32 %v2860, %v3164
      %v3365 = vmul.f32 %v2861, %v3165
      %v3366 = vmul.f32 %v2862, %v3166
      %v3367 = vmul.f32 %v2863, %v3167
      %v3368 = vadd.f32 %v2360, %v3168
      %v3369 = vadd.f32 %v2361, %v3169
      %v3370 = vadd.f32 %v2362, %v3170
      %v3371 = vadd.f32 %v2363, %v3171
      %v3372 = vadd.f32 %v2364, %v3172
      %v3373 = vadd.f32 %v2365, %v3173
      %v3374 = vadd.f32 %v2366, %v3174
      %v3375 = vadd.f32 %v2367, %v3175
      %v3376 = vadd.f32 %v2368, %v3176
      %v3377 = vadd.f32 %v2369, %v3177
      %v3378 = vadd.f32 %v2370, %v3178
      %v3379 = vadd.f32 %v2371, %v3179
      %v3380 = vadd.f32 %v2372, %v3180
      %v3381 = vadd.f32 %v2373, %v3181
      %v3382 = vadd.f32 %v2374, %v3182
      %v3383 = vadd.f32 %v2375, %v3183
      %v3384 = vadd.f32 %v2376, %v3184
      %v3385 = vadd.f32 %v2377, %v3185
      %v3386 = vadd.f32 %v2378, %v3186
      %v3387 = vadd.f32 %v2379, %v3187
      %v3388 = vadd.f32 %v2380, %v3188
      %v3389 = vadd.f32 %v2381, %v3189
      %v3390 = vadd.f32 %v2382, %v3190
      %v3391 = vadd.f32 %v2383, %v3191
      %v3392 = vadd.f32 %v2384, %v3192
      %v3393 = vadd.f32 %v2385, %v3193
      %v3394 = vadd.f32 %v2386, %v3194
      %v3395 = vadd.f32 %v2387, %v3195
      %v3396 = vadd.f32 %v2388, %v3196
      %v3397 = vadd.f32 %v2389, %v3197
      %v3398 = vadd.f32 %v2390, %v3198
      %v3399 = vadd.f32 %v2391, %v3199
      %v3400 = vadd.f32 %v2392, %v3200
      %v3401 = vadd.f32 %v2393, %v3201
      %v3402 = vadd.f32 %v2394, %v3202
      %v3403 = vadd.f32 %v2395, %v3203
      %v3404 = vadd.f32 %v2396, %v3204
      %v3405 = vadd.f32 %v2397, %v3205
      %v3406 = vadd.f32 %v2398, %v3206
      %v3407 = vadd.f32 %v2399, %v3207
      %v3408 = vadd.f32 %v2400, %v3208
      %v3409 = vadd.f32 %v2401, %v3209
      %v3410 = vadd.f32 %v2402, %v3210
      %v3411 = vadd.f32 %v2403, %v3211
      %v3412 = vadd.f32 %v2404, %v3212
      %v3413 = vadd.f32 %v2405, %v3213
      %v3414 = vadd.f32 %v2406, %v3214
      %v3415 = vadd.f32 %v2407, %v3215
      %v3416 = vadd.f32 %v2408, %v3216
      %v3417 = vadd.f32 %v2409, %v3217
      %v3418 = vadd.f32 %v2410, %v3218
      %v3419 = vadd.f32 %v2411, %v3219
      %v3420 = vadd.f32 %v2412, %v3220
      %v3421 = vadd.f32 %v2413, %v3221
      %v3422 = vadd.f32 %v2414, %v3222
      %v3423 = vadd.f32 %v2415, %v3223
      %v3424 = vadd.f32 %v2416, %v3224
      %v3425 = vadd.f32 %v2417, %v3225
      %v3426 = vadd.f32 %v2418, %v3226
      %v3427 = vadd.f32 %v2419, %v3227
      %v3428 = vadd.f32 %v2420, %v3228
      %v3429 = vadd.f32 %v2421, %v3229
      %v3430 = vadd.f32 %v2422, %v3230
      %v3431 = vadd.f32 %v2423, %v3231
      %v3432 = vadd.f32 %v2424, %v3232
      %v3433 = vadd.f32 %v2425, %v3233
      %v3434 = vadd.f32 %v2426, %v3234
      %v3435 = vadd.f32 %v2427, %v3235
      %v3436 = vadd.f32 %v2428, %v3236
      %v3437 = vadd.f32 %v2429, %v3237
      %v3438 = vadd.f32 %v2430, %v3238
      %v3439 = vadd.f32 %v2431, %v3239
      %v3440 = vadd.f32 %v2432, %v3240
      %v3441 = vadd.f32 %v2433, %v3241
      %v3442 = vadd.f32 %v2434, %v3242
      %v3443 = vadd.f32 %v2435, %v3243
      %v3444 = vadd.f32 %v2436, %v3244
      %v3445 = vadd.f32 %v2437, %v3245
      %v3446 = vadd.f32 %v2438, %v3246
      %v3447 = vadd.f32 %v2439, %v3247
      %v3448 = vadd.f32 %v2440, %v3248
      %v3449 = vadd.f32 %v2441, %v3249
      %v3450 = vadd.f32 %v2442, %v3250
      %v3451 = vadd.f32 %v2443, %v3251
      %v3452 = vadd.f32 %v2444, %v3252
      %v3453 = vadd.f32 %v2445, %v3253
      %v3454 = vadd.f32 %v2446, %v3254
      %v3455 = vadd.f32 %v2447, %v3255
      %v3456 = vadd.f32 %v2448, %v3256
      %v3457 = vadd.f32 %v2449, %v3257
      %v3458 = vadd.f32 %v2450, %v3258
      %v3459 = vadd.f32 %v2451, %v3259
      %v3460 = vadd.f32 %v2452, %v3260
      %v3461 = vadd.f32 %v2453, %v3261
      %v3462 = vadd.f32 %v2454, %v3262
      %v3463 = vadd.f32 %v2455, %v3263
      %v3464 = vadd.f32 %v2456, %v3264
      %v3465 = vadd.f32 %v2457, %v3265
      %v3466 = vadd.f32 %v2458, %v3266
      %v3467 = vadd.f32 %v2459, %v3267
      %v3468 = vadd.f32 %v2460, %v3268
      %v3469 = vadd.f32 %v2461, %v3269
      %v3470 = vadd.f32 %v2462, %v3270
      %v3471 = vadd.f32 %v2463, %v3271
      %v3472 = vadd.f32 %v2464, %v3272
      %v3473 = vadd.f32 %v2465, %v3273
      %v3474 = vadd.f32 %v2466, %v3274
      %v3475 = vadd.f32 %v2467, %v3275
      %v3476 = vadd.f32 %v2468, %v3276
      %v3477 = vadd.f32 %v2469, %v3277
      %v3478 = vadd.f32 %v2470, %v3278
      %v3479 = vadd.f32 %v2471, %v3279
      %v3480 = vadd.f32 %v2472, %v3280
      %v3481 = vadd.f32 %v2473, %v3281
      %v3482 = vadd.f32 %v2474, %v3282
      %v3483 = vadd.f32 %v2475, %v3283
      %v3484 = vadd.f32 %v2476, %v3284
      %v3485 = vadd.f32 %v2477, %v3285
      %v3486 = vadd.f32 %v2478, %v3286
      %v3487 = vadd.f32 %v2479, %v3287
      %v3488 = vadd.f32 %v2480, %v3288
      %v3489 = vadd.f32 %v2481, %v3289
      %v3490 = vadd.f32 %v2482, %v3290
      %v3491 = vadd.f32 %v2483, %v3291
      %v3492 = vadd.f32 %v2484, %v3292
      %v3493 = vadd.f32 %v2485, %v3293
      %v3494 = vadd.f32 %v2486, %v3294
      %v3495 = vadd.f32 %v2487, %v3295
      %v3496 = vadd.f32 %v2488, %v3296
      %v3497 = vadd.f32 %v2489, %v3297
      %v3498 = vadd.f32 %v2490, %v3298
      %v3499 = vadd.f32 %v2491, %v3299
      %v3500 = vadd.f32 %v2492, %v3300
      %v3501 = vadd.f32 %v2493, %v3301
      %v3502 = vadd.f32 %v2494, %v3302
      %v3503 = vadd.f32 %v2495, %v3303
      %v3504 = vadd.f32 %v2496, %v3304
      %v3505 = vadd.f32 %v2497, %v3305
      %v3506 = vadd.f32 %v2498, %v3306
      %v3507 = vadd.f32 %v2499, %v3307
      %v3508 = vadd.f32 %v2500, %v3308
      %v3509 = vadd.f32 %v2501, %v3309
      %v3510 = vadd.f32 %v2502, %v3310
      %v3511 = vadd.f32 %v2503, %v3311
      %v3512 = vadd.f32 %v2504, %v3312
      %v3513 = vadd.f32 %v2505, %v3313
      %v3514 = vadd.f32 %v2506, %v3314
      %v3515 = vadd.f32 %v2507, %v3315
      %v3516 = vadd.f32 %v2508, %v3316
      %v3517 = vadd.f32 %v2509, %v3317
      %v3518 = vadd.f32 %v2510, %v3318
      %v3519 = vadd.f32 %v2511, %v3319
      %v3520 = vadd.f32 %v2512, %v3320
      %v3521 = vadd.f32 %v2513, %v3321
      %v3522 = vadd.f32 %v2514, %v3322
      %v3523 = vadd.f32 %v2515, %v3323
      %v3524 = vadd.f32 %v2516, %v3324
      %v3525 = vadd.f32 %v2517, %v3325
      %v3526 = vadd.f32 %v2518, %v3326
      %v3527 = vadd.f32 %v2519, %v3327
      %v3528 = vadd.f32 %v2520, %v3328
      %v3529 = vadd.f32 %v2521, %v3329
      %v3530 = vadd.f32 %v2522, %v3330
      %v3531 = vadd.f32 %v2523, %v3331
      %v3532 = vadd.f32 %v2524, %v3332
      %v3533 = vadd.f32 %v2525, %v3333
      %v3534 = vadd.f32 %v2526, %v3334
      %v3535 = vadd.f32 %v2527, %v3335
      %v3536 = vadd.f32 %v2528, %v3336
      %v3537 = vadd.f32 %v2529, %v3337
      %v3538 = vadd.f32 %v2530, %v3338
      %v3539 = vadd.f32 %v2531, %v3339
      %v3540 = vadd.f32 %v2532, %v3340
      %v3541 = vadd.f32 %v2533, %v3341
      %v3542 = vadd.f32 %v2534, %v3342
      %v3543 = vadd.f32 %v2535, %v3343
      %v3544 = vadd.f32 %v2536, %v3344
      %v3545 = vadd.f32 %v2537, %v3345
      %v3546 = vadd.f32 %v2538, %v3346
      %v3547 = vadd.f32 %v2539, %v3347
      %v3548 = vadd.f32 %v2540, %v3348
      %v3549 = vadd.f32 %v2541, %v3349
      %v3550 = vadd.f32 %v2542, %v3350
      %v3551 = vadd.f32 %v2543, %v3351
      %v3552 = vadd.f32 %v2544, %v3352
      %v3553 = vadd.f32 %v2545, %v3353
      %v3554 = vadd.f32 %v2546, %v3354
      %v3555 = vadd.f32 %v2547, %v3355
      %v3556 = vadd.f32 %v2548, %v3356
      %v3557 = vadd.f32 %v2549, %v3357
      %v3558 = vadd.f32 %v2550, %v3358
      %v3559 = vadd.f32 %v2551, %v3359
      %v3560 = vadd.f32 %v2552, %v3360
      %v3561 = vadd.f32 %v2553, %v3361
      %v3562 = vadd.f32 %v2554, %v3362
      %v3563 = vadd.f32 %v2555, %v3363
      %v3564 = vadd.f32 %v2556, %v3364
      %v3565 = vadd.f32 %v2557, %v3365
      %v3566 = vadd.f32 %v2558, %v3366
      %v3567 = vadd.f32 %v2559, %v3367
      %v3568 = vpack.c.bf16 %v3393, %v3368
      %v3569 = vpack.c.bf16 %v3394, %v3369
      %v3570 = vpack.c.bf16 %v3395, %v3370
      %v3571 = vpack.c.bf16 %v3396, %v3371
      %v3572 = vpack.c.bf16 %v3397, %v3372
      %v3573 = vpack.c.bf16 %v3398, %v3373
      %v3574 = vpack.c.bf16 %v3399, %v3374
      %v3575 = vpack.c.bf16 %v3400, %v3375
      %v3576 = vpack.c.bf16 %v3401, %v3376
      %v3577 = vpack.c.bf16 %v3402, %v3377
      %v3578 = vpack.c.bf16 %v3403, %v3378
      %v3579 = vpack.c.bf16 %v3404, %v3379
      %v3580 = vpack.c.bf16 %v3405, %v3380
      %v3581 = vpack.c.bf16 %v3406, %v3381
      %v3582 = vpack.c.bf16 %v3407, %v3382
      %v3583 = vpack.c.bf16 %v3408, %v3383
      %v3584 = vpack.c.bf16 %v3409, %v3384
      %v3585 = vpack.c.bf16 %v3410, %v3385
      %v3586 = vpack.c.bf16 %v3411, %v3386
      %v3587 = vpack.c.bf16 %v3412, %v3387
      %v3588 = vpack.c.bf16 %v3413, %v3388
      %v3589 = vpack.c.bf16 %v3414, %v3389
      %v3590 = vpack.c.bf16 %v3415, %v3390
      %v3591 = vpack.c.bf16 %v3416, %v3391
      %v3592 = vpack.c.bf16 %v3417, %v3392
      %v3593 = vpack.c.bf16 %v3443, %v3418
      %v3594 = vpack.c.bf16 %v3444, %v3419
      %v3595 = vpack.c.bf16 %v3445, %v3420
      %v3596 = vpack.c.bf16 %v3446, %v3421
      %v3597 = vpack.c.bf16 %v3447, %v3422
      %v3598 = vpack.c.bf16 %v3448, %v3423
      %v3599 = vpack.c.bf16 %v3449, %v3424
      %v3600 = vpack.c.bf16 %v3450, %v3425
      %v3601 = vpack.c.bf16 %v3451, %v3426
      %v3602 = vpack.c.bf16 %v3452, %v3427
      %v3603 = vpack.c.bf16 %v3453, %v3428
      %v3604 = vpack.c.bf16 %v3454, %v3429
      %v3605 = vpack.c.bf16 %v3455, %v3430
      %v3606 = vpack.c.bf16 %v3456, %v3431
      %v3607 = vpack.c.bf16 %v3457, %v3432
      %v3608 = vpack.c.bf16 %v3458, %v3433
      %v3609 = vpack.c.bf16 %v3459, %v3434
      %v3610 = vpack.c.bf16 %v3460, %v3435
      %v3611 = vpack.c.bf16 %v3461, %v3436
      %v3612 = vpack.c.bf16 %v3462, %v3437
      %v3613 = vpack.c.bf16 %v3463, %v3438
      %v3614 = vpack.c.bf16 %v3464, %v3439
      %v3615 = vpack.c.bf16 %v3465, %v3440
      %v3616 = vpack.c.bf16 %v3466, %v3441
      %v3617 = vpack.c.bf16 %v3467, %v3442
      %v3618 = vpack.c.bf16 %v3493, %v3468
      %v3619 = vpack.c.bf16 %v3494, %v3469
      %v3620 = vpack.c.bf16 %v3495, %v3470
      %v3621 = vpack.c.bf16 %v3496, %v3471
      %v3622 = vpack.c.bf16 %v3497, %v3472
      %v3623 = vpack.c.bf16 %v3498, %v3473
      %v3624 = vpack.c.bf16 %v3499, %v3474
      %v3625 = vpack.c.bf16 %v3500, %v3475
      %v3626 = vpack.c.bf16 %v3501, %v3476
      %v3627 = vpack.c.bf16 %v3502, %v3477
      %v3628 = vpack.c.bf16 %v3503, %v3478
      %v3629 = vpack.c.bf16 %v3504, %v3479
      %v3630 = vpack.c.bf16 %v3505, %v3480
      %v3631 = vpack.c.bf16 %v3506, %v3481
      %v3632 = vpack.c.bf16 %v3507, %v3482
      %v3633 = vpack.c.bf16 %v3508, %v3483
      %v3634 = vpack.c.bf16 %v3509, %v3484
      %v3635 = vpack.c.bf16 %v3510, %v3485
      %v3636 = vpack.c.bf16 %v3511, %v3486
      %v3637 = vpack.c.bf16 %v3512, %v3487
      %v3638 = vpack.c.bf16 %v3513, %v3488
      %v3639 = vpack.c.bf16 %v3514, %v3489
      %v3640 = vpack.c.bf16 %v3515, %v3490
      %v3641 = vpack.c.bf16 %v3516, %v3491
      %v3642 = vpack.c.bf16 %v3517, %v3492
      %v3643 = vpack.c.bf16 %v3543, %v3518
      %v3644 = vpack.c.bf16 %v3544, %v3519
      %v3645 = vpack.c.bf16 %v3545, %v3520
      %v3646 = vpack.c.bf16 %v3546, %v3521
      %v3647 = vpack.c.bf16 %v3547, %v3522
      %v3648 = vpack.c.bf16 %v3548, %v3523
      %v3649 = vpack.c.bf16 %v3549, %v3524
      %v3650 = vpack.c.bf16 %v3550, %v3525
      %v3651 = vpack.c.bf16 %v3551, %v3526
      %v3652 = vpack.c.bf16 %v3552, %v3527
      %v3653 = vpack.c.bf16 %v3553, %v3528
      %v3654 = vpack.c.bf16 %v3554, %v3529
      %v3655 = vpack.c.bf16 %v3555, %v3530
      %v3656 = vpack.c.bf16 %v3556, %v3531
      %v3657 = vpack.c.bf16 %v3557, %v3532
      %v3658 = vpack.c.bf16 %v3558, %v3533
      %v3659 = vpack.c.bf16 %v3559, %v3534
      %v3660 = vpack.c.bf16 %v3560, %v3535
      %v3661 = vpack.c.bf16 %v3561, %v3536
      %v3662 = vpack.c.bf16 %v3562, %v3537
      %v3663 = vpack.c.bf16 %v3563, %v3538
      %v3664 = vpack.c.bf16 %v3564, %v3539
      %v3665 = vpack.c.bf16 %v3565, %v3540
      %v3666 = vpack.c.bf16 %v3566, %v3541
      %v3667 = vpack.c.bf16 %v3567, %v3542
      %v4060 = vunpack.c.l.b16 %v452
      %v4061 = vunpack.c.l.b16 %v453
      %v4062 = vunpack.c.l.b16 %v454
      %v4063 = vunpack.c.l.b16 %v455
      %v4064 = vunpack.c.l.b16 %v456
      %v4065 = vunpack.c.l.b16 %v457
      %v4066 = vunpack.c.l.b16 %v458
      %v4067 = vunpack.c.l.b16 %v459
      %v4068 = vunpack.c.l.b16 %v460
      %v4069 = vunpack.c.l.b16 %v461
      %v4070 = vunpack.c.l.b16 %v462
      %v4071 = vunpack.c.l.b16 %v463
      %v4072 = vunpack.c.l.b16 %v464
      %v4073 = vunpack.c.l.b16 %v465
      %v4074 = vunpack.c.l.b16 %v466
      %v4075 = vunpack.c.l.b16 %v467
      %v4076 = vunpack.c.l.b16 %v468
      %v4077 = vunpack.c.l.b16 %v469
      %v4078 = vunpack.c.l.b16 %v470
      %v4079 = vunpack.c.l.b16 %v471
      %v4080 = vunpack.c.l.b16 %v472
      %v4081 = vunpack.c.l.b16 %v473
      %v4082 = vunpack.c.l.b16 %v474
      %v4083 = vunpack.c.l.b16 %v475
      %v4084 = vunpack.c.l.b16 %v476
      %v4085 = vunpack.c.l.b16 %v477
      %v4086 = vunpack.c.l.b16 %v478
      %v4087 = vunpack.c.l.b16 %v479
      %v4088 = vunpack.c.l.b16 %v480
      %v4089 = vunpack.c.l.b16 %v481
      %v4090 = vunpack.c.l.b16 %v482
      %v4091 = vunpack.c.l.b16 %v483
      %v4092 = vunpack.c.l.b16 %v484
      %v4093 = vunpack.c.l.b16 %v485
      %v4094 = vunpack.c.l.b16 %v486
      %v4095 = vunpack.c.l.b16 %v487
      %v4096 = vunpack.c.l.b16 %v488
      %v4097 = vunpack.c.l.b16 %v489
      %v4098 = vunpack.c.l.b16 %v490
      %v4099 = vunpack.c.l.b16 %v491
      %v4100 = vunpack.c.l.b16 %v492
      %v4101 = vunpack.c.l.b16 %v493
      %v4102 = vunpack.c.l.b16 %v494
      %v4103 = vunpack.c.l.b16 %v495
      %v4104 = vunpack.c.l.b16 %v496
      %v4105 = vunpack.c.l.b16 %v497
      %v4106 = vunpack.c.l.b16 %v498
      %v4107 = vunpack.c.l.b16 %v499
      %v4108 = vunpack.c.l.b16 %v500
      %v4109 = vunpack.c.l.b16 %v501
      %v4110 = vunpack.c.l.b16 %v502
      %v4111 = vunpack.c.l.b16 %v503
      %v4112 = vunpack.c.l.b16 %v504
      %v4113 = vunpack.c.l.b16 %v505
      %v4114 = vunpack.c.l.b16 %v506
      %v4115 = vunpack.c.l.b16 %v507
      %v4116 = vunpack.c.l.b16 %v508
      %v4117 = vunpack.c.l.b16 %v509
      %v4118 = vunpack.c.l.b16 %v510
      %v4119 = vunpack.c.l.b16 %v511
      %v4120 = vunpack.c.l.b16 %v512
      %v4121 = vunpack.c.l.b16 %v513
      %v4122 = vunpack.c.l.b16 %v514
      %v4123 = vunpack.c.l.b16 %v515
      %v4124 = vunpack.c.l.b16 %v516
      %v4125 = vunpack.c.l.b16 %v517
      %v4126 = vunpack.c.l.b16 %v518
      %v4127 = vunpack.c.l.b16 %v519
      %v4128 = vunpack.c.l.b16 %v520
      %v4129 = vunpack.c.l.b16 %v521
      %v4130 = vunpack.c.l.b16 %v522
      %v4131 = vunpack.c.l.b16 %v523
      %v4132 = vunpack.c.l.b16 %v524
      %v4133 = vunpack.c.l.b16 %v525
      %v4134 = vunpack.c.l.b16 %v526
      %v4135 = vunpack.c.l.b16 %v527
      %v4136 = vunpack.c.l.b16 %v528
      %v4137 = vunpack.c.l.b16 %v529
      %v4138 = vunpack.c.l.b16 %v530
      %v4139 = vunpack.c.l.b16 %v531
      %v4140 = vunpack.c.l.b16 %v532
      %v4141 = vunpack.c.l.b16 %v533
      %v4142 = vunpack.c.l.b16 %v534
      %v4143 = vunpack.c.l.b16 %v535
      %v4144 = vunpack.c.l.b16 %v536
      %v4145 = vunpack.c.l.b16 %v537
      %v4146 = vunpack.c.l.b16 %v538
      %v4147 = vunpack.c.l.b16 %v539
      %v4148 = vunpack.c.l.b16 %v540
      %v4149 = vunpack.c.l.b16 %v541
      %v4150 = vunpack.c.l.b16 %v542
      %v4151 = vunpack.c.l.b16 %v543
      %v4152 = vunpack.c.l.b16 %v544
      %v4153 = vunpack.c.l.b16 %v545
      %v4154 = vunpack.c.l.b16 %v546
      %v4155 = vunpack.c.l.b16 %v547
      %v4156 = vunpack.c.l.b16 %v548
      %v4157 = vunpack.c.l.b16 %v549
      %v4158 = vunpack.c.l.b16 %v550
      %v4159 = vunpack.c.l.b16 %v551
      %v4160 = vunpack.c.l.b16 %v552
      %v4161 = vunpack.c.l.b16 %v553
      %v4162 = vunpack.c.l.b16 %v554
      %v4163 = vunpack.c.l.b16 %v555
      %v4164 = vunpack.c.l.b16 %v556
      %v4165 = vunpack.c.l.b16 %v557
      %v4166 = vunpack.c.l.b16 %v558
      %v4167 = vunpack.c.l.b16 %v559
      %v4168 = vunpack.c.l.b16 %v560
      %v4169 = vunpack.c.l.b16 %v561
      %v4170 = vunpack.c.l.b16 %v562
      %v4171 = vunpack.c.l.b16 %v563
      %v4172 = vunpack.c.l.b16 %v564
      %v4173 = vunpack.c.l.b16 %v565
      %v4174 = vunpack.c.l.b16 %v566
      %v4175 = vunpack.c.l.b16 %v567
      %v4176 = vunpack.c.l.b16 %v568
      %v4177 = vunpack.c.l.b16 %v569
      %v4178 = vunpack.c.l.b16 %v570
      %v4179 = vunpack.c.l.b16 %v571
      %v4180 = vunpack.c.l.b16 %v572
      %v4181 = vunpack.c.l.b16 %v573
      %v4182 = vunpack.c.l.b16 %v574
      %v4183 = vunpack.c.l.b16 %v575
      %v4184 = vunpack.c.l.b16 %v576
      %v4185 = vunpack.c.l.b16 %v577
      %v4186 = vunpack.c.l.b16 %v578
      %v4187 = vunpack.c.l.b16 %v579
      %v4188 = vunpack.c.l.b16 %v580
      %v4189 = vunpack.c.l.b16 %v581
      %v4190 = vunpack.c.l.b16 %v582
      %v4191 = vunpack.c.l.b16 %v583
      %v4192 = vunpack.c.l.b16 %v584
      %v4193 = vunpack.c.l.b16 %v585
      %v4194 = vunpack.c.l.b16 %v586
      %v4195 = vunpack.c.l.b16 %v587
      %v4196 = vunpack.c.l.b16 %v588
      %v4197 = vunpack.c.l.b16 %v589
      %v4198 = vunpack.c.l.b16 %v590
      %v4199 = vunpack.c.l.b16 %v591
      %v4200 = vunpack.c.l.b16 %v592
      %v4201 = vunpack.c.l.b16 %v593
      %v4202 = vunpack.c.l.b16 %v594
      %v4203 = vunpack.c.l.b16 %v595
      %v4204 = vunpack.c.l.b16 %v596
      %v4205 = vunpack.c.l.b16 %v597
      %v4206 = vunpack.c.l.b16 %v598
      %v4207 = vunpack.c.l.b16 %v599
      %v4208 = vunpack.c.l.b16 %v600
      %v4209 = vunpack.c.l.b16 %v601
      %v4210 = vunpack.c.l.b16 %v602
      %v4211 = vunpack.c.l.b16 %v603
      %v4212 = vunpack.c.l.b16 %v604
      %v4213 = vunpack.c.l.b16 %v605
      %v4214 = vunpack.c.l.b16 %v606
      %v4215 = vunpack.c.l.b16 %v607
      %v4216 = vunpack.c.l.b16 %v608
      %v4217 = vunpack.c.l.b16 %v609
      %v4218 = vunpack.c.l.b16 %v610
      %v4219 = vunpack.c.l.b16 %v611
      %v4220 = vunpack.c.l.b16 %v612
      %v4221 = vunpack.c.l.b16 %v613
      %v4222 = vunpack.c.l.b16 %v614
      %v4223 = vunpack.c.l.b16 %v615
      %v4224 = vunpack.c.l.b16 %v616
      %v4225 = vunpack.c.l.b16 %v617
      %v4226 = vunpack.c.l.b16 %v618
      %v4227 = vunpack.c.l.b16 %v619
      %v4228 = vunpack.c.l.b16 %v620
      %v4229 = vunpack.c.l.b16 %v621
      %v4230 = vunpack.c.l.b16 %v622
      %v4231 = vunpack.c.l.b16 %v623
      %v4232 = vunpack.c.l.b16 %v624
      %v4233 = vunpack.c.l.b16 %v625
      %v4234 = vunpack.c.l.b16 %v626
      %v4235 = vunpack.c.l.b16 %v627
      %v4236 = vunpack.c.l.b16 %v628
      %v4237 = vunpack.c.l.b16 %v629
      %v4238 = vunpack.c.l.b16 %v630
      %v4239 = vunpack.c.l.b16 %v631
      %v4240 = vunpack.c.l.b16 %v632
      %v4241 = vunpack.c.l.b16 %v633
      %v4242 = vunpack.c.l.b16 %v634
      %v4243 = vunpack.c.l.b16 %v635
      %v4244 = vunpack.c.l.b16 %v636
      %v4245 = vunpack.c.l.b16 %v637
      %v4246 = vunpack.c.l.b16 %v638
      %v4247 = vunpack.c.l.b16 %v639
      %v4248 = vunpack.c.l.b16 %v640
      %v4249 = vunpack.c.l.b16 %v641
      %v4250 = vunpack.c.l.b16 %v642
      %v4251 = vunpack.c.l.b16 %v643
      %v4252 = vunpack.c.l.b16 %v644
      %v4253 = vunpack.c.l.b16 %v645
      %v4254 = vunpack.c.l.b16 %v646
      %v4255 = vunpack.c.l.b16 %v647
      %v4256 = vunpack.c.l.b16 %v648
      %v4257 = vunpack.c.l.b16 %v649
      %v4258 = vunpack.c.l.b16 %v650
      %v4259 = vunpack.c.l.b16 %v651
      %v4260 = vunpack.c.l.b16 %v652
      %v4261 = vunpack.c.l.b16 %v653
      %v4262 = vunpack.c.l.b16 %v654
      %v4263 = vunpack.c.l.b16 %v655
      %v4264 = vunpack.c.l.b16 %v656
      %v4265 = vunpack.c.l.b16 %v657
      %v4266 = vunpack.c.l.b16 %v658
      %v4267 = vunpack.c.l.b16 %v659
      %v4268 = vunpack.c.l.b16 %v660
      %v4269 = vunpack.c.l.b16 %v661
      %v4270 = vunpack.c.l.b16 %v662
      %v4271 = vunpack.c.l.b16 %v663
      %v4272 = vunpack.c.l.b16 %v664
      %v4273 = vunpack.c.l.b16 %v665
      %v4274 = vunpack.c.l.b16 %v666
      %v4275 = vunpack.c.l.b16 %v667
      %v4276 = vunpack.c.l.b16 %v668
      %v4277 = vunpack.c.l.b16 %v669
      %v4278 = vunpack.c.l.b16 %v670
      %v4279 = vunpack.c.l.b16 %v671
      %v4280 = vunpack.c.l.b16 %v672
      %v4281 = vunpack.c.l.b16 %v673
      %v4282 = vunpack.c.l.b16 %v674
      %v4283 = vunpack.c.l.b16 %v675
      %v4284 = vunpack.c.l.b16 %v676
      %v4285 = vunpack.c.l.b16 %v677
      %v4286 = vunpack.c.l.b16 %v678
      %v4287 = vunpack.c.l.b16 %v679
      %v4288 = vunpack.c.l.b16 %v680
      %v4289 = vunpack.c.l.b16 %v681
      %v4290 = vunpack.c.l.b16 %v682
      %v4291 = vunpack.c.l.b16 %v683
      %v4292 = vunpack.c.l.b16 %v684
      %v4293 = vunpack.c.l.b16 %v685
      %v4294 = vunpack.c.l.b16 %v686
      %v4295 = vunpack.c.l.b16 %v687
      %v4296 = vunpack.c.l.b16 %v688
      %v4297 = vunpack.c.l.b16 %v689
      %v4298 = vunpack.c.l.b16 %v690
      %v4299 = vunpack.c.l.b16 %v691
      %v4300 = vunpack.c.l.b16 %v692
      %v4301 = vunpack.c.l.b16 %v693
      %v4302 = vunpack.c.l.b16 %v694
      %v4303 = vunpack.c.l.b16 %v695
      %v4304 = vunpack.c.l.b16 %v696
      %v4305 = vunpack.c.l.b16 %v697
      %v4306 = vunpack.c.l.b16 %v698
      %v4307 = vunpack.c.l.b16 %v699
      %v4308 = vunpack.c.l.b16 %v700
      %v4309 = vunpack.c.l.b16 %v701
      %v4310 = vunpack.c.l.b16 %v702
      %v4311 = vunpack.c.l.b16 %v703
      %v4312 = vunpack.c.l.b16 %v704
      %v4313 = vunpack.c.l.b16 %v705
      %v4314 = vunpack.c.l.b16 %v706
      %v4315 = vunpack.c.l.b16 %v707
      %v4316 = vunpack.c.l.b16 %v708
      %v4317 = vunpack.c.l.b16 %v709
      %v4318 = vunpack.c.l.b16 %v710
      %v4319 = vunpack.c.l.b16 %v711
      %v4320 = vunpack.c.l.b16 %v712
      %v4321 = vunpack.c.l.b16 %v713
      %v4322 = vunpack.c.l.b16 %v714
      %v4323 = vunpack.c.l.b16 %v715
      %v4324 = vunpack.c.l.b16 %v716
      %v4325 = vunpack.c.l.b16 %v717
      %v4326 = vunpack.c.l.b16 %v718
      %v4327 = vunpack.c.l.b16 %v719
      %v4328 = vunpack.c.l.b16 %v720
      %v4329 = vunpack.c.l.b16 %v721
      %v4330 = vunpack.c.l.b16 %v722
      %v4331 = vunpack.c.l.b16 %v723
      %v4332 = vunpack.c.l.b16 %v724
      %v4333 = vunpack.c.l.b16 %v725
      %v4334 = vunpack.c.l.b16 %v726
      %v4335 = vunpack.c.l.b16 %v727
      %v4336 = vunpack.c.l.b16 %v728
      %v4337 = vunpack.c.l.b16 %v729
      %v4338 = vunpack.c.l.b16 %v730
      %v4339 = vunpack.c.l.b16 %v731
      %v4340 = vunpack.c.l.b16 %v732
      %v4341 = vunpack.c.l.b16 %v733
      %v4342 = vunpack.c.l.b16 %v734
      %v4343 = vunpack.c.l.b16 %v735
      %v4344 = vunpack.c.l.b16 %v736
      %v4345 = vunpack.c.l.b16 %v737
      %v4346 = vunpack.c.l.b16 %v738
      %v4347 = vunpack.c.l.b16 %v739
      %v4348 = vunpack.c.l.b16 %v740
      %v4349 = vunpack.c.l.b16 %v741
      %v4350 = vunpack.c.l.b16 %v742
      %v4351 = vunpack.c.l.b16 %v743
      %v4352 = vunpack.c.l.b16 %v744
      %v4353 = vunpack.c.l.b16 %v745
      %v4354 = vunpack.c.l.b16 %v746
      %v4355 = vunpack.c.l.b16 %v747
      %v4356 = vunpack.c.l.b16 %v748
      %v4357 = vunpack.c.l.b16 %v749
      %v4358 = vunpack.c.l.b16 %v750
      %v4359 = vunpack.c.l.b16 %v751
      %v4360 = vunpack.c.l.b16 %v752
      %v4361 = vunpack.c.l.b16 %v753
      %v4362 = vunpack.c.l.b16 %v754
      %v4363 = vunpack.c.l.b16 %v755
      %v4364 = vunpack.c.l.b16 %v756
      %v4365 = vunpack.c.l.b16 %v757
      %v4366 = vunpack.c.l.b16 %v758
      %v4367 = vunpack.c.l.b16 %v759
      %v4368 = vunpack.c.l.b16 %v760
      %v4369 = vunpack.c.l.b16 %v761
      %v4370 = vunpack.c.l.b16 %v762
      %v4371 = vunpack.c.l.b16 %v763
      %v4372 = vunpack.c.l.b16 %v764
      %v4373 = vunpack.c.l.b16 %v765
      %v4374 = vunpack.c.l.b16 %v766
      %v4375 = vunpack.c.l.b16 %v767
      %v4376 = vunpack.c.l.b16 %v768
      %v4377 = vunpack.c.l.b16 %v769
      %v4378 = vunpack.c.l.b16 %v770
      %v4379 = vunpack.c.l.b16 %v771
      %v4380 = vunpack.c.l.b16 %v772
      %v4381 = vunpack.c.l.b16 %v773
      %v4382 = vunpack.c.l.b16 %v774
      %v4383 = vunpack.c.l.b16 %v775
      %v4384 = vunpack.c.l.b16 %v776
      %v4385 = vunpack.c.l.b16 %v777
      %v4386 = vunpack.c.l.b16 %v778
      %v4387 = vunpack.c.l.b16 %v779
      %v4388 = vunpack.c.l.b16 %v780
      %v4389 = vunpack.c.l.b16 %v781
      %v4390 = vunpack.c.l.b16 %v782
      %v4391 = vunpack.c.l.b16 %v783
      %v4392 = vunpack.c.l.b16 %v784
      %v4393 = vunpack.c.l.b16 %v785
      %v4394 = vunpack.c.l.b16 %v786
      %v4395 = vunpack.c.l.b16 %v787
      %v4396 = vunpack.c.l.b16 %v788
      %v4397 = vunpack.c.l.b16 %v789
      %v4398 = vunpack.c.l.b16 %v790
      %v4399 = vunpack.c.l.b16 %v791
      %v4400 = vunpack.c.l.b16 %v792
      %v4401 = vunpack.c.l.b16 %v793
      %v4402 = vunpack.c.l.b16 %v794
      %v4403 = vunpack.c.l.b16 %v795
      %v4404 = vunpack.c.l.b16 %v796
      %v4405 = vunpack.c.l.b16 %v797
      %v4406 = vunpack.c.l.b16 %v798
      %v4407 = vunpack.c.l.b16 %v799
      %v4408 = vunpack.c.l.b16 %v800
      %v4409 = vunpack.c.l.b16 %v801
      %v4410 = vunpack.c.l.b16 %v802
      %v4411 = vunpack.c.l.b16 %v803
      %v4412 = vunpack.c.l.b16 %v804
      %v4413 = vunpack.c.l.b16 %v805
      %v4414 = vunpack.c.l.b16 %v806
      %v4415 = vunpack.c.l.b16 %v807
      %v4416 = vunpack.c.l.b16 %v808
      %v4417 = vunpack.c.l.b16 %v809
      %v4418 = vunpack.c.l.b16 %v810
      %v4419 = vunpack.c.l.b16 %v811
      %v4420 = vunpack.c.l.b16 %v812
      %v4421 = vunpack.c.l.b16 %v813
      %v4422 = vunpack.c.l.b16 %v814
      %v4423 = vunpack.c.l.b16 %v815
      %v4424 = vunpack.c.l.b16 %v816
      %v4425 = vunpack.c.l.b16 %v817
      %v4426 = vunpack.c.l.b16 %v818
      %v4427 = vunpack.c.l.b16 %v819
      %v4428 = vunpack.c.l.b16 %v820
      %v4429 = vunpack.c.l.b16 %v821
      %v4430 = vunpack.c.l.b16 %v822
      %v4431 = vunpack.c.l.b16 %v823
      %v4432 = vunpack.c.l.b16 %v824
      %v4433 = vunpack.c.l.b16 %v825
      %v4434 = vunpack.c.l.b16 %v826
      %v4435 = vunpack.c.l.b16 %v827
      %v4436 = vunpack.c.l.b16 %v828
      %v4437 = vunpack.c.l.b16 %v829
      %v4438 = vunpack.c.l.b16 %v830
      %v4439 = vunpack.c.l.b16 %v831
      %v4440 = vunpack.c.l.b16 %v832
      %v4441 = vunpack.c.l.b16 %v833
      %v4442 = vunpack.c.l.b16 %v834
      %v4443 = vunpack.c.l.b16 %v835
      %v4444 = vunpack.c.l.b16 %v836
      %v4445 = vunpack.c.l.b16 %v837
      %v4446 = vunpack.c.l.b16 %v838
      %v4447 = vunpack.c.l.b16 %v839
      %v4448 = vunpack.c.l.b16 %v840
      %v4449 = vunpack.c.l.b16 %v841
      %v4450 = vunpack.c.l.b16 %v842
      %v4451 = vunpack.c.l.b16 %v843
      %v4452 = vpack.c.b16 %v4061, %v4060
      %v4453 = vpack.c.b16 %v4063, %v4062
      %v4454 = vpack.c.b16 %v4065, %v4064
      %v4455 = vpack.c.b16 %v4067, %v4066
      %v4456 = vpack.c.b16 %v4069, %v4068
      %v4457 = vpack.c.b16 %v4071, %v4070
      %v4458 = vpack.c.b16 %v4073, %v4072
      %v4459 = vpack.c.b16 %v4075, %v4074
      %v4460 = vpack.c.b16 %v4077, %v4076
      %v4461 = vpack.c.b16 %v4079, %v4078
      %v4462 = vpack.c.b16 %v4081, %v4080
      %v4463 = vpack.c.b16 %v4083, %v4082
      %v4464 = vpack.c.b16 %v4085, %v4084
      %v4465 = vpack.c.b16 %v4087, %v4086
      %v4466 = vpack.c.b16 %v4089, %v4088
      %v4467 = vpack.c.b16 %v4091, %v4090
      %v4468 = vpack.c.b16 %v4093, %v4092
      %v4469 = vpack.c.b16 %v4095, %v4094
      %v4470 = vpack.c.b16 %v4097, %v4096
      %v4471 = vpack.c.b16 %v4099, %v4098
      %v4472 = vpack.c.b16 %v4101, %v4100
      %v4473 = vpack.c.b16 %v4103, %v4102
      %v4474 = vpack.c.b16 %v4105, %v4104
      %v4475 = vpack.c.b16 %v4107, %v4106
      %v4476 = vpack.c.b16 %v4109, %v4108
      %v4477 = vpack.c.b16 %v4111, %v4110
      %v4478 = vpack.c.b16 %v4113, %v4112
      %v4479 = vpack.c.b16 %v4115, %v4114
      %v4480 = vpack.c.b16 %v4117, %v4116
      %v4481 = vpack.c.b16 %v4119, %v4118
      %v4482 = vpack.c.b16 %v4121, %v4120
      %v4483 = vpack.c.b16 %v4123, %v4122
      %v4484 = vpack.c.b16 %v4125, %v4124
      %v4485 = vpack.c.b16 %v4127, %v4126
      %v4486 = vpack.c.b16 %v4129, %v4128
      %v4487 = vpack.c.b16 %v4131, %v4130
      %v4488 = vpack.c.b16 %v4133, %v4132
      %v4489 = vpack.c.b16 %v4135, %v4134
      %v4490 = vpack.c.b16 %v4137, %v4136
      %v4491 = vpack.c.b16 %v4139, %v4138
      %v4492 = vpack.c.b16 %v4141, %v4140
      %v4493 = vpack.c.b16 %v4143, %v4142
      %v4494 = vpack.c.b16 %v4145, %v4144
      %v4495 = vpack.c.b16 %v4147, %v4146
      %v4496 = vpack.c.b16 %v4149, %v4148
      %v4497 = vpack.c.b16 %v4151, %v4150
      %v4498 = vpack.c.b16 %v4153, %v4152
      %v4499 = vpack.c.b16 %v4155, %v4154
      %v4500 = vpack.c.b16 %v4157, %v4156
      %v4501 = vpack.c.b16 %v4159, %v4158
      %v4502 = vpack.c.b16 %v4161, %v4160
      %v4503 = vpack.c.b16 %v4163, %v4162
      %v4504 = vpack.c.b16 %v4165, %v4164
      %v4505 = vpack.c.b16 %v4167, %v4166
      %v4506 = vpack.c.b16 %v4169, %v4168
      %v4507 = vpack.c.b16 %v4171, %v4170
      %v4508 = vpack.c.b16 %v4173, %v4172
      %v4509 = vpack.c.b16 %v4175, %v4174
      %v4510 = vpack.c.b16 %v4177, %v4176
      %v4511 = vpack.c.b16 %v4179, %v4178
      %v4512 = vpack.c.b16 %v4181, %v4180
      %v4513 = vpack.c.b16 %v4183, %v4182
      %v4514 = vpack.c.b16 %v4185, %v4184
      %v4515 = vpack.c.b16 %v4187, %v4186
      %v4516 = vpack.c.b16 %v4189, %v4188
      %v4517 = vpack.c.b16 %v4191, %v4190
      %v4518 = vpack.c.b16 %v4193, %v4192
      %v4519 = vpack.c.b16 %v4195, %v4194
      %v4520 = vpack.c.b16 %v4197, %v4196
      %v4521 = vpack.c.b16 %v4199, %v4198
      %v4522 = vpack.c.b16 %v4201, %v4200
      %v4523 = vpack.c.b16 %v4203, %v4202
      %v4524 = vpack.c.b16 %v4205, %v4204
      %v4525 = vpack.c.b16 %v4207, %v4206
      %v4526 = vpack.c.b16 %v4209, %v4208
      %v4527 = vpack.c.b16 %v4211, %v4210
      %v4528 = vpack.c.b16 %v4213, %v4212
      %v4529 = vpack.c.b16 %v4215, %v4214
      %v4530 = vpack.c.b16 %v4217, %v4216
      %v4531 = vpack.c.b16 %v4219, %v4218
      %v4532 = vpack.c.b16 %v4221, %v4220
      %v4533 = vpack.c.b16 %v4223, %v4222
      %v4534 = vpack.c.b16 %v4225, %v4224
      %v4535 = vpack.c.b16 %v4227, %v4226
      %v4536 = vpack.c.b16 %v4229, %v4228
      %v4537 = vpack.c.b16 %v4231, %v4230
      %v4538 = vpack.c.b16 %v4233, %v4232
      %v4539 = vpack.c.b16 %v4235, %v4234
      %v4540 = vpack.c.b16 %v4237, %v4236
      %v4541 = vpack.c.b16 %v4239, %v4238
      %v4542 = vpack.c.b16 %v4241, %v4240
      %v4543 = vpack.c.b16 %v4243, %v4242
      %v4544 = vpack.c.b16 %v4245, %v4244
      %v4545 = vpack.c.b16 %v4247, %v4246
      %v4546 = vpack.c.b16 %v4249, %v4248
      %v4547 = vpack.c.b16 %v4251, %v4250
      %v4548 = vpack.c.b16 %v4253, %v4252
      %v4549 = vpack.c.b16 %v4255, %v4254
      %v4550 = vpack.c.b16 %v4257, %v4256
      %v4551 = vpack.c.b16 %v4259, %v4258
      %v4552 = vpack.c.b16 %v4261, %v4260
      %v4553 = vpack.c.b16 %v4263, %v4262
      %v4554 = vpack.c.b16 %v4265, %v4264
      %v4555 = vpack.c.b16 %v4267, %v4266
      %v4556 = vpack.c.b16 %v4269, %v4268
      %v4557 = vpack.c.b16 %v4271, %v4270
      %v4558 = vpack.c.b16 %v4273, %v4272
      %v4559 = vpack.c.b16 %v4275, %v4274
      %v4560 = vpack.c.b16 %v4277, %v4276
      %v4561 = vpack.c.b16 %v4279, %v4278
      %v4562 = vpack.c.b16 %v4281, %v4280
      %v4563 = vpack.c.b16 %v4283, %v4282
      %v4564 = vpack.c.b16 %v4285, %v4284
      %v4565 = vpack.c.b16 %v4287, %v4286
      %v4566 = vpack.c.b16 %v4289, %v4288
      %v4567 = vpack.c.b16 %v4291, %v4290
      %v4568 = vpack.c.b16 %v4293, %v4292
      %v4569 = vpack.c.b16 %v4295, %v4294
      %v4570 = vpack.c.b16 %v4297, %v4296
      %v4571 = vpack.c.b16 %v4299, %v4298
      %v4572 = vpack.c.b16 %v4301, %v4300
      %v4573 = vpack.c.b16 %v4303, %v4302
      %v4574 = vpack.c.b16 %v4305, %v4304
      %v4575 = vpack.c.b16 %v4307, %v4306
      %v4576 = vpack.c.b16 %v4309, %v4308
      %v4577 = vpack.c.b16 %v4311, %v4310
      %v4578 = vpack.c.b16 %v4313, %v4312
      %v4579 = vpack.c.b16 %v4315, %v4314
      %v4580 = vpack.c.b16 %v4317, %v4316
      %v4581 = vpack.c.b16 %v4319, %v4318
      %v4582 = vpack.c.b16 %v4321, %v4320
      %v4583 = vpack.c.b16 %v4323, %v4322
      %v4584 = vpack.c.b16 %v4325, %v4324
      %v4585 = vpack.c.b16 %v4327, %v4326
      %v4586 = vpack.c.b16 %v4329, %v4328
      %v4587 = vpack.c.b16 %v4331, %v4330
      %v4588 = vpack.c.b16 %v4333, %v4332
      %v4589 = vpack.c.b16 %v4335, %v4334
      %v4590 = vpack.c.b16 %v4337, %v4336
      %v4591 = vpack.c.b16 %v4339, %v4338
      %v4592 = vpack.c.b16 %v4341, %v4340
      %v4593 = vpack.c.b16 %v4343, %v4342
      %v4594 = vpack.c.b16 %v4345, %v4344
      %v4595 = vpack.c.b16 %v4347, %v4346
      %v4596 = vpack.c.b16 %v4349, %v4348
      %v4597 = vpack.c.b16 %v4351, %v4350
      %v4598 = vpack.c.b16 %v4353, %v4352
      %v4599 = vpack.c.b16 %v4355, %v4354
      %v4600 = vpack.c.b16 %v4357, %v4356
      %v4601 = vpack.c.b16 %v4359, %v4358
      %v4602 = vpack.c.b16 %v4361, %v4360
      %v4603 = vpack.c.b16 %v4363, %v4362
      %v4604 = vpack.c.b16 %v4365, %v4364
      %v4605 = vpack.c.b16 %v4367, %v4366
      %v4606 = vpack.c.b16 %v4369, %v4368
      %v4607 = vpack.c.b16 %v4371, %v4370
      %v4608 = vpack.c.b16 %v4373, %v4372
      %v4609 = vpack.c.b16 %v4375, %v4374
      %v4610 = vpack.c.b16 %v4377, %v4376
      %v4611 = vpack.c.b16 %v4379, %v4378
      %v4612 = vpack.c.b16 %v4381, %v4380
      %v4613 = vpack.c.b16 %v4383, %v4382
      %v4614 = vpack.c.b16 %v4385, %v4384
      %v4615 = vpack.c.b16 %v4387, %v4386
      %v4616 = vpack.c.b16 %v4389, %v4388
      %v4617 = vpack.c.b16 %v4391, %v4390
      %v4618 = vpack.c.b16 %v4393, %v4392
      %v4619 = vpack.c.b16 %v4395, %v4394
      %v4620 = vpack.c.b16 %v4397, %v4396
      %v4621 = vpack.c.b16 %v4399, %v4398
      %v4622 = vpack.c.b16 %v4401, %v4400
      %v4623 = vpack.c.b16 %v4403, %v4402
      %v4624 = vpack.c.b16 %v4405, %v4404
      %v4625 = vpack.c.b16 %v4407, %v4406
      %v4626 = vpack.c.b16 %v4409, %v4408
      %v4627 = vpack.c.b16 %v4411, %v4410
      %v4628 = vpack.c.b16 %v4413, %v4412
      %v4629 = vpack.c.b16 %v4415, %v4414
      %v4630 = vpack.c.b16 %v4417, %v4416
      %v4631 = vpack.c.b16 %v4419, %v4418
      %v4632 = vpack.c.b16 %v4421, %v4420
      %v4633 = vpack.c.b16 %v4423, %v4422
      %v4634 = vpack.c.b16 %v4425, %v4424
      %v4635 = vpack.c.b16 %v4427, %v4426
      %v4636 = vpack.c.b16 %v4429, %v4428
      %v4637 = vpack.c.b16 %v4431, %v4430
      %v4638 = vpack.c.b16 %v4433, %v4432
      %v4639 = vpack.c.b16 %v4435, %v4434
      %v4640 = vpack.c.b16 %v4437, %v4436
      %v4641 = vpack.c.b16 %v4439, %v4438
      %v4642 = vpack.c.b16 %v4441, %v4440
      %v4643 = vpack.c.b16 %v4443, %v4442
      %v4644 = vpack.c.b16 %v4445, %v4444
      %v4645 = vpack.c.b16 %v4447, %v4446
      %v4646 = vpack.c.b16 %v4449, %v4448
      %v4647 = vpack.c.b16 %v4451, %v4450
      %vm4844 = vcmask 523264
      %v4846 = vsel %vm4844, %v2180, 0
      %v4849 = vsel %vm4844, %v2205, 0
      %v4852 = vsel %vm4844, %v2230, 0
      %v4855 = vsel %vm4844, %v2255, 0
      %4857 = vmatpush.bf16.msra.mxu0 %v4459
      %4858 = vmatpush.bf16.msra.mxu0 %v4458
      %4859 = vmatpush.bf16.msra.mxu0 %v4457
      %4860 = vmatpush.bf16.msra.mxu0 %v4456
      %4861 = vmatpush.bf16.msra.mxu0 %v4455
      %4862 = vmatpush.bf16.msra.mxu0 %v4454
      %4863 = vmatpush.bf16.msra.mxu0 %v4453
      %4864 = vmatpush.bf16.msra.mxu0 %v4452
      %4865 = vmatmul.bf16.gmra.mxu0 %v2156
      %v4866 = vpop.f32.mrf.mxu0
      %v4867 = vadd.f32 0.0, %v4866
      %v4868 = vpop.f32.mrf.mxu0
      %v4869 = vadd.f32 0.0, %v4868
      %4870 = vmatmul.bf16.gmra.mxu0 %v2181
      %v4871 = vpop.f32.mrf.mxu0
      %v4872 = vadd.f32 0.0, %v4871
      %v4873 = vpop.f32.mrf.mxu0
      %v4874 = vadd.f32 0.0, %v4873
      %4875 = vmatmul.bf16.gmra.mxu0 %v2206
      %v4876 = vpop.f32.mrf.mxu0
      %v4877 = vadd.f32 0.0, %v4876
      %v4878 = vpop.f32.mrf.mxu0
      %v4879 = vadd.f32 0.0, %v4878
      %4880 = vmatmul.bf16.gmra.mxu0 %v2231
      %v4881 = vpop.f32.mrf.mxu0
      %v4882 = vadd.f32 0.0, %v4881
      %v4883 = vpop.f32.mrf.mxu0
      %v4884 = vadd.f32 0.0, %v4883
      %4885 = vdwg.mxu0
      %4886 = vmatpush.bf16.msra.mxu0 %v4467
      %4887 = vmatpush.bf16.msra.mxu0 %v4466
      %4888 = vmatpush.bf16.msra.mxu0 %v4465
      %4889 = vmatpush.bf16.msra.mxu0 %v4464
      %4890 = vmatpush.bf16.msra.mxu0 %v4463
      %4891 = vmatpush.bf16.msra.mxu0 %v4462
      %4892 = vmatpush.bf16.msra.mxu0 %v4461
      %4893 = vmatpush.bf16.msra.mxu0 %v4460
      %4894 = vmatmul.bf16.gmra.mxu0 %v2157
      %v4895 = vpop.f32.mrf.mxu0
      %v4896 = vadd.f32 %v4867, %v4895
      %v4897 = vpop.f32.mrf.mxu0
      %v4898 = vadd.f32 %v4869, %v4897
      %4899 = vmatmul.bf16.gmra.mxu0 %v2182
      %v4900 = vpop.f32.mrf.mxu0
      %v4901 = vadd.f32 %v4872, %v4900
      %v4902 = vpop.f32.mrf.mxu0
      %v4903 = vadd.f32 %v4874, %v4902
      %4904 = vmatmul.bf16.gmra.mxu0 %v2207
      %v4905 = vpop.f32.mrf.mxu0
      %v4906 = vadd.f32 %v4877, %v4905
      %v4907 = vpop.f32.mrf.mxu0
      %v4908 = vadd.f32 %v4879, %v4907
      %4909 = vmatmul.bf16.gmra.mxu0 %v2232
      %v4910 = vpop.f32.mrf.mxu0
      %v4911 = vadd.f32 %v4882, %v4910
      %v4912 = vpop.f32.mrf.mxu0
      %v4913 = vadd.f32 %v4884, %v4912
      %4914 = vdwg.mxu0
      %4915 = vmatpush.bf16.msra.mxu0 %v4475
      %4916 = vmatpush.bf16.msra.mxu0 %v4474
      %4917 = vmatpush.bf16.msra.mxu0 %v4473
      %4918 = vmatpush.bf16.msra.mxu0 %v4472
      %4919 = vmatpush.bf16.msra.mxu0 %v4471
      %4920 = vmatpush.bf16.msra.mxu0 %v4470
      %4921 = vmatpush.bf16.msra.mxu0 %v4469
      %4922 = vmatpush.bf16.msra.mxu0 %v4468
      %4923 = vmatmul.bf16.gmra.mxu0 %v2158
      %v4924 = vpop.f32.mrf.mxu0
      %v4925 = vadd.f32 %v4896, %v4924
      %v4926 = vpop.f32.mrf.mxu0
      %v4927 = vadd.f32 %v4898, %v4926
      %4928 = vmatmul.bf16.gmra.mxu0 %v2183
      %v4929 = vpop.f32.mrf.mxu0
      %v4930 = vadd.f32 %v4901, %v4929
      %v4931 = vpop.f32.mrf.mxu0
      %v4932 = vadd.f32 %v4903, %v4931
      %4933 = vmatmul.bf16.gmra.mxu0 %v2208
      %v4934 = vpop.f32.mrf.mxu0
      %v4935 = vadd.f32 %v4906, %v4934
      %v4936 = vpop.f32.mrf.mxu0
      %v4937 = vadd.f32 %v4908, %v4936
      %4938 = vmatmul.bf16.gmra.mxu0 %v2233
      %v4939 = vpop.f32.mrf.mxu0
      %v4940 = vadd.f32 %v4911, %v4939
      %v4941 = vpop.f32.mrf.mxu0
      %v4942 = vadd.f32 %v4913, %v4941
      %4943 = vdwg.mxu0
      %4944 = vmatpush.bf16.msra.mxu0 %v4483
      %4945 = vmatpush.bf16.msra.mxu0 %v4482
      %4946 = vmatpush.bf16.msra.mxu0 %v4481
      %4947 = vmatpush.bf16.msra.mxu0 %v4480
      %4948 = vmatpush.bf16.msra.mxu0 %v4479
      %4949 = vmatpush.bf16.msra.mxu0 %v4478
      %4950 = vmatpush.bf16.msra.mxu0 %v4477
      %4951 = vmatpush.bf16.msra.mxu0 %v4476
      %4952 = vmatmul.bf16.gmra.mxu0 %v2159
      %v4953 = vpop.f32.mrf.mxu0
      %v4954 = vadd.f32 %v4925, %v4953
      %v4955 = vpop.f32.mrf.mxu0
      %v4956 = vadd.f32 %v4927, %v4955
      %4957 = vmatmul.bf16.gmra.mxu0 %v2184
      %v4958 = vpop.f32.mrf.mxu0
      %v4959 = vadd.f32 %v4930, %v4958
      %v4960 = vpop.f32.mrf.mxu0
      %v4961 = vadd.f32 %v4932, %v4960
      %4962 = vmatmul.bf16.gmra.mxu0 %v2209
      %v4963 = vpop.f32.mrf.mxu0
      %v4964 = vadd.f32 %v4935, %v4963
      %v4965 = vpop.f32.mrf.mxu0
      %v4966 = vadd.f32 %v4937, %v4965
      %4967 = vmatmul.bf16.gmra.mxu0 %v2234
      %v4968 = vpop.f32.mrf.mxu0
      %v4969 = vadd.f32 %v4940, %v4968
      %v4970 = vpop.f32.mrf.mxu0
      %v4971 = vadd.f32 %v4942, %v4970
      %4972 = vdwg.mxu0
      %4973 = vmatpush.bf16.msra.mxu0 %v4491
      %4974 = vmatpush.bf16.msra.mxu0 %v4490
      %4975 = vmatpush.bf16.msra.mxu0 %v4489
      %4976 = vmatpush.bf16.msra.mxu0 %v4488
      %4977 = vmatpush.bf16.msra.mxu0 %v4487
      %4978 = vmatpush.bf16.msra.mxu0 %v4486
      %4979 = vmatpush.bf16.msra.mxu0 %v4485
      %4980 = vmatpush.bf16.msra.mxu0 %v4484
      %4981 = vmatmul.bf16.gmra.mxu0 %v2160
      %v4982 = vpop.f32.mrf.mxu0
      %v4983 = vadd.f32 %v4954, %v4982
      %v4984 = vpop.f32.mrf.mxu0
      %v4985 = vadd.f32 %v4956, %v4984
      %4986 = vmatmul.bf16.gmra.mxu0 %v2185
      %v4987 = vpop.f32.mrf.mxu0
      %v4988 = vadd.f32 %v4959, %v4987
      %v4989 = vpop.f32.mrf.mxu0
      %v4990 = vadd.f32 %v4961, %v4989
      %4991 = vmatmul.bf16.gmra.mxu0 %v2210
      %v4992 = vpop.f32.mrf.mxu0
      %v4993 = vadd.f32 %v4964, %v4992
      %v4994 = vpop.f32.mrf.mxu0
      %v4995 = vadd.f32 %v4966, %v4994
      %4996 = vmatmul.bf16.gmra.mxu0 %v2235
      %v4997 = vpop.f32.mrf.mxu0
      %v4998 = vadd.f32 %v4969, %v4997
      %v4999 = vpop.f32.mrf.mxu0
      %v5000 = vadd.f32 %v4971, %v4999
      %5001 = vdwg.mxu0
      %5002 = vmatpush.bf16.msra.mxu0 %v4499
      %5003 = vmatpush.bf16.msra.mxu0 %v4498
      %5004 = vmatpush.bf16.msra.mxu0 %v4497
      %5005 = vmatpush.bf16.msra.mxu0 %v4496
      %5006 = vmatpush.bf16.msra.mxu0 %v4495
      %5007 = vmatpush.bf16.msra.mxu0 %v4494
      %5008 = vmatpush.bf16.msra.mxu0 %v4493
      %5009 = vmatpush.bf16.msra.mxu0 %v4492
      %5010 = vmatmul.bf16.gmra.mxu0 %v2161
      %v5011 = vpop.f32.mrf.mxu0
      %v5012 = vadd.f32 %v4983, %v5011
      %v5013 = vpop.f32.mrf.mxu0
      %v5014 = vadd.f32 %v4985, %v5013
      %5015 = vmatmul.bf16.gmra.mxu0 %v2186
      %v5016 = vpop.f32.mrf.mxu0
      %v5017 = vadd.f32 %v4988, %v5016
      %v5018 = vpop.f32.mrf.mxu0
      %v5019 = vadd.f32 %v4990, %v5018
      %5020 = vmatmul.bf16.gmra.mxu0 %v2211
      %v5021 = vpop.f32.mrf.mxu0
      %v5022 = vadd.f32 %v4993, %v5021
      %v5023 = vpop.f32.mrf.mxu0
      %v5024 = vadd.f32 %v4995, %v5023
      %5025 = vmatmul.bf16.gmra.mxu0 %v2236
      %v5026 = vpop.f32.mrf.mxu0
      %v5027 = vadd.f32 %v4998, %v5026
      %v5028 = vpop.f32.mrf.mxu0
      %v5029 = vadd.f32 %v5000, %v5028
      %5030 = vdwg.mxu0
      %5031 = vmatpush.bf16.msra.mxu0 %v4507
      %5032 = vmatpush.bf16.msra.mxu0 %v4506
      %5033 = vmatpush.bf16.msra.mxu0 %v4505
      %5034 = vmatpush.bf16.msra.mxu0 %v4504
      %5035 = vmatpush.bf16.msra.mxu0 %v4503
      %5036 = vmatpush.bf16.msra.mxu0 %v4502
      %5037 = vmatpush.bf16.msra.mxu0 %v4501
      %5038 = vmatpush.bf16.msra.mxu0 %v4500
      %5039 = vmatmul.bf16.gmra.mxu0 %v2162
      %v5040 = vpop.f32.mrf.mxu0
      %v5041 = vadd.f32 %v5012, %v5040
      %v5042 = vpop.f32.mrf.mxu0
      %v5043 = vadd.f32 %v5014, %v5042
      %5044 = vmatmul.bf16.gmra.mxu0 %v2187
      %v5045 = vpop.f32.mrf.mxu0
      %v5046 = vadd.f32 %v5017, %v5045
      %v5047 = vpop.f32.mrf.mxu0
      %v5048 = vadd.f32 %v5019, %v5047
      %5049 = vmatmul.bf16.gmra.mxu0 %v2212
      %v5050 = vpop.f32.mrf.mxu0
      %v5051 = vadd.f32 %v5022, %v5050
      %v5052 = vpop.f32.mrf.mxu0
      %v5053 = vadd.f32 %v5024, %v5052
      %5054 = vmatmul.bf16.gmra.mxu0 %v2237
      %v5055 = vpop.f32.mrf.mxu0
      %v5056 = vadd.f32 %v5027, %v5055
      %v5057 = vpop.f32.mrf.mxu0
      %v5058 = vadd.f32 %v5029, %v5057
      %5059 = vdwg.mxu0
      %5060 = vmatpush.bf16.msra.mxu0 %v4515
      %5061 = vmatpush.bf16.msra.mxu0 %v4514
      %5062 = vmatpush.bf16.msra.mxu0 %v4513
      %5063 = vmatpush.bf16.msra.mxu0 %v4512
      %5064 = vmatpush.bf16.msra.mxu0 %v4511
      %5065 = vmatpush.bf16.msra.mxu0 %v4510
      %5066 = vmatpush.bf16.msra.mxu0 %v4509
      %5067 = vmatpush.bf16.msra.mxu0 %v4508
      %5068 = vmatmul.bf16.gmra.mxu0 %v2163
      %v5069 = vpop.f32.mrf.mxu0
      %v5070 = vadd.f32 %v5041, %v5069
      %v5071 = vpop.f32.mrf.mxu0
      %v5072 = vadd.f32 %v5043, %v5071
      %5073 = vmatmul.bf16.gmra.mxu0 %v2188
      %v5074 = vpop.f32.mrf.mxu0
      %v5075 = vadd.f32 %v5046, %v5074
      %v5076 = vpop.f32.mrf.mxu0
      %v5077 = vadd.f32 %v5048, %v5076
      %5078 = vmatmul.bf16.gmra.mxu0 %v2213
      %v5079 = vpop.f32.mrf.mxu0
      %v5080 = vadd.f32 %v5051, %v5079
      %v5081 = vpop.f32.mrf.mxu0
      %v5082 = vadd.f32 %v5053, %v5081
      %5083 = vmatmul.bf16.gmra.mxu0 %v2238
      %v5084 = vpop.f32.mrf.mxu0
      %v5085 = vadd.f32 %v5056, %v5084
      %v5086 = vpop.f32.mrf.mxu0
      %v5087 = vadd.f32 %v5058, %v5086
      %5088 = vdwg.mxu0
      %5089 = vmatpush.bf16.msra.mxu0 %v4523
      %5090 = vmatpush.bf16.msra.mxu0 %v4522
      %5091 = vmatpush.bf16.msra.mxu0 %v4521
      %5092 = vmatpush.bf16.msra.mxu0 %v4520
      %5093 = vmatpush.bf16.msra.mxu0 %v4519
      %5094 = vmatpush.bf16.msra.mxu0 %v4518
      %5095 = vmatpush.bf16.msra.mxu0 %v4517
      %5096 = vmatpush.bf16.msra.mxu0 %v4516
      %5097 = vmatmul.bf16.gmra.mxu0 %v2164
      %v5098 = vpop.f32.mrf.mxu0
      %v5099 = vadd.f32 %v5070, %v5098
      %v5100 = vpop.f32.mrf.mxu0
      %v5101 = vadd.f32 %v5072, %v5100
      %5102 = vmatmul.bf16.gmra.mxu0 %v2189
      %v5103 = vpop.f32.mrf.mxu0
      %v5104 = vadd.f32 %v5075, %v5103
      %v5105 = vpop.f32.mrf.mxu0
      %v5106 = vadd.f32 %v5077, %v5105
      %5107 = vmatmul.bf16.gmra.mxu0 %v2214
      %v5108 = vpop.f32.mrf.mxu0
      %v5109 = vadd.f32 %v5080, %v5108
      %v5110 = vpop.f32.mrf.mxu0
      %v5111 = vadd.f32 %v5082, %v5110
      %5112 = vmatmul.bf16.gmra.mxu0 %v2239
      %v5113 = vpop.f32.mrf.mxu0
      %v5114 = vadd.f32 %v5085, %v5113
      %v5115 = vpop.f32.mrf.mxu0
      %v5116 = vadd.f32 %v5087, %v5115
      %5117 = vdwg.mxu0
      %5118 = vmatpush.bf16.msra.mxu0 %v4531
      %5119 = vmatpush.bf16.msra.mxu0 %v4530
      %5120 = vmatpush.bf16.msra.mxu0 %v4529
      %5121 = vmatpush.bf16.msra.mxu0 %v4528
      %5122 = vmatpush.bf16.msra.mxu0 %v4527
      %5123 = vmatpush.bf16.msra.mxu0 %v4526
      %5124 = vmatpush.bf16.msra.mxu0 %v4525
      %5125 = vmatpush.bf16.msra.mxu0 %v4524
      %5126 = vmatmul.bf16.gmra.mxu0 %v2165
      %v5127 = vpop.f32.mrf.mxu0
      %v5128 = vadd.f32 %v5099, %v5127
      %v5129 = vpop.f32.mrf.mxu0
      %v5130 = vadd.f32 %v5101, %v5129
      %5131 = vmatmul.bf16.gmra.mxu0 %v2190
      %v5132 = vpop.f32.mrf.mxu0
      %v5133 = vadd.f32 %v5104, %v5132
      %v5134 = vpop.f32.mrf.mxu0
      %v5135 = vadd.f32 %v5106, %v5134
      %5136 = vmatmul.bf16.gmra.mxu0 %v2215
      %v5137 = vpop.f32.mrf.mxu0
      %v5138 = vadd.f32 %v5109, %v5137
      %v5139 = vpop.f32.mrf.mxu0
      %v5140 = vadd.f32 %v5111, %v5139
      %5141 = vmatmul.bf16.gmra.mxu0 %v2240
      %v5142 = vpop.f32.mrf.mxu0
      %v5143 = vadd.f32 %v5114, %v5142
      %v5144 = vpop.f32.mrf.mxu0
      %v5145 = vadd.f32 %v5116, %v5144
      %5146 = vdwg.mxu0
      %5147 = vmatpush.bf16.msra.mxu0 %v4539
      %5148 = vmatpush.bf16.msra.mxu0 %v4538
      %5149 = vmatpush.bf16.msra.mxu0 %v4537
      %5150 = vmatpush.bf16.msra.mxu0 %v4536
      %5151 = vmatpush.bf16.msra.mxu0 %v4535
      %5152 = vmatpush.bf16.msra.mxu0 %v4534
      %5153 = vmatpush.bf16.msra.mxu0 %v4533
      %5154 = vmatpush.bf16.msra.mxu0 %v4532
      %5155 = vmatmul.bf16.gmra.mxu0 %v2166
      %v5156 = vpop.f32.mrf.mxu0
      %v5157 = vadd.f32 %v5128, %v5156
      %v5158 = vpop.f32.mrf.mxu0
      %v5159 = vadd.f32 %v5130, %v5158
      %5160 = vmatmul.bf16.gmra.mxu0 %v2191
      %v5161 = vpop.f32.mrf.mxu0
      %v5162 = vadd.f32 %v5133, %v5161
      %v5163 = vpop.f32.mrf.mxu0
      %v5164 = vadd.f32 %v5135, %v5163
      %5165 = vmatmul.bf16.gmra.mxu0 %v2216
      %v5166 = vpop.f32.mrf.mxu0
      %v5167 = vadd.f32 %v5138, %v5166
      %v5168 = vpop.f32.mrf.mxu0
      %v5169 = vadd.f32 %v5140, %v5168
      %5170 = vmatmul.bf16.gmra.mxu0 %v2241
      %v5171 = vpop.f32.mrf.mxu0
      %v5172 = vadd.f32 %v5143, %v5171
      %v5173 = vpop.f32.mrf.mxu0
      %v5174 = vadd.f32 %v5145, %v5173
      %5175 = vdwg.mxu0
      %5176 = vmatpush.bf16.msra.mxu0 %v4547
      %5177 = vmatpush.bf16.msra.mxu0 %v4546
      %5178 = vmatpush.bf16.msra.mxu0 %v4545
      %5179 = vmatpush.bf16.msra.mxu0 %v4544
      %5180 = vmatpush.bf16.msra.mxu0 %v4543
      %5181 = vmatpush.bf16.msra.mxu0 %v4542
      %5182 = vmatpush.bf16.msra.mxu0 %v4541
      %5183 = vmatpush.bf16.msra.mxu0 %v4540
      %5184 = vmatmul.bf16.gmra.mxu0 %v2167
      %v5185 = vpop.f32.mrf.mxu0
      %v5186 = vadd.f32 %v5157, %v5185
      %v5187 = vpop.f32.mrf.mxu0
      %v5188 = vadd.f32 %v5159, %v5187
      %5189 = vmatmul.bf16.gmra.mxu0 %v2192
      %v5190 = vpop.f32.mrf.mxu0
      %v5191 = vadd.f32 %v5162, %v5190
      %v5192 = vpop.f32.mrf.mxu0
      %v5193 = vadd.f32 %v5164, %v5192
      %5194 = vmatmul.bf16.gmra.mxu0 %v2217
      %v5195 = vpop.f32.mrf.mxu0
      %v5196 = vadd.f32 %v5167, %v5195
      %v5197 = vpop.f32.mrf.mxu0
      %v5198 = vadd.f32 %v5169, %v5197
      %5199 = vmatmul.bf16.gmra.mxu0 %v2242
      %v5200 = vpop.f32.mrf.mxu0
      %v5201 = vadd.f32 %v5172, %v5200
      %v5202 = vpop.f32.mrf.mxu0
      %v5203 = vadd.f32 %v5174, %v5202
      %5204 = vdwg.mxu0
      %5205 = vmatpush.bf16.msra.mxu0 %v4555
      %5206 = vmatpush.bf16.msra.mxu0 %v4554
      %5207 = vmatpush.bf16.msra.mxu0 %v4553
      %5208 = vmatpush.bf16.msra.mxu0 %v4552
      %5209 = vmatpush.bf16.msra.mxu0 %v4551
      %5210 = vmatpush.bf16.msra.mxu0 %v4550
      %5211 = vmatpush.bf16.msra.mxu0 %v4549
      %5212 = vmatpush.bf16.msra.mxu0 %v4548
      %5213 = vmatmul.bf16.gmra.mxu0 %v2168
      %v5214 = vpop.f32.mrf.mxu0
      %v5215 = vadd.f32 %v5186, %v5214
      %v5216 = vpop.f32.mrf.mxu0
      %v5217 = vadd.f32 %v5188, %v5216
      %5218 = vmatmul.bf16.gmra.mxu0 %v2193
      %v5219 = vpop.f32.mrf.mxu0
      %v5220 = vadd.f32 %v5191, %v5219
      %v5221 = vpop.f32.mrf.mxu0
      %v5222 = vadd.f32 %v5193, %v5221
      %5223 = vmatmul.bf16.gmra.mxu0 %v2218
      %v5224 = vpop.f32.mrf.mxu0
      %v5225 = vadd.f32 %v5196, %v5224
      %v5226 = vpop.f32.mrf.mxu0
      %v5227 = vadd.f32 %v5198, %v5226
      %5228 = vmatmul.bf16.gmra.mxu0 %v2243
      %v5229 = vpop.f32.mrf.mxu0
      %v5230 = vadd.f32 %v5201, %v5229
      %v5231 = vpop.f32.mrf.mxu0
      %v5232 = vadd.f32 %v5203, %v5231
      %5233 = vdwg.mxu0
      %5234 = vmatpush.bf16.msra.mxu0 %v4563
      %5235 = vmatpush.bf16.msra.mxu0 %v4562
      %5236 = vmatpush.bf16.msra.mxu0 %v4561
      %5237 = vmatpush.bf16.msra.mxu0 %v4560
      %5238 = vmatpush.bf16.msra.mxu0 %v4559
      %5239 = vmatpush.bf16.msra.mxu0 %v4558
      %5240 = vmatpush.bf16.msra.mxu0 %v4557
      %5241 = vmatpush.bf16.msra.mxu0 %v4556
      %5242 = vmatmul.bf16.gmra.mxu0 %v2169
      %v5243 = vpop.f32.mrf.mxu0
      %v5244 = vadd.f32 %v5215, %v5243
      %v5245 = vpop.f32.mrf.mxu0
      %v5246 = vadd.f32 %v5217, %v5245
      %5247 = vmatmul.bf16.gmra.mxu0 %v2194
      %v5248 = vpop.f32.mrf.mxu0
      %v5249 = vadd.f32 %v5220, %v5248
      %v5250 = vpop.f32.mrf.mxu0
      %v5251 = vadd.f32 %v5222, %v5250
      %5252 = vmatmul.bf16.gmra.mxu0 %v2219
      %v5253 = vpop.f32.mrf.mxu0
      %v5254 = vadd.f32 %v5225, %v5253
      %v5255 = vpop.f32.mrf.mxu0
      %v5256 = vadd.f32 %v5227, %v5255
      %5257 = vmatmul.bf16.gmra.mxu0 %v2244
      %v5258 = vpop.f32.mrf.mxu0
      %v5259 = vadd.f32 %v5230, %v5258
      %v5260 = vpop.f32.mrf.mxu0
      %v5261 = vadd.f32 %v5232, %v5260
      %5262 = vdwg.mxu0
      %5263 = vmatpush.bf16.msra.mxu0 %v4571
      %5264 = vmatpush.bf16.msra.mxu0 %v4570
      %5265 = vmatpush.bf16.msra.mxu0 %v4569
      %5266 = vmatpush.bf16.msra.mxu0 %v4568
      %5267 = vmatpush.bf16.msra.mxu0 %v4567
      %5268 = vmatpush.bf16.msra.mxu0 %v4566
      %5269 = vmatpush.bf16.msra.mxu0 %v4565
      %5270 = vmatpush.bf16.msra.mxu0 %v4564
      %5271 = vmatmul.bf16.gmra.mxu0 %v2170
      %v5272 = vpop.f32.mrf.mxu0
      %v5273 = vadd.f32 %v5244, %v5272
      %v5274 = vpop.f32.mrf.mxu0
      %v5275 = vadd.f32 %v5246, %v5274
      %5276 = vmatmul.bf16.gmra.mxu0 %v2195
      %v5277 = vpop.f32.mrf.mxu0
      %v5278 = vadd.f32 %v5249, %v5277
      %v5279 = vpop.f32.mrf.mxu0
      %v5280 = vadd.f32 %v5251, %v5279
      %5281 = vmatmul.bf16.gmra.mxu0 %v2220
      %v5282 = vpop.f32.mrf.mxu0
      %v5283 = vadd.f32 %v5254, %v5282
      %v5284 = vpop.f32.mrf.mxu0
      %v5285 = vadd.f32 %v5256, %v5284
      %5286 = vmatmul.bf16.gmra.mxu0 %v2245
      %v5287 = vpop.f32.mrf.mxu0
      %v5288 = vadd.f32 %v5259, %v5287
      %v5289 = vpop.f32.mrf.mxu0
      %v5290 = vadd.f32 %v5261, %v5289
      %5291 = vdwg.mxu0
      %5292 = vmatpush.bf16.msra.mxu0 %v4579
      %5293 = vmatpush.bf16.msra.mxu0 %v4578
      %5294 = vmatpush.bf16.msra.mxu0 %v4577
      %5295 = vmatpush.bf16.msra.mxu0 %v4576
      %5296 = vmatpush.bf16.msra.mxu0 %v4575
      %5297 = vmatpush.bf16.msra.mxu0 %v4574
      %5298 = vmatpush.bf16.msra.mxu0 %v4573
      %5299 = vmatpush.bf16.msra.mxu0 %v4572
      %5300 = vmatmul.bf16.gmra.mxu0 %v2171
      %v5301 = vpop.f32.mrf.mxu0
      %v5302 = vadd.f32 %v5273, %v5301
      %v5303 = vpop.f32.mrf.mxu0
      %v5304 = vadd.f32 %v5275, %v5303
      %5305 = vmatmul.bf16.gmra.mxu0 %v2196
      %v5306 = vpop.f32.mrf.mxu0
      %v5307 = vadd.f32 %v5278, %v5306
      %v5308 = vpop.f32.mrf.mxu0
      %v5309 = vadd.f32 %v5280, %v5308
      %5310 = vmatmul.bf16.gmra.mxu0 %v2221
      %v5311 = vpop.f32.mrf.mxu0
      %v5312 = vadd.f32 %v5283, %v5311
      %v5313 = vpop.f32.mrf.mxu0
      %v5314 = vadd.f32 %v5285, %v5313
      %5315 = vmatmul.bf16.gmra.mxu0 %v2246
      %v5316 = vpop.f32.mrf.mxu0
      %v5317 = vadd.f32 %v5288, %v5316
      %v5318 = vpop.f32.mrf.mxu0
      %v5319 = vadd.f32 %v5290, %v5318
      %5320 = vdwg.mxu0
      %5321 = vmatpush.bf16.msra.mxu0 %v4587
      %5322 = vmatpush.bf16.msra.mxu0 %v4586
      %5323 = vmatpush.bf16.msra.mxu0 %v4585
      %5324 = vmatpush.bf16.msra.mxu0 %v4584
      %5325 = vmatpush.bf16.msra.mxu0 %v4583
      %5326 = vmatpush.bf16.msra.mxu0 %v4582
      %5327 = vmatpush.bf16.msra.mxu0 %v4581
      %5328 = vmatpush.bf16.msra.mxu0 %v4580
      %5329 = vmatmul.bf16.gmra.mxu0 %v2172
      %v5330 = vpop.f32.mrf.mxu0
      %v5331 = vadd.f32 %v5302, %v5330
      %v5332 = vpop.f32.mrf.mxu0
      %v5333 = vadd.f32 %v5304, %v5332
      %5334 = vmatmul.bf16.gmra.mxu0 %v2197
      %v5335 = vpop.f32.mrf.mxu0
      %v5336 = vadd.f32 %v5307, %v5335
      %v5337 = vpop.f32.mrf.mxu0
      %v5338 = vadd.f32 %v5309, %v5337
      %5339 = vmatmul.bf16.gmra.mxu0 %v2222
      %v5340 = vpop.f32.mrf.mxu0
      %v5341 = vadd.f32 %v5312, %v5340
      %v5342 = vpop.f32.mrf.mxu0
      %v5343 = vadd.f32 %v5314, %v5342
      %5344 = vmatmul.bf16.gmra.mxu0 %v2247
      %v5345 = vpop.f32.mrf.mxu0
      %v5346 = vadd.f32 %v5317, %v5345
      %v5347 = vpop.f32.mrf.mxu0
      %v5348 = vadd.f32 %v5319, %v5347
      %5349 = vdwg.mxu0
      %5350 = vmatpush.bf16.msra.mxu0 %v4595
      %5351 = vmatpush.bf16.msra.mxu0 %v4594
      %5352 = vmatpush.bf16.msra.mxu0 %v4593
      %5353 = vmatpush.bf16.msra.mxu0 %v4592
      %5354 = vmatpush.bf16.msra.mxu0 %v4591
      %5355 = vmatpush.bf16.msra.mxu0 %v4590
      %5356 = vmatpush.bf16.msra.mxu0 %v4589
      %5357 = vmatpush.bf16.msra.mxu0 %v4588
      %5358 = vmatmul.bf16.gmra.mxu0 %v2173
      %v5359 = vpop.f32.mrf.mxu0
      %v5360 = vadd.f32 %v5331, %v5359
      %v5361 = vpop.f32.mrf.mxu0
      %v5362 = vadd.f32 %v5333, %v5361
      %5363 = vmatmul.bf16.gmra.mxu0 %v2198
      %v5364 = vpop.f32.mrf.mxu0
      %v5365 = vadd.f32 %v5336, %v5364
      %v5366 = vpop.f32.mrf.mxu0
      %v5367 = vadd.f32 %v5338, %v5366
      %5368 = vmatmul.bf16.gmra.mxu0 %v2223
      %v5369 = vpop.f32.mrf.mxu0
      %v5370 = vadd.f32 %v5341, %v5369
      %v5371 = vpop.f32.mrf.mxu0
      %v5372 = vadd.f32 %v5343, %v5371
      %5373 = vmatmul.bf16.gmra.mxu0 %v2248
      %v5374 = vpop.f32.mrf.mxu0
      %v5375 = vadd.f32 %v5346, %v5374
      %v5376 = vpop.f32.mrf.mxu0
      %v5377 = vadd.f32 %v5348, %v5376
      %5378 = vdwg.mxu0
      %5379 = vmatpush.bf16.msra.mxu0 %v4603
      %5380 = vmatpush.bf16.msra.mxu0 %v4602
      %5381 = vmatpush.bf16.msra.mxu0 %v4601
      %5382 = vmatpush.bf16.msra.mxu0 %v4600
      %5383 = vmatpush.bf16.msra.mxu0 %v4599
      %5384 = vmatpush.bf16.msra.mxu0 %v4598
      %5385 = vmatpush.bf16.msra.mxu0 %v4597
      %5386 = vmatpush.bf16.msra.mxu0 %v4596
      %5387 = vmatmul.bf16.gmra.mxu0 %v2174
      %v5388 = vpop.f32.mrf.mxu0
      %v5389 = vadd.f32 %v5360, %v5388
      %v5390 = vpop.f32.mrf.mxu0
      %v5391 = vadd.f32 %v5362, %v5390
      %5392 = vmatmul.bf16.gmra.mxu0 %v2199
      %v5393 = vpop.f32.mrf.mxu0
      %v5394 = vadd.f32 %v5365, %v5393
      %v5395 = vpop.f32.mrf.mxu0
      %v5396 = vadd.f32 %v5367, %v5395
      %5397 = vmatmul.bf16.gmra.mxu0 %v2224
      %v5398 = vpop.f32.mrf.mxu0
      %v5399 = vadd.f32 %v5370, %v5398
      %v5400 = vpop.f32.mrf.mxu0
      %v5401 = vadd.f32 %v5372, %v5400
      %5402 = vmatmul.bf16.gmra.mxu0 %v2249
      %v5403 = vpop.f32.mrf.mxu0
      %v5404 = vadd.f32 %v5375, %v5403
      %v5405 = vpop.f32.mrf.mxu0
      %v5406 = vadd.f32 %v5377, %v5405
      %5407 = vdwg.mxu0
      %5408 = vmatpush.bf16.msra.mxu0 %v4611
      %5409 = vmatpush.bf16.msra.mxu0 %v4610
      %5410 = vmatpush.bf16.msra.mxu0 %v4609
      %5411 = vmatpush.bf16.msra.mxu0 %v4608
      %5412 = vmatpush.bf16.msra.mxu0 %v4607
      %5413 = vmatpush.bf16.msra.mxu0 %v4606
      %5414 = vmatpush.bf16.msra.mxu0 %v4605
      %5415 = vmatpush.bf16.msra.mxu0 %v4604
      %5416 = vmatmul.bf16.gmra.mxu0 %v2175
      %v5417 = vpop.f32.mrf.mxu0
      %v5418 = vadd.f32 %v5389, %v5417
      %v5419 = vpop.f32.mrf.mxu0
      %v5420 = vadd.f32 %v5391, %v5419
      %5421 = vmatmul.bf16.gmra.mxu0 %v2200
      %v5422 = vpop.f32.mrf.mxu0
      %v5423 = vadd.f32 %v5394, %v5422
      %v5424 = vpop.f32.mrf.mxu0
      %v5425 = vadd.f32 %v5396, %v5424
      %5426 = vmatmul.bf16.gmra.mxu0 %v2225
      %v5427 = vpop.f32.mrf.mxu0
      %v5428 = vadd.f32 %v5399, %v5427
      %v5429 = vpop.f32.mrf.mxu0
      %v5430 = vadd.f32 %v5401, %v5429
      %5431 = vmatmul.bf16.gmra.mxu0 %v2250
      %v5432 = vpop.f32.mrf.mxu0
      %v5433 = vadd.f32 %v5404, %v5432
      %v5434 = vpop.f32.mrf.mxu0
      %v5435 = vadd.f32 %v5406, %v5434
      %5436 = vdwg.mxu0
      %5437 = vmatpush.bf16.msra.mxu0 %v4619
      %5438 = vmatpush.bf16.msra.mxu0 %v4618
      %5439 = vmatpush.bf16.msra.mxu0 %v4617
      %5440 = vmatpush.bf16.msra.mxu0 %v4616
      %5441 = vmatpush.bf16.msra.mxu0 %v4615
      %5442 = vmatpush.bf16.msra.mxu0 %v4614
      %5443 = vmatpush.bf16.msra.mxu0 %v4613
      %5444 = vmatpush.bf16.msra.mxu0 %v4612
      %5445 = vmatmul.bf16.gmra.mxu0 %v2176
      %v5446 = vpop.f32.mrf.mxu0
      %v5447 = vadd.f32 %v5418, %v5446
      %v5448 = vpop.f32.mrf.mxu0
      %v5449 = vadd.f32 %v5420, %v5448
      %5450 = vmatmul.bf16.gmra.mxu0 %v2201
      %v5451 = vpop.f32.mrf.mxu0
      %v5452 = vadd.f32 %v5423, %v5451
      %v5453 = vpop.f32.mrf.mxu0
      %v5454 = vadd.f32 %v5425, %v5453
      %5455 = vmatmul.bf16.gmra.mxu0 %v2226
      %v5456 = vpop.f32.mrf.mxu0
      %v5457 = vadd.f32 %v5428, %v5456
      %v5458 = vpop.f32.mrf.mxu0
      %v5459 = vadd.f32 %v5430, %v5458
      %5460 = vmatmul.bf16.gmra.mxu0 %v2251
      %v5461 = vpop.f32.mrf.mxu0
      %v5462 = vadd.f32 %v5433, %v5461
      %v5463 = vpop.f32.mrf.mxu0
      %v5464 = vadd.f32 %v5435, %v5463
      %5465 = vdwg.mxu0
      %5466 = vmatpush.bf16.msra.mxu0 %v4627
      %5467 = vmatpush.bf16.msra.mxu0 %v4626
      %5468 = vmatpush.bf16.msra.mxu0 %v4625
      %5469 = vmatpush.bf16.msra.mxu0 %v4624
      %5470 = vmatpush.bf16.msra.mxu0 %v4623
      %5471 = vmatpush.bf16.msra.mxu0 %v4622
      %5472 = vmatpush.bf16.msra.mxu0 %v4621
      %5473 = vmatpush.bf16.msra.mxu0 %v4620
      %5474 = vmatmul.bf16.gmra.mxu0 %v2177
      %v5475 = vpop.f32.mrf.mxu0
      %v5476 = vadd.f32 %v5447, %v5475
      %v5477 = vpop.f32.mrf.mxu0
      %v5478 = vadd.f32 %v5449, %v5477
      %5479 = vmatmul.bf16.gmra.mxu0 %v2202
      %v5480 = vpop.f32.mrf.mxu0
      %v5481 = vadd.f32 %v5452, %v5480
      %v5482 = vpop.f32.mrf.mxu0
      %v5483 = vadd.f32 %v5454, %v5482
      %5484 = vmatmul.bf16.gmra.mxu0 %v2227
      %v5485 = vpop.f32.mrf.mxu0
      %v5486 = vadd.f32 %v5457, %v5485
      %v5487 = vpop.f32.mrf.mxu0
      %v5488 = vadd.f32 %v5459, %v5487
      %5489 = vmatmul.bf16.gmra.mxu0 %v2252
      %v5490 = vpop.f32.mrf.mxu0
      %v5491 = vadd.f32 %v5462, %v5490
      %v5492 = vpop.f32.mrf.mxu0
      %v5493 = vadd.f32 %v5464, %v5492
      %5494 = vdwg.mxu0
      %5495 = vmatpush.bf16.msra.mxu0 %v4635
      %5496 = vmatpush.bf16.msra.mxu0 %v4634
      %5497 = vmatpush.bf16.msra.mxu0 %v4633
      %5498 = vmatpush.bf16.msra.mxu0 %v4632
      %5499 = vmatpush.bf16.msra.mxu0 %v4631
      %5500 = vmatpush.bf16.msra.mxu0 %v4630
      %5501 = vmatpush.bf16.msra.mxu0 %v4629
      %5502 = vmatpush.bf16.msra.mxu0 %v4628
      %5503 = vmatmul.bf16.gmra.mxu0 %v2178
      %v5504 = vpop.f32.mrf.mxu0
      %v5505 = vadd.f32 %v5476, %v5504
      %v5506 = vpop.f32.mrf.mxu0
      %v5507 = vadd.f32 %v5478, %v5506
      %5508 = vmatmul.bf16.gmra.mxu0 %v2203
      %v5509 = vpop.f32.mrf.mxu0
      %v5510 = vadd.f32 %v5481, %v5509
      %v5511 = vpop.f32.mrf.mxu0
      %v5512 = vadd.f32 %v5483, %v5511
      %5513 = vmatmul.bf16.gmra.mxu0 %v2228
      %v5514 = vpop.f32.mrf.mxu0
      %v5515 = vadd.f32 %v5486, %v5514
      %v5516 = vpop.f32.mrf.mxu0
      %v5517 = vadd.f32 %v5488, %v5516
      %5518 = vmatmul.bf16.gmra.mxu0 %v2253
      %v5519 = vpop.f32.mrf.mxu0
      %v5520 = vadd.f32 %v5491, %v5519
      %v5521 = vpop.f32.mrf.mxu0
      %v5522 = vadd.f32 %v5493, %v5521
      %5523 = vdwg.mxu0
      %5524 = vmatpush.bf16.msra.mxu0 %v4643
      %5525 = vmatpush.bf16.msra.mxu0 %v4642
      %5526 = vmatpush.bf16.msra.mxu0 %v4641
      %5527 = vmatpush.bf16.msra.mxu0 %v4640
      %5528 = vmatpush.bf16.msra.mxu0 %v4639
      %5529 = vmatpush.bf16.msra.mxu0 %v4638
      %5530 = vmatpush.bf16.msra.mxu0 %v4637
      %5531 = vmatpush.bf16.msra.mxu0 %v4636
      %5532 = vmatmul.bf16.gmra.mxu0 %v2179
      %v5533 = vpop.f32.mrf.mxu0
      %v5534 = vadd.f32 %v5505, %v5533
      %v5535 = vpop.f32.mrf.mxu0
      %v5536 = vadd.f32 %v5507, %v5535
      %5537 = vmatmul.bf16.gmra.mxu0 %v2204
      %v5538 = vpop.f32.mrf.mxu0
      %v5539 = vadd.f32 %v5510, %v5538
      %v5540 = vpop.f32.mrf.mxu0
      %v5541 = vadd.f32 %v5512, %v5540
      %5542 = vmatmul.bf16.gmra.mxu0 %v2229
      %v5543 = vpop.f32.mrf.mxu0
      %v5544 = vadd.f32 %v5515, %v5543
      %v5545 = vpop.f32.mrf.mxu0
      %v5546 = vadd.f32 %v5517, %v5545
      %5547 = vmatmul.bf16.gmra.mxu0 %v2254
      %v5548 = vpop.f32.mrf.mxu0
      %v5549 = vadd.f32 %v5520, %v5548
      %v5550 = vpop.f32.mrf.mxu0
      %v5551 = vadd.f32 %v5522, %v5550
      %5552 = vdwg.mxu0
      %5553 = vmatpush.bf16.msra.mxu0 0
      %5554 = vmatpush.bf16.msra.mxu0 0
      %5555 = vmatpush.bf16.msra.mxu0 0
      %5556 = vmatpush.bf16.msra.mxu0 0
      %5557 = vmatpush.bf16.msra.mxu0 %v4647
      %5558 = vmatpush.bf16.msra.mxu0 %v4646
      %5559 = vmatpush.bf16.msra.mxu0 %v4645
      %5560 = vmatpush.bf16.msra.mxu0 %v4644
      %5561 = vmatmul.bf16.gmra.mxu0 %v4846
      %v5562 = vpop.f32.mrf.mxu0
      %v5563 = vadd.f32 %v5534, %v5562
      %v5564 = vpop.f32.mrf.mxu0
      %v5565 = vadd.f32 %v5536, %v5564
      %5566 = vmatmul.bf16.gmra.mxu0 %v4849
      %v5567 = vpop.f32.mrf.mxu0
      %v5568 = vadd.f32 %v5539, %v5567
      %v5569 = vpop.f32.mrf.mxu0
      %v5570 = vadd.f32 %v5541, %v5569
      %5571 = vmatmul.bf16.gmra.mxu0 %v4852
      %v5572 = vpop.f32.mrf.mxu0
      %v5573 = vadd.f32 %v5544, %v5572
      %v5574 = vpop.f32.mrf.mxu0
      %v5575 = vadd.f32 %v5546, %v5574
      %5576 = vmatmul.bf16.gmra.mxu0 %v4855
      %v5577 = vpop.f32.mrf.mxu0
      %v5578 = vadd.f32 %v5549, %v5577
      %v5579 = vpop.f32.mrf.mxu0
      %v5580 = vadd.f32 %v5551, %v5579
      %5581 = vdwg.mxu0
      %vm5582 = vcmask 15360
      %5583 = vst.msk [vmem:[%s443] sm:$0xff] %vm5582, %v5563
      %5584 = vst.msk [vmem:[%s443 + $0x8] sm:$0xff] %vm5582, %v5565
      %5585 = vst.msk [vmem:[%s443 + $0x10] sm:$0xff] %vm5582, %v5568
      %5586 = vst.msk [vmem:[%s443 + $0x18] sm:$0xff] %vm5582, %v5570
      %5587 = vst.msk [vmem:[%s443 + $0x20] sm:$0xff] %vm5582, %v5573
      %5588 = vst.msk [vmem:[%s443 + $0x28] sm:$0xff] %vm5582, %v5575
      %5589 = vst.msk [vmem:[%s443 + $0x30] sm:$0xff] %vm5582, %v5578
      %5590 = vst.msk [vmem:[%s443 + $0x38] sm:$0xff] %vm5582, %v5580
      %v5592 = vsel %vm4844, %v3592, 0
      %v5595 = vsel %vm4844, %v3617, 0
      %v5598 = vsel %vm4844, %v3642, 0
      %v5601 = vsel %vm4844, %v3667, 0
      %5603 = vmatpush.bf16.msra.mxu0 %v4459
      %5604 = vmatpush.bf16.msra.mxu0 %v4458
      %5605 = vmatpush.bf16.msra.mxu0 %v4457
      %5606 = vmatpush.bf16.msra.mxu0 %v4456
      %5607 = vmatpush.bf16.msra.mxu0 %v4455
      %5608 = vmatpush.bf16.msra.mxu0 %v4454
      %5609 = vmatpush.bf16.msra.mxu0 %v4453
      %5610 = vmatpush.bf16.msra.mxu0 %v4452
      %5611 = vmatmul.bf16.gmra.mxu0 %v3568
      %v5612 = vpop.f32.mrf.mxu0
      %v5613 = vadd.f32 0.0, %v5612
      %v5614 = vpop.f32.mrf.mxu0
      %v5615 = vadd.f32 0.0, %v5614
      %5616 = vmatmul.bf16.gmra.mxu0 %v3593
      %v5617 = vpop.f32.mrf.mxu0
      %v5618 = vadd.f32 0.0, %v5617
      %v5619 = vpop.f32.mrf.mxu0
      %v5620 = vadd.f32 0.0, %v5619
      %5621 = vmatmul.bf16.gmra.mxu0 %v3618
      %v5622 = vpop.f32.mrf.mxu0
      %v5623 = vadd.f32 0.0, %v5622
      %v5624 = vpop.f32.mrf.mxu0
      %v5625 = vadd.f32 0.0, %v5624
      %5626 = vmatmul.bf16.gmra.mxu0 %v3643
      %v5627 = vpop.f32.mrf.mxu0
      %v5628 = vadd.f32 0.0, %v5627
      %v5629 = vpop.f32.mrf.mxu0
      %v5630 = vadd.f32 0.0, %v5629
      %5631 = vdwg.mxu0
      %5632 = vmatpush.bf16.msra.mxu0 %v4467
      %5633 = vmatpush.bf16.msra.mxu0 %v4466
      %5634 = vmatpush.bf16.msra.mxu0 %v4465
      %5635 = vmatpush.bf16.msra.mxu0 %v4464
      %5636 = vmatpush.bf16.msra.mxu0 %v4463
      %5637 = vmatpush.bf16.msra.mxu0 %v4462
      %5638 = vmatpush.bf16.msra.mxu0 %v4461
      %5639 = vmatpush.bf16.msra.mxu0 %v4460
      %5640 = vmatmul.bf16.gmra.mxu0 %v3569
      %v5641 = vpop.f32.mrf.mxu0
      %v5642 = vadd.f32 %v5613, %v5641
      %v5643 = vpop.f32.mrf.mxu0
      %v5644 = vadd.f32 %v5615, %v5643
      %5645 = vmatmul.bf16.gmra.mxu0 %v3594
      %v5646 = vpop.f32.mrf.mxu0
      %v5647 = vadd.f32 %v5618, %v5646
      %v5648 = vpop.f32.mrf.mxu0
      %v5649 = vadd.f32 %v5620, %v5648
      %5650 = vmatmul.bf16.gmra.mxu0 %v3619
      %v5651 = vpop.f32.mrf.mxu0
      %v5652 = vadd.f32 %v5623, %v5651
      %v5653 = vpop.f32.mrf.mxu0
      %v5654 = vadd.f32 %v5625, %v5653
      %5655 = vmatmul.bf16.gmra.mxu0 %v3644
      %v5656 = vpop.f32.mrf.mxu0
      %v5657 = vadd.f32 %v5628, %v5656
      %v5658 = vpop.f32.mrf.mxu0
      %v5659 = vadd.f32 %v5630, %v5658
      %5660 = vdwg.mxu0
      %5661 = vmatpush.bf16.msra.mxu0 %v4475
      %5662 = vmatpush.bf16.msra.mxu0 %v4474
      %5663 = vmatpush.bf16.msra.mxu0 %v4473
      %5664 = vmatpush.bf16.msra.mxu0 %v4472
      %5665 = vmatpush.bf16.msra.mxu0 %v4471
      %5666 = vmatpush.bf16.msra.mxu0 %v4470
      %5667 = vmatpush.bf16.msra.mxu0 %v4469
      %5668 = vmatpush.bf16.msra.mxu0 %v4468
      %5669 = vmatmul.bf16.gmra.mxu0 %v3570
      %v5670 = vpop.f32.mrf.mxu0
      %v5671 = vadd.f32 %v5642, %v5670
      %v5672 = vpop.f32.mrf.mxu0
      %v5673 = vadd.f32 %v5644, %v5672
      %5674 = vmatmul.bf16.gmra.mxu0 %v3595
      %v5675 = vpop.f32.mrf.mxu0
      %v5676 = vadd.f32 %v5647, %v5675
      %v5677 = vpop.f32.mrf.mxu0
      %v5678 = vadd.f32 %v5649, %v5677
      %5679 = vmatmul.bf16.gmra.mxu0 %v3620
      %v5680 = vpop.f32.mrf.mxu0
      %v5681 = vadd.f32 %v5652, %v5680
      %v5682 = vpop.f32.mrf.mxu0
      %v5683 = vadd.f32 %v5654, %v5682
      %5684 = vmatmul.bf16.gmra.mxu0 %v3645
      %v5685 = vpop.f32.mrf.mxu0
      %v5686 = vadd.f32 %v5657, %v5685
      %v5687 = vpop.f32.mrf.mxu0
      %v5688 = vadd.f32 %v5659, %v5687
      %5689 = vdwg.mxu0
      %5690 = vmatpush.bf16.msra.mxu0 %v4483
      %5691 = vmatpush.bf16.msra.mxu0 %v4482
      %5692 = vmatpush.bf16.msra.mxu0 %v4481
      %5693 = vmatpush.bf16.msra.mxu0 %v4480
      %5694 = vmatpush.bf16.msra.mxu0 %v4479
      %5695 = vmatpush.bf16.msra.mxu0 %v4478
      %5696 = vmatpush.bf16.msra.mxu0 %v4477
      %5697 = vmatpush.bf16.msra.mxu0 %v4476
      %5698 = vmatmul.bf16.gmra.mxu0 %v3571
      %v5699 = vpop.f32.mrf.mxu0
      %v5700 = vadd.f32 %v5671, %v5699
      %v5701 = vpop.f32.mrf.mxu0
      %v5702 = vadd.f32 %v5673, %v5701
      %5703 = vmatmul.bf16.gmra.mxu0 %v3596
      %v5704 = vpop.f32.mrf.mxu0
      %v5705 = vadd.f32 %v5676, %v5704
      %v5706 = vpop.f32.mrf.mxu0
      %v5707 = vadd.f32 %v5678, %v5706
      %5708 = vmatmul.bf16.gmra.mxu0 %v3621
      %v5709 = vpop.f32.mrf.mxu0
      %v5710 = vadd.f32 %v5681, %v5709
      %v5711 = vpop.f32.mrf.mxu0
      %v5712 = vadd.f32 %v5683, %v5711
      %5713 = vmatmul.bf16.gmra.mxu0 %v3646
      %v5714 = vpop.f32.mrf.mxu0
      %v5715 = vadd.f32 %v5686, %v5714
      %v5716 = vpop.f32.mrf.mxu0
      %v5717 = vadd.f32 %v5688, %v5716
      %5718 = vdwg.mxu0
      %5719 = vmatpush.bf16.msra.mxu0 %v4491
      %5720 = vmatpush.bf16.msra.mxu0 %v4490
      %5721 = vmatpush.bf16.msra.mxu0 %v4489
      %5722 = vmatpush.bf16.msra.mxu0 %v4488
      %5723 = vmatpush.bf16.msra.mxu0 %v4487
      %5724 = vmatpush.bf16.msra.mxu0 %v4486
      %5725 = vmatpush.bf16.msra.mxu0 %v4485
      %5726 = vmatpush.bf16.msra.mxu0 %v4484
      %5727 = vmatmul.bf16.gmra.mxu0 %v3572
      %v5728 = vpop.f32.mrf.mxu0
      %v5729 = vadd.f32 %v5700, %v5728
      %v5730 = vpop.f32.mrf.mxu0
      %v5731 = vadd.f32 %v5702, %v5730
      %5732 = vmatmul.bf16.gmra.mxu0 %v3597
      %v5733 = vpop.f32.mrf.mxu0
      %v5734 = vadd.f32 %v5705, %v5733
      %v5735 = vpop.f32.mrf.mxu0
      %v5736 = vadd.f32 %v5707, %v5735
      %5737 = vmatmul.bf16.gmra.mxu0 %v3622
      %v5738 = vpop.f32.mrf.mxu0
      %v5739 = vadd.f32 %v5710, %v5738
      %v5740 = vpop.f32.mrf.mxu0
      %v5741 = vadd.f32 %v5712, %v5740
      %5742 = vmatmul.bf16.gmra.mxu0 %v3647
      %v5743 = vpop.f32.mrf.mxu0
      %v5744 = vadd.f32 %v5715, %v5743
      %v5745 = vpop.f32.mrf.mxu0
      %v5746 = vadd.f32 %v5717, %v5745
      %5747 = vdwg.mxu0
      %5748 = vmatpush.bf16.msra.mxu0 %v4499
      %5749 = vmatpush.bf16.msra.mxu0 %v4498
      %5750 = vmatpush.bf16.msra.mxu0 %v4497
      %5751 = vmatpush.bf16.msra.mxu0 %v4496
      %5752 = vmatpush.bf16.msra.mxu0 %v4495
      %5753 = vmatpush.bf16.msra.mxu0 %v4494
      %5754 = vmatpush.bf16.msra.mxu0 %v4493
      %5755 = vmatpush.bf16.msra.mxu0 %v4492
      %5756 = vmatmul.bf16.gmra.mxu0 %v3573
      %v5757 = vpop.f32.mrf.mxu0
      %v5758 = vadd.f32 %v5729, %v5757
      %v5759 = vpop.f32.mrf.mxu0
      %v5760 = vadd.f32 %v5731, %v5759
      %5761 = vmatmul.bf16.gmra.mxu0 %v3598
      %v5762 = vpop.f32.mrf.mxu0
      %v5763 = vadd.f32 %v5734, %v5762
      %v5764 = vpop.f32.mrf.mxu0
      %v5765 = vadd.f32 %v5736, %v5764
      %5766 = vmatmul.bf16.gmra.mxu0 %v3623
      %v5767 = vpop.f32.mrf.mxu0
      %v5768 = vadd.f32 %v5739, %v5767
      %v5769 = vpop.f32.mrf.mxu0
      %v5770 = vadd.f32 %v5741, %v5769
      %5771 = vmatmul.bf16.gmra.mxu0 %v3648
      %v5772 = vpop.f32.mrf.mxu0
      %v5773 = vadd.f32 %v5744, %v5772
      %v5774 = vpop.f32.mrf.mxu0
      %v5775 = vadd.f32 %v5746, %v5774
      %5776 = vdwg.mxu0
      %5777 = vmatpush.bf16.msra.mxu0 %v4507
      %5778 = vmatpush.bf16.msra.mxu0 %v4506
      %5779 = vmatpush.bf16.msra.mxu0 %v4505
      %5780 = vmatpush.bf16.msra.mxu0 %v4504
      %5781 = vmatpush.bf16.msra.mxu0 %v4503
      %5782 = vmatpush.bf16.msra.mxu0 %v4502
      %5783 = vmatpush.bf16.msra.mxu0 %v4501
      %5784 = vmatpush.bf16.msra.mxu0 %v4500
      %5785 = vmatmul.bf16.gmra.mxu0 %v3574
      %v5786 = vpop.f32.mrf.mxu0
      %v5787 = vadd.f32 %v5758, %v5786
      %v5788 = vpop.f32.mrf.mxu0
      %v5789 = vadd.f32 %v5760, %v5788
      %5790 = vmatmul.bf16.gmra.mxu0 %v3599
      %v5791 = vpop.f32.mrf.mxu0
      %v5792 = vadd.f32 %v5763, %v5791
      %v5793 = vpop.f32.mrf.mxu0
      %v5794 = vadd.f32 %v5765, %v5793
      %5795 = vmatmul.bf16.gmra.mxu0 %v3624
      %v5796 = vpop.f32.mrf.mxu0
      %v5797 = vadd.f32 %v5768, %v5796
      %v5798 = vpop.f32.mrf.mxu0
      %v5799 = vadd.f32 %v5770, %v5798
      %5800 = vmatmul.bf16.gmra.mxu0 %v3649
      %v5801 = vpop.f32.mrf.mxu0
      %v5802 = vadd.f32 %v5773, %v5801
      %v5803 = vpop.f32.mrf.mxu0
      %v5804 = vadd.f32 %v5775, %v5803
      %5805 = vdwg.mxu0
      %5806 = vmatpush.bf16.msra.mxu0 %v4515
      %5807 = vmatpush.bf16.msra.mxu0 %v4514
      %5808 = vmatpush.bf16.msra.mxu0 %v4513
      %5809 = vmatpush.bf16.msra.mxu0 %v4512
      %5810 = vmatpush.bf16.msra.mxu0 %v4511
      %5811 = vmatpush.bf16.msra.mxu0 %v4510
      %5812 = vmatpush.bf16.msra.mxu0 %v4509
      %5813 = vmatpush.bf16.msra.mxu0 %v4508
      %5814 = vmatmul.bf16.gmra.mxu0 %v3575
      %v5815 = vpop.f32.mrf.mxu0
      %v5816 = vadd.f32 %v5787, %v5815
      %v5817 = vpop.f32.mrf.mxu0
      %v5818 = vadd.f32 %v5789, %v5817
      %5819 = vmatmul.bf16.gmra.mxu0 %v3600
      %v5820 = vpop.f32.mrf.mxu0
      %v5821 = vadd.f32 %v5792, %v5820
      %v5822 = vpop.f32.mrf.mxu0
      %v5823 = vadd.f32 %v5794, %v5822
      %5824 = vmatmul.bf16.gmra.mxu0 %v3625
      %v5825 = vpop.f32.mrf.mxu0
      %v5826 = vadd.f32 %v5797, %v5825
      %v5827 = vpop.f32.mrf.mxu0
      %v5828 = vadd.f32 %v5799, %v5827
      %5829 = vmatmul.bf16.gmra.mxu0 %v3650
      %v5830 = vpop.f32.mrf.mxu0
      %v5831 = vadd.f32 %v5802, %v5830
      %v5832 = vpop.f32.mrf.mxu0
      %v5833 = vadd.f32 %v5804, %v5832
      %5834 = vdwg.mxu0
      %5835 = vmatpush.bf16.msra.mxu0 %v4523
      %5836 = vmatpush.bf16.msra.mxu0 %v4522
      %5837 = vmatpush.bf16.msra.mxu0 %v4521
      %5838 = vmatpush.bf16.msra.mxu0 %v4520
      %5839 = vmatpush.bf16.msra.mxu0 %v4519
      %5840 = vmatpush.bf16.msra.mxu0 %v4518
      %5841 = vmatpush.bf16.msra.mxu0 %v4517
      %5842 = vmatpush.bf16.msra.mxu0 %v4516
      %5843 = vmatmul.bf16.gmra.mxu0 %v3576
      %v5844 = vpop.f32.mrf.mxu0
      %v5845 = vadd.f32 %v5816, %v5844
      %v5846 = vpop.f32.mrf.mxu0
      %v5847 = vadd.f32 %v5818, %v5846
      %5848 = vmatmul.bf16.gmra.mxu0 %v3601
      %v5849 = vpop.f32.mrf.mxu0
      %v5850 = vadd.f32 %v5821, %v5849
      %v5851 = vpop.f32.mrf.mxu0
      %v5852 = vadd.f32 %v5823, %v5851
      %5853 = vmatmul.bf16.gmra.mxu0 %v3626
      %v5854 = vpop.f32.mrf.mxu0
      %v5855 = vadd.f32 %v5826, %v5854
      %v5856 = vpop.f32.mrf.mxu0
      %v5857 = vadd.f32 %v5828, %v5856
      %5858 = vmatmul.bf16.gmra.mxu0 %v3651
      %v5859 = vpop.f32.mrf.mxu0
      %v5860 = vadd.f32 %v5831, %v5859
      %v5861 = vpop.f32.mrf.mxu0
      %v5862 = vadd.f32 %v5833, %v5861
      %5863 = vdwg.mxu0
      %5864 = vmatpush.bf16.msra.mxu0 %v4531
      %5865 = vmatpush.bf16.msra.mxu0 %v4530
      %5866 = vmatpush.bf16.msra.mxu0 %v4529
      %5867 = vmatpush.bf16.msra.mxu0 %v4528
      %5868 = vmatpush.bf16.msra.mxu0 %v4527
      %5869 = vmatpush.bf16.msra.mxu0 %v4526
      %5870 = vmatpush.bf16.msra.mxu0 %v4525
      %5871 = vmatpush.bf16.msra.mxu0 %v4524
      %5872 = vmatmul.bf16.gmra.mxu0 %v3577
      %v5873 = vpop.f32.mrf.mxu0
      %v5874 = vadd.f32 %v5845, %v5873
      %v5875 = vpop.f32.mrf.mxu0
      %v5876 = vadd.f32 %v5847, %v5875
      %5877 = vmatmul.bf16.gmra.mxu0 %v3602
      %v5878 = vpop.f32.mrf.mxu0
      %v5879 = vadd.f32 %v5850, %v5878
      %v5880 = vpop.f32.mrf.mxu0
      %v5881 = vadd.f32 %v5852, %v5880
      %5882 = vmatmul.bf16.gmra.mxu0 %v3627
      %v5883 = vpop.f32.mrf.mxu0
      %v5884 = vadd.f32 %v5855, %v5883
      %v5885 = vpop.f32.mrf.mxu0
      %v5886 = vadd.f32 %v5857, %v5885
      %5887 = vmatmul.bf16.gmra.mxu0 %v3652
      %v5888 = vpop.f32.mrf.mxu0
      %v5889 = vadd.f32 %v5860, %v5888
      %v5890 = vpop.f32.mrf.mxu0
      %v5891 = vadd.f32 %v5862, %v5890
      %5892 = vdwg.mxu0
      %5893 = vmatpush.bf16.msra.mxu0 %v4539
      %5894 = vmatpush.bf16.msra.mxu0 %v4538
      %5895 = vmatpush.bf16.msra.mxu0 %v4537
      %5896 = vmatpush.bf16.msra.mxu0 %v4536
      %5897 = vmatpush.bf16.msra.mxu0 %v4535
      %5898 = vmatpush.bf16.msra.mxu0 %v4534
      %5899 = vmatpush.bf16.msra.mxu0 %v4533
      %5900 = vmatpush.bf16.msra.mxu0 %v4532
      %5901 = vmatmul.bf16.gmra.mxu0 %v3578
      %v5902 = vpop.f32.mrf.mxu0
      %v5903 = vadd.f32 %v5874, %v5902
      %v5904 = vpop.f32.mrf.mxu0
      %v5905 = vadd.f32 %v5876, %v5904
      %5906 = vmatmul.bf16.gmra.mxu0 %v3603
      %v5907 = vpop.f32.mrf.mxu0
      %v5908 = vadd.f32 %v5879, %v5907
      %v5909 = vpop.f32.mrf.mxu0
      %v5910 = vadd.f32 %v5881, %v5909
      %5911 = vmatmul.bf16.gmra.mxu0 %v3628
      %v5912 = vpop.f32.mrf.mxu0
      %v5913 = vadd.f32 %v5884, %v5912
      %v5914 = vpop.f32.mrf.mxu0
      %v5915 = vadd.f32 %v5886, %v5914
      %5916 = vmatmul.bf16.gmra.mxu0 %v3653
      %v5917 = vpop.f32.mrf.mxu0
      %v5918 = vadd.f32 %v5889, %v5917
      %v5919 = vpop.f32.mrf.mxu0
      %v5920 = vadd.f32 %v5891, %v5919
      %5921 = vdwg.mxu0
      %5922 = vmatpush.bf16.msra.mxu0 %v4547
      %5923 = vmatpush.bf16.msra.mxu0 %v4546
      %5924 = vmatpush.bf16.msra.mxu0 %v4545
      %5925 = vmatpush.bf16.msra.mxu0 %v4544
      %5926 = vmatpush.bf16.msra.mxu0 %v4543
      %5927 = vmatpush.bf16.msra.mxu0 %v4542
      %5928 = vmatpush.bf16.msra.mxu0 %v4541
      %5929 = vmatpush.bf16.msra.mxu0 %v4540
      %5930 = vmatmul.bf16.gmra.mxu0 %v3579
      %v5931 = vpop.f32.mrf.mxu0
      %v5932 = vadd.f32 %v5903, %v5931
      %v5933 = vpop.f32.mrf.mxu0
      %v5934 = vadd.f32 %v5905, %v5933
      %5935 = vmatmul.bf16.gmra.mxu0 %v3604
      %v5936 = vpop.f32.mrf.mxu0
      %v5937 = vadd.f32 %v5908, %v5936
      %v5938 = vpop.f32.mrf.mxu0
      %v5939 = vadd.f32 %v5910, %v5938
      %5940 = vmatmul.bf16.gmra.mxu0 %v3629
      %v5941 = vpop.f32.mrf.mxu0
      %v5942 = vadd.f32 %v5913, %v5941
      %v5943 = vpop.f32.mrf.mxu0
      %v5944 = vadd.f32 %v5915, %v5943
      %5945 = vmatmul.bf16.gmra.mxu0 %v3654
      %v5946 = vpop.f32.mrf.mxu0
      %v5947 = vadd.f32 %v5918, %v5946
      %v5948 = vpop.f32.mrf.mxu0
      %v5949 = vadd.f32 %v5920, %v5948
      %5950 = vdwg.mxu0
      %5951 = vmatpush.bf16.msra.mxu0 %v4555
      %5952 = vmatpush.bf16.msra.mxu0 %v4554
      %5953 = vmatpush.bf16.msra.mxu0 %v4553
      %5954 = vmatpush.bf16.msra.mxu0 %v4552
      %5955 = vmatpush.bf16.msra.mxu0 %v4551
      %5956 = vmatpush.bf16.msra.mxu0 %v4550
      %5957 = vmatpush.bf16.msra.mxu0 %v4549
      %5958 = vmatpush.bf16.msra.mxu0 %v4548
      %5959 = vmatmul.bf16.gmra.mxu0 %v3580
      %v5960 = vpop.f32.mrf.mxu0
      %v5961 = vadd.f32 %v5932, %v5960
      %v5962 = vpop.f32.mrf.mxu0
      %v5963 = vadd.f32 %v5934, %v5962
      %5964 = vmatmul.bf16.gmra.mxu0 %v3605
      %v5965 = vpop.f32.mrf.mxu0
      %v5966 = vadd.f32 %v5937, %v5965
      %v5967 = vpop.f32.mrf.mxu0
      %v5968 = vadd.f32 %v5939, %v5967
      %5969 = vmatmul.bf16.gmra.mxu0 %v3630
      %v5970 = vpop.f32.mrf.mxu0
      %v5971 = vadd.f32 %v5942, %v5970
      %v5972 = vpop.f32.mrf.mxu0
      %v5973 = vadd.f32 %v5944, %v5972
      %5974 = vmatmul.bf16.gmra.mxu0 %v3655
      %v5975 = vpop.f32.mrf.mxu0
      %v5976 = vadd.f32 %v5947, %v5975
      %v5977 = vpop.f32.mrf.mxu0
      %v5978 = vadd.f32 %v5949, %v5977
      %5979 = vdwg.mxu0
      %5980 = vmatpush.bf16.msra.mxu0 %v4563
      %5981 = vmatpush.bf16.msra.mxu0 %v4562
      %5982 = vmatpush.bf16.msra.mxu0 %v4561
      %5983 = vmatpush.bf16.msra.mxu0 %v4560
      %5984 = vmatpush.bf16.msra.mxu0 %v4559
      %5985 = vmatpush.bf16.msra.mxu0 %v4558
      %5986 = vmatpush.bf16.msra.mxu0 %v4557
      %5987 = vmatpush.bf16.msra.mxu0 %v4556
      %5988 = vmatmul.bf16.gmra.mxu0 %v3581
      %v5989 = vpop.f32.mrf.mxu0
      %v5990 = vadd.f32 %v5961, %v5989
      %v5991 = vpop.f32.mrf.mxu0
      %v5992 = vadd.f32 %v5963, %v5991
      %5993 = vmatmul.bf16.gmra.mxu0 %v3606
      %v5994 = vpop.f32.mrf.mxu0
      %v5995 = vadd.f32 %v5966, %v5994
      %v5996 = vpop.f32.mrf.mxu0
      %v5997 = vadd.f32 %v5968, %v5996
      %5998 = vmatmul.bf16.gmra.mxu0 %v3631
      %v5999 = vpop.f32.mrf.mxu0
      %v6000 = vadd.f32 %v5971, %v5999
      %v6001 = vpop.f32.mrf.mxu0
      %v6002 = vadd.f32 %v5973, %v6001
      %6003 = vmatmul.bf16.gmra.mxu0 %v3656
      %v6004 = vpop.f32.mrf.mxu0
      %v6005 = vadd.f32 %v5976, %v6004
      %v6006 = vpop.f32.mrf.mxu0
      %v6007 = vadd.f32 %v5978, %v6006
      %6008 = vdwg.mxu0
      %6009 = vmatpush.bf16.msra.mxu0 %v4571
      %6010 = vmatpush.bf16.msra.mxu0 %v4570
      %6011 = vmatpush.bf16.msra.mxu0 %v4569
      %6012 = vmatpush.bf16.msra.mxu0 %v4568
      %6013 = vmatpush.bf16.msra.mxu0 %v4567
      %6014 = vmatpush.bf16.msra.mxu0 %v4566
      %6015 = vmatpush.bf16.msra.mxu0 %v4565
      %6016 = vmatpush.bf16.msra.mxu0 %v4564
      %6017 = vmatmul.bf16.gmra.mxu0 %v3582
      %v6018 = vpop.f32.mrf.mxu0
      %v6019 = vadd.f32 %v5990, %v6018
      %v6020 = vpop.f32.mrf.mxu0
      %v6021 = vadd.f32 %v5992, %v6020
      %6022 = vmatmul.bf16.gmra.mxu0 %v3607
      %v6023 = vpop.f32.mrf.mxu0
      %v6024 = vadd.f32 %v5995, %v6023
      %v6025 = vpop.f32.mrf.mxu0
      %v6026 = vadd.f32 %v5997, %v6025
      %6027 = vmatmul.bf16.gmra.mxu0 %v3632
      %v6028 = vpop.f32.mrf.mxu0
      %v6029 = vadd.f32 %v6000, %v6028
      %v6030 = vpop.f32.mrf.mxu0
      %v6031 = vadd.f32 %v6002, %v6030
      %6032 = vmatmul.bf16.gmra.mxu0 %v3657
      %v6033 = vpop.f32.mrf.mxu0
      %v6034 = vadd.f32 %v6005, %v6033
      %v6035 = vpop.f32.mrf.mxu0
      %v6036 = vadd.f32 %v6007, %v6035
      %6037 = vdwg.mxu0
      %6038 = vmatpush.bf16.msra.mxu0 %v4579
      %6039 = vmatpush.bf16.msra.mxu0 %v4578
      %6040 = vmatpush.bf16.msra.mxu0 %v4577
      %6041 = vmatpush.bf16.msra.mxu0 %v4576
      %6042 = vmatpush.bf16.msra.mxu0 %v4575
      %6043 = vmatpush.bf16.msra.mxu0 %v4574
      %6044 = vmatpush.bf16.msra.mxu0 %v4573
      %6045 = vmatpush.bf16.msra.mxu0 %v4572
      %6046 = vmatmul.bf16.gmra.mxu0 %v3583
      %v6047 = vpop.f32.mrf.mxu0
      %v6048 = vadd.f32 %v6019, %v6047
      %v6049 = vpop.f32.mrf.mxu0
      %v6050 = vadd.f32 %v6021, %v6049
      %6051 = vmatmul.bf16.gmra.mxu0 %v3608
      %v6052 = vpop.f32.mrf.mxu0
      %v6053 = vadd.f32 %v6024, %v6052
      %v6054 = vpop.f32.mrf.mxu0
      %v6055 = vadd.f32 %v6026, %v6054
      %6056 = vmatmul.bf16.gmra.mxu0 %v3633
      %v6057 = vpop.f32.mrf.mxu0
      %v6058 = vadd.f32 %v6029, %v6057
      %v6059 = vpop.f32.mrf.mxu0
      %v6060 = vadd.f32 %v6031, %v6059
      %6061 = vmatmul.bf16.gmra.mxu0 %v3658
      %v6062 = vpop.f32.mrf.mxu0
      %v6063 = vadd.f32 %v6034, %v6062
      %v6064 = vpop.f32.mrf.mxu0
      %v6065 = vadd.f32 %v6036, %v6064
      %6066 = vdwg.mxu0
      %6067 = vmatpush.bf16.msra.mxu0 %v4587
      %6068 = vmatpush.bf16.msra.mxu0 %v4586
      %6069 = vmatpush.bf16.msra.mxu0 %v4585
      %6070 = vmatpush.bf16.msra.mxu0 %v4584
      %6071 = vmatpush.bf16.msra.mxu0 %v4583
      %6072 = vmatpush.bf16.msra.mxu0 %v4582
      %6073 = vmatpush.bf16.msra.mxu0 %v4581
      %6074 = vmatpush.bf16.msra.mxu0 %v4580
      %6075 = vmatmul.bf16.gmra.mxu0 %v3584
      %v6076 = vpop.f32.mrf.mxu0
      %v6077 = vadd.f32 %v6048, %v6076
      %v6078 = vpop.f32.mrf.mxu0
      %v6079 = vadd.f32 %v6050, %v6078
      %6080 = vmatmul.bf16.gmra.mxu0 %v3609
      %v6081 = vpop.f32.mrf.mxu0
      %v6082 = vadd.f32 %v6053, %v6081
      %v6083 = vpop.f32.mrf.mxu0
      %v6084 = vadd.f32 %v6055, %v6083
      %6085 = vmatmul.bf16.gmra.mxu0 %v3634
      %v6086 = vpop.f32.mrf.mxu0
      %v6087 = vadd.f32 %v6058, %v6086
      %v6088 = vpop.f32.mrf.mxu0
      %v6089 = vadd.f32 %v6060, %v6088
      %6090 = vmatmul.bf16.gmra.mxu0 %v3659
      %v6091 = vpop.f32.mrf.mxu0
      %v6092 = vadd.f32 %v6063, %v6091
      %v6093 = vpop.f32.mrf.mxu0
      %v6094 = vadd.f32 %v6065, %v6093
      %6095 = vdwg.mxu0
      %6096 = vmatpush.bf16.msra.mxu0 %v4595
      %6097 = vmatpush.bf16.msra.mxu0 %v4594
      %6098 = vmatpush.bf16.msra.mxu0 %v4593
      %6099 = vmatpush.bf16.msra.mxu0 %v4592
      %6100 = vmatpush.bf16.msra.mxu0 %v4591
      %6101 = vmatpush.bf16.msra.mxu0 %v4590
      %6102 = vmatpush.bf16.msra.mxu0 %v4589
      %6103 = vmatpush.bf16.msra.mxu0 %v4588
      %6104 = vmatmul.bf16.gmra.mxu0 %v3585
      %v6105 = vpop.f32.mrf.mxu0
      %v6106 = vadd.f32 %v6077, %v6105
      %v6107 = vpop.f32.mrf.mxu0
      %v6108 = vadd.f32 %v6079, %v6107
      %6109 = vmatmul.bf16.gmra.mxu0 %v3610
      %v6110 = vpop.f32.mrf.mxu0
      %v6111 = vadd.f32 %v6082, %v6110
      %v6112 = vpop.f32.mrf.mxu0
      %v6113 = vadd.f32 %v6084, %v6112
      %6114 = vmatmul.bf16.gmra.mxu0 %v3635
      %v6115 = vpop.f32.mrf.mxu0
      %v6116 = vadd.f32 %v6087, %v6115
      %v6117 = vpop.f32.mrf.mxu0
      %v6118 = vadd.f32 %v6089, %v6117
      %6119 = vmatmul.bf16.gmra.mxu0 %v3660
      %v6120 = vpop.f32.mrf.mxu0
      %v6121 = vadd.f32 %v6092, %v6120
      %v6122 = vpop.f32.mrf.mxu0
      %v6123 = vadd.f32 %v6094, %v6122
      %6124 = vdwg.mxu0
      %6125 = vmatpush.bf16.msra.mxu0 %v4603
      %6126 = vmatpush.bf16.msra.mxu0 %v4602
      %6127 = vmatpush.bf16.msra.mxu0 %v4601
      %6128 = vmatpush.bf16.msra.mxu0 %v4600
      %6129 = vmatpush.bf16.msra.mxu0 %v4599
      %6130 = vmatpush.bf16.msra.mxu0 %v4598
      %6131 = vmatpush.bf16.msra.mxu0 %v4597
      %6132 = vmatpush.bf16.msra.mxu0 %v4596
      %6133 = vmatmul.bf16.gmra.mxu0 %v3586
      %v6134 = vpop.f32.mrf.mxu0
      %v6135 = vadd.f32 %v6106, %v6134
      %v6136 = vpop.f32.mrf.mxu0
      %v6137 = vadd.f32 %v6108, %v6136
      %6138 = vmatmul.bf16.gmra.mxu0 %v3611
      %v6139 = vpop.f32.mrf.mxu0
      %v6140 = vadd.f32 %v6111, %v6139
      %v6141 = vpop.f32.mrf.mxu0
      %v6142 = vadd.f32 %v6113, %v6141
      %6143 = vmatmul.bf16.gmra.mxu0 %v3636
      %v6144 = vpop.f32.mrf.mxu0
      %v6145 = vadd.f32 %v6116, %v6144
      %v6146 = vpop.f32.mrf.mxu0
      %v6147 = vadd.f32 %v6118, %v6146
      %6148 = vmatmul.bf16.gmra.mxu0 %v3661
      %v6149 = vpop.f32.mrf.mxu0
      %v6150 = vadd.f32 %v6121, %v6149
      %v6151 = vpop.f32.mrf.mxu0
      %v6152 = vadd.f32 %v6123, %v6151
      %6153 = vdwg.mxu0
      %6154 = vmatpush.bf16.msra.mxu0 %v4611
      %6155 = vmatpush.bf16.msra.mxu0 %v4610
      %6156 = vmatpush.bf16.msra.mxu0 %v4609
      %6157 = vmatpush.bf16.msra.mxu0 %v4608
      %6158 = vmatpush.bf16.msra.mxu0 %v4607
      %6159 = vmatpush.bf16.msra.mxu0 %v4606
      %6160 = vmatpush.bf16.msra.mxu0 %v4605
      %6161 = vmatpush.bf16.msra.mxu0 %v4604
      %6162 = vmatmul.bf16.gmra.mxu0 %v3587
      %v6163 = vpop.f32.mrf.mxu0
      %v6164 = vadd.f32 %v6135, %v6163
      %v6165 = vpop.f32.mrf.mxu0
      %v6166 = vadd.f32 %v6137, %v6165
      %6167 = vmatmul.bf16.gmra.mxu0 %v3612
      %v6168 = vpop.f32.mrf.mxu0
      %v6169 = vadd.f32 %v6140, %v6168
      %v6170 = vpop.f32.mrf.mxu0
      %v6171 = vadd.f32 %v6142, %v6170
      %6172 = vmatmul.bf16.gmra.mxu0 %v3637
      %v6173 = vpop.f32.mrf.mxu0
      %v6174 = vadd.f32 %v6145, %v6173
      %v6175 = vpop.f32.mrf.mxu0
      %v6176 = vadd.f32 %v6147, %v6175
      %6177 = vmatmul.bf16.gmra.mxu0 %v3662
      %v6178 = vpop.f32.mrf.mxu0
      %v6179 = vadd.f32 %v6150, %v6178
      %v6180 = vpop.f32.mrf.mxu0
      %v6181 = vadd.f32 %v6152, %v6180
      %6182 = vdwg.mxu0
      %6183 = vmatpush.bf16.msra.mxu0 %v4619
      %6184 = vmatpush.bf16.msra.mxu0 %v4618
      %6185 = vmatpush.bf16.msra.mxu0 %v4617
      %6186 = vmatpush.bf16.msra.mxu0 %v4616
      %6187 = vmatpush.bf16.msra.mxu0 %v4615
      %6188 = vmatpush.bf16.msra.mxu0 %v4614
      %6189 = vmatpush.bf16.msra.mxu0 %v4613
      %6190 = vmatpush.bf16.msra.mxu0 %v4612
      %6191 = vmatmul.bf16.gmra.mxu0 %v3588
      %v6192 = vpop.f32.mrf.mxu0
      %v6193 = vadd.f32 %v6164, %v6192
      %v6194 = vpop.f32.mrf.mxu0
      %v6195 = vadd.f32 %v6166, %v6194
      %6196 = vmatmul.bf16.gmra.mxu0 %v3613
      %v6197 = vpop.f32.mrf.mxu0
      %v6198 = vadd.f32 %v6169, %v6197
      %v6199 = vpop.f32.mrf.mxu0
      %v6200 = vadd.f32 %v6171, %v6199
      %6201 = vmatmul.bf16.gmra.mxu0 %v3638
      %v6202 = vpop.f32.mrf.mxu0
      %v6203 = vadd.f32 %v6174, %v6202
      %v6204 = vpop.f32.mrf.mxu0
      %v6205 = vadd.f32 %v6176, %v6204
      %6206 = vmatmul.bf16.gmra.mxu0 %v3663
      %v6207 = vpop.f32.mrf.mxu0
      %v6208 = vadd.f32 %v6179, %v6207
      %v6209 = vpop.f32.mrf.mxu0
      %v6210 = vadd.f32 %v6181, %v6209
      %6211 = vdwg.mxu0
      %6212 = vmatpush.bf16.msra.mxu0 %v4627
      %6213 = vmatpush.bf16.msra.mxu0 %v4626
      %6214 = vmatpush.bf16.msra.mxu0 %v4625
      %6215 = vmatpush.bf16.msra.mxu0 %v4624
      %6216 = vmatpush.bf16.msra.mxu0 %v4623
      %6217 = vmatpush.bf16.msra.mxu0 %v4622
      %6218 = vmatpush.bf16.msra.mxu0 %v4621
      %6219 = vmatpush.bf16.msra.mxu0 %v4620
      %6220 = vmatmul.bf16.gmra.mxu0 %v3589
      %v6221 = vpop.f32.mrf.mxu0
      %v6222 = vadd.f32 %v6193, %v6221
      %v6223 = vpop.f32.mrf.mxu0
      %v6224 = vadd.f32 %v6195, %v6223
      %6225 = vmatmul.bf16.gmra.mxu0 %v3614
      %v6226 = vpop.f32.mrf.mxu0
      %v6227 = vadd.f32 %v6198, %v6226
      %v6228 = vpop.f32.mrf.mxu0
      %v6229 = vadd.f32 %v6200, %v6228
      %6230 = vmatmul.bf16.gmra.mxu0 %v3639
      %v6231 = vpop.f32.mrf.mxu0
      %v6232 = vadd.f32 %v6203, %v6231
      %v6233 = vpop.f32.mrf.mxu0
      %v6234 = vadd.f32 %v6205, %v6233
      %6235 = vmatmul.bf16.gmra.mxu0 %v3664
      %v6236 = vpop.f32.mrf.mxu0
      %v6237 = vadd.f32 %v6208, %v6236
      %v6238 = vpop.f32.mrf.mxu0
      %v6239 = vadd.f32 %v6210, %v6238
      %6240 = vdwg.mxu0
      %6241 = vmatpush.bf16.msra.mxu0 %v4635
      %6242 = vmatpush.bf16.msra.mxu0 %v4634
      %6243 = vmatpush.bf16.msra.mxu0 %v4633
      %6244 = vmatpush.bf16.msra.mxu0 %v4632
      %6245 = vmatpush.bf16.msra.mxu0 %v4631
      %6246 = vmatpush.bf16.msra.mxu0 %v4630
      %6247 = vmatpush.bf16.msra.mxu0 %v4629
      %6248 = vmatpush.bf16.msra.mxu0 %v4628
      %6249 = vmatmul.bf16.gmra.mxu0 %v3590
      %v6250 = vpop.f32.mrf.mxu0
      %v6251 = vadd.f32 %v6222, %v6250
      %v6252 = vpop.f32.mrf.mxu0
      %v6253 = vadd.f32 %v6224, %v6252
      %6254 = vmatmul.bf16.gmra.mxu0 %v3615
      %v6255 = vpop.f32.mrf.mxu0
      %v6256 = vadd.f32 %v6227, %v6255
      %v6257 = vpop.f32.mrf.mxu0
      %v6258 = vadd.f32 %v6229, %v6257
      %6259 = vmatmul.bf16.gmra.mxu0 %v3640
      %v6260 = vpop.f32.mrf.mxu0
      %v6261 = vadd.f32 %v6232, %v6260
      %v6262 = vpop.f32.mrf.mxu0
      %v6263 = vadd.f32 %v6234, %v6262
      %6264 = vmatmul.bf16.gmra.mxu0 %v3665
      %v6265 = vpop.f32.mrf.mxu0
      %v6266 = vadd.f32 %v6237, %v6265
      %v6267 = vpop.f32.mrf.mxu0
      %v6268 = vadd.f32 %v6239, %v6267
      %6269 = vdwg.mxu0
      %6270 = vmatpush.bf16.msra.mxu0 %v4643
      %6271 = vmatpush.bf16.msra.mxu0 %v4642
      %6272 = vmatpush.bf16.msra.mxu0 %v4641
      %6273 = vmatpush.bf16.msra.mxu0 %v4640
      %6274 = vmatpush.bf16.msra.mxu0 %v4639
      %6275 = vmatpush.bf16.msra.mxu0 %v4638
      %6276 = vmatpush.bf16.msra.mxu0 %v4637
      %6277 = vmatpush.bf16.msra.mxu0 %v4636
      %6278 = vmatmul.bf16.gmra.mxu0 %v3591
      %v6279 = vpop.f32.mrf.mxu0
      %v6280 = vadd.f32 %v6251, %v6279
      %v6281 = vpop.f32.mrf.mxu0
      %v6282 = vadd.f32 %v6253, %v6281
      %6283 = vmatmul.bf16.gmra.mxu0 %v3616
      %v6284 = vpop.f32.mrf.mxu0
      %v6285 = vadd.f32 %v6256, %v6284
      %v6286 = vpop.f32.mrf.mxu0
      %v6287 = vadd.f32 %v6258, %v6286
      %6288 = vmatmul.bf16.gmra.mxu0 %v3641
      %v6289 = vpop.f32.mrf.mxu0
      %v6290 = vadd.f32 %v6261, %v6289
      %v6291 = vpop.f32.mrf.mxu0
      %v6292 = vadd.f32 %v6263, %v6291
      %6293 = vmatmul.bf16.gmra.mxu0 %v3666
      %v6294 = vpop.f32.mrf.mxu0
      %v6295 = vadd.f32 %v6266, %v6294
      %v6296 = vpop.f32.mrf.mxu0
      %v6297 = vadd.f32 %v6268, %v6296
      %6298 = vdwg.mxu0
      %6299 = vmatpush.bf16.msra.mxu0 0
      %6300 = vmatpush.bf16.msra.mxu0 0
      %6301 = vmatpush.bf16.msra.mxu0 0
      %6302 = vmatpush.bf16.msra.mxu0 0
      %6303 = vmatpush.bf16.msra.mxu0 %v4647
      %6304 = vmatpush.bf16.msra.mxu0 %v4646
      %6305 = vmatpush.bf16.msra.mxu0 %v4645
      %6306 = vmatpush.bf16.msra.mxu0 %v4644
      %6307 = vmatmul.bf16.gmra.mxu0 %v5592
      %v6308 = vpop.f32.mrf.mxu0
      %v6309 = vadd.f32 %v6280, %v6308
      %v6310 = vpop.f32.mrf.mxu0
      %v6311 = vadd.f32 %v6282, %v6310
      %6312 = vmatmul.bf16.gmra.mxu0 %v5595
      %v6313 = vpop.f32.mrf.mxu0
      %v6314 = vadd.f32 %v6285, %v6313
      %v6315 = vpop.f32.mrf.mxu0
      %v6316 = vadd.f32 %v6287, %v6315
      %6317 = vmatmul.bf16.gmra.mxu0 %v5598
      %v6318 = vpop.f32.mrf.mxu0
      %v6319 = vadd.f32 %v6290, %v6318
      %v6320 = vpop.f32.mrf.mxu0
      %v6321 = vadd.f32 %v6292, %v6320
      %6322 = vmatmul.bf16.gmra.mxu0 %v5601
      %v6323 = vpop.f32.mrf.mxu0
      %v6324 = vadd.f32 %v6295, %v6323
      %v6325 = vpop.f32.mrf.mxu0
      %v6326 = vadd.f32 %v6297, %v6325
      %6327 = vdwg.mxu0
      %6328 = vst.msk [vmem:[%s449] sm:$0xff] %vm5582, %v6309
      %6329 = vst.msk [vmem:[%s449 + $0x8] sm:$0xff] %vm5582, %v6311
      %6330 = vst.msk [vmem:[%s449 + $0x10] sm:$0xff] %vm5582, %v6314
      %6331 = vst.msk [vmem:[%s449 + $0x18] sm:$0xff] %vm5582, %v6316
      %6332 = vst.msk [vmem:[%s449 + $0x20] sm:$0xff] %vm5582, %v6319
      %6333 = vst.msk [vmem:[%s449 + $0x28] sm:$0xff] %vm5582, %v6321
      %6334 = vst.msk [vmem:[%s449 + $0x30] sm:$0xff] %vm5582, %v6324
      %6335 = vst.msk [vmem:[%s449 + $0x38] sm:$0xff] %vm5582, %v6326
      %s6336 = smul.u32 8, %s20
      %p6337 = scmp.lt.s32.totalorder %s6336, 31
      %s6338 = scalar_select %p6337, %s6336, 31
      %s6339 = smul.addr %s6338, 8
      %s6340 = scalar_lea.vmem %s7, %s6339
      %s6341 = smul.u32 8, %s20
      %p6342 = scmp.lt.s32.totalorder %s6341, 31
      %s6343 = scalar_select %p6342, %s6341, 31
      %s6344 = smul.addr %s6343, 8
      %s6345 = scalar_lea.vmem %s8, %s6344
      // Predicated region
      $region49: #{forward.8} parent=47 // pred_check
        %p6346 = pneg %p215
      $region50: #{forward.8} parent=47 // pred_check_branch
        %6348 = sbr.rel (%p6346) target = $region52
      $region51: #{forward.8} parent=47 // pred_region
        %s6349 = smul.u32 8, %s20
      $region52: #{forward.8} parent=47 // pred_fallthru
        _
      // Predicated region
      $region53: #{forward.8} parent=47 // pred_check
        %p6350 = pneg %p241
      $region54: #{forward.8} parent=47 // pred_check_branch
        %6352 = sbr.rel (%p6350) target = $region56
      $region55: #{forward.8} parent=47 // pred_region
        %s6353 = smul.u32 8, %s20
      $region56: #{forward.8} parent=47 // pred_fallthru
        _
    $region48: #{forward.8} parent=5 // pred_fallthru
      _
    %p6354 = scmp.le.s32.totalorder 2, %s15
    // Predicated region
    $region57: #{forward.8} parent=5 // pred_check
      %p6355 = pneg %p6354
    $region58: #{forward.8} parent=5 // pred_check_branch
      %6357 = sbr.rel (%p6355) target = $region60
    $region59: #{forward.8} parent=5 // pred_region
      %s6358 = ssub.s32 %s15, 2
      // Predicated region
      $region61: #{forward.8} parent=59 // pred_check
        %p6359 = pneg %p221
      $region62: #{forward.8} parent=59 // pred_check_branch
        %6361 = sbr.rel (%p6359) target = $region64
      $region63: #{forward.8} parent=59 // pred_region
        %s6362 = smul.u32 8, %s21
        %p6363 = scmp.lt.s32.totalorder %s6362, 31
        %s6364 = scalar_select %p6363, %s6362, 31
        %s6365 = smul.addr %s6364, 8
        %s6366 = scalar_lea.vmem %s7, %s6365
      $region64: #{forward.8} parent=59 // pred_fallthru
        _
      // Predicated region
      $region65: #{forward.8} parent=59 // pred_check
        %p6367 = pneg %p247
      $region66: #{forward.8} parent=59 // pred_check_branch
        %6369 = sbr.rel (%p6367) target = $region68
      $region67: #{forward.8} parent=59 // pred_region
        %s6370 = smul.u32 8, %s21
        %p6371 = scmp.lt.s32.totalorder %s6370, 31
        %s6372 = scalar_select %p6371, %s6370, 31
        %s6373 = smul.addr %s6372, 8
        %s6374 = scalar_lea.vmem %s8, %s6373
      $region68: #{forward.8} parent=59 // pred_fallthru
        _
    $region60: #{forward.8} parent=5 // pred_fallthru
      _
  $region6: #{forward.8} parent=0 // loop_footer
    %s19 = sadd.s32 1, %s15
  $region7: #{forward.8} parent=0 // loop_footer_branch
    %14 = sbr.rel target = $region3
  $region8: #{forward.8} parent=0 // loop_exit
    _

</llo_original>
